<compile_context>
chip_gen: v5e
topology: v5e:2x2
jax: 0.10.0
libtpu: 0.0.40
codegen_flags: <defaults>
</compile_context>

<pallas_src>
import functools
import math

import jax
import jax.numpy as jnp
from jax.experimental import pallas as pl
from jax.experimental.pallas import tpu as pltpu


def _round_up(x, m):
    return (x + m - 1) // m * m


def _cdiv(a, b):
    return -(-a // b)


# --------------------------------------------------------------------------
# Pallas kernel 1: conv-as-matmul (im2col patches @ reshaped weight) + bias
# (+ optional LeakyReLU(0.2)).
#   single-K path: grid = (M tiles, Cout tiles), no accumulator scratch.
#   multi-K path : grid = (M tiles, Cout tiles, K tiles), K innermost
#                  ("arbitrary"), f32 VMEM accumulator, k==0 writes directly.
# --------------------------------------------------------------------------
def _conv_matmul_single_k_kernel(a_ref, b_ref, bias_ref, o_ref, *, act):
    out = jnp.dot(a_ref[...], b_ref[...], preferred_element_type=jnp.float32)
    out = out + bias_ref[...]                       # (tm, tn) + (1, tn)
    if act:                                         # LeakyReLU(0.2)
        out = jnp.where(out >= 0, out, 0.2 * out)
    o_ref[...] = out.astype(o_ref.dtype)


def _conv_matmul_multi_k_kernel(a_ref, b_ref, bias_ref, o_ref, acc_ref, *,
                                act, nk):
    k = pl.program_id(2)
    prod = jnp.dot(a_ref[...], b_ref[...], preferred_element_type=jnp.float32)

    @pl.when(k == 0)
    def _():
        acc_ref[...] = prod                         # no separate zero-init pass

    @pl.when(k != 0)
    def _():
        acc_ref[...] += prod

    @pl.when(k == nk - 1)
    def _():
        out = acc_ref[...] + bias_ref[...]          # (tm, tn) + (1, tn)
        if act:                                     # LeakyReLU(0.2)
            out = jnp.where(out >= 0, out, 0.2 * out)
        o_ref[...] = out.astype(o_ref.dtype)


def _im2col(x, k, stride, pad):
    """x: NHWC -> patches [N*OH*OW, k*k*C] (order: kh, kw, cin fastest-cin)."""
    n, h, w, c = x.shape
    xp = jnp.pad(x, ((0, 0), (pad, pad), (pad, pad), (0, 0)))
    oh = (h + 2 * pad - k) // stride + 1
    ow = (w + 2 * pad - k) // stride + 1
    cols = []
    for kh in range(k):
        for kw in range(k):
            cols.append(xp[:, kh:kh + stride * oh:stride,
                           kw:kw + stride * ow:stride, :])
    patches = jnp.concatenate(cols, axis=-1)        # (N, OH, OW, k*k*C)
    return patches.reshape(n * oh * ow, k * k * c), oh, ow


def conv2d_pallas(x_nhwc, w, b, stride, pad, act, out_dtype=jnp.bfloat16):
    """w: (Cout, Cin, KH, KW) PyTorch layout; b: (Cout,)."""
    cout, cin, kh, kw = w.shape
    n = x_nhwc.shape[0]

    # Pad Cin so K = KH*KW*Cin is an exact multiple of 128 (lane width) up
    # front: no second pad/copy of the large patch matrix along K.
    cin_step = 128 // math.gcd(kh * kw, 128)
    cin_p = _round_up(cin, cin_step)
    if cin_p != cin:
        x_nhwc = jnp.pad(x_nhwc, ((0, 0), (0, 0), (0, 0), (0, cin_p - cin)))
        w = jnp.pad(w, ((0, 0), (0, cin_p - cin), (0, 0), (0, 0)))

    # bf16 operands (MXU-native); accumulation stays f32 in the kernel.
    patches, oh, ow = _im2col(x_nhwc.astype(jnp.bfloat16), kh, stride, pad)
    m, kdim = patches.shape                          # kdim % 128 == 0

    # weight -> (KH, KW, Cin, Cout) -> (K, Cout), matching im2col ordering.
    w2 = jnp.transpose(w, (2, 3, 1, 0)).reshape(kdim, cout).astype(jnp.bfloat16)

    n_pad = _round_up(cout, 128)
    tn = 256 if n_pad % 256 == 0 else 128
    tk = next(t for t in (1024, 512, 256, 128) if kdim % t == 0)
    nk = kdim // tk

    # Large, roughly balanced M tiles (cap 2048).  Keep >=2 M tiles whenever M
    # is moderately large so the grid shards across v7x's 2 TensorCores.  The
    # patch matrix is NOT padded along M: the partial last block relies on
    # Pallas' masked edge stores, and garbage rows never reach HBM.
    TM_CAP = 2048
    n_m_tiles = max(1, _cdiv(m, TM_CAP))
    if n_m_tiles == 1 and m > 1024:
        n_m_tiles = 2
    tm = min(_round_up(_cdiv(m, n_m_tiles), 8), TM_CAP)
    mt = _cdiv(m, tm)

    bmat = w2 if n_pad == cout else jnp.pad(w2, ((0, 0), (0, n_pad - cout)))
    bias = jnp.pad(b, (0, n_pad - cout)).reshape(1, n_pad).astype(jnp.float32)

    out_itemsize = jnp.dtype(out_dtype).itemsize
    cost = pl.CostEstimate(
        flops=2 * m * kdim * n_pad,
        transcendentals=0,
        bytes_accessed=(patches.size + bmat.size) * 2 + m * n_pad * out_itemsize)

    # Explicit scoped-VMEM budget sized to the double-buffered footprint
    # (v5e default is only 16 MiB; cap at v7x's 64 MiB physical VMEM).
    vmem_needed = (2 * (tm * tk * 2 + tk * tn * 2 + tm * tn * out_itemsize + tn * 4)
                   + tm * tn * 4)
    vmem_limit = int(min(64 << 20, max(32 << 20, 1.5 * vmem_needed)))

    if nk == 1:
        a_spec_kwargs = {}
        if mt >= 3:
            # Single-step K reduction -> the A stream is the exposed DMA; a
            # third buffer hides its latency across grid steps (esp. v5e).
            a_spec_kwargs = dict(pipeline_mode=pl.Buffered(3))
        out = pl.pallas_call(
            functools.partial(_conv_matmul_single_k_kernel, act=act),
            out_shape=jax.ShapeDtypeStruct((m, n_pad), out_dtype),
            grid_spec=pltpu.PrefetchScalarGridSpec(
                num_scalar_prefetch=0,
                grid=(mt, n_pad // tn),
                in_specs=[
                    pl.BlockSpec((tm, tk), lambda i, j: (i, 0), **a_spec_kwargs),
                    pl.BlockSpec((tk, tn), lambda i, j: (0, j)),
                    pl.BlockSpec((1, tn), lambda i, j: (0, j)),
                ],
                out_specs=pl.BlockSpec((tm, tn), lambda i, j: (i, j)),
            ),
            compiler_params=pltpu.CompilerParams(
                dimension_semantics=("parallel", "parallel"),
                vmem_limit_bytes=vmem_limit),
            cost_estimate=cost,
        )(patches, bmat, bias)
    else:
        out = pl.pallas_call(
            functools.partial(_conv_matmul_multi_k_kernel, act=act, nk=nk),
            out_shape=jax.ShapeDtypeStruct((m, n_pad), out_dtype),
            grid_spec=pltpu.PrefetchScalarGridSpec(
                num_scalar_prefetch=0,
                grid=(mt, n_pad // tn, nk),
                in_specs=[
                    pl.BlockSpec((tm, tk), lambda i, j, k: (i, k)),
                    pl.BlockSpec((tk, tn), lambda i, j, k: (k, j)),
                    pl.BlockSpec((1, tn), lambda i, j, k: (0, j)),
                ],
                out_specs=pl.BlockSpec((tm, tn), lambda i, j, k: (i, j)),
                scratch_shapes=[pltpu.VMEM((tm, tn), jnp.float32)],
            ),
            compiler_params=pltpu.CompilerParams(
                dimension_semantics=("parallel", "parallel", "arbitrary"),
                vmem_limit_bytes=vmem_limit),
            cost_estimate=cost,
        )(patches, bmat, bias)

    return out[:, :cout].reshape(n, oh, ow, cout)


# --------------------------------------------------------------------------
# Pallas kernel 2: InstanceNorm2d (affine=False, eps=1e-5) + LeakyReLU(0.2).
# Grid over (batch, channel-tile).  Statistics are single-pass sum /
# sum-of-squares accumulated in f32 over hw chunks (only a chunk is upcast to
# f32 at a time); normalization is applied chunk by chunk as well.
# --------------------------------------------------------------------------
def _instnorm_lrelu_kernel(x_ref, o_ref, *, chunk):
    hw = x_ref.shape[1]
    tc = x_ref.shape[2]
    nchunks = hw // chunk                            # chunk divides hw (wrapper)
    inv_hw = 1.0 / hw
    eps = 1e-5

    if nchunks == 1:
        x = x_ref[...].astype(jnp.float32)           # (1, hw, tc)
        mean = jnp.sum(x, axis=1, keepdims=True) * inv_hw
        ex2 = jnp.sum(x * x, axis=1, keepdims=True) * inv_hw
        var = ex2 - mean * mean
        y = (x - mean) * jax.lax.rsqrt(var + eps)
        o_ref[...] = jnp.where(y >= 0, y, 0.2 * y).astype(o_ref.dtype)
        return

    def stats_body(i, carry):
        s, s2 = carry
        start = pl.multiple_of(i * chunk, chunk)
        xb = x_ref[:, pl.ds(start, chunk), :].astype(jnp.float32)  # (1,chunk,tc)
        return (s + jnp.sum(xb, axis=1, keepdims=True),
                s2 + jnp.sum(xb * xb, axis=1, keepdims=True))

    zero = jnp.zeros((1, 1, tc), jnp.float32)
    s, s2 = jax.lax.fori_loop(0, nchunks, stats_body, (zero, zero))
    mean = s * inv_hw
    var = s2 * inv_hw - mean * mean
    inv_std = jax.lax.rsqrt(var + eps)

    def norm_body(i, carry):
        start = pl.multiple_of(i * chunk, chunk)
        xb = x_ref[:, pl.ds(start, chunk), :].astype(jnp.float32)
        y = (xb - mean) * inv_std
        o_ref[:, pl.ds(start, chunk), :] = jnp.where(y >= 0, y, 0.2 * y).astype(
            o_ref.dtype)
        return carry

    jax.lax.fori_loop(0, nchunks, norm_body, 0)


def _pick_chunk(hw):
    for c in (2048, 1024, 512, 256, 128, 64, 32):    # all multiples of 8
        if c < hw and hw % c == 0:
            return c
    return hw


def instnorm_lrelu_pallas(x_nhwc):
    n, h, w, c = x_nhwc.shape
    hw = h * w
    x = x_nhwc.reshape(n, hw, c)
    # tc = 128 gives n*(c/128) grid steps (pipelining + megacore sharding).
    tc = 128 if c % 128 == 0 else c
    chunk = _pick_chunk(hw)
    # TODO(synk): for very large HW, tile the spatial axis across the grid
    # (two-pass stats) instead of holding the full (1, hw, tc) block.
    vmem_needed = 4 * hw * tc * 2 + 4 * chunk * tc * 4
    vmem_limit = int(min(64 << 20, max(32 << 20, 1.5 * vmem_needed)))
    out = pl.pallas_call(
        functools.partial(_instnorm_lrelu_kernel, chunk=chunk),
        out_shape=jax.ShapeDtypeStruct((n, hw, c), x.dtype),
        grid_spec=pltpu.PrefetchScalarGridSpec(
            num_scalar_prefetch=0,
            grid=(n, c // tc),
            in_specs=[pl.BlockSpec((1, hw, tc), lambda i, j: (i, 0, j))],
            out_specs=pl.BlockSpec((1, hw, tc), lambda i, j: (i, 0, j)),
        ),
        compiler_params=pltpu.CompilerParams(
            dimension_semantics=("parallel", "parallel"),
            vmem_limit_bytes=vmem_limit),
    )(x)
    return out.reshape(n, h, w, c)


# --------------------------------------------------------------------------
# Full PatchDiscriminator forward
# --------------------------------------------------------------------------
def init_params(key):
    specs = [  # (Cout, Cin, KH, KW)
        (64, 6, 4, 4),
        (128, 64, 4, 4),
        (256, 128, 4, 4),
        (512, 256, 4, 4),
        (1, 512, 4, 4),
    ]
    params = {}
    for i, shape in enumerate(specs, start=1):
        key, kw_, kb_ = jax.random.split(key, 3)
        params[f"w{i}"] = 0.02 * jax.random.normal(kw_, shape, jnp.float32)
        params[f"b{i}"] = 0.01 * jax.random.normal(kb_, (shape[0],), jnp.float32)
    return params


def patch_discriminator(he, ihc, params):
    """he, ihc: NCHW float32 -> NCHW float32 patch logits."""
    x = jnp.concatenate([he, ihc], axis=1)          # (N, 6, H, W)
    x = jnp.transpose(x, (0, 2, 3, 1))              # NHWC internal layout

    x = conv2d_pallas(x, params["w1"], params["b1"], 2, 1, act=True)
    x = conv2d_pallas(x, params["w2"], params["b2"], 2, 1, act=False)
    x = instnorm_lrelu_pallas(x)
    x = conv2d_pallas(x, params["w3"], params["b3"], 2, 1, act=False)
    x = instnorm_lrelu_pallas(x)
    x = conv2d_pallas(x, params["w4"], params["b4"], 1, 1, act=False)
    x = instnorm_lrelu_pallas(x)
    x = conv2d_pallas(x, params["w5"], params["b5"], 1, 1, act=False,
                      out_dtype=jnp.float32)

    return jnp.transpose(x, (0, 3, 1, 2))           # back to NCHW


# --------------------------------------------------------------------------
# Plain-JAX f32 reference (numerical sanity check)
# --------------------------------------------------------------------------
def ref_forward(he, ihc, params):
    def conv(x, w, b, s, p):
        y = jax.lax.conv_general_dilated(
            x, w, (s, s), [(p, p), (p, p)],
            dimension_numbers=("NCHW", "OIHW", "NCHW"))
        return y + b[None, :, None, None]

    def inorm(x):
        m = jnp.mean(x, axis=(2, 3), keepdims=True)
        v = jnp.mean((x - m) ** 2, axis=(2, 3), keepdims=True)
        return (x - m) * jax.lax.rsqrt(v + 1e-5)

    def lrelu(x):
        return jnp.where(x >= 0, x, 0.2 * x)

    x = jnp.concatenate([he, ihc], axis=1)
    x = lrelu(conv(x, params["w1"], params["b1"], 2, 1))
    x = lrelu(inorm(conv(x, params["w2"], params["b2"], 2, 1)))
    x = lrelu(inorm(conv(x, params["w3"], params["b3"], 2, 1)))
    x = lrelu(inorm(conv(x, params["w4"], params["b4"], 1, 1)))
    x = conv(x, params["w5"], params["b5"], 1, 1)
    return x


if __name__ == "__main__":
    key = jax.random.PRNGKey(0)
    kp, khe, kihc = jax.random.split(key, 3)

    params = init_params(kp)
    he = jax.random.normal(khe, (2, 3, 32, 32), jnp.float32)
    ihc = jax.random.normal(kihc, (2, 3, 32, 32), jnp.float32)

    fwd = jax.jit(patch_discriminator)
    out = jax.block_until_ready(fwd(he, ihc, params))
    assert out.shape == (2, 1, 2, 2), out.shape

    ref = jax.block_until_ready(ref_forward(he, ihc, params))
    # bf16 matmul operands (f32 accumulate) -> compare with a bf16-sized
    # tolerance against the pure-f32 reference (accuracy/perf trade-off that is
    # fine for a GAN discriminator).
    err = float(jnp.max(jnp.abs(out - ref)))
    scale = float(jnp.max(jnp.abs(ref)))
    assert err <= 0.08 * scale + 0.08, (err, scale)

    print("KERNEL_OK")
</pallas_src>

<mosaic_0001>
module attributes {stable_mosaic.version = 11 : i64} {
  func.func @_conv_matmul_single_k_kernel(%arg0: i32, %arg1: i32, %arg2: memref<512x128xbf16, #tpu.memory_space<vmem>>, %arg3: memref<128x128xbf16, #tpu.memory_space<vmem>>, %arg4: memref<1x128xf32, #tpu.memory_space<vmem>>, %arg5: memref<512x128xbf16, #tpu.memory_space<vmem>>) attributes {dimension_semantics = [#tpu.dimension_semantics<parallel>, #tpu.dimension_semantics<parallel>], iteration_bounds = array<i64: 1, 1>, scalar_prefetch = 0 : i64, scratch_operands = 0 : i64, tpu.core_type = #tpu.core_type<tc>, window_params = [{transform_indices = @transform_0, window_bounds = array<i64: 512, 128>}, {transform_indices = @transform_1, window_bounds = array<i64: 128, 128>}, {transform_indices = @transform_2, window_bounds = array<i64: 1, 128>}, {transform_indices = @transform_3, window_bounds = array<i64: 512, 128>}]} {
    %c0 = arith.constant 0 : index
    %c0_0 = arith.constant 0 : index
    %0 = vector.load %arg2[%c0, %c0_0] : memref<512x128xbf16, #tpu.memory_space<vmem>>, vector<512x128xbf16>
    %c0_1 = arith.constant 0 : index
    %c0_2 = arith.constant 0 : index
    %1 = vector.load %arg3[%c0_1, %c0_2] : memref<128x128xbf16, #tpu.memory_space<vmem>>, vector<128x128xbf16>
    %cst = arith.constant dense<0.000000e+00> : vector<512x128xf32>
    %2 = tpu.matmul %0, %1, %cst {dimension_numbers = #tpu.dot_dimension_numbers<[1], [0], [0], [1], [0, 0, 1, 1], [], []>} : vector<512x128xbf16>, vector<128x128xbf16>, vector<512x128xf32> -> vector<512x128xf32>
    %c0_3 = arith.constant 0 : index
    %c0_4 = arith.constant 0 : index
    %3 = vector.load %arg4[%c0_3, %c0_4] : memref<1x128xf32, #tpu.memory_space<vmem>>, vector<1x128xf32>
    %4 = vector.broadcast %3 : vector<1x128xf32> to vector<512x128xf32>
    %5 = arith.addf %2, %4 : vector<512x128xf32>
    %cst_5 = arith.constant 0.000000e+00 : f32
    %6 = vector.broadcast %cst_5 : f32 to vector<512x128xf32>
    %7 = arith.cmpf oge, %5, %6 : vector<512x128xf32>
    %cst_6 = arith.constant 2.000000e-01 : f32
    %8 = vector.broadcast %cst_6 : f32 to vector<512x128xf32>
    %9 = arith.mulf %8, %5 : vector<512x128xf32>
    %10 = arith.select %7, %5, %9 : vector<512x128xi1>, vector<512x128xf32>
    %11 = arith.truncf %10 : vector<512x128xf32> to vector<512x128xbf16>
    %c0_7 = arith.constant 0 : index
    %c0_8 = arith.constant 0 : index
    %12 = vector.load %arg5[%c0_7, %c0_8] : memref<512x128xbf16, #tpu.memory_space<vmem>>, vector<512x128xbf16>
    tpu.vector_store %arg5[%c0_7, %c0_8], %11 {strides = array<i32>} : memref<512x128xbf16, #tpu.memory_space<vmem>>, vector<512x128xbf16>,
    return
  }
  func.func @transform_0(%arg0: i32, %arg1: i32) -> (i32, i32) {
    %c0_i32 = arith.constant 0 : i32
    %c0_i32_0 = arith.constant 0 : i32
    return %arg0, %c0_i32 : i32, i32
  }
  func.func @transform_1(%arg0: i32, %arg1: i32) -> (i32, i32) {
    %c0_i32 = arith.constant 0 : i32
    %c0_i32_0 = arith.constant 0 : i32
    return %c0_i32, %arg1 : i32, i32
  }
  func.func @transform_2(%arg0: i32, %arg1: i32) -> (i32, i32) {
    %c0_i32 = arith.constant 0 : i32
    %c0_i32_0 = arith.constant 0 : i32
    return %c0_i32, %arg1 : i32, i32
  }
  func.func @transform_3(%arg0: i32, %arg1: i32) -> (i32, i32) {
    %c0_i32 = arith.constant 0 : i32
    return %arg0, %arg1 : i32, i32
  }
}

module attributes {stable_mosaic.version = 11 : i64} {
  func.func @_conv_matmul_single_k_kernel(%arg0: i32, %arg1: i32, %arg2: memref<128x1024xbf16, #tpu.memory_space<vmem>>, %arg3: memref<1024x128xbf16, #tpu.memory_space<vmem>>, %arg4: memref<1x128xf32, #tpu.memory_space<vmem>>, %arg5: memref<128x128xbf16, #tpu.memory_space<vmem>>) attributes {dimension_semantics = [#tpu.dimension_semantics<parallel>, #tpu.dimension_semantics<parallel>], iteration_bounds = array<i64: 1, 1>, scalar_prefetch = 0 : i64, scratch_operands = 0 : i64, tpu.core_type = #tpu.core_type<tc>, window_params = [{transform_indices = @transform_0, window_bounds = array<i64: 128, 1024>}, {transform_indices = @transform_1, window_bounds = array<i64: 1024, 128>}, {transform_indices = @transform_2, window_bounds = array<i64: 1, 128>}, {transform_indices = @transform_3, window_bounds = array<i64: 128, 128>}]} {
    %c0 = arith.constant 0 : index
    %c0_0 = arith.constant 0 : index
    %0 = vector.load %arg2[%c0, %c0_0] : memref<128x1024xbf16, #tpu.memory_space<vmem>>, vector<128x1024xbf16>
    %c0_1 = arith.constant 0 : index
    %c0_2 = arith.constant 0 : index
    %1 = vector.load %arg3[%c0_1, %c0_2] : memref<1024x128xbf16, #tpu.memory_space<vmem>>, vector<1024x128xbf16>
    %cst = arith.constant dense<0.000000e+00> : vector<128x128xf32>
    %2 = tpu.matmul %0, %1, %cst {dimension_numbers = #tpu.dot_dimension_numbers<[1], [0], [0], [1], [0, 0, 1, 1], [], []>} : vector<128x1024xbf16>, vector<1024x128xbf16>, vector<128x128xf32> -> vector<128x128xf32>
    %c0_3 = arith.constant 0 : index
    %c0_4 = arith.constant 0 : index
    %3 = vector.load %arg4[%c0_3, %c0_4] : memref<1x128xf32, #tpu.memory_space<vmem>>, vector<1x128xf32>
    %4 = vector.broadcast %3 : vector<1x128xf32> to vector<128x128xf32>
    %5 = arith.addf %2, %4 : vector<128x128xf32>
    %6 = arith.truncf %5 : vector<128x128xf32> to vector<128x128xbf16>
    %c0_5 = arith.constant 0 : index
    %c0_6 = arith.constant 0 : index
    %7 = vector.load %arg5[%c0_5, %c0_6] : memref<128x128xbf16, #tpu.memory_space<vmem>>, vector<128x128xbf16>
    tpu.vector_store %arg5[%c0_5, %c0_6], %6 {strides = array<i32>} : memref<128x128xbf16, #tpu.memory_space<vmem>>, vector<128x128xbf16>,
    return
  }
  func.func @transform_0(%arg0: i32, %arg1: i32) -> (i32, i32) {
    %c0_i32 = arith.constant 0 : i32
    %c0_i32_0 = arith.constant 0 : i32
    return %arg0, %c0_i32 : i32, i32
  }
  func.func @transform_1(%arg0: i32, %arg1: i32) -> (i32, i32) {
    %c0_i32 = arith.constant 0 : i32
    %c0_i32_0 = arith.constant 0 : i32
    return %c0_i32, %arg1 : i32, i32
  }
  func.func @transform_2(%arg0: i32, %arg1: i32) -> (i32, i32) {
    %c0_i32 = arith.constant 0 : i32
    %c0_i32_0 = arith.constant 0 : i32
    return %c0_i32, %arg1 : i32, i32
  }
  func.func @transform_3(%arg0: i32, %arg1: i32) -> (i32, i32) {
    %c0_i32 = arith.constant 0 : i32
    return %arg0, %arg1 : i32, i32
  }
}

module attributes {stable_mosaic.version = 11 : i64} {
  func.func @_instnorm_lrelu_kernel(%arg0: i32, %arg1: i32, %arg2: memref<1x64x128xbf16, #tpu.memory_space<vmem>>, %arg3: memref<1x64x128xbf16, #tpu.memory_space<vmem>>) attributes {dimension_semantics = [#tpu.dimension_semantics<parallel>, #tpu.dimension_semantics<parallel>], iteration_bounds = array<i64: 2, 1>, scalar_prefetch = 0 : i64, scratch_operands = 0 : i64, tpu.core_type = #tpu.core_type<tc>, window_params = [{transform_indices = @transform_0, window_bounds = array<i64: 1, 64, 128>}, {transform_indices = @transform_1, window_bounds = array<i64: 1, 64, 128>}]} {
    %cst = arith.constant 0.000000e+00 : f32
    %0 = vector.broadcast %cst : f32 to vector<1x1x128xf32>
    %c0_i32 = arith.constant 0 : i32
    %c2_i32 = arith.constant 2 : i32
    %1 = arith.addi %c0_i32, %c2_i32 : i32
    %c1_i32 = arith.constant 1 : i32
    %2:2 = scf.for %arg4 = %c0_i32 to %1 step %c1_i32 iter_args(%arg5 = %0, %arg6 = %0) -> (vector<1x1x128xf32>, vector<1x1x128xf32>)  : i32 {
      %c32_i32 = arith.constant 32 : i32
      %13 = arith.muli %arg4, %c32_i32 : i32
      %14 = tpu.assume_multiple %13, 32 : i32
      %c0 = arith.constant 0 : index
      %15 = arith.index_cast %14 : i32 to index
      %c0_8 = arith.constant 0 : index
      %16 = vector.load %arg2[%c0, %15, %c0_8] : memref<1x64x128xbf16, #tpu.memory_space<vmem>>, vector<1x32x128xbf16>
      %17 = arith.extf %16 : vector<1x32x128xbf16> to vector<1x32x128xf32>
      %cst_9 = arith.constant dense<0.000000e+00> : vector<1x128xf32>
      %18 = vector.multi_reduction <add>, %17, %cst_9 [1] : vector<1x32x128xf32> to vector<1x128xf32>
      %19 = vector.shape_cast %18 : vector<1x128xf32> to vector<1x1x128xf32>
      %20 = arith.addf %arg5, %19 : vector<1x1x128xf32>
      %21 = arith.mulf %17, %17 : vector<1x32x128xf32>
      %cst_10 = arith.constant dense<0.000000e+00> : vector<1x128xf32>
      %22 = vector.multi_reduction <add>, %21, %cst_10 [1] : vector<1x32x128xf32> to vector<1x128xf32>
      %23 = vector.shape_cast %22 : vector<1x128xf32> to vector<1x1x128xf32>
      %24 = arith.addf %arg6, %23 : vector<1x1x128xf32>
      scf.yield %20, %24 : vector<1x1x128xf32>, vector<1x1x128xf32>
    }
    %c2_i32_0 = arith.constant 2 : i32
    %cst_1 = arith.constant 1.562500e-02 : f32
    %3 = vector.broadcast %cst_1 : f32 to vector<1x1x128xf32>
    %4 = arith.mulf %2#0, %3 : vector<1x1x128xf32>
    %cst_2 = arith.constant 1.562500e-02 : f32
    %5 = vector.broadcast %cst_2 : f32 to vector<1x1x128xf32>
    %6 = arith.mulf %2#1, %5 : vector<1x1x128xf32>
    %7 = arith.mulf %4, %4 : vector<1x1x128xf32>
    %8 = arith.subf %6, %7 : vector<1x1x128xf32>
    %cst_3 = arith.constant 9.99999974E-6 : f32
    %9 = vector.broadcast %cst_3 : f32 to vector<1x1x128xf32>
    %10 = arith.addf %8, %9 : vector<1x1x128xf32>
    %11 = math.rsqrt %10 : vector<1x1x128xf32>
    %c0_i32_4 = arith.constant 0 : i32
    %c2_i32_5 = arith.constant 2 : i32
    %12 = arith.addi %c0_i32_4, %c2_i32_5 : i32
    %c1_i32_6 = arith.constant 1 : i32
    scf.for %arg4 = %c0_i32_4 to %12 step %c1_i32_6  : i32 {
      %c32_i32 = arith.constant 32 : i32
      %13 = arith.muli %arg4, %c32_i32 : i32
      %14 = tpu.assume_multiple %13, 32 : i32
      %c0 = arith.constant 0 : index
      %15 = arith.index_cast %14 : i32 to index
      %c0_8 = arith.constant 0 : index
      %16 = vector.load %arg2[%c0, %15, %c0_8] : memref<1x64x128xbf16, #tpu.memory_space<vmem>>, vector<1x32x128xbf16>
      %17 = arith.extf %16 : vector<1x32x128xbf16> to vector<1x32x128xf32>
      %18 = vector.broadcast %4 : vector<1x1x128xf32> to vector<1x32x128xf32>
      %19 = arith.subf %17, %18 : vector<1x32x128xf32>
      %20 = vector.broadcast %11 : vector<1x1x128xf32> to vector<1x32x128xf32>
      %21 = arith.mulf %19, %20 : vector<1x32x128xf32>
      %cst_9 = arith.constant 0.000000e+00 : f32
      %22 = vector.broadcast %cst_9 : f32 to vector<1x32x128xf32>
      %23 = arith.cmpf oge, %21, %22 : vector<1x32x128xf32>
      %cst_10 = arith.constant 2.000000e-01 : f32
      %24 = vector.broadcast %cst_10 : f32 to vector<1x32x128xf32>
      %25 = arith.mulf %24, %21 : vector<1x32x128xf32>
      %26 = arith.select %23, %21, %25 : vector<1x32x128xi1>, vector<1x32x128xf32>
      %27 = arith.truncf %26 : vector<1x32x128xf32> to vector<1x32x128xbf16>
      %c0_11 = arith.constant 0 : index
      %28 = arith.index_cast %14 : i32 to index
      %c0_12 = arith.constant 0 : index
      %29 = vector.load %arg3[%c0_11, %28, %c0_12] : memref<1x64x128xbf16, #tpu.memory_space<vmem>>, vector<1x32x128xbf16>
      tpu.vector_store %arg3[%c0_11, %28, %c0_12], %27 {strides = array<i32>} : memref<1x64x128xbf16, #tpu.memory_space<vmem>>, vector<1x32x128xbf16>,
    }
    %c2_i32_7 = arith.constant 2 : i32
    return
  }
  func.func @transform_0(%arg0: i32, %arg1: i32) -> (i32, i32, i32) {
    %c0_i32 = arith.constant 0 : i32
    %c0_i32_0 = arith.constant 0 : i32
    return %arg0, %c0_i32, %arg1 : i32, i32, i32
  }
  func.func @transform_1(%arg0: i32, %arg1: i32) -> (i32, i32, i32) {
    %c0_i32 = arith.constant 0 : i32
    %c0_i32_0 = arith.constant 0 : i32
    return %arg0, %c0_i32, %arg1 : i32, i32, i32
  }
}

module attributes {stable_mosaic.version = 11 : i64} {
  func.func @_conv_matmul_multi_k_kernel(%arg0: i32, %arg1: i32, %arg2: i32, %arg3: memref<32x1024xbf16, #tpu.memory_space<vmem>>, %arg4: memref<1024x256xbf16, #tpu.memory_space<vmem>>, %arg5: memref<1x256xf32, #tpu.memory_space<vmem>>, %arg6: memref<32x256xbf16, #tpu.memory_space<vmem>>, %arg7: memref<32x256xf32, #tpu.memory_space<vmem>>) attributes {dimension_semantics = [#tpu.dimension_semantics<parallel>, #tpu.dimension_semantics<parallel>, #tpu.dimension_semantics<arbitrary>], iteration_bounds = array<i64: 1, 1, 2>, scalar_prefetch = 0 : i64, scratch_operands = 1 : i64, tpu.core_type = #tpu.core_type<tc>, window_params = [{transform_indices = @transform_0, window_bounds = array<i64: 32, 1024>}, {transform_indices = @transform_1, window_bounds = array<i64: 1024, 256>}, {transform_indices = @transform_2, window_bounds = array<i64: 1, 256>}, {transform_indices = @transform_3, window_bounds = array<i64: 32, 256>}]} {
    %c0 = arith.constant 0 : index
    %c0_0 = arith.constant 0 : index
    %0 = vector.load %arg3[%c0, %c0_0] : memref<32x1024xbf16, #tpu.memory_space<vmem>>, vector<32x1024xbf16>
    %c0_1 = arith.constant 0 : index
    %c0_2 = arith.constant 0 : index
    %1 = vector.load %arg4[%c0_1, %c0_2] : memref<1024x256xbf16, #tpu.memory_space<vmem>>, vector<1024x256xbf16>
    %cst = arith.constant dense<0.000000e+00> : vector<32x256xf32>
    %2 = tpu.matmul %0, %1, %cst {dimension_numbers = #tpu.dot_dimension_numbers<[1], [0], [0], [1], [0, 0, 1, 1], [], []>} : vector<32x1024xbf16>, vector<1024x256xbf16>, vector<32x256xf32> -> vector<32x256xf32>
    %c0_i32 = arith.constant 0 : i32
    %3 = arith.cmpi eq, %arg2, %c0_i32 : i32
    %4 = arith.extui %3 : i1 to i32
    %c0_i32_3 = arith.constant 0 : i32
    %5 = arith.cmpi ne, %4, %c0_i32_3 : i32
    scf.if %5 {
      %c0_7 = arith.constant 0 : index
      %c0_8 = arith.constant 0 : index
      %12 = vector.load %arg7[%c0_7, %c0_8] : memref<32x256xf32, #tpu.memory_space<vmem>>, vector<32x256xf32>
      tpu.vector_store %arg7[%c0_7, %c0_8], %2 {strides = array<i32>} : memref<32x256xf32, #tpu.memory_space<vmem>>, vector<32x256xf32>,
    } else {
    }
    %c0_i32_4 = arith.constant 0 : i32
    %6 = arith.cmpi ne, %arg2, %c0_i32_4 : i32
    %7 = arith.extui %6 : i1 to i32
    %c0_i32_5 = arith.constant 0 : i32
    %8 = arith.cmpi ne, %7, %c0_i32_5 : i32
    scf.if %8 {
      %c0_7 = arith.constant 0 : index
      %c0_8 = arith.constant 0 : index
      %12 = vector.load %arg7[%c0_7, %c0_8] : memref<32x256xf32, #tpu.memory_space<vmem>>, vector<32x256xf32>
      %13 = arith.addf %12, %2 : vector<32x256xf32>
      %c0_9 = arith.constant 0 : index
      %c0_10 = arith.constant 0 : index
      %14 = vector.load %arg7[%c0_9, %c0_10] : memref<32x256xf32, #tpu.memory_space<vmem>>, vector<32x256xf32>
      tpu.vector_store %arg7[%c0_9, %c0_10], %13 {strides = array<i32>} : memref<32x256xf32, #tpu.memory_space<vmem>>, vector<32x256xf32>,
    } else {
    }
    %c1_i32 = arith.constant 1 : i32
    %9 = arith.cmpi eq, %arg2, %c1_i32 : i32
    %10 = arith.extui %9 : i1 to i32
    %c0_i32_6 = arith.constant 0 : i32
    %11 = arith.cmpi ne, %10, %c0_i32_6 : i32
    scf.if %11 {
      %c0_7 = arith.constant 0 : index
      %c0_8 = arith.constant 0 : index
      %12 = vector.load %arg7[%c0_7, %c0_8] : memref<32x256xf32, #tpu.memory_space<vmem>>, vector<32x256xf32>
      %c0_9 = arith.constant 0 : index
      %c0_10 = arith.constant 0 : index
      %13 = vector.load %arg5[%c0_9, %c0_10] : memref<1x256xf32, #tpu.memory_space<vmem>>, vector<1x256xf32>
      %14 = vector.broadcast %13 : vector<1x256xf32> to vector<32x256xf32>
      %15 = arith.addf %12, %14 : vector<32x256xf32>
      %16 = arith.truncf %15 : vector<32x256xf32> to vector<32x256xbf16>
      %c0_11 = arith.constant 0 : index
      %c0_12 = arith.constant 0 : index
      %17 = vector.load %arg6[%c0_11, %c0_12] : memref<32x256xbf16, #tpu.memory_space<vmem>>, vector<32x256xbf16>
      tpu.vector_store %arg6[%c0_11, %c0_12], %16 {strides = array<i32>} : memref<32x256xbf16, #tpu.memory_space<vmem>>, vector<32x256xbf16>,
    } else {
    }
    return
  }
  func.func @transform_0(%arg0: i32, %arg1: i32, %arg2: i32) -> (i32, i32) {
    %c0_i32 = arith.constant 0 : i32
    return %arg0, %arg2 : i32, i32
  }
  func.func @transform_1(%arg0: i32, %arg1: i32, %arg2: i32) -> (i32, i32) {
    %c0_i32 = arith.constant 0 : i32
    return %arg2, %arg1 : i32, i32
  }
  func.func @transform_2(%arg0: i32, %arg1: i32, %arg2: i32) -> (i32, i32) {
    %c0_i32 = arith.constant 0 : i32
    %c0_i32_0 = arith.constant 0 : i32
    return %c0_i32, %arg1 : i32, i32
  }
  func.func @transform_3(%arg0: i32, %arg1: i32, %arg2: i32) -> (i32, i32) {
    %c0_i32 = arith.constant 0 : i32
    return %arg0, %arg1 : i32, i32
  }
}

module attributes {stable_mosaic.version = 11 : i64} {
  func.func @_instnorm_lrelu_kernel(%arg0: i32, %arg1: i32, %arg2: memref<1x16x128xbf16, #tpu.memory_space<vmem>>, %arg3: memref<1x16x128xbf16, #tpu.memory_space<vmem>>) attributes {dimension_semantics = [#tpu.dimension_semantics<parallel>, #tpu.dimension_semantics<parallel>], iteration_bounds = array<i64: 2, 2>, scalar_prefetch = 0 : i64, scratch_operands = 0 : i64, tpu.core_type = #tpu.core_type<tc>, window_params = [{transform_indices = @transform_0, window_bounds = array<i64: 1, 16, 128>}, {transform_indices = @transform_1, window_bounds = array<i64: 1, 16, 128>}]} {
    %c0 = arith.constant 0 : index
    %c0_0 = arith.constant 0 : index
    %c0_1 = arith.constant 0 : index
    %0 = vector.load %arg2[%c0, %c0_0, %c0_1] : memref<1x16x128xbf16, #tpu.memory_space<vmem>>, vector<1x16x128xbf16>
    %1 = arith.extf %0 : vector<1x16x128xbf16> to vector<1x16x128xf32>
    %cst = arith.constant dense<0.000000e+00> : vector<1x128xf32>
    %2 = vector.multi_reduction <add>, %1, %cst [1] : vector<1x16x128xf32> to vector<1x128xf32>
    %3 = vector.shape_cast %2 : vector<1x128xf32> to vector<1x1x128xf32>
    %cst_2 = arith.constant 6.250000e-02 : f32
    %4 = vector.broadcast %cst_2 : f32 to vector<1x1x128xf32>
    %5 = arith.mulf %3, %4 : vector<1x1x128xf32>
    %6 = arith.mulf %1, %1 : vector<1x16x128xf32>
    %cst_3 = arith.constant dense<0.000000e+00> : vector<1x128xf32>
    %7 = vector.multi_reduction <add>, %6, %cst_3 [1] : vector<1x16x128xf32> to vector<1x128xf32>
    %8 = vector.shape_cast %7 : vector<1x128xf32> to vector<1x1x128xf32>
    %cst_4 = arith.constant 6.250000e-02 : f32
    %9 = vector.broadcast %cst_4 : f32 to vector<1x1x128xf32>
    %10 = arith.mulf %8, %9 : vector<1x1x128xf32>
    %11 = arith.mulf %5, %5 : vector<1x1x128xf32>
    %12 = arith.subf %10, %11 : vector<1x1x128xf32>
    %13 = vector.broadcast %5 : vector<1x1x128xf32> to vector<1x16x128xf32>
    %14 = arith.subf %1, %13 : vector<1x16x128xf32>
    %cst_5 = arith.constant 9.99999974E-6 : f32
    %15 = vector.broadcast %cst_5 : f32 to vector<1x1x128xf32>
    %16 = arith.addf %12, %15 : vector<1x1x128xf32>
    %17 = math.rsqrt %16 : vector<1x1x128xf32>
    %18 = vector.broadcast %17 : vector<1x1x128xf32> to vector<1x16x128xf32>
    %19 = arith.mulf %14, %18 : vector<1x16x128xf32>
    %cst_6 = arith.constant 0.000000e+00 : f32
    %20 = vector.broadcast %cst_6 : f32 to vector<1x16x128xf32>
    %21 = arith.cmpf oge, %19, %20 : vector<1x16x128xf32>
    %cst_7 = arith.constant 2.000000e-01 : f32
    %22 = vector.broadcast %cst_7 : f32 to vector<1x16x128xf32>
    %23 = arith.mulf %22, %19 : vector<1x16x128xf32>
    %24 = arith.select %21, %19, %23 : vector<1x16x128xi1>, vector<1x16x128xf32>
    %25 = arith.truncf %24 : vector<1x16x128xf32> to vector<1x16x128xbf16>
    %c0_8 = arith.constant 0 : index
    %c0_9 = arith.constant 0 : index
    %c0_10 = arith.constant 0 : index
    %26 = vector.load %arg3[%c0_8, %c0_9, %c0_10] : memref<1x16x128xbf16, #tpu.memory_space<vmem>>, vector<1x16x128xbf16>
    tpu.vector_store %arg3[%c0_8, %c0_9, %c0_10], %25 {strides = array<i32>} : memref<1x16x128xbf16, #tpu.memory_space<vmem>>, vector<1x16x128xbf16>,
    return
  }
  func.func @transform_0(%arg0: i32, %arg1: i32) -> (i32, i32, i32) {
    %c0_i32 = arith.constant 0 : i32
    %c0_i32_0 = arith.constant 0 : i32
    return %arg0, %c0_i32, %arg1 : i32, i32, i32
  }
  func.func @transform_1(%arg0: i32, %arg1: i32) -> (i32, i32, i32) {
    %c0_i32 = arith.constant 0 : i32
    %c0_i32_0 = arith.constant 0 : i32
    return %arg0, %c0_i32, %arg1 : i32, i32, i32
  }
}

module attributes {stable_mosaic.version = 11 : i64} {
  func.func @_conv_matmul_multi_k_kernel(%arg0: i32, %arg1: i32, %arg2: i32, %arg3: memref<24x1024xbf16, #tpu.memory_space<vmem>>, %arg4: memref<1024x256xbf16, #tpu.memory_space<vmem>>, %arg5: memref<1x256xf32, #tpu.memory_space<vmem>>, %arg6: memref<24x256xbf16, #tpu.memory_space<vmem>>, %arg7: memref<24x256xf32, #tpu.memory_space<vmem>>) attributes {dimension_semantics = [#tpu.dimension_semantics<parallel>, #tpu.dimension_semantics<parallel>, #tpu.dimension_semantics<arbitrary>], iteration_bounds = array<i64: 1, 2, 4>, scalar_prefetch = 0 : i64, scratch_operands = 1 : i64, tpu.core_type = #tpu.core_type<tc>, window_params = [{transform_indices = @transform_0, window_bounds = array<i64: 24, 1024>}, {transform_indices = @transform_1, window_bounds = array<i64: 1024, 256>}, {transform_indices = @transform_2, window_bounds = array<i64: 1, 256>}, {transform_indices = @transform_3, window_bounds = array<i64: 24, 256>}]} {
    %c0 = arith.constant 0 : index
    %c0_0 = arith.constant 0 : index
    %0 = vector.load %arg3[%c0, %c0_0] : memref<24x1024xbf16, #tpu.memory_space<vmem>>, vector<24x1024xbf16>
    %c0_1 = arith.constant 0 : index
    %c0_2 = arith.constant 0 : index
    %1 = vector.load %arg4[%c0_1, %c0_2] : memref<1024x256xbf16, #tpu.memory_space<vmem>>, vector<1024x256xbf16>
    %cst = arith.constant dense<0.000000e+00> : vector<24x256xf32>
    %2 = tpu.matmul %0, %1, %cst {dimension_numbers = #tpu.dot_dimension_numbers<[1], [0], [0], [1], [0, 0, 1, 1], [], []>} : vector<24x1024xbf16>, vector<1024x256xbf16>, vector<24x256xf32> -> vector<24x256xf32>
    %c0_i32 = arith.constant 0 : i32
    %3 = arith.cmpi eq, %arg2, %c0_i32 : i32
    %4 = arith.extui %3 : i1 to i32
    %c0_i32_3 = arith.constant 0 : i32
    %5 = arith.cmpi ne, %4, %c0_i32_3 : i32
    scf.if %5 {
      %c0_7 = arith.constant 0 : index
      %c0_8 = arith.constant 0 : index
      %12 = vector.load %arg7[%c0_7, %c0_8] : memref<24x256xf32, #tpu.memory_space<vmem>>, vector<24x256xf32>
      tpu.vector_store %arg7[%c0_7, %c0_8], %2 {strides = array<i32>} : memref<24x256xf32, #tpu.memory_space<vmem>>, vector<24x256xf32>,
    } else {
    }
    %c0_i32_4 = arith.constant 0 : i32
    %6 = arith.cmpi ne, %arg2, %c0_i32_4 : i32
    %7 = arith.extui %6 : i1 to i32
    %c0_i32_5 = arith.constant 0 : i32
    %8 = arith.cmpi ne, %7, %c0_i32_5 : i32
    scf.if %8 {
      %c0_7 = arith.constant 0 : index
      %c0_8 = arith.constant 0 : index
      %12 = vector.load %arg7[%c0_7, %c0_8] : memref<24x256xf32, #tpu.memory_space<vmem>>, vector<24x256xf32>
      %13 = arith.addf %12, %2 : vector<24x256xf32>
      %c0_9 = arith.constant 0 : index
      %c0_10 = arith.constant 0 : index
      %14 = vector.load %arg7[%c0_9, %c0_10] : memref<24x256xf32, #tpu.memory_space<vmem>>, vector<24x256xf32>
      tpu.vector_store %arg7[%c0_9, %c0_10], %13 {strides = array<i32>} : memref<24x256xf32, #tpu.memory_space<vmem>>, vector<24x256xf32>,
    } else {
    }
    %c3_i32 = arith.constant 3 : i32
    %9 = arith.cmpi eq, %arg2, %c3_i32 : i32
    %10 = arith.extui %9 : i1 to i32
    %c0_i32_6 = arith.constant 0 : i32
    %11 = arith.cmpi ne, %10, %c0_i32_6 : i32
    scf.if %11 {
      %c0_7 = arith.constant 0 : index
      %c0_8 = arith.constant 0 : index
      %12 = vector.load %arg7[%c0_7, %c0_8] : memref<24x256xf32, #tpu.memory_space<vmem>>, vector<24x256xf32>
      %c0_9 = arith.constant 0 : index
      %c0_10 = arith.constant 0 : index
      %13 = vector.load %arg5[%c0_9, %c0_10] : memref<1x256xf32, #tpu.memory_space<vmem>>, vector<1x256xf32>
      %14 = vector.broadcast %13 : vector<1x256xf32> to vector<24x256xf32>
      %15 = arith.addf %12, %14 : vector<24x256xf32>
      %16 = arith.truncf %15 : vector<24x256xf32> to vector<24x256xbf16>
      %c0_11 = arith.constant 0 : index
      %c0_12 = arith.constant 0 : index
      %17 = vector.load %arg6[%c0_11, %c0_12] : memref<24x256xbf16, #tpu.memory_space<vmem>>, vector<24x256xbf16>
      tpu.vector_store %arg6[%c0_11, %c0_12], %16 {strides = array<i32>} : memref<24x256xbf16, #tpu.memory_space<vmem>>, vector<24x256xbf16>,
    } else {
    }
    return
  }
  func.func @transform_0(%arg0: i32, %arg1: i32, %arg2: i32) -> (i32, i32) {
    %c0_i32 = arith.constant 0 : i32
    return %arg0, %arg2 : i32, i32
  }
  func.func @transform_1(%arg0: i32, %arg1: i32, %arg2: i32) -> (i32, i32) {
    %c0_i32 = arith.constant 0 : i32
    return %arg2, %arg1 : i32, i32
  }
  func.func @transform_2(%arg0: i32, %arg1: i32, %arg2: i32) -> (i32, i32) {
    %c0_i32 = arith.constant 0 : i32
    %c0_i32_0 = arith.constant 0 : i32
    return %c0_i32, %arg1 : i32, i32
  }
  func.func @transform_3(%arg0: i32, %arg1: i32, %arg2: i32) -> (i32, i32) {
    %c0_i32 = arith.constant 0 : i32
    return %arg0, %arg1 : i32, i32
  }
}

module attributes {stable_mosaic.version = 11 : i64} {
  func.func @_instnorm_lrelu_kernel(%arg0: i32, %arg1: i32, %arg2: memref<1x9x128xbf16, #tpu.memory_space<vmem>>, %arg3: memref<1x9x128xbf16, #tpu.memory_space<vmem>>) attributes {dimension_semantics = [#tpu.dimension_semantics<parallel>, #tpu.dimension_semantics<parallel>], iteration_bounds = array<i64: 2, 4>, scalar_prefetch = 0 : i64, scratch_operands = 0 : i64, tpu.core_type = #tpu.core_type<tc>, window_params = [{transform_indices = @transform_0, window_bounds = array<i64: 1, 9, 128>}, {transform_indices = @transform_1, window_bounds = array<i64: 1, 9, 128>}]} {
    %c0 = arith.constant 0 : index
    %c0_0 = arith.constant 0 : index
    %c0_1 = arith.constant 0 : index
    %0 = vector.load %arg2[%c0, %c0_0, %c0_1] : memref<1x9x128xbf16, #tpu.memory_space<vmem>>, vector<1x9x128xbf16>
    %1 = arith.extf %0 : vector<1x9x128xbf16> to vector<1x9x128xf32>
    %cst = arith.constant dense<0.000000e+00> : vector<1x128xf32>
    %2 = vector.multi_reduction <add>, %1, %cst [1] : vector<1x9x128xf32> to vector<1x128xf32>
    %3 = vector.shape_cast %2 : vector<1x128xf32> to vector<1x1x128xf32>
    %cst_2 = arith.constant 0.111111112 : f32
    %4 = vector.broadcast %cst_2 : f32 to vector<1x1x128xf32>
    %5 = arith.mulf %3, %4 : vector<1x1x128xf32>
    %6 = arith.mulf %1, %1 : vector<1x9x128xf32>
    %cst_3 = arith.constant dense<0.000000e+00> : vector<1x128xf32>
    %7 = vector.multi_reduction <add>, %6, %cst_3 [1] : vector<1x9x128xf32> to vector<1x128xf32>
    %8 = vector.shape_cast %7 : vector<1x128xf32> to vector<1x1x128xf32>
    %cst_4 = arith.constant 0.111111112 : f32
    %9 = vector.broadcast %cst_4 : f32 to vector<1x1x128xf32>
    %10 = arith.mulf %8, %9 : vector<1x1x128xf32>
    %11 = arith.mulf %5, %5 : vector<1x1x128xf32>
    %12 = arith.subf %10, %11 : vector<1x1x128xf32>
    %13 = vector.broadcast %5 : vector<1x1x128xf32> to vector<1x9x128xf32>
    %14 = arith.subf %1, %13 : vector<1x9x128xf32>
    %cst_5 = arith.constant 9.99999974E-6 : f32
    %15 = vector.broadcast %cst_5 : f32 to vector<1x1x128xf32>
    %16 = arith.addf %12, %15 : vector<1x1x128xf32>
    %17 = math.rsqrt %16 : vector<1x1x128xf32>
    %18 = vector.broadcast %17 : vector<1x1x128xf32> to vector<1x9x128xf32>
    %19 = arith.mulf %14, %18 : vector<1x9x128xf32>
    %cst_6 = arith.constant 0.000000e+00 : f32
    %20 = vector.broadcast %cst_6 : f32 to vector<1x9x128xf32>
    %21 = arith.cmpf oge, %19, %20 : vector<1x9x128xf32>
    %cst_7 = arith.constant 2.000000e-01 : f32
    %22 = vector.broadcast %cst_7 : f32 to vector<1x9x128xf32>
    %23 = arith.mulf %22, %19 : vector<1x9x128xf32>
    %24 = arith.select %21, %19, %23 : vector<1x9x128xi1>, vector<1x9x128xf32>
    %25 = arith.truncf %24 : vector<1x9x128xf32> to vector<1x9x128xbf16>
    %c0_8 = arith.constant 0 : index
    %c0_9 = arith.constant 0 : index
    %c0_10 = arith.constant 0 : index
    %26 = vector.load %arg3[%c0_8, %c0_9, %c0_10] : memref<1x9x128xbf16, #tpu.memory_space<vmem>>, vector<1x9x128xbf16>
    tpu.vector_store %arg3[%c0_8, %c0_9, %c0_10], %25 {strides = array<i32>} : memref<1x9x128xbf16, #tpu.memory_space<vmem>>, vector<1x9x128xbf16>,
    return
  }
  func.func @transform_0(%arg0: i32, %arg1: i32) -> (i32, i32, i32) {
    %c0_i32 = arith.constant 0 : i32
    %c0_i32_0 = arith.constant 0 : i32
    return %arg0, %c0_i32, %arg1 : i32, i32, i32
  }
  func.func @transform_1(%arg0: i32, %arg1: i32) -> (i32, i32, i32) {
    %c0_i32 = arith.constant 0 : i32
    %c0_i32_0 = arith.constant 0 : i32
    return %arg0, %c0_i32, %arg1 : i32, i32, i32
  }
}

module attributes {stable_mosaic.version = 11 : i64} {
  func.func @_conv_matmul_multi_k_kernel(%arg0: i32, %arg1: i32, %arg2: i32, %arg3: memref<8x1024xbf16, #tpu.memory_space<vmem>>, %arg4: memref<1024x128xbf16, #tpu.memory_space<vmem>>, %arg5: memref<1x128xf32, #tpu.memory_space<vmem>>, %arg6: memref<8x128xf32, #tpu.memory_space<vmem>>, %arg7: memref<8x128xf32, #tpu.memory_space<vmem>>) attributes {dimension_semantics = [#tpu.dimension_semantics<parallel>, #tpu.dimension_semantics<parallel>, #tpu.dimension_semantics<arbitrary>], iteration_bounds = array<i64: 1, 1, 8>, scalar_prefetch = 0 : i64, scratch_operands = 1 : i64, tpu.core_type = #tpu.core_type<tc>, window_params = [{transform_indices = @transform_0, window_bounds = array<i64: 8, 1024>}, {transform_indices = @transform_1, window_bounds = array<i64: 1024, 128>}, {transform_indices = @transform_2, window_bounds = array<i64: 1, 128>}, {transform_indices = @transform_3, window_bounds = array<i64: 8, 128>}]} {
    %c0 = arith.constant 0 : index
    %c0_0 = arith.constant 0 : index
    %0 = vector.load %arg3[%c0, %c0_0] : memref<8x1024xbf16, #tpu.memory_space<vmem>>, vector<8x1024xbf16>
    %c0_1 = arith.constant 0 : index
    %c0_2 = arith.constant 0 : index
    %1 = vector.load %arg4[%c0_1, %c0_2] : memref<1024x128xbf16, #tpu.memory_space<vmem>>, vector<1024x128xbf16>
    %cst = arith.constant dense<0.000000e+00> : vector<8x128xf32>
    %2 = tpu.matmul %0, %1, %cst {dimension_numbers = #tpu.dot_dimension_numbers<[1], [0], [0], [1], [0, 0, 1, 1], [], []>} : vector<8x1024xbf16>, vector<1024x128xbf16>, vector<8x128xf32> -> vector<8x128xf32>
    %c0_i32 = arith.constant 0 : i32
    %3 = arith.cmpi eq, %arg2, %c0_i32 : i32
    %4 = arith.extui %3 : i1 to i32
    %c0_i32_3 = arith.constant 0 : i32
    %5 = arith.cmpi ne, %4, %c0_i32_3 : i32
    scf.if %5 {
      %c0_7 = arith.constant 0 : index
      %c0_8 = arith.constant 0 : index
      %12 = vector.load %arg7[%c0_7, %c0_8] : memref<8x128xf32, #tpu.memory_space<vmem>>, vector<8x128xf32>
      tpu.vector_store %arg7[%c0_7, %c0_8], %2 {strides = array<i32>} : memref<8x128xf32, #tpu.memory_space<vmem>>, vector<8x128xf32>,
    } else {
    }
    %c0_i32_4 = arith.constant 0 : i32
    %6 = arith.cmpi ne, %arg2, %c0_i32_4 : i32
    %7 = arith.extui %6 : i1 to i32
    %c0_i32_5 = arith.constant 0 : i32
    %8 = arith.cmpi ne, %7, %c0_i32_5 : i32
    scf.if %8 {
      %c0_7 = arith.constant 0 : index
      %c0_8 = arith.constant 0 : index
      %12 = vector.load %arg7[%c0_7, %c0_8] : memref<8x128xf32, #tpu.memory_space<vmem>>, vector<8x128xf32>
      %13 = arith.addf %12, %2 : vector<8x128xf32>
      %c0_9 = arith.constant 0 : index
      %c0_10 = arith.constant 0 : index
      %14 = vector.load %arg7[%c0_9, %c0_10] : memref<8x128xf32, #tpu.memory_space<vmem>>, vector<8x128xf32>
      tpu.vector_store %arg7[%c0_9, %c0_10], %13 {strides = array<i32>} : memref<8x128xf32, #tpu.memory_space<vmem>>, vector<8x128xf32>,
    } else {
    }
    %c7_i32 = arith.constant 7 : i32
    %9 = arith.cmpi eq, %arg2, %c7_i32 : i32
    %10 = arith.extui %9 : i1 to i32
    %c0_i32_6 = arith.constant 0 : i32
    %11 = arith.cmpi ne, %10, %c0_i32_6 : i32
    scf.if %11 {
      %c0_7 = arith.constant 0 : index
      %c0_8 = arith.constant 0 : index
      %12 = vector.load %arg7[%c0_7, %c0_8] : memref<8x128xf32, #tpu.memory_space<vmem>>, vector<8x128xf32>
      %c0_9 = arith.constant 0 : index
      %c0_10 = arith.constant 0 : index
      %13 = vector.load %arg5[%c0_9, %c0_10] : memref<1x128xf32, #tpu.memory_space<vmem>>, vector<1x128xf32>
      %14 = vector.broadcast %13 : vector<1x128xf32> to vector<8x128xf32>
      %15 = arith.addf %12, %14 : vector<8x128xf32>
      %c0_11 = arith.constant 0 : index
      %c0_12 = arith.constant 0 : index
      %16 = vector.load %arg6[%c0_11, %c0_12] : memref<8x128xf32, #tpu.memory_space<vmem>>, vector<8x128xf32>
      tpu.vector_store %arg6[%c0_11, %c0_12], %15 {strides = array<i32>} : memref<8x128xf32, #tpu.memory_space<vmem>>, vector<8x128xf32>,
    } else {
    }
    return
  }
  func.func @transform_0(%arg0: i32, %arg1: i32, %arg2: i32) -> (i32, i32) {
    %c0_i32 = arith.constant 0 : i32
    return %arg0, %arg2 : i32, i32
  }
  func.func @transform_1(%arg0: i32, %arg1: i32, %arg2: i32) -> (i32, i32) {
    %c0_i32 = arith.constant 0 : i32
    return %arg2, %arg1 : i32, i32
  }
  func.func @transform_2(%arg0: i32, %arg1: i32, %arg2: i32) -> (i32, i32) {
    %c0_i32 = arith.constant 0 : i32
    %c0_i32_0 = arith.constant 0 : i32
    return %c0_i32, %arg1 : i32, i32
  }
  func.func @transform_3(%arg0: i32, %arg1: i32, %arg2: i32) -> (i32, i32) {
    %c0_i32 = arith.constant 0 : i32
    return %arg0, %arg1 : i32, i32
  }
}

</mosaic_0001>

<llo_original>
// kernel: patch_discriminator.8
$region0: #{patch_discriminator.8}
  #allocation0 [shape = 'u32[]', space=smem, size = 0x4, offset = 0x4, fixed_abs, tag = 'smem constant byte address 0x4 - core index']
  #allocation1 [shape = 'u32[72,128]{1,0:T(1,128)}', space=vmem, size = 0x9000, scoped, tag = 'internal scratch']
  %s0 = inlined_call_operand.vmem [shape: bf16[512,128], index: 0, kind: input, shape index: {}]
  %s1 = inlined_call_operand.vmem [shape: bf16[128,128], index: 1, kind: input, shape index: {}]
  %s2 = inlined_call_operand.vmem [shape: f32[1,128], index: 2, kind: input, shape index: {}]
  %s3 = inlined_call_operand.vmem [shape: bf16[512,128], index: 3, kind: output, shape index: {}]
  %s4 = sld [smem:[#allocation0]]
  $region22: #{patch_discriminator.8} parent=0
    _
  %s6 = ssub.s32 1, %s4
  %s7 = scalar_select 0, %s6, %s4
  // Predicated region
  $region2: #{patch_discriminator.8} parent=0 // pred_check
    _
  $region3: #{patch_discriminator.8} parent=0 // pred_check_branch
    %9 = sbr.rel (0) target = $region5
  $region4: #{patch_discriminator.8} parent=0 // pred_region
    _
  $region5: #{patch_discriminator.8} parent=0 // pred_fallthru
    _
  // Predicated region
  $region6: #{patch_discriminator.8} parent=0 // pred_check
    _
  $region7: #{patch_discriminator.8} parent=0 // pred_check_branch
    %11 = sbr.rel (0) target = $region9
  $region8: #{patch_discriminator.8} parent=0 // pred_region
    _
  $region9: #{patch_discriminator.8} parent=0 // pred_fallthru
    _
  // Predicated region
  $region10: #{patch_discriminator.8} parent=0 // pred_check
    _
  $region11: #{patch_discriminator.8} parent=0 // pred_check_branch
    %13 = sbr.rel (0) target = $region13
  $region12: #{patch_discriminator.8} parent=0 // pred_region
    _
  $region13: #{patch_discriminator.8} parent=0 // pred_fallthru
    _
  %v14 = vld [vmem:[%s0] sm:$0xf]
  %v15 = vld [vmem:[%s0 + $0x4] sm:$0xf]
  %v16 = vld [vmem:[%s0 + $0x8] sm:$0xf]
  %v17 = vld [vmem:[%s0 + $0xc] sm:$0xf]
  %v18 = vld [vmem:[%s0 + $0x10] sm:$0xf]
  %v19 = vld [vmem:[%s0 + $0x14] sm:$0xf]
  %v20 = vld [vmem:[%s0 + $0x18] sm:$0xf]
  %v21 = vld [vmem:[%s0 + $0x1c] sm:$0xf]
  %v22 = vld [vmem:[%s0 + $0x20] sm:$0xf]
  %v23 = vld [vmem:[%s0 + $0x24] sm:$0xf]
  %v24 = vld [vmem:[%s0 + $0x28] sm:$0xf]
  %v25 = vld [vmem:[%s0 + $0x2c] sm:$0xf]
  %v26 = vld [vmem:[%s0 + $0x30] sm:$0xf]
  %v27 = vld [vmem:[%s0 + $0x34] sm:$0xf]
  %v28 = vld [vmem:[%s0 + $0x38] sm:$0xf]
  %v29 = vld [vmem:[%s0 + $0x3c] sm:$0xf]
  %v30 = vld [vmem:[%s0 + $0x40] sm:$0xf]
  %v31 = vld [vmem:[%s0 + $0x44] sm:$0xf]
  %v32 = vld [vmem:[%s0 + $0x48] sm:$0xf]
  %v33 = vld [vmem:[%s0 + $0x4c] sm:$0xf]
  %v34 = vld [vmem:[%s0 + $0x50] sm:$0xf]
  %v35 = vld [vmem:[%s0 + $0x54] sm:$0xf]
  %v36 = vld [vmem:[%s0 + $0x58] sm:$0xf]
  %v37 = vld [vmem:[%s0 + $0x5c] sm:$0xf]
  %v38 = vld [vmem:[%s0 + $0x60] sm:$0xf]
  %v39 = vld [vmem:[%s0 + $0x64] sm:$0xf]
  %v40 = vld [vmem:[%s0 + $0x68] sm:$0xf]
  %v41 = vld [vmem:[%s0 + $0x6c] sm:$0xf]
  %v42 = vld [vmem:[%s0 + $0x70] sm:$0xf]
  %v43 = vld [vmem:[%s0 + $0x74] sm:$0xf]
  %v44 = vld [vmem:[%s0 + $0x78] sm:$0xf]
  %v45 = vld [vmem:[%s0 + $0x7c] sm:$0xf]
  %v46 = vld [vmem:[%s0 + $0x80] sm:$0xf]
  %v47 = vld [vmem:[%s0 + $0x84] sm:$0xf]
  %v48 = vld [vmem:[%s0 + $0x88] sm:$0xf]
  %v49 = vld [vmem:[%s0 + $0x8c] sm:$0xf]
  %v50 = vld [vmem:[%s0 + $0x90] sm:$0xf]
  %v51 = vld [vmem:[%s0 + $0x94] sm:$0xf]
  %v52 = vld [vmem:[%s0 + $0x98] sm:$0xf]
  %v53 = vld [vmem:[%s0 + $0x9c] sm:$0xf]
  %v54 = vld [vmem:[%s0 + $0xa0] sm:$0xf]
  %v55 = vld [vmem:[%s0 + $0xa4] sm:$0xf]
  %v56 = vld [vmem:[%s0 + $0xa8] sm:$0xf]
  %v57 = vld [vmem:[%s0 + $0xac] sm:$0xf]
  %v58 = vld [vmem:[%s0 + $0xb0] sm:$0xf]
  %v59 = vld [vmem:[%s0 + $0xb4] sm:$0xf]
  %v60 = vld [vmem:[%s0 + $0xb8] sm:$0xf]
  %v61 = vld [vmem:[%s0 + $0xbc] sm:$0xf]
  %v62 = vld [vmem:[%s0 + $0xc0] sm:$0xf]
  %v63 = vld [vmem:[%s0 + $0xc4] sm:$0xf]
  %v64 = vld [vmem:[%s0 + $0xc8] sm:$0xf]
  %v65 = vld [vmem:[%s0 + $0xcc] sm:$0xf]
  %v66 = vld [vmem:[%s0 + $0xd0] sm:$0xf]
  %v67 = vld [vmem:[%s0 + $0xd4] sm:$0xf]
  %v68 = vld [vmem:[%s0 + $0xd8] sm:$0xf]
  %v69 = vld [vmem:[%s0 + $0xdc] sm:$0xf]
  %v70 = vld [vmem:[%s0 + $0xe0] sm:$0xf]
  %v71 = vld [vmem:[%s0 + $0xe4] sm:$0xf]
  %v72 = vld [vmem:[%s0 + $0xe8] sm:$0xf]
  %v73 = vld [vmem:[%s0 + $0xec] sm:$0xf]
  %v74 = vld [vmem:[%s0 + $0xf0] sm:$0xf]
  %v75 = vld [vmem:[%s0 + $0xf4] sm:$0xf]
  %v76 = vld [vmem:[%s0 + $0xf8] sm:$0xf]
  %v77 = vld [vmem:[%s0 + $0xfc] sm:$0xf]
  %v78 = vld [vmem:[%s1] sm:$0xf]
  %v79 = vld [vmem:[%s1 + $0x4] sm:$0xf]
  %v80 = vld [vmem:[%s1 + $0x8] sm:$0xf]
  %v81 = vld [vmem:[%s1 + $0xc] sm:$0xf]
  %v82 = vld [vmem:[%s1 + $0x10] sm:$0xf]
  %v83 = vld [vmem:[%s1 + $0x14] sm:$0xf]
  %v84 = vld [vmem:[%s1 + $0x18] sm:$0xf]
  %v85 = vld [vmem:[%s1 + $0x1c] sm:$0xf]
  %v86 = vld [vmem:[%s1 + $0x20] sm:$0xf]
  %v87 = vld [vmem:[%s1 + $0x24] sm:$0xf]
  %v88 = vld [vmem:[%s1 + $0x28] sm:$0xf]
  %v89 = vld [vmem:[%s1 + $0x2c] sm:$0xf]
  %v90 = vld [vmem:[%s1 + $0x30] sm:$0xf]
  %v91 = vld [vmem:[%s1 + $0x34] sm:$0xf]
  %v92 = vld [vmem:[%s1 + $0x38] sm:$0xf]
  %v93 = vld [vmem:[%s1 + $0x3c] sm:$0xf]
  %v94 = vld [vmem:[%s2] sm:$0x1]
  %v96 = vperm.slane %v94, 0
  %v162 = vunpack.c.l.b16 %v14
  %v163 = vunpack.c.l.b16 %v15
  %v164 = vunpack.c.l.b16 %v16
  %v165 = vunpack.c.l.b16 %v17
  %v166 = vunpack.c.l.b16 %v18
  %v167 = vunpack.c.l.b16 %v19
  %v168 = vunpack.c.l.b16 %v20
  %v169 = vunpack.c.l.b16 %v21
  %v170 = vunpack.c.l.b16 %v22
  %v171 = vunpack.c.l.b16 %v23
  %v172 = vunpack.c.l.b16 %v24
  %v173 = vunpack.c.l.b16 %v25
  %v174 = vunpack.c.l.b16 %v26
  %v175 = vunpack.c.l.b16 %v27
  %v176 = vunpack.c.l.b16 %v28
  %v177 = vunpack.c.l.b16 %v29
  %v178 = vunpack.c.l.b16 %v30
  %v179 = vunpack.c.l.b16 %v31
  %v180 = vunpack.c.l.b16 %v32
  %v181 = vunpack.c.l.b16 %v33
  %v182 = vunpack.c.l.b16 %v34
  %v183 = vunpack.c.l.b16 %v35
  %v184 = vunpack.c.l.b16 %v36
  %v185 = vunpack.c.l.b16 %v37
  %v186 = vunpack.c.l.b16 %v38
  %v187 = vunpack.c.l.b16 %v39
  %v188 = vunpack.c.l.b16 %v40
  %v189 = vunpack.c.l.b16 %v41
  %v190 = vunpack.c.l.b16 %v42
  %v191 = vunpack.c.l.b16 %v43
  %v192 = vunpack.c.l.b16 %v44
  %v193 = vunpack.c.l.b16 %v45
  %v194 = vunpack.c.l.b16 %v46
  %v195 = vunpack.c.l.b16 %v47
  %v196 = vunpack.c.l.b16 %v48
  %v197 = vunpack.c.l.b16 %v49
  %v198 = vunpack.c.l.b16 %v50
  %v199 = vunpack.c.l.b16 %v51
  %v200 = vunpack.c.l.b16 %v52
  %v201 = vunpack.c.l.b16 %v53
  %v202 = vunpack.c.l.b16 %v54
  %v203 = vunpack.c.l.b16 %v55
  %v204 = vunpack.c.l.b16 %v56
  %v205 = vunpack.c.l.b16 %v57
  %v206 = vunpack.c.l.b16 %v58
  %v207 = vunpack.c.l.b16 %v59
  %v208 = vunpack.c.l.b16 %v60
  %v209 = vunpack.c.l.b16 %v61
  %v210 = vunpack.c.l.b16 %v62
  %v211 = vunpack.c.l.b16 %v63
  %v212 = vunpack.c.l.b16 %v64
  %v213 = vunpack.c.l.b16 %v65
  %v214 = vunpack.c.l.b16 %v66
  %v215 = vunpack.c.l.b16 %v67
  %v216 = vunpack.c.l.b16 %v68
  %v217 = vunpack.c.l.b16 %v69
  %v218 = vunpack.c.l.b16 %v70
  %v219 = vunpack.c.l.b16 %v71
  %v220 = vunpack.c.l.b16 %v72
  %v221 = vunpack.c.l.b16 %v73
  %v222 = vunpack.c.l.b16 %v74
  %v223 = vunpack.c.l.b16 %v75
  %v224 = vunpack.c.l.b16 %v76
  %v225 = vunpack.c.l.b16 %v77
  %v226 = vpack.c.b16 %v163, %v162
  %v227 = vpack.c.b16 %v165, %v164
  %v228 = vpack.c.b16 %v167, %v166
  %v229 = vpack.c.b16 %v169, %v168
  %v230 = vpack.c.b16 %v171, %v170
  %v231 = vpack.c.b16 %v173, %v172
  %v232 = vpack.c.b16 %v175, %v174
  %v233 = vpack.c.b16 %v177, %v176
  %v234 = vpack.c.b16 %v179, %v178
  %v235 = vpack.c.b16 %v181, %v180
  %v236 = vpack.c.b16 %v183, %v182
  %v237 = vpack.c.b16 %v185, %v184
  %v238 = vpack.c.b16 %v187, %v186
  %v239 = vpack.c.b16 %v189, %v188
  %v240 = vpack.c.b16 %v191, %v190
  %v241 = vpack.c.b16 %v193, %v192
  %v242 = vpack.c.b16 %v195, %v194
  %v243 = vpack.c.b16 %v197, %v196
  %v244 = vpack.c.b16 %v199, %v198
  %v245 = vpack.c.b16 %v201, %v200
  %v246 = vpack.c.b16 %v203, %v202
  %v247 = vpack.c.b16 %v205, %v204
  %v248 = vpack.c.b16 %v207, %v206
  %v249 = vpack.c.b16 %v209, %v208
  %v250 = vpack.c.b16 %v211, %v210
  %v251 = vpack.c.b16 %v213, %v212
  %v252 = vpack.c.b16 %v215, %v214
  %v253 = vpack.c.b16 %v217, %v216
  %v254 = vpack.c.b16 %v219, %v218
  %v255 = vpack.c.b16 %v221, %v220
  %v256 = vpack.c.b16 %v223, %v222
  %v257 = vpack.c.b16 %v225, %v224
  %v306 = vunpack.c.l.b16 %v78
  %v307 = vunpack.c.l.b16 %v79
  %v308 = vunpack.c.l.b16 %v80
  %v309 = vunpack.c.l.b16 %v81
  %v310 = vunpack.c.l.b16 %v82
  %v311 = vunpack.c.l.b16 %v83
  %v312 = vunpack.c.l.b16 %v84
  %v313 = vunpack.c.l.b16 %v85
  %v314 = vunpack.c.l.b16 %v86
  %v315 = vunpack.c.l.b16 %v87
  %v316 = vunpack.c.l.b16 %v88
  %v317 = vunpack.c.l.b16 %v89
  %v318 = vunpack.c.l.b16 %v90
  %v319 = vunpack.c.l.b16 %v91
  %v320 = vunpack.c.l.b16 %v92
  %v321 = vunpack.c.l.b16 %v93
  %v322 = vpack.c.b16 %v307, %v306
  %v323 = vpack.c.b16 %v309, %v308
  %v324 = vpack.c.b16 %v311, %v310
  %v325 = vpack.c.b16 %v313, %v312
  %v326 = vpack.c.b16 %v315, %v314
  %v327 = vpack.c.b16 %v317, %v316
  %v328 = vpack.c.b16 %v319, %v318
  %v329 = vpack.c.b16 %v321, %v320
  %338 = vmatpush.bf16.msra.mxu0 %v329
  %339 = vmatpush.bf16.msra.mxu0 %v328
  %340 = vmatpush.bf16.msra.mxu0 %v327
  %341 = vmatpush.bf16.msra.mxu0 %v326
  %342 = vmatpush.bf16.msra.mxu0 %v325
  %343 = vmatpush.bf16.msra.mxu0 %v324
  %344 = vmatpush.bf16.msra.mxu0 %v323
  %345 = vmatpush.bf16.msra.mxu0 %v322
  %346 = vmatmul.bf16.gmra.mxu0 %v226
  %v347 = vpop.f32.mrf.mxu0
  %v348 = vadd.f32 %v96, %v347
  %v349 = vpop.f32.mrf.mxu0
  %v350 = vadd.f32 %v96, %v349
  %351 = vmatmul.bf16.gmra.mxu0 %v227
  %v352 = vpop.f32.mrf.mxu0
  %v353 = vadd.f32 %v96, %v352
  %v354 = vpop.f32.mrf.mxu0
  %v355 = vadd.f32 %v96, %v354
  %356 = vmatmul.bf16.gmra.mxu0 %v228
  %v357 = vpop.f32.mrf.mxu0
  %v358 = vadd.f32 %v96, %v357
  %v359 = vpop.f32.mrf.mxu0
  %v360 = vadd.f32 %v96, %v359
  %361 = vmatmul.bf16.gmra.mxu0 %v229
  %v362 = vpop.f32.mrf.mxu0
  %v363 = vadd.f32 %v96, %v362
  %v364 = vpop.f32.mrf.mxu0
  %v365 = vadd.f32 %v96, %v364
  %366 = vmatmul.bf16.gmra.mxu0 %v230
  %v367 = vpop.f32.mrf.mxu0
  %v368 = vadd.f32 %v96, %v367
  %v369 = vpop.f32.mrf.mxu0
  %v370 = vadd.f32 %v96, %v369
  %371 = vmatmul.bf16.gmra.mxu0 %v231
  %v372 = vpop.f32.mrf.mxu0
  %v373 = vadd.f32 %v96, %v372
  %v374 = vpop.f32.mrf.mxu0
  %v375 = vadd.f32 %v96, %v374
  %376 = vmatmul.bf16.gmra.mxu0 %v232
  %v377 = vpop.f32.mrf.mxu0
  %v378 = vadd.f32 %v96, %v377
  %v379 = vpop.f32.mrf.mxu0
  %v380 = vadd.f32 %v96, %v379
  %381 = vmatmul.bf16.gmra.mxu0 %v233
  %v382 = vpop.f32.mrf.mxu0
  %v383 = vadd.f32 %v96, %v382
  %v384 = vpop.f32.mrf.mxu0
  %v385 = vadd.f32 %v96, %v384
  %386 = vmatmul.bf16.gmra.mxu0 %v234
  %v387 = vpop.f32.mrf.mxu0
  %v388 = vadd.f32 %v96, %v387
  %v389 = vpop.f32.mrf.mxu0
  %v390 = vadd.f32 %v96, %v389
  %391 = vmatmul.bf16.gmra.mxu0 %v235
  %v392 = vpop.f32.mrf.mxu0
  %v393 = vadd.f32 %v96, %v392
  %v394 = vpop.f32.mrf.mxu0
  %v395 = vadd.f32 %v96, %v394
  %396 = vmatmul.bf16.gmra.mxu0 %v236
  %v397 = vpop.f32.mrf.mxu0
  %v398 = vadd.f32 %v96, %v397
  %v399 = vpop.f32.mrf.mxu0
  %v400 = vadd.f32 %v96, %v399
  %401 = vmatmul.bf16.gmra.mxu0 %v237
  %v402 = vpop.f32.mrf.mxu0
  %v403 = vadd.f32 %v96, %v402
  %v404 = vpop.f32.mrf.mxu0
  %v405 = vadd.f32 %v96, %v404
  %406 = vmatmul.bf16.gmra.mxu0 %v238
  %v407 = vpop.f32.mrf.mxu0
  %v408 = vadd.f32 %v96, %v407
  %v409 = vpop.f32.mrf.mxu0
  %v410 = vadd.f32 %v96, %v409
  %411 = vmatmul.bf16.gmra.mxu0 %v239
  %v412 = vpop.f32.mrf.mxu0
  %v413 = vadd.f32 %v96, %v412
  %v414 = vpop.f32.mrf.mxu0
  %v415 = vadd.f32 %v96, %v414
  %416 = vmatmul.bf16.gmra.mxu0 %v240
  %v417 = vpop.f32.mrf.mxu0
  %v418 = vadd.f32 %v96, %v417
  %v419 = vpop.f32.mrf.mxu0
  %v420 = vadd.f32 %v96, %v419
  %421 = vmatmul.bf16.gmra.mxu0 %v241
  %v422 = vpop.f32.mrf.mxu0
  %v423 = vadd.f32 %v96, %v422
  %v424 = vpop.f32.mrf.mxu0
  %v425 = vadd.f32 %v96, %v424
  %426 = vmatmul.bf16.gmra.mxu0 %v242
  %v427 = vpop.f32.mrf.mxu0
  %v428 = vadd.f32 %v96, %v427
  %v429 = vpop.f32.mrf.mxu0
  %v430 = vadd.f32 %v96, %v429
  %431 = vmatmul.bf16.gmra.mxu0 %v243
  %v432 = vpop.f32.mrf.mxu0
  %v433 = vadd.f32 %v96, %v432
  %v434 = vpop.f32.mrf.mxu0
  %v435 = vadd.f32 %v96, %v434
  %436 = vmatmul.bf16.gmra.mxu0 %v244
  %v437 = vpop.f32.mrf.mxu0
  %v438 = vadd.f32 %v96, %v437
  %v439 = vpop.f32.mrf.mxu0
  %v440 = vadd.f32 %v96, %v439
  %441 = vmatmul.bf16.gmra.mxu0 %v245
  %v442 = vpop.f32.mrf.mxu0
  %v443 = vadd.f32 %v96, %v442
  %v444 = vpop.f32.mrf.mxu0
  %v445 = vadd.f32 %v96, %v444
  %446 = vmatmul.bf16.gmra.mxu0 %v246
  %v447 = vpop.f32.mrf.mxu0
  %v448 = vadd.f32 %v96, %v447
  %v449 = vpop.f32.mrf.mxu0
  %v450 = vadd.f32 %v96, %v449
  %451 = vmatmul.bf16.gmra.mxu0 %v247
  %v452 = vpop.f32.mrf.mxu0
  %v453 = vadd.f32 %v96, %v452
  %v454 = vpop.f32.mrf.mxu0
  %v455 = vadd.f32 %v96, %v454
  %456 = vmatmul.bf16.gmra.mxu0 %v248
  %v457 = vpop.f32.mrf.mxu0
  %v458 = vadd.f32 %v96, %v457
  %v459 = vpop.f32.mrf.mxu0
  %v460 = vadd.f32 %v96, %v459
  %461 = vmatmul.bf16.gmra.mxu0 %v249
  %v462 = vpop.f32.mrf.mxu0
  %v463 = vadd.f32 %v96, %v462
  %v464 = vpop.f32.mrf.mxu0
  %v465 = vadd.f32 %v96, %v464
  %466 = vmatmul.bf16.gmra.mxu0 %v250
  %v467 = vpop.f32.mrf.mxu0
  %v468 = vadd.f32 %v96, %v467
  %v469 = vpop.f32.mrf.mxu0
  %v470 = vadd.f32 %v96, %v469
  %471 = vmatmul.bf16.gmra.mxu0 %v251
  %v472 = vpop.f32.mrf.mxu0
  %v473 = vadd.f32 %v96, %v472
  %v474 = vpop.f32.mrf.mxu0
  %v475 = vadd.f32 %v96, %v474
  %476 = vmatmul.bf16.gmra.mxu0 %v252
  %v477 = vpop.f32.mrf.mxu0
  %v478 = vadd.f32 %v96, %v477
  %v479 = vpop.f32.mrf.mxu0
  %v480 = vadd.f32 %v96, %v479
  %481 = vmatmul.bf16.gmra.mxu0 %v253
  %v482 = vpop.f32.mrf.mxu0
  %v483 = vadd.f32 %v96, %v482
  %v484 = vpop.f32.mrf.mxu0
  %v485 = vadd.f32 %v96, %v484
  %486 = vmatmul.bf16.gmra.mxu0 %v254
  %v487 = vpop.f32.mrf.mxu0
  %v488 = vadd.f32 %v96, %v487
  %v489 = vpop.f32.mrf.mxu0
  %v490 = vadd.f32 %v96, %v489
  %491 = vmatmul.bf16.gmra.mxu0 %v255
  %v492 = vpop.f32.mrf.mxu0
  %v493 = vadd.f32 %v96, %v492
  %v494 = vpop.f32.mrf.mxu0
  %v495 = vadd.f32 %v96, %v494
  %496 = vmatmul.bf16.gmra.mxu0 %v256
  %v497 = vpop.f32.mrf.mxu0
  %v498 = vadd.f32 %v96, %v497
  %v499 = vpop.f32.mrf.mxu0
  %v500 = vadd.f32 %v96, %v499
  %501 = vmatmul.bf16.gmra.mxu0 %v257
  %v502 = vpop.f32.mrf.mxu0
  %v503 = vadd.f32 %v96, %v502
  %v504 = vpop.f32.mrf.mxu0
  %v505 = vadd.f32 %v96, %v504
  %506 = vdwg.mxu0
  %vm507 = vcmp.ge.f32.partialorder %v348, 0.0
  %vm508 = vcmp.ge.f32.partialorder %v350, 0.0
  %vm509 = vcmp.ge.f32.partialorder %v353, 0.0
  %vm510 = vcmp.ge.f32.partialorder %v355, 0.0
  %vm511 = vcmp.ge.f32.partialorder %v358, 0.0
  %vm512 = vcmp.ge.f32.partialorder %v360, 0.0
  %vm513 = vcmp.ge.f32.partialorder %v363, 0.0
  %vm514 = vcmp.ge.f32.partialorder %v365, 0.0
  %vm515 = vcmp.ge.f32.partialorder %v368, 0.0
  %vm516 = vcmp.ge.f32.partialorder %v370, 0.0
  %vm517 = vcmp.ge.f32.partialorder %v373, 0.0
  %vm518 = vcmp.ge.f32.partialorder %v375, 0.0
  %vm519 = vcmp.ge.f32.partialorder %v378, 0.0
  %vm520 = vcmp.ge.f32.partialorder %v380, 0.0
  %vm521 = vcmp.ge.f32.partialorder %v383, 0.0
  %vm522 = vcmp.ge.f32.partialorder %v385, 0.0
  %vm523 = vcmp.ge.f32.partialorder %v388, 0.0
  %vm524 = vcmp.ge.f32.partialorder %v390, 0.0
  %vm525 = vcmp.ge.f32.partialorder %v393, 0.0
  %vm526 = vcmp.ge.f32.partialorder %v395, 0.0
  %vm527 = vcmp.ge.f32.partialorder %v398, 0.0
  %vm528 = vcmp.ge.f32.partialorder %v400, 0.0
  %vm529 = vcmp.ge.f32.partialorder %v403, 0.0
  %vm530 = vcmp.ge.f32.partialorder %v405, 0.0
  %vm531 = vcmp.ge.f32.partialorder %v408, 0.0
  %vm532 = vcmp.ge.f32.partialorder %v410, 0.0
  %vm533 = vcmp.ge.f32.partialorder %v413, 0.0
  %vm534 = vcmp.ge.f32.partialorder %v415, 0.0
  %vm535 = vcmp.ge.f32.partialorder %v418, 0.0
  %vm536 = vcmp.ge.f32.partialorder %v420, 0.0
  %vm537 = vcmp.ge.f32.partialorder %v423, 0.0
  %vm538 = vcmp.ge.f32.partialorder %v425, 0.0
  %vm539 = vcmp.ge.f32.partialorder %v428, 0.0
  %vm540 = vcmp.ge.f32.partialorder %v430, 0.0
  %vm541 = vcmp.ge.f32.partialorder %v433, 0.0
  %vm542 = vcmp.ge.f32.partialorder %v435, 0.0
  %vm543 = vcmp.ge.f32.partialorder %v438, 0.0
  %vm544 = vcmp.ge.f32.partialorder %v440, 0.0
  %vm545 = vcmp.ge.f32.partialorder %v443, 0.0
  %vm546 = vcmp.ge.f32.partialorder %v445, 0.0
  %vm547 = vcmp.ge.f32.partialorder %v448, 0.0
  %vm548 = vcmp.ge.f32.partialorder %v450, 0.0
  %vm549 = vcmp.ge.f32.partialorder %v453, 0.0
  %vm550 = vcmp.ge.f32.partialorder %v455, 0.0
  %vm551 = vcmp.ge.f32.partialorder %v458, 0.0
  %vm552 = vcmp.ge.f32.partialorder %v460, 0.0
  %vm553 = vcmp.ge.f32.partialorder %v463, 0.0
  %vm554 = vcmp.ge.f32.partialorder %v465, 0.0
  %vm555 = vcmp.ge.f32.partialorder %v468, 0.0
  %vm556 = vcmp.ge.f32.partialorder %v470, 0.0
  %vm557 = vcmp.ge.f32.partialorder %v473, 0.0
  %vm558 = vcmp.ge.f32.partialorder %v475, 0.0
  %vm559 = vcmp.ge.f32.partialorder %v478, 0.0
  %vm560 = vcmp.ge.f32.partialorder %v480, 0.0
  %vm561 = vcmp.ge.f32.partialorder %v483, 0.0
  %vm562 = vcmp.ge.f32.partialorder %v485, 0.0
  %vm563 = vcmp.ge.f32.partialorder %v488, 0.0
  %vm564 = vcmp.ge.f32.partialorder %v490, 0.0
  %vm565 = vcmp.ge.f32.partialorder %v493, 0.0
  %vm566 = vcmp.ge.f32.partialorder %v495, 0.0
  %vm567 = vcmp.ge.f32.partialorder %v498, 0.0
  %vm568 = vcmp.ge.f32.partialorder %v500, 0.0
  %vm569 = vcmp.ge.f32.partialorder %v503, 0.0
  %vm570 = vcmp.ge.f32.partialorder %v505, 0.0
  %v571 = vmul.f32 %v348, 0.2
  %v572 = vmul.f32 %v350, 0.2
  %v573 = vmul.f32 %v353, 0.2
  %v574 = vmul.f32 %v355, 0.2
  %v575 = vmul.f32 %v358, 0.2
  %v576 = vmul.f32 %v360, 0.2
  %v577 = vmul.f32 %v363, 0.2
  %v578 = vmul.f32 %v365, 0.2
  %v579 = vmul.f32 %v368, 0.2
  %v580 = vmul.f32 %v370, 0.2
  %v581 = vmul.f32 %v373, 0.2
  %v582 = vmul.f32 %v375, 0.2
  %v583 = vmul.f32 %v378, 0.2
  %v584 = vmul.f32 %v380, 0.2
  %v585 = vmul.f32 %v383, 0.2
  %v586 = vmul.f32 %v385, 0.2
  %v587 = vmul.f32 %v388, 0.2
  %v588 = vmul.f32 %v390, 0.2
  %v589 = vmul.f32 %v393, 0.2
  %v590 = vmul.f32 %v395, 0.2
  %v591 = vmul.f32 %v398, 0.2
  %v592 = vmul.f32 %v400, 0.2
  %v593 = vmul.f32 %v403, 0.2
  %v594 = vmul.f32 %v405, 0.2
  %v595 = vmul.f32 %v408, 0.2
  %v596 = vmul.f32 %v410, 0.2
  %v597 = vmul.f32 %v413, 0.2
  %v598 = vmul.f32 %v415, 0.2
  %v599 = vmul.f32 %v418, 0.2
  %v600 = vmul.f32 %v420, 0.2
  %v601 = vmul.f32 %v423, 0.2
  %v602 = vmul.f32 %v425, 0.2
  %v603 = vmul.f32 %v428, 0.2
  %v604 = vmul.f32 %v430, 0.2
  %v605 = vmul.f32 %v433, 0.2
  %v606 = vmul.f32 %v435, 0.2
  %v607 = vmul.f32 %v438, 0.2
  %v608 = vmul.f32 %v440, 0.2
  %v609 = vmul.f32 %v443, 0.2
  %v610 = vmul.f32 %v445, 0.2
  %v611 = vmul.f32 %v448, 0.2
  %v612 = vmul.f32 %v450, 0.2
  %v613 = vmul.f32 %v453, 0.2
  %v614 = vmul.f32 %v455, 0.2
  %v615 = vmul.f32 %v458, 0.2
  %v616 = vmul.f32 %v460, 0.2
  %v617 = vmul.f32 %v463, 0.2
  %v618 = vmul.f32 %v465, 0.2
  %v619 = vmul.f32 %v468, 0.2
  %v620 = vmul.f32 %v470, 0.2
  %v621 = vmul.f32 %v473, 0.2
  %v622 = vmul.f32 %v475, 0.2
  %v623 = vmul.f32 %v478, 0.2
  %v624 = vmul.f32 %v480, 0.2
  %v625 = vmul.f32 %v483, 0.2
  %v626 = vmul.f32 %v485, 0.2
  %v627 = vmul.f32 %v488, 0.2
  %v628 = vmul.f32 %v490, 0.2
  %v629 = vmul.f32 %v493, 0.2
  %v630 = vmul.f32 %v495, 0.2
  %v631 = vmul.f32 %v498, 0.2
  %v632 = vmul.f32 %v500, 0.2
  %v633 = vmul.f32 %v503, 0.2
  %v634 = vmul.f32 %v505, 0.2
  %v635 = vsel %vm507, %v348, %v571
  %v636 = vsel %vm508, %v350, %v572
  %v637 = vsel %vm509, %v353, %v573
  %v638 = vsel %vm510, %v355, %v574
  %v639 = vsel %vm511, %v358, %v575
  %v640 = vsel %vm512, %v360, %v576
  %v641 = vsel %vm513, %v363, %v577
  %v642 = vsel %vm514, %v365, %v578
  %v643 = vsel %vm515, %v368, %v579
  %v644 = vsel %vm516, %v370, %v580
  %v645 = vsel %vm517, %v373, %v581
  %v646 = vsel %vm518, %v375, %v582
  %v647 = vsel %vm519, %v378, %v583
  %v648 = vsel %vm520, %v380, %v584
  %v649 = vsel %vm521, %v383, %v585
  %v650 = vsel %vm522, %v385, %v586
  %v651 = vsel %vm523, %v388, %v587
  %v652 = vsel %vm524, %v390, %v588
  %v653 = vsel %vm525, %v393, %v589
  %v654 = vsel %vm526, %v395, %v590
  %v655 = vsel %vm527, %v398, %v591
  %v656 = vsel %vm528, %v400, %v592
  %v657 = vsel %vm529, %v403, %v593
  %v658 = vsel %vm530, %v405, %v594
  %v659 = vsel %vm531, %v408, %v595
  %v660 = vsel %vm532, %v410, %v596
  %v661 = vsel %vm533, %v413, %v597
  %v662 = vsel %vm534, %v415, %v598
  %v663 = vsel %vm535, %v418, %v599
  %v664 = vsel %vm536, %v420, %v600
  %v665 = vsel %vm537, %v423, %v601
  %v666 = vsel %vm538, %v425, %v602
  %v667 = vsel %vm539, %v428, %v603
  %v668 = vsel %vm540, %v430, %v604
  %v669 = vsel %vm541, %v433, %v605
  %v670 = vsel %vm542, %v435, %v606
  %v671 = vsel %vm543, %v438, %v607
  %v672 = vsel %vm544, %v440, %v608
  %v673 = vsel %vm545, %v443, %v609
  %v674 = vsel %vm546, %v445, %v610
  %v675 = vsel %vm547, %v448, %v611
  %v676 = vsel %vm548, %v450, %v612
  %v677 = vsel %vm549, %v453, %v613
  %v678 = vsel %vm550, %v455, %v614
  %v679 = vsel %vm551, %v458, %v615
  %v680 = vsel %vm552, %v460, %v616
  %v681 = vsel %vm553, %v463, %v617
  %v682 = vsel %vm554, %v465, %v618
  %v683 = vsel %vm555, %v468, %v619
  %v684 = vsel %vm556, %v470, %v620
  %v685 = vsel %vm557, %v473, %v621
  %v686 = vsel %vm558, %v475, %v622
  %v687 = vsel %vm559, %v478, %v623
  %v688 = vsel %vm560, %v480, %v624
  %v689 = vsel %vm561, %v483, %v625
  %v690 = vsel %vm562, %v485, %v626
  %v691 = vsel %vm563, %v488, %v627
  %v692 = vsel %vm564, %v490, %v628
  %v693 = vsel %vm565, %v493, %v629
  %v694 = vsel %vm566, %v495, %v630
  %v695 = vsel %vm567, %v498, %v631
  %v696 = vsel %vm568, %v500, %v632
  %v697 = vsel %vm569, %v503, %v633
  %v698 = vsel %vm570, %v505, %v634
  %v699 = vpack.c.bf16 %v635, %v635
  %v700 = vpack.c.bf16 %v636, %v636
  %v701 = vpack.c.bf16 %v637, %v637
  %v702 = vpack.c.bf16 %v638, %v638
  %v703 = vpack.c.bf16 %v639, %v639
  %v704 = vpack.c.bf16 %v640, %v640
  %v705 = vpack.c.bf16 %v641, %v641
  %v706 = vpack.c.bf16 %v642, %v642
  %v707 = vpack.c.bf16 %v643, %v643
  %v708 = vpack.c.bf16 %v644, %v644
  %v709 = vpack.c.bf16 %v645, %v645
  %v710 = vpack.c.bf16 %v646, %v646
  %v711 = vpack.c.bf16 %v647, %v647
  %v712 = vpack.c.bf16 %v648, %v648
  %v713 = vpack.c.bf16 %v649, %v649
  %v714 = vpack.c.bf16 %v650, %v650
  %v715 = vpack.c.bf16 %v651, %v651
  %v716 = vpack.c.bf16 %v652, %v652
  %v717 = vpack.c.bf16 %v653, %v653
  %v718 = vpack.c.bf16 %v654, %v654
  %v719 = vpack.c.bf16 %v655, %v655
  %v720 = vpack.c.bf16 %v656, %v656
  %v721 = vpack.c.bf16 %v657, %v657
  %v722 = vpack.c.bf16 %v658, %v658
  %v723 = vpack.c.bf16 %v659, %v659
  %v724 = vpack.c.bf16 %v660, %v660
  %v725 = vpack.c.bf16 %v661, %v661
  %v726 = vpack.c.bf16 %v662, %v662
  %v727 = vpack.c.bf16 %v663, %v663
  %v728 = vpack.c.bf16 %v664, %v664
  %v729 = vpack.c.bf16 %v665, %v665
  %v730 = vpack.c.bf16 %v666, %v666
  %v731 = vpack.c.bf16 %v667, %v667
  %v732 = vpack.c.bf16 %v668, %v668
  %v733 = vpack.c.bf16 %v669, %v669
  %v734 = vpack.c.bf16 %v670, %v670
  %v735 = vpack.c.bf16 %v671, %v671
  %v736 = vpack.c.bf16 %v672, %v672
  %v737 = vpack.c.bf16 %v673, %v673
  %v738 = vpack.c.bf16 %v674, %v674
  %v739 = vpack.c.bf16 %v675, %v675
  %v740 = vpack.c.bf16 %v676, %v676
  %v741 = vpack.c.bf16 %v677, %v677
  %v742 = vpack.c.bf16 %v678, %v678
  %v743 = vpack.c.bf16 %v679, %v679
  %v744 = vpack.c.bf16 %v680, %v680
  %v745 = vpack.c.bf16 %v681, %v681
  %v746 = vpack.c.bf16 %v682, %v682
  %v747 = vpack.c.bf16 %v683, %v683
  %v748 = vpack.c.bf16 %v684, %v684
  %v749 = vpack.c.bf16 %v685, %v685
  %v750 = vpack.c.bf16 %v686, %v686
  %v751 = vpack.c.bf16 %v687, %v687
  %v752 = vpack.c.bf16 %v688, %v688
  %v753 = vpack.c.bf16 %v689, %v689
  %v754 = vpack.c.bf16 %v690, %v690
  %v755 = vpack.c.bf16 %v691, %v691
  %v756 = vpack.c.bf16 %v692, %v692
  %v757 = vpack.c.bf16 %v693, %v693
  %v758 = vpack.c.bf16 %v694, %v694
  %v759 = vpack.c.bf16 %v695, %v695
  %v760 = vpack.c.bf16 %v696, %v696
  %v761 = vpack.c.bf16 %v697, %v697
  %v762 = vpack.c.bf16 %v698, %v698
  %763 = vst [vmem:[%s3] sm:$0xf] %v699
  %764 = vst [vmem:[%s3 + $0x4] sm:$0xf] %v700
  %765 = vst [vmem:[%s3 + $0x8] sm:$0xf] %v701
  %766 = vst [vmem:[%s3 + $0xc] sm:$0xf] %v702
  %767 = vst [vmem:[%s3 + $0x10] sm:$0xf] %v703
  %768 = vst [vmem:[%s3 + $0x14] sm:$0xf] %v704
  %769 = vst [vmem:[%s3 + $0x18] sm:$0xf] %v705
  %770 = vst [vmem:[%s3 + $0x1c] sm:$0xf] %v706
  %771 = vst [vmem:[%s3 + $0x20] sm:$0xf] %v707
  %772 = vst [vmem:[%s3 + $0x24] sm:$0xf] %v708
  %773 = vst [vmem:[%s3 + $0x28] sm:$0xf] %v709
  %774 = vst [vmem:[%s3 + $0x2c] sm:$0xf] %v710
  %775 = vst [vmem:[%s3 + $0x30] sm:$0xf] %v711
  %776 = vst [vmem:[%s3 + $0x34] sm:$0xf] %v712
  %777 = vst [vmem:[%s3 + $0x38] sm:$0xf] %v713
  %778 = vst [vmem:[%s3 + $0x3c] sm:$0xf] %v714
  %779 = vst [vmem:[%s3 + $0x40] sm:$0xf] %v715
  %780 = vst [vmem:[%s3 + $0x44] sm:$0xf] %v716
  %781 = vst [vmem:[%s3 + $0x48] sm:$0xf] %v717
  %782 = vst [vmem:[%s3 + $0x4c] sm:$0xf] %v718
  %783 = vst [vmem:[%s3 + $0x50] sm:$0xf] %v719
  %784 = vst [vmem:[%s3 + $0x54] sm:$0xf] %v720
  %785 = vst [vmem:[%s3 + $0x58] sm:$0xf] %v721
  %786 = vst [vmem:[%s3 + $0x5c] sm:$0xf] %v722
  %787 = vst [vmem:[%s3 + $0x60] sm:$0xf] %v723
  %788 = vst [vmem:[%s3 + $0x64] sm:$0xf] %v724
  %789 = vst [vmem:[%s3 + $0x68] sm:$0xf] %v725
  %790 = vst [vmem:[%s3 + $0x6c] sm:$0xf] %v726
  %791 = vst [vmem:[%s3 + $0x70] sm:$0xf] %v727
  %792 = vst [vmem:[%s3 + $0x74] sm:$0xf] %v728
  %793 = vst [vmem:[%s3 + $0x78] sm:$0xf] %v729
  %794 = vst [vmem:[%s3 + $0x7c] sm:$0xf] %v730
  %795 = vst [vmem:[%s3 + $0x80] sm:$0xf] %v731
  %796 = vst [vmem:[%s3 + $0x84] sm:$0xf] %v732
  %797 = vst [vmem:[%s3 + $0x88] sm:$0xf] %v733
  %798 = vst [vmem:[%s3 + $0x8c] sm:$0xf] %v734
  %799 = vst [vmem:[%s3 + $0x90] sm:$0xf] %v735
  %800 = vst [vmem:[%s3 + $0x94] sm:$0xf] %v736
  %801 = vst [vmem:[%s3 + $0x98] sm:$0xf] %v737
  %802 = vst [vmem:[%s3 + $0x9c] sm:$0xf] %v738
  %803 = vst [vmem:[%s3 + $0xa0] sm:$0xf] %v739
  %804 = vst [vmem:[%s3 + $0xa4] sm:$0xf] %v740
  %805 = vst [vmem:[%s3 + $0xa8] sm:$0xf] %v741
  %806 = vst [vmem:[%s3 + $0xac] sm:$0xf] %v742
  %807 = vst [vmem:[%s3 + $0xb0] sm:$0xf] %v743
  %808 = vst [vmem:[%s3 + $0xb4] sm:$0xf] %v744
  %809 = vst [vmem:[%s3 + $0xb8] sm:$0xf] %v745
  %810 = vst [vmem:[%s3 + $0xbc] sm:$0xf] %v746
  %811 = vst [vmem:[%s3 + $0xc0] sm:$0xf] %v747
  %812 = vst [vmem:[%s3 + $0xc4] sm:$0xf] %v748
  %813 = vst [vmem:[%s3 + $0xc8] sm:$0xf] %v749
  %814 = vst [vmem:[%s3 + $0xcc] sm:$0xf] %v750
  %815 = vst [vmem:[%s3 + $0xd0] sm:$0xf] %v751
  %816 = vst [vmem:[%s3 + $0xd4] sm:$0xf] %v752
  %817 = vst [vmem:[%s3 + $0xd8] sm:$0xf] %v753
  %818 = vst [vmem:[%s3 + $0xdc] sm:$0xf] %v754
  %819 = vst [vmem:[%s3 + $0xe0] sm:$0xf] %v755
  %820 = vst [vmem:[%s3 + $0xe4] sm:$0xf] %v756
  %821 = vst [vmem:[%s3 + $0xe8] sm:$0xf] %v757
  %822 = vst [vmem:[%s3 + $0xec] sm:$0xf] %v758
  %823 = vst [vmem:[%s3 + $0xf0] sm:$0xf] %v759
  %824 = vst [vmem:[%s3 + $0xf4] sm:$0xf] %v760
  %825 = vst [vmem:[%s3 + $0xf8] sm:$0xf] %v761
  %826 = vst [vmem:[%s3 + $0xfc] sm:$0xf] %v762
  // Predicated region
  $region14: #{patch_discriminator.8} parent=0 // pred_check
    _
  $region15: #{patch_discriminator.8} parent=0 // pred_check_branch
    %828 = sbr.rel (0) target = $region17
  $region16: #{patch_discriminator.8} parent=0 // pred_region
    _
  $region17: #{patch_discriminator.8} parent=0 // pred_fallthru
    _
  // Predicated region
  $region18: #{patch_discriminator.8} parent=0 // pred_check
    _
  $region19: #{patch_discriminator.8} parent=0 // pred_check_branch
    %830 = sbr.rel (0) target = $region21
  $region20: #{patch_discriminator.8} parent=0 // pred_region
    _
  $region21: #{patch_discriminator.8} parent=0 // pred_fallthru
    _

// kernel: patch_discriminator.10
$region0: #{patch_discriminator.10}
  #allocation0 [shape = 'u32[]', space=smem, size = 0x4, offset = 0x4, fixed_abs, tag = 'smem constant byte address 0x4 - core index']
  #allocation1 [shape = 'u32[72,128]{1,0:T(1,128)}', space=vmem, size = 0x9000, scoped, tag = 'internal scratch']
  %s0 = inlined_call_operand.vmem [shape: bf16[2,64,128], index: 0, kind: input, shape index: {}]
  %s1 = inlined_call_operand.vmem [shape: bf16[2,64,128], index: 1, kind: output, shape index: {}]
  %s2 = sld [smem:[#allocation0]]
  $region51: #{patch_discriminator.10} parent=0
    _
  %s4 = ssub.s32 1, %s2
  %s5 = scalar_select 0, %s4, %s2
  loop: start=0, step=1, limit=4
  $region2: #{patch_discriminator.10} parent=0 // loop_pre_header
    _
  $region3: #{patch_discriminator.10} parent=0 // loop_header
    %s7 = sphi 0, %s11
    %p8 = scmp.ge.s32.totalorder %s7, 4
    %s14 = sphi 0, %s26
    %s15 = sphi 0, %s22
    %s16 = sphi 0, %s14
    %s17 = sphi 0, %s15
    %s18 = sphi 0, %s16
    %s19 = sphi 0, %s17
    %s31 = sphi 0, %s33
    %s34 = sphi 0, %s31
    %s35 = sphi 0, %s34
    %s51 = sphi 0, %s35
    %s59 = sphi 0, %s61
    %s62 = sphi 0, %s59
    %s63 = sphi 0, %s62
    %s79 = sphi 0, %s63
  $region4: #{patch_discriminator.10} parent=0 // loop_header_branch
    %10 = sbr.rel (%p8) target = $region8
  $region5: #{patch_discriminator.10} parent=0 // loop_body
    %s12 = ssub.s32 %s7, 1
    %s13 = ssub.s32 %s7, 2
    %s20 = sadd.s32 1, %s15
    %p21 = scmp.ge.s32.totalorder %s20, 1
    %s22 = scalar_select %p21, 0, %s20
    %s23 = sadd.s32 1, %s14
    %s24 = scalar_select %p21, %s23, %s14
    %p25 = scmp.ge.s32.totalorder %s24, 2
    %s26 = scalar_select %p25, 0, %s24
    %s27 = ssub.s32 %s14, %s26
    %s28 = ssub.s32 %s15, %s22
    %s29 = sor.u32 %s27, %s28
    %p30 = scmp.eq.s32.totalorder %s29, 0
    %s32 = sadd.s32 %s31, 1
    %s33 = scalar_select %p30, %s31, %s32
    %p36 = pneg %p30
    %p37 = scmp.eq.s32.totalorder %s7, 1
    %p38 = por %p36, %p37
    %p39 = scmp.ne.s32.totalorder %s31, %s34
    %p40 = scmp.eq.s32.totalorder %s7, 0
    %p41 = por %p39, %p40
    %p42 = scmp.ne.s32.totalorder %s31, %s34
    %p43 = scmp.eq.s32.totalorder %s12, 1
    %p44 = por %p42, %p43
    %p45 = scmp.ne.s32.totalorder %s34, %s35
    %p46 = scmp.eq.s32.totalorder %s12, 0
    %p47 = por %p45, %p46
    %p48 = scmp.ne.s32.totalorder %s34, %s35
    %p49 = scmp.eq.s32.totalorder %s13, 1
    %p50 = por %p48, %p49
    %p52 = scmp.ne.s32.totalorder %s35, %s51
    %p53 = scmp.eq.s32.totalorder %s13, 0
    %p54 = por %p52, %p53
    %s55 = ssub.s32 %s14, %s26
    %s56 = ssub.s32 %s15, %s22
    %s57 = sor.u32 %s55, %s56
    %p58 = scmp.eq.s32.totalorder %s57, 0
    %s60 = sadd.s32 %s59, 1
    %s61 = scalar_select %p58, %s59, %s60
    %p64 = pneg %p58
    %p65 = scmp.eq.s32.totalorder %s7, 1
    %p66 = por %p64, %p65
    %p67 = scmp.ne.s32.totalorder %s59, %s62
    %p68 = scmp.eq.s32.totalorder %s7, 0
    %p69 = por %p67, %p68
    %p70 = scmp.ne.s32.totalorder %s59, %s62
    %p71 = scmp.eq.s32.totalorder %s12, 1
    %p72 = por %p70, %p71
    %p73 = scmp.ne.s32.totalorder %s62, %s63
    %p74 = scmp.eq.s32.totalorder %s12, 0
    %p75 = por %p73, %p74
    %p76 = scmp.ne.s32.totalorder %s62, %s63
    %p77 = scmp.eq.s32.totalorder %s13, 1
    %p78 = por %p76, %p77
    %p80 = scmp.ne.s32.totalorder %s63, %s79
    %p81 = scmp.eq.s32.totalorder %s13, 0
    %p82 = por %p80, %p81
    %p83 = scmp.le.s32.totalorder 1, %s7
    %p84 = scmp.lt.s32.totalorder %s7, 3
    %p85 = pnand %p83, %p84
    %p86 = pneg %p85
    // Predicated region
    $region9: #{patch_discriminator.10} parent=5 // pred_check
      _
    $region10: #{patch_discriminator.10} parent=5 // pred_check_branch
      %88 = sbr.rel (%p85) target = $region12
    $region11: #{patch_discriminator.10} parent=5 // pred_region
      %s89 = ssub.s32 %s7, 1
    $region12: #{patch_discriminator.10} parent=5 // pred_fallthru
      _
    %p90 = scmp.lt.s32.totalorder %s7, 2
    // Predicated region
    $region13: #{patch_discriminator.10} parent=5 // pred_check
      %p91 = pneg %p90
    $region14: #{patch_discriminator.10} parent=5 // pred_check_branch
      %93 = sbr.rel (%p91) target = $region16
    $region15: #{patch_discriminator.10} parent=5 // pred_region
      // Predicated region
      $region17: #{patch_discriminator.10} parent=15 // pred_check
        %p94 = pneg %p41
      $region18: #{patch_discriminator.10} parent=15 // pred_check_branch
        %96 = sbr.rel (%p94) target = $region20
      $region19: #{patch_discriminator.10} parent=15 // pred_region
        %p97 = scmp.lt.s32.totalorder %s14, 1
        %s98 = scalar_select %p97, %s14, 1
        %p99 = scmp.lt.s32.totalorder %s15, 0
        %s100 = scalar_select %p99, %s15, 0
        %s101 = smul.addr %s98, 8
        %s102 = sadd.s32 %s100, %s101
        %s103 = smul.addr %s102, 4
        %s104 = scalar_lea.vmem %s0, %s103
      $region20: #{patch_discriminator.10} parent=15 // pred_fallthru
        _
    $region16: #{patch_discriminator.10} parent=5 // pred_fallthru
      _
    %p105 = scmp.le.s32.totalorder 1, %s7
    %p106 = scmp.lt.s32.totalorder %s7, 3
    %p107 = pnand %p105, %p106
    %p108 = pneg %p107
    // Predicated region
    $region21: #{patch_discriminator.10} parent=5 // pred_check
      _
    $region22: #{patch_discriminator.10} parent=5 // pred_check_branch
      %110 = sbr.rel (%p107) target = $region24
    $region23: #{patch_discriminator.10} parent=5 // pred_region
      %s111 = ssub.s32 %s7, 1
      %p112 = scmp.lt.s32.totalorder %s16, 1
      %s113 = scalar_select %p112, %s16, 1
      %p114 = scmp.lt.s32.totalorder %s17, 0
      %s115 = scalar_select %p114, %s17, 0
      %s116 = smul.addr %s113, 8
      %s117 = sadd.s32 %s115, %s116
      %s118 = smul.addr %s117, 4
      %s119 = scalar_lea.vmem %s0, %s118
      %p120 = pneg %p47
      %p121 = pneg %p44
      %p122 = pneg %p75
      %p123 = pneg %p72
      %p124 = scmp.lt.s32.totalorder %s16, 1
      %s125 = scalar_select %p124, %s16, 1
      %p126 = scmp.lt.s32.totalorder %s17, 0
      %s127 = scalar_select %p126, %s17, 0
      %s128 = smul.addr %s125, 8
      %s129 = sadd.s32 %s127, %s128
      %s130 = smul.addr %s129, 4
      %s131 = scalar_lea.vmem %s1, %s130
      %p132 = scmp.lt.s32.totalorder %s16, 1
      %s133 = scalar_select %p132, %s16, 1
      %p134 = scmp.lt.s32.totalorder %s17, 0
      %s135 = scalar_select %p134, %s17, 0
      %s136 = smul.addr %s133, 8
      %s137 = sadd.s32 %s135, %s136
      %s138 = smul.addr %s137, 4
      %s139 = scalar_lea.vmem %s0, %s138
      %p140 = scmp.lt.s32.totalorder %s16, 1
      %s141 = scalar_select %p140, %s16, 1
      %p142 = scmp.lt.s32.totalorder %s17, 0
      %s143 = scalar_select %p142, %s17, 0
      %s144 = smul.addr %s141, 8
      %s145 = sadd.s32 %s143, %s144
      %s146 = smul.addr %s145, 4
      %s147 = scalar_lea.vmem %s1, %s146
      loop: start=0, step=1, limit=2
      $region25: #{patch_discriminator.10} parent=23 // loop_pre_header
        _
      $region26: #{patch_discriminator.10} parent=23 // loop_header
        %s149 = sphi 0, %s153
        %p150 = scmp.ge.s32.totalorder %s149, 2
        %v154 = vphi 0.0, %v178
        %v155 = vphi 0.0, %v192
      $region27: #{patch_discriminator.10} parent=23 // loop_header_branch
        %152 = sbr.rel (%p150) target = $region31
      $region28: #{patch_discriminator.10} parent=23 // loop_body
        %s156 = smul.u32 %s149, 32
        %s157 = sshra.s32 %s156, 3
        %s158 = sand.u32 %s156, 7
        %s159 = smul.addr %s157, 4
        %s160 = scalar_lea.vmem %s139, %s159
        %v161 = vld [vmem:[%s160] sm:$0xf]
        %v162 = vld [vmem:[%s160 + $0x4] sm:$0xf]
        %v163 = vld [vmem:[%s160 + $0x8] sm:$0xf]
        %v164 = vld [vmem:[%s160 + $0xc] sm:$0xf]
        %v165 = vunpack.c.l.bf16 %v161
        %v166 = vunpack.c.l.bf16 %v162
        %v167 = vunpack.c.l.bf16 %v163
        %v168 = vunpack.c.l.bf16 %v164
        %v169 = vadd.f32 %v165, %v166
        %v170 = vadd.f32 %v169, %v167
        %v171 = vadd.f32 %v170, %v168
        %v172 = vrot.slane %v171, 4
        %v173 = vadd.f32 %v171, %v172
        %v174 = vrot.slane %v173, 2
        %v175 = vadd.f32 %v173, %v174
        %v176 = vrot.slane %v175, 1
        %v177 = vadd.f32 %v175, %v176
        %v178 = vadd.f32 %v154, %v177
        %v179 = vmul.f32 %v165, %v165
        %v180 = vmul.f32 %v166, %v166
        %v181 = vmul.f32 %v167, %v167
        %v182 = vmul.f32 %v168, %v168
        %v183 = vadd.f32 %v179, %v180
        %v184 = vadd.f32 %v183, %v181
        %v185 = vadd.f32 %v184, %v182
        %v186 = vrot.slane %v185, 4
        %v187 = vadd.f32 %v185, %v186
        %v188 = vrot.slane %v187, 2
        %v189 = vadd.f32 %v187, %v188
        %v190 = vrot.slane %v189, 1
        %v191 = vadd.f32 %v189, %v190
        %v192 = vadd.f32 %v155, %v191
      $region29: #{patch_discriminator.10} parent=23 // loop_footer
        %s153 = sadd.s32 1, %s149
      $region30: #{patch_discriminator.10} parent=23 // loop_footer_branch
        %148 = sbr.rel target = $region26
      $region31: #{patch_discriminator.10} parent=23 // loop_exit
        _
      %v193 = vmul.f32 %v154, 0.015625
      %v194 = vmul.f32 %v155, 0.015625
      %v195 = vmul.f32 %v193, %v193
      %v196 = vsub.f32 %v194, %v195
      %v197 = vadd.f32 %v196, 1e-05
      %v198 = vrsqrt.pop %v197
      %v199 = vmul.f32 %v198, %v197
      %v200 = vmul.f32 %v199, %v198
      %v201 = vmul.f32 0.5, %v200
      %v202 = vsub.f32 1.5, %v201
      %v203 = vmul.f32 %v198, %v202
      %vm204 = vweird.f32 %v197
      %vm205 = vweird.f32 %v198
      %vm206 = vmor %vm204, %vm205
      %v207 = vsel %vm206, %v198, %v203
      loop: start=0, step=1, limit=2
      $region32: #{patch_discriminator.10} parent=23 // loop_pre_header
        _
      $region33: #{patch_discriminator.10} parent=23 // loop_header
        %s209 = sphi 0, %s213
        %p210 = scmp.ge.s32.totalorder %s209, 2
      $region34: #{patch_discriminator.10} parent=23 // loop_header_branch
        %212 = sbr.rel (%p210) target = $region38
      $region35: #{patch_discriminator.10} parent=23 // loop_body
        %s214 = smul.u32 %s209, 32
        %s215 = sshra.s32 %s214, 3
        %s216 = sand.u32 %s214, 7
        %s217 = smul.addr %s215, 4
        %s218 = scalar_lea.vmem %s139, %s217
        %v219 = vld [vmem:[%s218] sm:$0xf]
        %v220 = vld [vmem:[%s218 + $0x4] sm:$0xf]
        %v221 = vld [vmem:[%s218 + $0x8] sm:$0xf]
        %v222 = vld [vmem:[%s218 + $0xc] sm:$0xf]
        %v223 = vunpack.c.l.bf16 %v219
        %v224 = vunpack.c.l.bf16 %v220
        %v225 = vunpack.c.l.bf16 %v221
        %v226 = vunpack.c.l.bf16 %v222
        %v227 = vsub.f32 %v223, %v193
        %v228 = vsub.f32 %v224, %v193
        %v229 = vsub.f32 %v225, %v193
        %v230 = vsub.f32 %v226, %v193
        %v231 = vmul.f32 %v227, %v207
        %v232 = vmul.f32 %v228, %v207
        %v233 = vmul.f32 %v229, %v207
        %v234 = vmul.f32 %v230, %v207
        %vm235 = vcmp.ge.f32.partialorder %v231, 0.0
        %vm236 = vcmp.ge.f32.partialorder %v232, 0.0
        %vm237 = vcmp.ge.f32.partialorder %v233, 0.0
        %vm238 = vcmp.ge.f32.partialorder %v234, 0.0
        %v239 = vmul.f32 %v231, 0.2
        %v240 = vmul.f32 %v232, 0.2
        %v241 = vmul.f32 %v233, 0.2
        %v242 = vmul.f32 %v234, 0.2
        %v243 = vsel %vm235, %v231, %v239
        %v244 = vsel %vm236, %v232, %v240
        %v245 = vsel %vm237, %v233, %v241
        %v246 = vsel %vm238, %v234, %v242
        %v247 = vpack.c.bf16 %v243, %v243
        %v248 = vpack.c.bf16 %v244, %v244
        %v249 = vpack.c.bf16 %v245, %v245
        %v250 = vpack.c.bf16 %v246, %v246
        %s251 = smul.addr %s215, 4
        %s252 = scalar_lea.vmem %s147, %s251
        %253 = vst [vmem:[%s252] sm:$0xf] %v247
        %254 = vst [vmem:[%s252 + $0x4] sm:$0xf] %v248
        %255 = vst [vmem:[%s252 + $0x8] sm:$0xf] %v249
        %256 = vst [vmem:[%s252 + $0xc] sm:$0xf] %v250
      $region36: #{patch_discriminator.10} parent=23 // loop_footer
        %s213 = sadd.s32 1, %s209
      $region37: #{patch_discriminator.10} parent=23 // loop_footer_branch
        %208 = sbr.rel target = $region33
      $region38: #{patch_discriminator.10} parent=23 // loop_exit
        _
      %p257 = scmp.lt.s32.totalorder %s16, 1
      %s258 = scalar_select %p257, %s16, 1
      %p259 = scmp.lt.s32.totalorder %s17, 0
      %s260 = scalar_select %p259, %s17, 0
      %s261 = smul.addr %s258, 8
      %s262 = sadd.s32 %s260, %s261
      %s263 = smul.addr %s262, 4
      %s264 = scalar_lea.vmem %s1, %s263
      // Predicated region
      $region39: #{patch_discriminator.10} parent=23 // pred_check
        %p265 = pneg %p72
      $region40: #{patch_discriminator.10} parent=23 // pred_check_branch
        %267 = sbr.rel (%p265) target = $region42
      $region41: #{patch_discriminator.10} parent=23 // pred_region
        _
      $region42: #{patch_discriminator.10} parent=23 // pred_fallthru
        _
    $region24: #{patch_discriminator.10} parent=5 // pred_fallthru
      _
    %p268 = scmp.le.s32.totalorder 2, %s7
    // Predicated region
    $region43: #{patch_discriminator.10} parent=5 // pred_check
      %p269 = pneg %p268
    $region44: #{patch_discriminator.10} parent=5 // pred_check_branch
      %271 = sbr.rel (%p269) target = $region46
    $region45: #{patch_discriminator.10} parent=5 // pred_region
      %s272 = ssub.s32 %s7, 2
      // Predicated region
      $region47: #{patch_discriminator.10} parent=45 // pred_check
        %p273 = pneg %p78
      $region48: #{patch_discriminator.10} parent=45 // pred_check_branch
        %275 = sbr.rel (%p273) target = $region50
      $region49: #{patch_discriminator.10} parent=45 // pred_region
        %p276 = scmp.lt.s32.totalorder %s18, 1
        %s277 = scalar_select %p276, %s18, 1
        %p278 = scmp.lt.s32.totalorder %s19, 0
        %s279 = scalar_select %p278, %s19, 0
        %s280 = smul.addr %s277, 8
        %s281 = sadd.s32 %s279, %s280
        %s282 = smul.addr %s281, 4
        %s283 = scalar_lea.vmem %s1, %s282
      $region50: #{patch_discriminator.10} parent=45 // pred_fallthru
        _
    $region46: #{patch_discriminator.10} parent=5 // pred_fallthru
      _
  $region6: #{patch_discriminator.10} parent=0 // loop_footer
    %s11 = sadd.s32 1, %s7
  $region7: #{patch_discriminator.10} parent=0 // loop_footer_branch
    %6 = sbr.rel target = $region3
  $region8: #{patch_discriminator.10} parent=0 // loop_exit
    _

// kernel: patch_discriminator.9
$region0: #{patch_discriminator.9}
  #allocation0 [shape = 'u32[]', space=smem, size = 0x4, offset = 0x4, fixed_abs, tag = 'smem constant byte address 0x4 - core index']
  #allocation1 [shape = 'u32[72,128]{1,0:T(1,128)}', space=vmem, size = 0x9000, scoped, tag = 'internal scratch']
  %s0 = inlined_call_operand.vmem [shape: bf16[128,1024], index: 0, kind: input, shape index: {}]
  %s1 = inlined_call_operand.vmem [shape: bf16[1024,128], index: 1, kind: input, shape index: {}]
  %s2 = inlined_call_operand.vmem [shape: f32[1,128], index: 2, kind: input, shape index: {}]
  %s3 = inlined_call_operand.vmem [shape: bf16[128,128], index: 3, kind: output, shape index: {}]
  %s4 = sld [smem:[#allocation0]]
  $region22: #{patch_discriminator.9} parent=0
    _
  %s6 = ssub.s32 1, %s4
  %s7 = scalar_select 0, %s6, %s4
  // Predicated region
  $region2: #{patch_discriminator.9} parent=0 // pred_check
    _
  $region3: #{patch_discriminator.9} parent=0 // pred_check_branch
    %9 = sbr.rel (0) target = $region5
  $region4: #{patch_discriminator.9} parent=0 // pred_region
    _
  $region5: #{patch_discriminator.9} parent=0 // pred_fallthru
    _
  // Predicated region
  $region6: #{patch_discriminator.9} parent=0 // pred_check
    _
  $region7: #{patch_discriminator.9} parent=0 // pred_check_branch
    %11 = sbr.rel (0) target = $region9
  $region8: #{patch_discriminator.9} parent=0 // pred_region
    _
  $region9: #{patch_discriminator.9} parent=0 // pred_fallthru
    _
  // Predicated region
  $region10: #{patch_discriminator.9} parent=0 // pred_check
    _
  $region11: #{patch_discriminator.9} parent=0 // pred_check_branch
    %13 = sbr.rel (0) target = $region13
  $region12: #{patch_discriminator.9} parent=0 // pred_region
    _
  $region13: #{patch_discriminator.9} parent=0 // pred_fallthru
    _
  %v14 = vld [vmem:[%s0] sm:$0xff]
  %v15 = vld [vmem:[%s0 + $0x8] sm:$0xff]
  %v16 = vld [vmem:[%s0 + $0x10] sm:$0xff]
  %v17 = vld [vmem:[%s0 + $0x18] sm:$0xff]
  %v18 = vld [vmem:[%s0 + $0x20] sm:$0xff]
  %v19 = vld [vmem:[%s0 + $0x28] sm:$0xff]
  %v20 = vld [vmem:[%s0 + $0x30] sm:$0xff]
  %v21 = vld [vmem:[%s0 + $0x38] sm:$0xff]
  %v22 = vld [vmem:[%s0 + $0x40] sm:$0xff]
  %v23 = vld [vmem:[%s0 + $0x48] sm:$0xff]
  %v24 = vld [vmem:[%s0 + $0x50] sm:$0xff]
  %v25 = vld [vmem:[%s0 + $0x58] sm:$0xff]
  %v26 = vld [vmem:[%s0 + $0x60] sm:$0xff]
  %v27 = vld [vmem:[%s0 + $0x68] sm:$0xff]
  %v28 = vld [vmem:[%s0 + $0x70] sm:$0xff]
  %v29 = vld [vmem:[%s0 + $0x78] sm:$0xff]
  %v30 = vld [vmem:[%s0 + $0x80] sm:$0xff]
  %v31 = vld [vmem:[%s0 + $0x88] sm:$0xff]
  %v32 = vld [vmem:[%s0 + $0x90] sm:$0xff]
  %v33 = vld [vmem:[%s0 + $0x98] sm:$0xff]
  %v34 = vld [vmem:[%s0 + $0xa0] sm:$0xff]
  %v35 = vld [vmem:[%s0 + $0xa8] sm:$0xff]
  %v36 = vld [vmem:[%s0 + $0xb0] sm:$0xff]
  %v37 = vld [vmem:[%s0 + $0xb8] sm:$0xff]
  %v38 = vld [vmem:[%s0 + $0xc0] sm:$0xff]
  %v39 = vld [vmem:[%s0 + $0xc8] sm:$0xff]
  %v40 = vld [vmem:[%s0 + $0xd0] sm:$0xff]
  %v41 = vld [vmem:[%s0 + $0xd8] sm:$0xff]
  %v42 = vld [vmem:[%s0 + $0xe0] sm:$0xff]
  %v43 = vld [vmem:[%s0 + $0xe8] sm:$0xff]
  %v44 = vld [vmem:[%s0 + $0xf0] sm:$0xff]
  %v45 = vld [vmem:[%s0 + $0xf8] sm:$0xff]
  %v46 = vld [vmem:[%s0 + $0x100] sm:$0xff]
  %v47 = vld [vmem:[%s0 + $0x108] sm:$0xff]
  %v48 = vld [vmem:[%s0 + $0x110] sm:$0xff]
  %v49 = vld [vmem:[%s0 + $0x118] sm:$0xff]
  %v50 = vld [vmem:[%s0 + $0x120] sm:$0xff]
  %v51 = vld [vmem:[%s0 + $0x128] sm:$0xff]
  %v52 = vld [vmem:[%s0 + $0x130] sm:$0xff]
  %v53 = vld [vmem:[%s0 + $0x138] sm:$0xff]
  %v54 = vld [vmem:[%s0 + $0x140] sm:$0xff]
  %v55 = vld [vmem:[%s0 + $0x148] sm:$0xff]
  %v56 = vld [vmem:[%s0 + $0x150] sm:$0xff]
  %v57 = vld [vmem:[%s0 + $0x158] sm:$0xff]
  %v58 = vld [vmem:[%s0 + $0x160] sm:$0xff]
  %v59 = vld [vmem:[%s0 + $0x168] sm:$0xff]
  %v60 = vld [vmem:[%s0 + $0x170] sm:$0xff]
  %v61 = vld [vmem:[%s0 + $0x178] sm:$0xff]
  %v62 = vld [vmem:[%s0 + $0x180] sm:$0xff]
  %v63 = vld [vmem:[%s0 + $0x188] sm:$0xff]
  %v64 = vld [vmem:[%s0 + $0x190] sm:$0xff]
  %v65 = vld [vmem:[%s0 + $0x198] sm:$0xff]
  %v66 = vld [vmem:[%s0 + $0x1a0] sm:$0xff]
  %v67 = vld [vmem:[%s0 + $0x1a8] sm:$0xff]
  %v68 = vld [vmem:[%s0 + $0x1b0] sm:$0xff]
  %v69 = vld [vmem:[%s0 + $0x1b8] sm:$0xff]
  %v70 = vld [vmem:[%s0 + $0x1c0] sm:$0xff]
  %v71 = vld [vmem:[%s0 + $0x1c8] sm:$0xff]
  %v72 = vld [vmem:[%s0 + $0x1d0] sm:$0xff]
  %v73 = vld [vmem:[%s0 + $0x1d8] sm:$0xff]
  %v74 = vld [vmem:[%s0 + $0x1e0] sm:$0xff]
  %v75 = vld [vmem:[%s0 + $0x1e8] sm:$0xff]
  %v76 = vld [vmem:[%s0 + $0x1f0] sm:$0xff]
  %v77 = vld [vmem:[%s0 + $0x1f8] sm:$0xff]
  %v78 = vld [vmem:[%s1] sm:$0xf]
  %v79 = vld [vmem:[%s1 + $0x4] sm:$0xf]
  %v80 = vld [vmem:[%s1 + $0x8] sm:$0xf]
  %v81 = vld [vmem:[%s1 + $0xc] sm:$0xf]
  %v82 = vld [vmem:[%s1 + $0x10] sm:$0xf]
  %v83 = vld [vmem:[%s1 + $0x14] sm:$0xf]
  %v84 = vld [vmem:[%s1 + $0x18] sm:$0xf]
  %v85 = vld [vmem:[%s1 + $0x1c] sm:$0xf]
  %v86 = vld [vmem:[%s1 + $0x20] sm:$0xf]
  %v87 = vld [vmem:[%s1 + $0x24] sm:$0xf]
  %v88 = vld [vmem:[%s1 + $0x28] sm:$0xf]
  %v89 = vld [vmem:[%s1 + $0x2c] sm:$0xf]
  %v90 = vld [vmem:[%s1 + $0x30] sm:$0xf]
  %v91 = vld [vmem:[%s1 + $0x34] sm:$0xf]
  %v92 = vld [vmem:[%s1 + $0x38] sm:$0xf]
  %v93 = vld [vmem:[%s1 + $0x3c] sm:$0xf]
  %v94 = vld [vmem:[%s1 + $0x40] sm:$0xf]
  %v95 = vld [vmem:[%s1 + $0x44] sm:$0xf]
  %v96 = vld [vmem:[%s1 + $0x48] sm:$0xf]
  %v97 = vld [vmem:[%s1 + $0x4c] sm:$0xf]
  %v98 = vld [vmem:[%s1 + $0x50] sm:$0xf]
  %v99 = vld [vmem:[%s1 + $0x54] sm:$0xf]
  %v100 = vld [vmem:[%s1 + $0x58] sm:$0xf]
  %v101 = vld [vmem:[%s1 + $0x5c] sm:$0xf]
  %v102 = vld [vmem:[%s1 + $0x60] sm:$0xf]
  %v103 = vld [vmem:[%s1 + $0x64] sm:$0xf]
  %v104 = vld [vmem:[%s1 + $0x68] sm:$0xf]
  %v105 = vld [vmem:[%s1 + $0x6c] sm:$0xf]
  %v106 = vld [vmem:[%s1 + $0x70] sm:$0xf]
  %v107 = vld [vmem:[%s1 + $0x74] sm:$0xf]
  %v108 = vld [vmem:[%s1 + $0x78] sm:$0xf]
  %v109 = vld [vmem:[%s1 + $0x7c] sm:$0xf]
  %v110 = vld [vmem:[%s1 + $0x80] sm:$0xf]
  %v111 = vld [vmem:[%s1 + $0x84] sm:$0xf]
  %v112 = vld [vmem:[%s1 + $0x88] sm:$0xf]
  %v113 = vld [vmem:[%s1 + $0x8c] sm:$0xf]
  %v114 = vld [vmem:[%s1 + $0x90] sm:$0xf]
  %v115 = vld [vmem:[%s1 + $0x94] sm:$0xf]
  %v116 = vld [vmem:[%s1 + $0x98] sm:$0xf]
  %v117 = vld [vmem:[%s1 + $0x9c] sm:$0xf]
  %v118 = vld [vmem:[%s1 + $0xa0] sm:$0xf]
  %v119 = vld [vmem:[%s1 + $0xa4] sm:$0xf]
  %v120 = vld [vmem:[%s1 + $0xa8] sm:$0xf]
  %v121 = vld [vmem:[%s1 + $0xac] sm:$0xf]
  %v122 = vld [vmem:[%s1 + $0xb0] sm:$0xf]
  %v123 = vld [vmem:[%s1 + $0xb4] sm:$0xf]
  %v124 = vld [vmem:[%s1 + $0xb8] sm:$0xf]
  %v125 = vld [vmem:[%s1 + $0xbc] sm:$0xf]
  %v126 = vld [vmem:[%s1 + $0xc0] sm:$0xf]
  %v127 = vld [vmem:[%s1 + $0xc4] sm:$0xf]
  %v128 = vld [vmem:[%s1 + $0xc8] sm:$0xf]
  %v129 = vld [vmem:[%s1 + $0xcc] sm:$0xf]
  %v130 = vld [vmem:[%s1 + $0xd0] sm:$0xf]
  %v131 = vld [vmem:[%s1 + $0xd4] sm:$0xf]
  %v132 = vld [vmem:[%s1 + $0xd8] sm:$0xf]
  %v133 = vld [vmem:[%s1 + $0xdc] sm:$0xf]
  %v134 = vld [vmem:[%s1 + $0xe0] sm:$0xf]
  %v135 = vld [vmem:[%s1 + $0xe4] sm:$0xf]
  %v136 = vld [vmem:[%s1 + $0xe8] sm:$0xf]
  %v137 = vld [vmem:[%s1 + $0xec] sm:$0xf]
  %v138 = vld [vmem:[%s1 + $0xf0] sm:$0xf]
  %v139 = vld [vmem:[%s1 + $0xf4] sm:$0xf]
  %v140 = vld [vmem:[%s1 + $0xf8] sm:$0xf]
  %v141 = vld [vmem:[%s1 + $0xfc] sm:$0xf]
  %v142 = vld [vmem:[%s1 + $0x100] sm:$0xf]
  %v143 = vld [vmem:[%s1 + $0x104] sm:$0xf]
  %v144 = vld [vmem:[%s1 + $0x108] sm:$0xf]
  %v145 = vld [vmem:[%s1 + $0x10c] sm:$0xf]
  %v146 = vld [vmem:[%s1 + $0x110] sm:$0xf]
  %v147 = vld [vmem:[%s1 + $0x114] sm:$0xf]
  %v148 = vld [vmem:[%s1 + $0x118] sm:$0xf]
  %v149 = vld [vmem:[%s1 + $0x11c] sm:$0xf]
  %v150 = vld [vmem:[%s1 + $0x120] sm:$0xf]
  %v151 = vld [vmem:[%s1 + $0x124] sm:$0xf]
  %v152 = vld [vmem:[%s1 + $0x128] sm:$0xf]
  %v153 = vld [vmem:[%s1 + $0x12c] sm:$0xf]
  %v154 = vld [vmem:[%s1 + $0x130] sm:$0xf]
  %v155 = vld [vmem:[%s1 + $0x134] sm:$0xf]
  %v156 = vld [vmem:[%s1 + $0x138] sm:$0xf]
  %v157 = vld [vmem:[%s1 + $0x13c] sm:$0xf]
  %v158 = vld [vmem:[%s1 + $0x140] sm:$0xf]
  %v159 = vld [vmem:[%s1 + $0x144] sm:$0xf]
  %v160 = vld [vmem:[%s1 + $0x148] sm:$0xf]
  %v161 = vld [vmem:[%s1 + $0x14c] sm:$0xf]
  %v162 = vld [vmem:[%s1 + $0x150] sm:$0xf]
  %v163 = vld [vmem:[%s1 + $0x154] sm:$0xf]
  %v164 = vld [vmem:[%s1 + $0x158] sm:$0xf]
  %v165 = vld [vmem:[%s1 + $0x15c] sm:$0xf]
  %v166 = vld [vmem:[%s1 + $0x160] sm:$0xf]
  %v167 = vld [vmem:[%s1 + $0x164] sm:$0xf]
  %v168 = vld [vmem:[%s1 + $0x168] sm:$0xf]
  %v169 = vld [vmem:[%s1 + $0x16c] sm:$0xf]
  %v170 = vld [vmem:[%s1 + $0x170] sm:$0xf]
  %v171 = vld [vmem:[%s1 + $0x174] sm:$0xf]
  %v172 = vld [vmem:[%s1 + $0x178] sm:$0xf]
  %v173 = vld [vmem:[%s1 + $0x17c] sm:$0xf]
  %v174 = vld [vmem:[%s1 + $0x180] sm:$0xf]
  %v175 = vld [vmem:[%s1 + $0x184] sm:$0xf]
  %v176 = vld [vmem:[%s1 + $0x188] sm:$0xf]
  %v177 = vld [vmem:[%s1 + $0x18c] sm:$0xf]
  %v178 = vld [vmem:[%s1 + $0x190] sm:$0xf]
  %v179 = vld [vmem:[%s1 + $0x194] sm:$0xf]
  %v180 = vld [vmem:[%s1 + $0x198] sm:$0xf]
  %v181 = vld [vmem:[%s1 + $0x19c] sm:$0xf]
  %v182 = vld [vmem:[%s1 + $0x1a0] sm:$0xf]
  %v183 = vld [vmem:[%s1 + $0x1a4] sm:$0xf]
  %v184 = vld [vmem:[%s1 + $0x1a8] sm:$0xf]
  %v185 = vld [vmem:[%s1 + $0x1ac] sm:$0xf]
  %v186 = vld [vmem:[%s1 + $0x1b0] sm:$0xf]
  %v187 = vld [vmem:[%s1 + $0x1b4] sm:$0xf]
  %v188 = vld [vmem:[%s1 + $0x1b8] sm:$0xf]
  %v189 = vld [vmem:[%s1 + $0x1bc] sm:$0xf]
  %v190 = vld [vmem:[%s1 + $0x1c0] sm:$0xf]
  %v191 = vld [vmem:[%s1 + $0x1c4] sm:$0xf]
  %v192 = vld [vmem:[%s1 + $0x1c8] sm:$0xf]
  %v193 = vld [vmem:[%s1 + $0x1cc] sm:$0xf]
  %v194 = vld [vmem:[%s1 + $0x1d0] sm:$0xf]
  %v195 = vld [vmem:[%s1 + $0x1d4] sm:$0xf]
  %v196 = vld [vmem:[%s1 + $0x1d8] sm:$0xf]
  %v197 = vld [vmem:[%s1 + $0x1dc] sm:$0xf]
  %v198 = vld [vmem:[%s1 + $0x1e0] sm:$0xf]
  %v199 = vld [vmem:[%s1 + $0x1e4] sm:$0xf]
  %v200 = vld [vmem:[%s1 + $0x1e8] sm:$0xf]
  %v201 = vld [vmem:[%s1 + $0x1ec] sm:$0xf]
  %v202 = vld [vmem:[%s1 + $0x1f0] sm:$0xf]
  %v203 = vld [vmem:[%s1 + $0x1f4] sm:$0xf]
  %v204 = vld [vmem:[%s1 + $0x1f8] sm:$0xf]
  %v205 = vld [vmem:[%s1 + $0x1fc] sm:$0xf]
  %v206 = vld [vmem:[%s2] sm:$0x1]
  %v208 = vperm.slane %v206, 0
  %v274 = vunpack.c.l.b16 %v14
  %v275 = vunpack.c.h.b16 %v14
  %v276 = vunpack.c.l.b16 %v15
  %v277 = vunpack.c.h.b16 %v15
  %v278 = vunpack.c.l.b16 %v16
  %v279 = vunpack.c.h.b16 %v16
  %v280 = vunpack.c.l.b16 %v17
  %v281 = vunpack.c.h.b16 %v17
  %v282 = vunpack.c.l.b16 %v18
  %v283 = vunpack.c.h.b16 %v18
  %v284 = vunpack.c.l.b16 %v19
  %v285 = vunpack.c.h.b16 %v19
  %v286 = vunpack.c.l.b16 %v20
  %v287 = vunpack.c.h.b16 %v20
  %v288 = vunpack.c.l.b16 %v21
  %v289 = vunpack.c.h.b16 %v21
  %v290 = vunpack.c.l.b16 %v22
  %v291 = vunpack.c.h.b16 %v22
  %v292 = vunpack.c.l.b16 %v23
  %v293 = vunpack.c.h.b16 %v23
  %v294 = vunpack.c.l.b16 %v24
  %v295 = vunpack.c.h.b16 %v24
  %v296 = vunpack.c.l.b16 %v25
  %v297 = vunpack.c.h.b16 %v25
  %v298 = vunpack.c.l.b16 %v26
  %v299 = vunpack.c.h.b16 %v26
  %v300 = vunpack.c.l.b16 %v27
  %v301 = vunpack.c.h.b16 %v27
  %v302 = vunpack.c.l.b16 %v28
  %v303 = vunpack.c.h.b16 %v28
  %v304 = vunpack.c.l.b16 %v29
  %v305 = vunpack.c.h.b16 %v29
  %v306 = vunpack.c.l.b16 %v30
  %v307 = vunpack.c.h.b16 %v30
  %v308 = vunpack.c.l.b16 %v31
  %v309 = vunpack.c.h.b16 %v31
  %v310 = vunpack.c.l.b16 %v32
  %v311 = vunpack.c.h.b16 %v32
  %v312 = vunpack.c.l.b16 %v33
  %v313 = vunpack.c.h.b16 %v33
  %v314 = vunpack.c.l.b16 %v34
  %v315 = vunpack.c.h.b16 %v34
  %v316 = vunpack.c.l.b16 %v35
  %v317 = vunpack.c.h.b16 %v35
  %v318 = vunpack.c.l.b16 %v36
  %v319 = vunpack.c.h.b16 %v36
  %v320 = vunpack.c.l.b16 %v37
  %v321 = vunpack.c.h.b16 %v37
  %v322 = vunpack.c.l.b16 %v38
  %v323 = vunpack.c.h.b16 %v38
  %v324 = vunpack.c.l.b16 %v39
  %v325 = vunpack.c.h.b16 %v39
  %v326 = vunpack.c.l.b16 %v40
  %v327 = vunpack.c.h.b16 %v40
  %v328 = vunpack.c.l.b16 %v41
  %v329 = vunpack.c.h.b16 %v41
  %v330 = vunpack.c.l.b16 %v42
  %v331 = vunpack.c.h.b16 %v42
  %v332 = vunpack.c.l.b16 %v43
  %v333 = vunpack.c.h.b16 %v43
  %v334 = vunpack.c.l.b16 %v44
  %v335 = vunpack.c.h.b16 %v44
  %v336 = vunpack.c.l.b16 %v45
  %v337 = vunpack.c.h.b16 %v45
  %v338 = vunpack.c.l.b16 %v46
  %v339 = vunpack.c.h.b16 %v46
  %v340 = vunpack.c.l.b16 %v47
  %v341 = vunpack.c.h.b16 %v47
  %v342 = vunpack.c.l.b16 %v48
  %v343 = vunpack.c.h.b16 %v48
  %v344 = vunpack.c.l.b16 %v49
  %v345 = vunpack.c.h.b16 %v49
  %v346 = vunpack.c.l.b16 %v50
  %v347 = vunpack.c.h.b16 %v50
  %v348 = vunpack.c.l.b16 %v51
  %v349 = vunpack.c.h.b16 %v51
  %v350 = vunpack.c.l.b16 %v52
  %v351 = vunpack.c.h.b16 %v52
  %v352 = vunpack.c.l.b16 %v53
  %v353 = vunpack.c.h.b16 %v53
  %v354 = vunpack.c.l.b16 %v54
  %v355 = vunpack.c.h.b16 %v54
  %v356 = vunpack.c.l.b16 %v55
  %v357 = vunpack.c.h.b16 %v55
  %v358 = vunpack.c.l.b16 %v56
  %v359 = vunpack.c.h.b16 %v56
  %v360 = vunpack.c.l.b16 %v57
  %v361 = vunpack.c.h.b16 %v57
  %v362 = vunpack.c.l.b16 %v58
  %v363 = vunpack.c.h.b16 %v58
  %v364 = vunpack.c.l.b16 %v59
  %v365 = vunpack.c.h.b16 %v59
  %v366 = vunpack.c.l.b16 %v60
  %v367 = vunpack.c.h.b16 %v60
  %v368 = vunpack.c.l.b16 %v61
  %v369 = vunpack.c.h.b16 %v61
  %v370 = vunpack.c.l.b16 %v62
  %v371 = vunpack.c.h.b16 %v62
  %v372 = vunpack.c.l.b16 %v63
  %v373 = vunpack.c.h.b16 %v63
  %v374 = vunpack.c.l.b16 %v64
  %v375 = vunpack.c.h.b16 %v64
  %v376 = vunpack.c.l.b16 %v65
  %v377 = vunpack.c.h.b16 %v65
  %v378 = vunpack.c.l.b16 %v66
  %v379 = vunpack.c.h.b16 %v66
  %v380 = vunpack.c.l.b16 %v67
  %v381 = vunpack.c.h.b16 %v67
  %v382 = vunpack.c.l.b16 %v68
  %v383 = vunpack.c.h.b16 %v68
  %v384 = vunpack.c.l.b16 %v69
  %v385 = vunpack.c.h.b16 %v69
  %v386 = vunpack.c.l.b16 %v70
  %v387 = vunpack.c.h.b16 %v70
  %v388 = vunpack.c.l.b16 %v71
  %v389 = vunpack.c.h.b16 %v71
  %v390 = vunpack.c.l.b16 %v72
  %v391 = vunpack.c.h.b16 %v72
  %v392 = vunpack.c.l.b16 %v73
  %v393 = vunpack.c.h.b16 %v73
  %v394 = vunpack.c.l.b16 %v74
  %v395 = vunpack.c.h.b16 %v74
  %v396 = vunpack.c.l.b16 %v75
  %v397 = vunpack.c.h.b16 %v75
  %v398 = vunpack.c.l.b16 %v76
  %v399 = vunpack.c.h.b16 %v76
  %v400 = vunpack.c.l.b16 %v77
  %v401 = vunpack.c.h.b16 %v77
  %v402 = vpack.c.b16 %v282, %v274
  %v403 = vpack.c.b16 %v283, %v275
  %v404 = vpack.c.b16 %v284, %v276
  %v405 = vpack.c.b16 %v285, %v277
  %v406 = vpack.c.b16 %v286, %v278
  %v407 = vpack.c.b16 %v287, %v279
  %v408 = vpack.c.b16 %v288, %v280
  %v409 = vpack.c.b16 %v289, %v281
  %v410 = vpack.c.b16 %v298, %v290
  %v411 = vpack.c.b16 %v299, %v291
  %v412 = vpack.c.b16 %v300, %v292
  %v413 = vpack.c.b16 %v301, %v293
  %v414 = vpack.c.b16 %v302, %v294
  %v415 = vpack.c.b16 %v303, %v295
  %v416 = vpack.c.b16 %v304, %v296
  %v417 = vpack.c.b16 %v305, %v297
  %v418 = vpack.c.b16 %v314, %v306
  %v419 = vpack.c.b16 %v315, %v307
  %v420 = vpack.c.b16 %v316, %v308
  %v421 = vpack.c.b16 %v317, %v309
  %v422 = vpack.c.b16 %v318, %v310
  %v423 = vpack.c.b16 %v319, %v311
  %v424 = vpack.c.b16 %v320, %v312
  %v425 = vpack.c.b16 %v321, %v313
  %v426 = vpack.c.b16 %v330, %v322
  %v427 = vpack.c.b16 %v331, %v323
  %v428 = vpack.c.b16 %v332, %v324
  %v429 = vpack.c.b16 %v333, %v325
  %v430 = vpack.c.b16 %v334, %v326
  %v431 = vpack.c.b16 %v335, %v327
  %v432 = vpack.c.b16 %v336, %v328
  %v433 = vpack.c.b16 %v337, %v329
  %v434 = vpack.c.b16 %v346, %v338
  %v435 = vpack.c.b16 %v347, %v339
  %v436 = vpack.c.b16 %v348, %v340
  %v437 = vpack.c.b16 %v349, %v341
  %v438 = vpack.c.b16 %v350, %v342
  %v439 = vpack.c.b16 %v351, %v343
  %v440 = vpack.c.b16 %v352, %v344
  %v441 = vpack.c.b16 %v353, %v345
  %v442 = vpack.c.b16 %v362, %v354
  %v443 = vpack.c.b16 %v363, %v355
  %v444 = vpack.c.b16 %v364, %v356
  %v445 = vpack.c.b16 %v365, %v357
  %v446 = vpack.c.b16 %v366, %v358
  %v447 = vpack.c.b16 %v367, %v359
  %v448 = vpack.c.b16 %v368, %v360
  %v449 = vpack.c.b16 %v369, %v361
  %v450 = vpack.c.b16 %v378, %v370
  %v451 = vpack.c.b16 %v379, %v371
  %v452 = vpack.c.b16 %v380, %v372
  %v453 = vpack.c.b16 %v381, %v373
  %v454 = vpack.c.b16 %v382, %v374
  %v455 = vpack.c.b16 %v383, %v375
  %v456 = vpack.c.b16 %v384, %v376
  %v457 = vpack.c.b16 %v385, %v377
  %v458 = vpack.c.b16 %v394, %v386
  %v459 = vpack.c.b16 %v395, %v387
  %v460 = vpack.c.b16 %v396, %v388
  %v461 = vpack.c.b16 %v397, %v389
  %v462 = vpack.c.b16 %v398, %v390
  %v463 = vpack.c.b16 %v399, %v391
  %v464 = vpack.c.b16 %v400, %v392
  %v465 = vpack.c.b16 %v401, %v393
  %v658 = vunpack.c.l.b16 %v78
  %v659 = vunpack.c.l.b16 %v79
  %v660 = vunpack.c.l.b16 %v80
  %v661 = vunpack.c.l.b16 %v81
  %v662 = vunpack.c.l.b16 %v82
  %v663 = vunpack.c.l.b16 %v83
  %v664 = vunpack.c.l.b16 %v84
  %v665 = vunpack.c.l.b16 %v85
  %v666 = vunpack.c.l.b16 %v86
  %v667 = vunpack.c.l.b16 %v87
  %v668 = vunpack.c.l.b16 %v88
  %v669 = vunpack.c.l.b16 %v89
  %v670 = vunpack.c.l.b16 %v90
  %v671 = vunpack.c.l.b16 %v91
  %v672 = vunpack.c.l.b16 %v92
  %v673 = vunpack.c.l.b16 %v93
  %v674 = vunpack.c.l.b16 %v94
  %v675 = vunpack.c.l.b16 %v95
  %v676 = vunpack.c.l.b16 %v96
  %v677 = vunpack.c.l.b16 %v97
  %v678 = vunpack.c.l.b16 %v98
  %v679 = vunpack.c.l.b16 %v99
  %v680 = vunpack.c.l.b16 %v100
  %v681 = vunpack.c.l.b16 %v101
  %v682 = vunpack.c.l.b16 %v102
  %v683 = vunpack.c.l.b16 %v103
  %v684 = vunpack.c.l.b16 %v104
  %v685 = vunpack.c.l.b16 %v105
  %v686 = vunpack.c.l.b16 %v106
  %v687 = vunpack.c.l.b16 %v107
  %v688 = vunpack.c.l.b16 %v108
  %v689 = vunpack.c.l.b16 %v109
  %v690 = vunpack.c.l.b16 %v110
  %v691 = vunpack.c.l.b16 %v111
  %v692 = vunpack.c.l.b16 %v112
  %v693 = vunpack.c.l.b16 %v113
  %v694 = vunpack.c.l.b16 %v114
  %v695 = vunpack.c.l.b16 %v115
  %v696 = vunpack.c.l.b16 %v116
  %v697 = vunpack.c.l.b16 %v117
  %v698 = vunpack.c.l.b16 %v118
  %v699 = vunpack.c.l.b16 %v119
  %v700 = vunpack.c.l.b16 %v120
  %v701 = vunpack.c.l.b16 %v121
  %v702 = vunpack.c.l.b16 %v122
  %v703 = vunpack.c.l.b16 %v123
  %v704 = vunpack.c.l.b16 %v124
  %v705 = vunpack.c.l.b16 %v125
  %v706 = vunpack.c.l.b16 %v126
  %v707 = vunpack.c.l.b16 %v127
  %v708 = vunpack.c.l.b16 %v128
  %v709 = vunpack.c.l.b16 %v129
  %v710 = vunpack.c.l.b16 %v130
  %v711 = vunpack.c.l.b16 %v131
  %v712 = vunpack.c.l.b16 %v132
  %v713 = vunpack.c.l.b16 %v133
  %v714 = vunpack.c.l.b16 %v134
  %v715 = vunpack.c.l.b16 %v135
  %v716 = vunpack.c.l.b16 %v136
  %v717 = vunpack.c.l.b16 %v137
  %v718 = vunpack.c.l.b16 %v138
  %v719 = vunpack.c.l.b16 %v139
  %v720 = vunpack.c.l.b16 %v140
  %v721 = vunpack.c.l.b16 %v141
  %v722 = vunpack.c.l.b16 %v142
  %v723 = vunpack.c.l.b16 %v143
  %v724 = vunpack.c.l.b16 %v144
  %v725 = vunpack.c.l.b16 %v145
  %v726 = vunpack.c.l.b16 %v146
  %v727 = vunpack.c.l.b16 %v147
  %v728 = vunpack.c.l.b16 %v148
  %v729 = vunpack.c.l.b16 %v149
  %v730 = vunpack.c.l.b16 %v150
  %v731 = vunpack.c.l.b16 %v151
  %v732 = vunpack.c.l.b16 %v152
  %v733 = vunpack.c.l.b16 %v153
  %v734 = vunpack.c.l.b16 %v154
  %v735 = vunpack.c.l.b16 %v155
  %v736 = vunpack.c.l.b16 %v156
  %v737 = vunpack.c.l.b16 %v157
  %v738 = vunpack.c.l.b16 %v158
  %v739 = vunpack.c.l.b16 %v159
  %v740 = vunpack.c.l.b16 %v160
  %v741 = vunpack.c.l.b16 %v161
  %v742 = vunpack.c.l.b16 %v162
  %v743 = vunpack.c.l.b16 %v163
  %v744 = vunpack.c.l.b16 %v164
  %v745 = vunpack.c.l.b16 %v165
  %v746 = vunpack.c.l.b16 %v166
  %v747 = vunpack.c.l.b16 %v167
  %v748 = vunpack.c.l.b16 %v168
  %v749 = vunpack.c.l.b16 %v169
  %v750 = vunpack.c.l.b16 %v170
  %v751 = vunpack.c.l.b16 %v171
  %v752 = vunpack.c.l.b16 %v172
  %v753 = vunpack.c.l.b16 %v173
  %v754 = vunpack.c.l.b16 %v174
  %v755 = vunpack.c.l.b16 %v175
  %v756 = vunpack.c.l.b16 %v176
  %v757 = vunpack.c.l.b16 %v177
  %v758 = vunpack.c.l.b16 %v178
  %v759 = vunpack.c.l.b16 %v179
  %v760 = vunpack.c.l.b16 %v180
  %v761 = vunpack.c.l.b16 %v181
  %v762 = vunpack.c.l.b16 %v182
  %v763 = vunpack.c.l.b16 %v183
  %v764 = vunpack.c.l.b16 %v184
  %v765 = vunpack.c.l.b16 %v185
  %v766 = vunpack.c.l.b16 %v186
  %v767 = vunpack.c.l.b16 %v187
  %v768 = vunpack.c.l.b16 %v188
  %v769 = vunpack.c.l.b16 %v189
  %v770 = vunpack.c.l.b16 %v190
  %v771 = vunpack.c.l.b16 %v191
  %v772 = vunpack.c.l.b16 %v192
  %v773 = vunpack.c.l.b16 %v193
  %v774 = vunpack.c.l.b16 %v194
  %v775 = vunpack.c.l.b16 %v195
  %v776 = vunpack.c.l.b16 %v196
  %v777 = vunpack.c.l.b16 %v197
  %v778 = vunpack.c.l.b16 %v198
  %v779 = vunpack.c.l.b16 %v199
  %v780 = vunpack.c.l.b16 %v200
  %v781 = vunpack.c.l.b16 %v201
  %v782 = vunpack.c.l.b16 %v202
  %v783 = vunpack.c.l.b16 %v203
  %v784 = vunpack.c.l.b16 %v204
  %v785 = vunpack.c.l.b16 %v205
  %v786 = vpack.c.b16 %v659, %v658
  %v787 = vpack.c.b16 %v661, %v660
  %v788 = vpack.c.b16 %v663, %v662
  %v789 = vpack.c.b16 %v665, %v664
  %v790 = vpack.c.b16 %v667, %v666
  %v791 = vpack.c.b16 %v669, %v668
  %v792 = vpack.c.b16 %v671, %v670
  %v793 = vpack.c.b16 %v673, %v672
  %v794 = vpack.c.b16 %v675, %v674
  %v795 = vpack.c.b16 %v677, %v676
  %v796 = vpack.c.b16 %v679, %v678
  %v797 = vpack.c.b16 %v681, %v680
  %v798 = vpack.c.b16 %v683, %v682
  %v799 = vpack.c.b16 %v685, %v684
  %v800 = vpack.c.b16 %v687, %v686
  %v801 = vpack.c.b16 %v689, %v688
  %v802 = vpack.c.b16 %v691, %v690
  %v803 = vpack.c.b16 %v693, %v692
  %v804 = vpack.c.b16 %v695, %v694
  %v805 = vpack.c.b16 %v697, %v696
  %v806 = vpack.c.b16 %v699, %v698
  %v807 = vpack.c.b16 %v701, %v700
  %v808 = vpack.c.b16 %v703, %v702
  %v809 = vpack.c.b16 %v705, %v704
  %v810 = vpack.c.b16 %v707, %v706
  %v811 = vpack.c.b16 %v709, %v708
  %v812 = vpack.c.b16 %v711, %v710
  %v813 = vpack.c.b16 %v713, %v712
  %v814 = vpack.c.b16 %v715, %v714
  %v815 = vpack.c.b16 %v717, %v716
  %v816 = vpack.c.b16 %v719, %v718
  %v817 = vpack.c.b16 %v721, %v720
  %v818 = vpack.c.b16 %v723, %v722
  %v819 = vpack.c.b16 %v725, %v724
  %v820 = vpack.c.b16 %v727, %v726
  %v821 = vpack.c.b16 %v729, %v728
  %v822 = vpack.c.b16 %v731, %v730
  %v823 = vpack.c.b16 %v733, %v732
  %v824 = vpack.c.b16 %v735, %v734
  %v825 = vpack.c.b16 %v737, %v736
  %v826 = vpack.c.b16 %v739, %v738
  %v827 = vpack.c.b16 %v741, %v740
  %v828 = vpack.c.b16 %v743, %v742
  %v829 = vpack.c.b16 %v745, %v744
  %v830 = vpack.c.b16 %v747, %v746
  %v831 = vpack.c.b16 %v749, %v748
  %v832 = vpack.c.b16 %v751, %v750
  %v833 = vpack.c.b16 %v753, %v752
  %v834 = vpack.c.b16 %v755, %v754
  %v835 = vpack.c.b16 %v757, %v756
  %v836 = vpack.c.b16 %v759, %v758
  %v837 = vpack.c.b16 %v761, %v760
  %v838 = vpack.c.b16 %v763, %v762
  %v839 = vpack.c.b16 %v765, %v764
  %v840 = vpack.c.b16 %v767, %v766
  %v841 = vpack.c.b16 %v769, %v768
  %v842 = vpack.c.b16 %v771, %v770
  %v843 = vpack.c.b16 %v773, %v772
  %v844 = vpack.c.b16 %v775, %v774
  %v845 = vpack.c.b16 %v777, %v776
  %v846 = vpack.c.b16 %v779, %v778
  %v847 = vpack.c.b16 %v781, %v780
  %v848 = vpack.c.b16 %v783, %v782
  %v849 = vpack.c.b16 %v785, %v784
  %914 = vmatpush.bf16.msra.mxu0 %v793
  %915 = vmatpush.bf16.msra.mxu0 %v792
  %916 = vmatpush.bf16.msra.mxu0 %v791
  %917 = vmatpush.bf16.msra.mxu0 %v790
  %918 = vmatpush.bf16.msra.mxu0 %v789
  %919 = vmatpush.bf16.msra.mxu0 %v788
  %920 = vmatpush.bf16.msra.mxu0 %v787
  %921 = vmatpush.bf16.msra.mxu0 %v786
  %922 = vmatmul.bf16.gmra.mxu0 %v402
  %v923 = vpop.f32.mrf.mxu0
  %v924 = vadd.f32 %v208, %v923
  %v925 = vpop.f32.mrf.mxu0
  %v926 = vadd.f32 %v208, %v925
  %927 = vmatmul.bf16.gmra.mxu0 %v410
  %v928 = vpop.f32.mrf.mxu0
  %v929 = vadd.f32 %v208, %v928
  %v930 = vpop.f32.mrf.mxu0
  %v931 = vadd.f32 %v208, %v930
  %932 = vmatmul.bf16.gmra.mxu0 %v418
  %v933 = vpop.f32.mrf.mxu0
  %v934 = vadd.f32 %v208, %v933
  %v935 = vpop.f32.mrf.mxu0
  %v936 = vadd.f32 %v208, %v935
  %937 = vmatmul.bf16.gmra.mxu0 %v426
  %v938 = vpop.f32.mrf.mxu0
  %v939 = vadd.f32 %v208, %v938
  %v940 = vpop.f32.mrf.mxu0
  %v941 = vadd.f32 %v208, %v940
  %942 = vmatmul.bf16.gmra.mxu0 %v434
  %v943 = vpop.f32.mrf.mxu0
  %v944 = vadd.f32 %v208, %v943
  %v945 = vpop.f32.mrf.mxu0
  %v946 = vadd.f32 %v208, %v945
  %947 = vmatmul.bf16.gmra.mxu0 %v442
  %v948 = vpop.f32.mrf.mxu0
  %v949 = vadd.f32 %v208, %v948
  %v950 = vpop.f32.mrf.mxu0
  %v951 = vadd.f32 %v208, %v950
  %952 = vmatmul.bf16.gmra.mxu0 %v450
  %v953 = vpop.f32.mrf.mxu0
  %v954 = vadd.f32 %v208, %v953
  %v955 = vpop.f32.mrf.mxu0
  %v956 = vadd.f32 %v208, %v955
  %957 = vmatmul.bf16.gmra.mxu0 %v458
  %v958 = vpop.f32.mrf.mxu0
  %v959 = vadd.f32 %v208, %v958
  %v960 = vpop.f32.mrf.mxu0
  %v961 = vadd.f32 %v208, %v960
  %962 = vdwg.mxu0
  %963 = vmatpush.bf16.msra.mxu0 %v801
  %964 = vmatpush.bf16.msra.mxu0 %v800
  %965 = vmatpush.bf16.msra.mxu0 %v799
  %966 = vmatpush.bf16.msra.mxu0 %v798
  %967 = vmatpush.bf16.msra.mxu0 %v797
  %968 = vmatpush.bf16.msra.mxu0 %v796
  %969 = vmatpush.bf16.msra.mxu0 %v795
  %970 = vmatpush.bf16.msra.mxu0 %v794
  %971 = vmatmul.bf16.gmra.mxu0 %v403
  %v972 = vpop.f32.mrf.mxu0
  %v973 = vadd.f32 %v924, %v972
  %v974 = vpop.f32.mrf.mxu0
  %v975 = vadd.f32 %v926, %v974
  %976 = vmatmul.bf16.gmra.mxu0 %v411
  %v977 = vpop.f32.mrf.mxu0
  %v978 = vadd.f32 %v929, %v977
  %v979 = vpop.f32.mrf.mxu0
  %v980 = vadd.f32 %v931, %v979
  %981 = vmatmul.bf16.gmra.mxu0 %v419
  %v982 = vpop.f32.mrf.mxu0
  %v983 = vadd.f32 %v934, %v982
  %v984 = vpop.f32.mrf.mxu0
  %v985 = vadd.f32 %v936, %v984
  %986 = vmatmul.bf16.gmra.mxu0 %v427
  %v987 = vpop.f32.mrf.mxu0
  %v988 = vadd.f32 %v939, %v987
  %v989 = vpop.f32.mrf.mxu0
  %v990 = vadd.f32 %v941, %v989
  %991 = vmatmul.bf16.gmra.mxu0 %v435
  %v992 = vpop.f32.mrf.mxu0
  %v993 = vadd.f32 %v944, %v992
  %v994 = vpop.f32.mrf.mxu0
  %v995 = vadd.f32 %v946, %v994
  %996 = vmatmul.bf16.gmra.mxu0 %v443
  %v997 = vpop.f32.mrf.mxu0
  %v998 = vadd.f32 %v949, %v997
  %v999 = vpop.f32.mrf.mxu0
  %v1000 = vadd.f32 %v951, %v999
  %1001 = vmatmul.bf16.gmra.mxu0 %v451
  %v1002 = vpop.f32.mrf.mxu0
  %v1003 = vadd.f32 %v954, %v1002
  %v1004 = vpop.f32.mrf.mxu0
  %v1005 = vadd.f32 %v956, %v1004
  %1006 = vmatmul.bf16.gmra.mxu0 %v459
  %v1007 = vpop.f32.mrf.mxu0
  %v1008 = vadd.f32 %v959, %v1007
  %v1009 = vpop.f32.mrf.mxu0
  %v1010 = vadd.f32 %v961, %v1009
  %1011 = vdwg.mxu0
  %1012 = vmatpush.bf16.msra.mxu0 %v809
  %1013 = vmatpush.bf16.msra.mxu0 %v808
  %1014 = vmatpush.bf16.msra.mxu0 %v807
  %1015 = vmatpush.bf16.msra.mxu0 %v806
  %1016 = vmatpush.bf16.msra.mxu0 %v805
  %1017 = vmatpush.bf16.msra.mxu0 %v804
  %1018 = vmatpush.bf16.msra.mxu0 %v803
  %1019 = vmatpush.bf16.msra.mxu0 %v802
  %1020 = vmatmul.bf16.gmra.mxu0 %v404
  %v1021 = vpop.f32.mrf.mxu0
  %v1022 = vadd.f32 %v973, %v1021
  %v1023 = vpop.f32.mrf.mxu0
  %v1024 = vadd.f32 %v975, %v1023
  %1025 = vmatmul.bf16.gmra.mxu0 %v412
  %v1026 = vpop.f32.mrf.mxu0
  %v1027 = vadd.f32 %v978, %v1026
  %v1028 = vpop.f32.mrf.mxu0
  %v1029 = vadd.f32 %v980, %v1028
  %1030 = vmatmul.bf16.gmra.mxu0 %v420
  %v1031 = vpop.f32.mrf.mxu0
  %v1032 = vadd.f32 %v983, %v1031
  %v1033 = vpop.f32.mrf.mxu0
  %v1034 = vadd.f32 %v985, %v1033
  %1035 = vmatmul.bf16.gmra.mxu0 %v428
  %v1036 = vpop.f32.mrf.mxu0
  %v1037 = vadd.f32 %v988, %v1036
  %v1038 = vpop.f32.mrf.mxu0
  %v1039 = vadd.f32 %v990, %v1038
  %1040 = vmatmul.bf16.gmra.mxu0 %v436
  %v1041 = vpop.f32.mrf.mxu0
  %v1042 = vadd.f32 %v993, %v1041
  %v1043 = vpop.f32.mrf.mxu0
  %v1044 = vadd.f32 %v995, %v1043
  %1045 = vmatmul.bf16.gmra.mxu0 %v444
  %v1046 = vpop.f32.mrf.mxu0
  %v1047 = vadd.f32 %v998, %v1046
  %v1048 = vpop.f32.mrf.mxu0
  %v1049 = vadd.f32 %v1000, %v1048
  %1050 = vmatmul.bf16.gmra.mxu0 %v452
  %v1051 = vpop.f32.mrf.mxu0
  %v1052 = vadd.f32 %v1003, %v1051
  %v1053 = vpop.f32.mrf.mxu0
  %v1054 = vadd.f32 %v1005, %v1053
  %1055 = vmatmul.bf16.gmra.mxu0 %v460
  %v1056 = vpop.f32.mrf.mxu0
  %v1057 = vadd.f32 %v1008, %v1056
  %v1058 = vpop.f32.mrf.mxu0
  %v1059 = vadd.f32 %v1010, %v1058
  %1060 = vdwg.mxu0
  %1061 = vmatpush.bf16.msra.mxu0 %v817
  %1062 = vmatpush.bf16.msra.mxu0 %v816
  %1063 = vmatpush.bf16.msra.mxu0 %v815
  %1064 = vmatpush.bf16.msra.mxu0 %v814
  %1065 = vmatpush.bf16.msra.mxu0 %v813
  %1066 = vmatpush.bf16.msra.mxu0 %v812
  %1067 = vmatpush.bf16.msra.mxu0 %v811
  %1068 = vmatpush.bf16.msra.mxu0 %v810
  %1069 = vmatmul.bf16.gmra.mxu0 %v405
  %v1070 = vpop.f32.mrf.mxu0
  %v1071 = vadd.f32 %v1022, %v1070
  %v1072 = vpop.f32.mrf.mxu0
  %v1073 = vadd.f32 %v1024, %v1072
  %1074 = vmatmul.bf16.gmra.mxu0 %v413
  %v1075 = vpop.f32.mrf.mxu0
  %v1076 = vadd.f32 %v1027, %v1075
  %v1077 = vpop.f32.mrf.mxu0
  %v1078 = vadd.f32 %v1029, %v1077
  %1079 = vmatmul.bf16.gmra.mxu0 %v421
  %v1080 = vpop.f32.mrf.mxu0
  %v1081 = vadd.f32 %v1032, %v1080
  %v1082 = vpop.f32.mrf.mxu0
  %v1083 = vadd.f32 %v1034, %v1082
  %1084 = vmatmul.bf16.gmra.mxu0 %v429
  %v1085 = vpop.f32.mrf.mxu0
  %v1086 = vadd.f32 %v1037, %v1085
  %v1087 = vpop.f32.mrf.mxu0
  %v1088 = vadd.f32 %v1039, %v1087
  %1089 = vmatmul.bf16.gmra.mxu0 %v437
  %v1090 = vpop.f32.mrf.mxu0
  %v1091 = vadd.f32 %v1042, %v1090
  %v1092 = vpop.f32.mrf.mxu0
  %v1093 = vadd.f32 %v1044, %v1092
  %1094 = vmatmul.bf16.gmra.mxu0 %v445
  %v1095 = vpop.f32.mrf.mxu0
  %v1096 = vadd.f32 %v1047, %v1095
  %v1097 = vpop.f32.mrf.mxu0
  %v1098 = vadd.f32 %v1049, %v1097
  %1099 = vmatmul.bf16.gmra.mxu0 %v453
  %v1100 = vpop.f32.mrf.mxu0
  %v1101 = vadd.f32 %v1052, %v1100
  %v1102 = vpop.f32.mrf.mxu0
  %v1103 = vadd.f32 %v1054, %v1102
  %1104 = vmatmul.bf16.gmra.mxu0 %v461
  %v1105 = vpop.f32.mrf.mxu0
  %v1106 = vadd.f32 %v1057, %v1105
  %v1107 = vpop.f32.mrf.mxu0
  %v1108 = vadd.f32 %v1059, %v1107
  %1109 = vdwg.mxu0
  %1110 = vmatpush.bf16.msra.mxu0 %v825
  %1111 = vmatpush.bf16.msra.mxu0 %v824
  %1112 = vmatpush.bf16.msra.mxu0 %v823
  %1113 = vmatpush.bf16.msra.mxu0 %v822
  %1114 = vmatpush.bf16.msra.mxu0 %v821
  %1115 = vmatpush.bf16.msra.mxu0 %v820
  %1116 = vmatpush.bf16.msra.mxu0 %v819
  %1117 = vmatpush.bf16.msra.mxu0 %v818
  %1118 = vmatmul.bf16.gmra.mxu0 %v406
  %v1119 = vpop.f32.mrf.mxu0
  %v1120 = vadd.f32 %v1071, %v1119
  %v1121 = vpop.f32.mrf.mxu0
  %v1122 = vadd.f32 %v1073, %v1121
  %1123 = vmatmul.bf16.gmra.mxu0 %v414
  %v1124 = vpop.f32.mrf.mxu0
  %v1125 = vadd.f32 %v1076, %v1124
  %v1126 = vpop.f32.mrf.mxu0
  %v1127 = vadd.f32 %v1078, %v1126
  %1128 = vmatmul.bf16.gmra.mxu0 %v422
  %v1129 = vpop.f32.mrf.mxu0
  %v1130 = vadd.f32 %v1081, %v1129
  %v1131 = vpop.f32.mrf.mxu0
  %v1132 = vadd.f32 %v1083, %v1131
  %1133 = vmatmul.bf16.gmra.mxu0 %v430
  %v1134 = vpop.f32.mrf.mxu0
  %v1135 = vadd.f32 %v1086, %v1134
  %v1136 = vpop.f32.mrf.mxu0
  %v1137 = vadd.f32 %v1088, %v1136
  %1138 = vmatmul.bf16.gmra.mxu0 %v438
  %v1139 = vpop.f32.mrf.mxu0
  %v1140 = vadd.f32 %v1091, %v1139
  %v1141 = vpop.f32.mrf.mxu0
  %v1142 = vadd.f32 %v1093, %v1141
  %1143 = vmatmul.bf16.gmra.mxu0 %v446
  %v1144 = vpop.f32.mrf.mxu0
  %v1145 = vadd.f32 %v1096, %v1144
  %v1146 = vpop.f32.mrf.mxu0
  %v1147 = vadd.f32 %v1098, %v1146
  %1148 = vmatmul.bf16.gmra.mxu0 %v454
  %v1149 = vpop.f32.mrf.mxu0
  %v1150 = vadd.f32 %v1101, %v1149
  %v1151 = vpop.f32.mrf.mxu0
  %v1152 = vadd.f32 %v1103, %v1151
  %1153 = vmatmul.bf16.gmra.mxu0 %v462
  %v1154 = vpop.f32.mrf.mxu0
  %v1155 = vadd.f32 %v1106, %v1154
  %v1156 = vpop.f32.mrf.mxu0
  %v1157 = vadd.f32 %v1108, %v1156
  %1158 = vdwg.mxu0
  %1159 = vmatpush.bf16.msra.mxu0 %v833
  %1160 = vmatpush.bf16.msra.mxu0 %v832
  %1161 = vmatpush.bf16.msra.mxu0 %v831
  %1162 = vmatpush.bf16.msra.mxu0 %v830
  %1163 = vmatpush.bf16.msra.mxu0 %v829
  %1164 = vmatpush.bf16.msra.mxu0 %v828
  %1165 = vmatpush.bf16.msra.mxu0 %v827
  %1166 = vmatpush.bf16.msra.mxu0 %v826
  %1167 = vmatmul.bf16.gmra.mxu0 %v407
  %v1168 = vpop.f32.mrf.mxu0
  %v1169 = vadd.f32 %v1120, %v1168
  %v1170 = vpop.f32.mrf.mxu0
  %v1171 = vadd.f32 %v1122, %v1170
  %1172 = vmatmul.bf16.gmra.mxu0 %v415
  %v1173 = vpop.f32.mrf.mxu0
  %v1174 = vadd.f32 %v1125, %v1173
  %v1175 = vpop.f32.mrf.mxu0
  %v1176 = vadd.f32 %v1127, %v1175
  %1177 = vmatmul.bf16.gmra.mxu0 %v423
  %v1178 = vpop.f32.mrf.mxu0
  %v1179 = vadd.f32 %v1130, %v1178
  %v1180 = vpop.f32.mrf.mxu0
  %v1181 = vadd.f32 %v1132, %v1180
  %1182 = vmatmul.bf16.gmra.mxu0 %v431
  %v1183 = vpop.f32.mrf.mxu0
  %v1184 = vadd.f32 %v1135, %v1183
  %v1185 = vpop.f32.mrf.mxu0
  %v1186 = vadd.f32 %v1137, %v1185
  %1187 = vmatmul.bf16.gmra.mxu0 %v439
  %v1188 = vpop.f32.mrf.mxu0
  %v1189 = vadd.f32 %v1140, %v1188
  %v1190 = vpop.f32.mrf.mxu0
  %v1191 = vadd.f32 %v1142, %v1190
  %1192 = vmatmul.bf16.gmra.mxu0 %v447
  %v1193 = vpop.f32.mrf.mxu0
  %v1194 = vadd.f32 %v1145, %v1193
  %v1195 = vpop.f32.mrf.mxu0
  %v1196 = vadd.f32 %v1147, %v1195
  %1197 = vmatmul.bf16.gmra.mxu0 %v455
  %v1198 = vpop.f32.mrf.mxu0
  %v1199 = vadd.f32 %v1150, %v1198
  %v1200 = vpop.f32.mrf.mxu0
  %v1201 = vadd.f32 %v1152, %v1200
  %1202 = vmatmul.bf16.gmra.mxu0 %v463
  %v1203 = vpop.f32.mrf.mxu0
  %v1204 = vadd.f32 %v1155, %v1203
  %v1205 = vpop.f32.mrf.mxu0
  %v1206 = vadd.f32 %v1157, %v1205
  %1207 = vdwg.mxu0
  %1208 = vmatpush.bf16.msra.mxu0 %v841
  %1209 = vmatpush.bf16.msra.mxu0 %v840
  %1210 = vmatpush.bf16.msra.mxu0 %v839
  %1211 = vmatpush.bf16.msra.mxu0 %v838
  %1212 = vmatpush.bf16.msra.mxu0 %v837
  %1213 = vmatpush.bf16.msra.mxu0 %v836
  %1214 = vmatpush.bf16.msra.mxu0 %v835
  %1215 = vmatpush.bf16.msra.mxu0 %v834
  %1216 = vmatmul.bf16.gmra.mxu0 %v408
  %v1217 = vpop.f32.mrf.mxu0
  %v1218 = vadd.f32 %v1169, %v1217
  %v1219 = vpop.f32.mrf.mxu0
  %v1220 = vadd.f32 %v1171, %v1219
  %1221 = vmatmul.bf16.gmra.mxu0 %v416
  %v1222 = vpop.f32.mrf.mxu0
  %v1223 = vadd.f32 %v1174, %v1222
  %v1224 = vpop.f32.mrf.mxu0
  %v1225 = vadd.f32 %v1176, %v1224
  %1226 = vmatmul.bf16.gmra.mxu0 %v424
  %v1227 = vpop.f32.mrf.mxu0
  %v1228 = vadd.f32 %v1179, %v1227
  %v1229 = vpop.f32.mrf.mxu0
  %v1230 = vadd.f32 %v1181, %v1229
  %1231 = vmatmul.bf16.gmra.mxu0 %v432
  %v1232 = vpop.f32.mrf.mxu0
  %v1233 = vadd.f32 %v1184, %v1232
  %v1234 = vpop.f32.mrf.mxu0
  %v1235 = vadd.f32 %v1186, %v1234
  %1236 = vmatmul.bf16.gmra.mxu0 %v440
  %v1237 = vpop.f32.mrf.mxu0
  %v1238 = vadd.f32 %v1189, %v1237
  %v1239 = vpop.f32.mrf.mxu0
  %v1240 = vadd.f32 %v1191, %v1239
  %1241 = vmatmul.bf16.gmra.mxu0 %v448
  %v1242 = vpop.f32.mrf.mxu0
  %v1243 = vadd.f32 %v1194, %v1242
  %v1244 = vpop.f32.mrf.mxu0
  %v1245 = vadd.f32 %v1196, %v1244
  %1246 = vmatmul.bf16.gmra.mxu0 %v456
  %v1247 = vpop.f32.mrf.mxu0
  %v1248 = vadd.f32 %v1199, %v1247
  %v1249 = vpop.f32.mrf.mxu0
  %v1250 = vadd.f32 %v1201, %v1249
  %1251 = vmatmul.bf16.gmra.mxu0 %v464
  %v1252 = vpop.f32.mrf.mxu0
  %v1253 = vadd.f32 %v1204, %v1252
  %v1254 = vpop.f32.mrf.mxu0
  %v1255 = vadd.f32 %v1206, %v1254
  %1256 = vdwg.mxu0
  %1257 = vmatpush.bf16.msra.mxu0 %v849
  %1258 = vmatpush.bf16.msra.mxu0 %v848
  %1259 = vmatpush.bf16.msra.mxu0 %v847
  %1260 = vmatpush.bf16.msra.mxu0 %v846
  %1261 = vmatpush.bf16.msra.mxu0 %v845
  %1262 = vmatpush.bf16.msra.mxu0 %v844
  %1263 = vmatpush.bf16.msra.mxu0 %v843
  %1264 = vmatpush.bf16.msra.mxu0 %v842
  %1265 = vmatmul.bf16.gmra.mxu0 %v409
  %v1266 = vpop.f32.mrf.mxu0
  %v1267 = vadd.f32 %v1218, %v1266
  %v1268 = vpop.f32.mrf.mxu0
  %v1269 = vadd.f32 %v1220, %v1268
  %1270 = vmatmul.bf16.gmra.mxu0 %v417
  %v1271 = vpop.f32.mrf.mxu0
  %v1272 = vadd.f32 %v1223, %v1271
  %v1273 = vpop.f32.mrf.mxu0
  %v1274 = vadd.f32 %v1225, %v1273
  %1275 = vmatmul.bf16.gmra.mxu0 %v425
  %v1276 = vpop.f32.mrf.mxu0
  %v1277 = vadd.f32 %v1228, %v1276
  %v1278 = vpop.f32.mrf.mxu0
  %v1279 = vadd.f32 %v1230, %v1278
  %1280 = vmatmul.bf16.gmra.mxu0 %v433
  %v1281 = vpop.f32.mrf.mxu0
  %v1282 = vadd.f32 %v1233, %v1281
  %v1283 = vpop.f32.mrf.mxu0
  %v1284 = vadd.f32 %v1235, %v1283
  %1285 = vmatmul.bf16.gmra.mxu0 %v441
  %v1286 = vpop.f32.mrf.mxu0
  %v1287 = vadd.f32 %v1238, %v1286
  %v1288 = vpop.f32.mrf.mxu0
  %v1289 = vadd.f32 %v1240, %v1288
  %1290 = vmatmul.bf16.gmra.mxu0 %v449
  %v1291 = vpop.f32.mrf.mxu0
  %v1292 = vadd.f32 %v1243, %v1291
  %v1293 = vpop.f32.mrf.mxu0
  %v1294 = vadd.f32 %v1245, %v1293
  %1295 = vmatmul.bf16.gmra.mxu0 %v457
  %v1296 = vpop.f32.mrf.mxu0
  %v1297 = vadd.f32 %v1248, %v1296
  %v1298 = vpop.f32.mrf.mxu0
  %v1299 = vadd.f32 %v1250, %v1298
  %1300 = vmatmul.bf16.gmra.mxu0 %v465
  %v1301 = vpop.f32.mrf.mxu0
  %v1302 = vadd.f32 %v1253, %v1301
  %v1303 = vpop.f32.mrf.mxu0
  %v1304 = vadd.f32 %v1255, %v1303
  %1305 = vdwg.mxu0
  %v1306 = vpack.c.bf16 %v1267, %v1267
  %v1307 = vpack.c.bf16 %v1269, %v1269
  %v1308 = vpack.c.bf16 %v1272, %v1272
  %v1309 = vpack.c.bf16 %v1274, %v1274
  %v1310 = vpack.c.bf16 %v1277, %v1277
  %v1311 = vpack.c.bf16 %v1279, %v1279
  %v1312 = vpack.c.bf16 %v1282, %v1282
  %v1313 = vpack.c.bf16 %v1284, %v1284
  %v1314 = vpack.c.bf16 %v1287, %v1287
  %v1315 = vpack.c.bf16 %v1289, %v1289
  %v1316 = vpack.c.bf16 %v1292, %v1292
  %v1317 = vpack.c.bf16 %v1294, %v1294
  %v1318 = vpack.c.bf16 %v1297, %v1297
  %v1319 = vpack.c.bf16 %v1299, %v1299
  %v1320 = vpack.c.bf16 %v1302, %v1302
  %v1321 = vpack.c.bf16 %v1304, %v1304
  %1322 = vst [vmem:[%s3] sm:$0xf] %v1306
  %1323 = vst [vmem:[%s3 + $0x4] sm:$0xf] %v1307
  %1324 = vst [vmem:[%s3 + $0x8] sm:$0xf] %v1308
  %1325 = vst [vmem:[%s3 + $0xc] sm:$0xf] %v1309
  %1326 = vst [vmem:[%s3 + $0x10] sm:$0xf] %v1310
  %1327 = vst [vmem:[%s3 + $0x14] sm:$0xf] %v1311
  %1328 = vst [vmem:[%s3 + $0x18] sm:$0xf] %v1312
  %1329 = vst [vmem:[%s3 + $0x1c] sm:$0xf] %v1313
  %1330 = vst [vmem:[%s3 + $0x20] sm:$0xf] %v1314
  %1331 = vst [vmem:[%s3 + $0x24] sm:$0xf] %v1315
  %1332 = vst [vmem:[%s3 + $0x28] sm:$0xf] %v1316
  %1333 = vst [vmem:[%s3 + $0x2c] sm:$0xf] %v1317
  %1334 = vst [vmem:[%s3 + $0x30] sm:$0xf] %v1318
  %1335 = vst [vmem:[%s3 + $0x34] sm:$0xf] %v1319
  %1336 = vst [vmem:[%s3 + $0x38] sm:$0xf] %v1320
  %1337 = vst [vmem:[%s3 + $0x3c] sm:$0xf] %v1321
  // Predicated region
  $region14: #{patch_discriminator.9} parent=0 // pred_check
    _
  $region15: #{patch_discriminator.9} parent=0 // pred_check_branch
    %1339 = sbr.rel (0) target = $region17
  $region16: #{patch_discriminator.9} parent=0 // pred_region
    _
  $region17: #{patch_discriminator.9} parent=0 // pred_fallthru
    _
  // Predicated region
  $region18: #{patch_discriminator.9} parent=0 // pred_check
    _
  $region19: #{patch_discriminator.9} parent=0 // pred_check_branch
    %1341 = sbr.rel (0) target = $region21
  $region20: #{patch_discriminator.9} parent=0 // pred_region
    _
  $region21: #{patch_discriminator.9} parent=0 // pred_fallthru
    _

// kernel: patch_discriminator.12
$region0: #{patch_discriminator.12}
  #allocation0 [shape = 'u32[]', space=smem, size = 0x4, offset = 0x4, fixed_abs, tag = 'smem constant byte address 0x4 - core index']
  #allocation1 [shape = 'u32[72,128]{1,0:T(1,128)}', space=vmem, size = 0x9000, scoped, tag = 'internal scratch']
  %s0 = inlined_call_operand.vmem [shape: bf16[2,16,256], index: 0, kind: input, shape index: {}]
  %s1 = inlined_call_operand.vmem [shape: bf16[2,16,256], index: 1, kind: output, shape index: {}]
  %s2 = sld [smem:[#allocation0]]
  $region115: #{patch_discriminator.12} parent=0
    _
  %s4 = ssub.s32 1, %s2
  %s5 = scalar_select 0, %s4, %s2
  $region1: #{patch_discriminator.12} parent=0
    #allocation2 [shape = 'u8[8192]{0}', space=vmem, size = 0x2000, scoped, tag = 'input window, operand 0']
    #allocation3 [shape = 'u8[8192]{0}', space=vmem, size = 0x2000, scoped, tag = 'output window, operand 0']
    loop: start=0, step=1, limit=6
    $region2: #{patch_discriminator.12} parent=1 // loop_pre_header
      _
    $region3: #{patch_discriminator.12} parent=1 // loop_header
      %s7 = sphi 0, %s11
      %p8 = scmp.ge.s32.totalorder %s7, 6
      %s14 = sphi 0, %s26
      %s15 = sphi 0, %s22
      %s16 = sphi 0, %s14
      %s17 = sphi 0, %s15
      %s18 = sphi 0, %s16
      %s19 = sphi 0, %s17
      %s31 = sphi 0, %s33
      %s34 = sphi 0, %s31
      %s35 = sphi 0, %s34
      %s51 = sphi 0, %s35
      %s59 = sphi 0, %s61
      %s62 = sphi 0, %s59
      %s63 = sphi 0, %s62
      %s79 = sphi 0, %s63
    $region4: #{patch_discriminator.12} parent=1 // loop_header_branch
      %10 = sbr.rel (%p8) target = $region8
    $region5: #{patch_discriminator.12} parent=1 // loop_body
      %s12 = ssub.s32 %s7, 1
      %s13 = ssub.s32 %s7, 2
      %s20 = sadd.s32 1, %s15
      %p21 = scmp.ge.s32.totalorder %s20, 2
      %s22 = scalar_select %p21, 0, %s20
      %s23 = sadd.s32 1, %s14
      %s24 = scalar_select %p21, %s23, %s14
      %p25 = scmp.ge.s32.totalorder %s24, 2
      %s26 = scalar_select %p25, 0, %s24
      %s27 = ssub.s32 %s14, %s26
      %s28 = ssub.s32 %s15, %s22
      %s29 = sor.u32 %s27, %s28
      %p30 = scmp.eq.s32.totalorder %s29, 0
      %s32 = sadd.s32 %s31, 1
      %s33 = scalar_select %p30, %s31, %s32
      %p36 = pneg %p30
      %p37 = scmp.eq.s32.totalorder %s7, 3
      %p38 = por %p36, %p37
      %p39 = scmp.ne.s32.totalorder %s31, %s34
      %p40 = scmp.eq.s32.totalorder %s7, 0
      %p41 = por %p39, %p40
      %p42 = scmp.ne.s32.totalorder %s31, %s34
      %p43 = scmp.eq.s32.totalorder %s12, 3
      %p44 = por %p42, %p43
      %p45 = scmp.ne.s32.totalorder %s34, %s35
      %p46 = scmp.eq.s32.totalorder %s12, 0
      %p47 = por %p45, %p46
      %p48 = scmp.ne.s32.totalorder %s34, %s35
      %p49 = scmp.eq.s32.totalorder %s13, 3
      %p50 = por %p48, %p49
      %p52 = scmp.ne.s32.totalorder %s35, %s51
      %p53 = scmp.eq.s32.totalorder %s13, 0
      %p54 = por %p52, %p53
      %s55 = ssub.s32 %s14, %s26
      %s56 = ssub.s32 %s15, %s22
      %s57 = sor.u32 %s55, %s56
      %p58 = scmp.eq.s32.totalorder %s57, 0
      %s60 = sadd.s32 %s59, 1
      %s61 = scalar_select %p58, %s59, %s60
      %p64 = pneg %p58
      %p65 = scmp.eq.s32.totalorder %s7, 3
      %p66 = por %p64, %p65
      %p67 = scmp.ne.s32.totalorder %s59, %s62
      %p68 = scmp.eq.s32.totalorder %s7, 0
      %p69 = por %p67, %p68
      %p70 = scmp.ne.s32.totalorder %s59, %s62
      %p71 = scmp.eq.s32.totalorder %s12, 3
      %p72 = por %p70, %p71
      %p73 = scmp.ne.s32.totalorder %s62, %s63
      %p74 = scmp.eq.s32.totalorder %s12, 0
      %p75 = por %p73, %p74
      %p76 = scmp.ne.s32.totalorder %s62, %s63
      %p77 = scmp.eq.s32.totalorder %s13, 3
      %p78 = por %p76, %p77
      %p80 = scmp.ne.s32.totalorder %s63, %s79
      %p81 = scmp.eq.s32.totalorder %s13, 0
      %p82 = por %p80, %p81
      %p83 = scmp.le.s32.totalorder 1, %s7
      %p84 = scmp.lt.s32.totalorder %s7, 5
      %p85 = pnand %p83, %p84
      %p86 = pneg %p85
      // Predicated region
      $region9: #{patch_discriminator.12} parent=5 // pred_check
        _
      $region10: #{patch_discriminator.12} parent=5 // pred_check_branch
        %88 = sbr.rel (%p85) target = $region12
      $region11: #{patch_discriminator.12} parent=5 // pred_region
        %s89 = ssub.s32 %s7, 1
      $region12: #{patch_discriminator.12} parent=5 // pred_fallthru
        _
      %p90 = scmp.lt.s32.totalorder %s7, 4
      // Predicated region
      $region13: #{patch_discriminator.12} parent=5 // pred_check
        %p91 = pneg %p90
      $region14: #{patch_discriminator.12} parent=5 // pred_check_branch
        %93 = sbr.rel (%p91) target = $region16
      $region15: #{patch_discriminator.12} parent=5 // pred_region
        // Predicated region
        $region17: #{patch_discriminator.12} parent=15 // pred_check
          %p94 = pneg %p41
        $region18: #{patch_discriminator.12} parent=15 // pred_check_branch
          %96 = sbr.rel (%p94) target = $region20
        $region19: #{patch_discriminator.12} parent=15 // pred_region
          %s97 = sand.u32 %s31, 1
          %s98 = sand.u32 %s31, 1
          %s99 = smul.addr %s98, 8
          %s100 = scalar_lea.vmem [#allocation2], %s99
          %s101 = smul.addr %s14, 4
          %s102 = sadd.s32 %s15, %s101
          %s103 = smul.addr %s102, 4
          %s104 = scalar_lea.vmem %s0, %s103
          // Predicated region
          $region21: #{patch_discriminator.12} parent=19 // pred_check
            _
          $region22: #{patch_discriminator.12} parent=19 // pred_check_branch
            %106 = sbr.rel (0) target = $region24
          $region23: #{patch_discriminator.12} parent=19 // pred_region
            // Predicated region
            $region25: #{patch_discriminator.12} parent=23 // pred_check
              _
            $region26: #{patch_discriminator.12} parent=23 // pred_check_branch
              %108 = sbr.rel target = $region28
            $region27: #{patch_discriminator.12} parent=23 // pred_region
              // Predicated region
              $region40: #{patch_discriminator.12} parent=27 // pred_check
                _
              $region41: #{patch_discriminator.12} parent=27 // pred_check_branch
                %126 = sbr.rel (0) target = $region43
              $region42: #{patch_discriminator.12} parent=27 // pred_region
                loop: start=0, step=1, limit=1
                $region44: #{patch_discriminator.12} parent=42 // loop_pre_header
                  _
                $region45: #{patch_discriminator.12} parent=42 // loop_header
                  %s128 = sphi 0, %s132
                  %p129 = scmp.ge.s32.totalorder %s128, 1
                  %s133 = sphi %s104, %s104
                  %s134 = sphi %s100, %s100
                $region46: #{patch_discriminator.12} parent=42 // loop_header_branch
                  %131 = sbr.rel (%p129) target = $region50
                $region47: #{patch_discriminator.12} parent=42 // loop_body
                  _
                $region48: #{patch_discriminator.12} parent=42 // loop_footer
                  %s132 = sadd.s32 1, %s128
                $region49: #{patch_discriminator.12} parent=42 // loop_footer_branch
                  %127 = sbr.rel target = $region45
                $region50: #{patch_discriminator.12} parent=42 // loop_exit
                  _
                %s136 = ssub.s32 16, 1
                loop: start=0, step=1, limit=1
                $region51: #{patch_discriminator.12} parent=42 // loop_pre_header
                  _
                $region52: #{patch_discriminator.12} parent=42 // loop_header
                  %s138 = sphi 0, %s142
                  %p139 = scmp.ge.s32.totalorder %s138, 1
                  %s143 = sphi %s104, %s104
                  %s144 = sphi %s100, %s100
                $region53: #{patch_discriminator.12} parent=42 // loop_header_branch
                  %141 = sbr.rel (%p139) target = $region57
                $region54: #{patch_discriminator.12} parent=42 // loop_body
                  %v145 = vld [vmem:[%s143] sm:%s136]
                  %146 = vst [vmem:[%s144] sm:%s136] %v145
                  %v147 = vld [vmem:[%s143 + $0x8] sm:%s136]
                  %148 = vst [vmem:[%s144 + $0x4] sm:%s136] %v147
                $region55: #{patch_discriminator.12} parent=42 // loop_footer
                  %s142 = sadd.s32 1, %s138
                $region56: #{patch_discriminator.12} parent=42 // loop_footer_branch
                  %137 = sbr.rel target = $region52
                $region57: #{patch_discriminator.12} parent=42 // loop_exit
                  _
              $region43: #{patch_discriminator.12} parent=27 // pred_fallthru
                _
            $region28: #{patch_discriminator.12} parent=23 // pred_fallthru
              _
            // Predicated region
            $region29: #{patch_discriminator.12} parent=23 // pred_check
              _
            $region30: #{patch_discriminator.12} parent=23 // pred_check_branch
              %110 = sbr.rel (0) target = $region32
            $region31: #{patch_discriminator.12} parent=23 // pred_region
              %s112 = ssub.s32 16, 1
              loop: start=0, step=1, limit=1
              $region33: #{patch_discriminator.12} parent=31 // loop_pre_header
                _
              $region34: #{patch_discriminator.12} parent=31 // loop_header
                %s114 = sphi 0, %s118
                %p115 = scmp.ge.s32.totalorder %s114, 1
                %s119 = sphi %s104, %s104
                %s120 = sphi %s100, %s100
              $region35: #{patch_discriminator.12} parent=31 // loop_header_branch
                %117 = sbr.rel (%p115) target = $region39
              $region36: #{patch_discriminator.12} parent=31 // loop_body
                %v121 = vld [vmem:[%s119] sm:%s112]
                %122 = vst [vmem:[%s120] sm:%s112] %v121
                %v123 = vld [vmem:[%s119 + $0x8] sm:%s112]
                %124 = vst [vmem:[%s120 + $0x4] sm:%s112] %v123
              $region37: #{patch_discriminator.12} parent=31 // loop_footer
                %s118 = sadd.s32 1, %s114
              $region38: #{patch_discriminator.12} parent=31 // loop_footer_branch
                %113 = sbr.rel target = $region34
              $region39: #{patch_discriminator.12} parent=31 // loop_exit
                _
            $region32: #{patch_discriminator.12} parent=23 // pred_fallthru
              _
          $region24: #{patch_discriminator.12} parent=19 // pred_fallthru
            _
          %149 = vnop
        $region20: #{patch_discriminator.12} parent=15 // pred_fallthru
          _
      $region16: #{patch_discriminator.12} parent=5 // pred_fallthru
        _
      %p150 = scmp.le.s32.totalorder 1, %s7
      %p151 = scmp.lt.s32.totalorder %s7, 5
      %p152 = pnand %p150, %p151
      %p153 = pneg %p152
      // Predicated region
      $region58: #{patch_discriminator.12} parent=5 // pred_check
        _
      $region59: #{patch_discriminator.12} parent=5 // pred_check_branch
        %155 = sbr.rel (%p152) target = $region61
      $region60: #{patch_discriminator.12} parent=5 // pred_region
        %s156 = ssub.s32 %s7, 1
        %s157 = sand.u32 %s34, 1
        %s158 = sand.u32 %s34, 1
        %s159 = smul.addr %s158, 8
        %s160 = scalar_lea.vmem [#allocation2], %s159
        // Predicated region
        $region62: #{patch_discriminator.12} parent=60 // pred_check
          %p161 = pneg %p47
        $region63: #{patch_discriminator.12} parent=60 // pred_check_branch
          %163 = sbr.rel (%p161) target = $region65
        $region64: #{patch_discriminator.12} parent=60 // pred_region
          _
        $region65: #{patch_discriminator.12} parent=60 // pred_fallthru
          _
        %s164 = sand.u32 %s34, 1
        %s165 = sand.u32 %s34, 1
        %s166 = smul.addr %s165, 8
        %s167 = scalar_lea.vmem [#allocation2], %s166
        %p168 = pneg %p47
        %p169 = pneg %p44
        %p170 = pneg %p75
        %p171 = pneg %p72
        %s172 = sand.u32 %s62, 1
        %s173 = sand.u32 %s62, 1
        %s174 = smul.addr %s173, 8
        %s175 = scalar_lea.vmem [#allocation3], %s174
        %v176 = vld [vmem:[%s160] sm:$0xf]
        %v177 = vld [vmem:[%s160 + $0x4] sm:$0xf]
        %v178 = vunpack.c.l.bf16 %v176
        %v179 = vunpack.c.l.bf16 %v177
        %v180 = vadd.f32 %v178, %v179
        %v181 = vrot.slane %v180, 4
        %v182 = vadd.f32 %v180, %v181
        %v183 = vrot.slane %v182, 2
        %v184 = vadd.f32 %v182, %v183
        %v185 = vrot.slane %v184, 1
        %v186 = vadd.f32 %v184, %v185
        %v187 = vmul.f32 %v186, 0.0625
        %v188 = vmul.f32 %v178, %v178
        %v189 = vmul.f32 %v179, %v179
        %v190 = vadd.f32 %v188, %v189
        %v191 = vrot.slane %v190, 4
        %v192 = vadd.f32 %v190, %v191
        %v193 = vrot.slane %v192, 2
        %v194 = vadd.f32 %v192, %v193
        %v195 = vrot.slane %v194, 1
        %v196 = vadd.f32 %v194, %v195
        %v197 = vmul.f32 %v196, 0.0625
        %v198 = vmul.f32 %v187, %v187
        %v199 = vsub.f32 %v197, %v198
        %v200 = vsub.f32 %v178, %v187
        %v201 = vsub.f32 %v179, %v187
        %v202 = vadd.f32 %v199, 1e-05
        %v203 = vrsqrt.pop %v202
        %v204 = vmul.f32 %v203, %v202
        %v205 = vmul.f32 %v204, %v203
        %v206 = vmul.f32 0.5, %v205
        %v207 = vsub.f32 1.5, %v206
        %v208 = vmul.f32 %v203, %v207
        %vm209 = vweird.f32 %v202
        %vm210 = vweird.f32 %v203
        %vm211 = vmor %vm209, %vm210
        %v212 = vsel %vm211, %v203, %v208
        %v213 = vmul.f32 %v200, %v212
        %v214 = vmul.f32 %v201, %v212
        %vm215 = vcmp.ge.f32.partialorder %v213, 0.0
        %vm216 = vcmp.ge.f32.partialorder %v214, 0.0
        %v217 = vmul.f32 %v213, 0.2
        %v218 = vmul.f32 %v214, 0.2
        %v219 = vsel %vm215, %v213, %v217
        %v220 = vsel %vm216, %v214, %v218
        %v221 = vpack.c.bf16 %v219, %v219
        %v222 = vpack.c.bf16 %v220, %v220
        %223 = vst [vmem:[%s175] sm:$0xf] %v221
        %224 = vst [vmem:[%s175 + $0x4] sm:$0xf] %v222
        %s225 = sand.u32 %s62, 1
        %s226 = sand.u32 %s62, 1
        %s227 = smul.addr %s226, 8
        %s228 = scalar_lea.vmem [#allocation3], %s227
        // Predicated region
        $region66: #{patch_discriminator.12} parent=60 // pred_check
          %p229 = pneg %p72
        $region67: #{patch_discriminator.12} parent=60 // pred_check_branch
          %231 = sbr.rel (%p229) target = $region69
        $region68: #{patch_discriminator.12} parent=60 // pred_region
          %s232 = smul.addr %s16, 4
          %s233 = sadd.s32 %s17, %s232
          %s234 = smul.addr %s233, 4
          %s235 = scalar_lea.vmem %s1, %s234
          // Predicated region
          $region70: #{patch_discriminator.12} parent=68 // pred_check
            _
          $region71: #{patch_discriminator.12} parent=68 // pred_check_branch
            %237 = sbr.rel (0) target = $region73
          $region72: #{patch_discriminator.12} parent=68 // pred_region
            // Predicated region
            $region74: #{patch_discriminator.12} parent=72 // pred_check
              _
            $region75: #{patch_discriminator.12} parent=72 // pred_check_branch
              %239 = sbr.rel target = $region77
            $region76: #{patch_discriminator.12} parent=72 // pred_region
              // Predicated region
              $region89: #{patch_discriminator.12} parent=76 // pred_check
                _
              $region90: #{patch_discriminator.12} parent=76 // pred_check_branch
                %257 = sbr.rel (0) target = $region92
              $region91: #{patch_discriminator.12} parent=76 // pred_region
                loop: start=0, step=1, limit=1
                $region93: #{patch_discriminator.12} parent=91 // loop_pre_header
                  _
                $region94: #{patch_discriminator.12} parent=91 // loop_header
                  %s259 = sphi 0, %s263
                  %p260 = scmp.ge.s32.totalorder %s259, 1
                  %s264 = sphi %s228, %s228
                  %s265 = sphi %s235, %s235
                $region95: #{patch_discriminator.12} parent=91 // loop_header_branch
                  %262 = sbr.rel (%p260) target = $region99
                $region96: #{patch_discriminator.12} parent=91 // loop_body
                  _
                $region97: #{patch_discriminator.12} parent=91 // loop_footer
                  %s263 = sadd.s32 1, %s259
                $region98: #{patch_discriminator.12} parent=91 // loop_footer_branch
                  %258 = sbr.rel target = $region94
                $region99: #{patch_discriminator.12} parent=91 // loop_exit
                  _
                %s267 = ssub.s32 16, 1
                loop: start=0, step=1, limit=1
                $region100: #{patch_discriminator.12} parent=91 // loop_pre_header
                  _
                $region101: #{patch_discriminator.12} parent=91 // loop_header
                  %s269 = sphi 0, %s273
                  %p270 = scmp.ge.s32.totalorder %s269, 1
                  %s274 = sphi %s228, %s228
                  %s275 = sphi %s235, %s235
                $region102: #{patch_discriminator.12} parent=91 // loop_header_branch
                  %272 = sbr.rel (%p270) target = $region106
                $region103: #{patch_discriminator.12} parent=91 // loop_body
                  %v276 = vld [vmem:[%s274] sm:%s267]
                  %277 = vst [vmem:[%s275] sm:%s267] %v276
                  %v278 = vld [vmem:[%s274 + $0x4] sm:%s267]
                  %279 = vst [vmem:[%s275 + $0x8] sm:%s267] %v278
                $region104: #{patch_discriminator.12} parent=91 // loop_footer
                  %s273 = sadd.s32 1, %s269
                $region105: #{patch_discriminator.12} parent=91 // loop_footer_branch
                  %268 = sbr.rel target = $region101
                $region106: #{patch_discriminator.12} parent=91 // loop_exit
                  _
              $region92: #{patch_discriminator.12} parent=76 // pred_fallthru
                _
            $region77: #{patch_discriminator.12} parent=72 // pred_fallthru
              _
            // Predicated region
            $region78: #{patch_discriminator.12} parent=72 // pred_check
              _
            $region79: #{patch_discriminator.12} parent=72 // pred_check_branch
              %241 = sbr.rel (0) target = $region81
            $region80: #{patch_discriminator.12} parent=72 // pred_region
              %s243 = ssub.s32 16, 1
              loop: start=0, step=1, limit=1
              $region82: #{patch_discriminator.12} parent=80 // loop_pre_header
                _
              $region83: #{patch_discriminator.12} parent=80 // loop_header
                %s245 = sphi 0, %s249
                %p246 = scmp.ge.s32.totalorder %s245, 1
                %s250 = sphi %s228, %s228
                %s251 = sphi %s235, %s235
              $region84: #{patch_discriminator.12} parent=80 // loop_header_branch
                %248 = sbr.rel (%p246) target = $region88
              $region85: #{patch_discriminator.12} parent=80 // loop_body
                %v252 = vld [vmem:[%s250] sm:%s243]
                %253 = vst [vmem:[%s251] sm:%s243] %v252
                %v254 = vld [vmem:[%s250 + $0x4] sm:%s243]
                %255 = vst [vmem:[%s251 + $0x8] sm:%s243] %v254
              $region86: #{patch_discriminator.12} parent=80 // loop_footer
                %s249 = sadd.s32 1, %s245
              $region87: #{patch_discriminator.12} parent=80 // loop_footer_branch
                %244 = sbr.rel target = $region83
              $region88: #{patch_discriminator.12} parent=80 // loop_exit
                _
            $region81: #{patch_discriminator.12} parent=72 // pred_fallthru
              _
          $region73: #{patch_discriminator.12} parent=68 // pred_fallthru
            _
          %280 = vnop
        $region69: #{patch_discriminator.12} parent=60 // pred_fallthru
          _
      $region61: #{patch_discriminator.12} parent=5 // pred_fallthru
        _
      %p281 = scmp.le.s32.totalorder 2, %s7
      // Predicated region
      $region107: #{patch_discriminator.12} parent=5 // pred_check
        %p282 = pneg %p281
      $region108: #{patch_discriminator.12} parent=5 // pred_check_branch
        %284 = sbr.rel (%p282) target = $region110
      $region109: #{patch_discriminator.12} parent=5 // pred_region
        %s285 = ssub.s32 %s7, 2
        // Predicated region
        $region111: #{patch_discriminator.12} parent=109 // pred_check
          %p286 = pneg %p78
        $region112: #{patch_discriminator.12} parent=109 // pred_check_branch
          %288 = sbr.rel (%p286) target = $region114
        $region113: #{patch_discriminator.12} parent=109 // pred_region
          %s289 = sand.u32 %s63, 1
          %s290 = sand.u32 %s63, 1
          %s291 = smul.addr %s290, 8
          %s292 = scalar_lea.vmem [#allocation3], %s291
        $region114: #{patch_discriminator.12} parent=109 // pred_fallthru
          _
      $region110: #{patch_discriminator.12} parent=5 // pred_fallthru
        _
    $region6: #{patch_discriminator.12} parent=1 // loop_footer
      %s11 = sadd.s32 1, %s7
    $region7: #{patch_discriminator.12} parent=1 // loop_footer_branch
      %6 = sbr.rel target = $region3
    $region8: #{patch_discriminator.12} parent=1 // loop_exit
      _

// kernel: patch_discriminator.11
$region0: #{patch_discriminator.11}
  #allocation0 [shape = 'u32[]', space=smem, size = 0x4, offset = 0x4, fixed_abs, tag = 'smem constant byte address 0x4 - core index']
  #allocation1 [shape = 'u32[72,128]{1,0:T(1,128)}', space=vmem, size = 0x9000, scoped, tag = 'internal scratch']
  #allocation2 [shape = 'f32[32,256]{1,0:T(8,128)}', space=vmem, size = 0x8000, scoped, tag = 'scratch operand']
  %s0 = inlined_call_operand.vmem [shape: bf16[32,2048], index: 0, kind: input, shape index: {}]
  %s1 = inlined_call_operand.vmem [shape: bf16[2048,256], index: 1, kind: input, shape index: {}]
  %s2 = inlined_call_operand.vmem [shape: f32[1,256], index: 2, kind: input, shape index: {}]
  %s3 = inlined_call_operand.vmem [shape: bf16[32,256], index: 3, kind: output, shape index: {}]
  %s4 = sld [smem:[#allocation0]]
  $region80: #{patch_discriminator.11} parent=0
    _
  %s6 = ssub.s32 1, %s4
  %s7 = scalar_select 0, %s6, %s4
  $region1: #{patch_discriminator.11} parent=0
    #allocation3 [shape = 'u8[131072]{0}', space=vmem, size = 0x20000, scoped, tag = 'input window, operand 0']
    loop: start=0, step=1, limit=4
    $region2: #{patch_discriminator.11} parent=1 // loop_pre_header
      _
    $region3: #{patch_discriminator.11} parent=1 // loop_header
      %s9 = sphi 0, %s13
      %p10 = scmp.ge.s32.totalorder %s9, 4
      %s16 = sphi 0, %s35
      %s17 = sphi 0, %s31
      %s18 = sphi 0, %s27
      %s19 = sphi 0, %s16
      %s20 = sphi 0, %s17
      %s21 = sphi 0, %s18
      %s22 = sphi 0, %s19
      %s23 = sphi 0, %s20
      %s24 = sphi 0, %s21
      %s40 = sphi 0, %s42
      %s43 = sphi 0, %s40
      %s44 = sphi 0, %s43
      %s60 = sphi 0, %s44
      %s68 = sphi 0, %s70
      %s71 = sphi 0, %s68
      %s72 = sphi 0, %s71
      %s88 = sphi 0, %s72
      %s94 = sphi 0, %s96
      %s97 = sphi 0, %s94
      %s98 = sphi 0, %s97
      %s114 = sphi 0, %s98
      %s122 = sphi 0, %s124
      %s125 = sphi 0, %s122
      %s126 = sphi 0, %s125
      %s142 = sphi 0, %s126
    $region4: #{patch_discriminator.11} parent=1 // loop_header_branch
      %12 = sbr.rel (%p10) target = $region8
    $region5: #{patch_discriminator.11} parent=1 // loop_body
      %s14 = ssub.s32 %s9, 1
      %s15 = ssub.s32 %s9, 2
      %s25 = sadd.s32 1, %s18
      %p26 = scmp.ge.s32.totalorder %s25, 2
      %s27 = scalar_select %p26, 0, %s25
      %s28 = sadd.s32 1, %s17
      %s29 = scalar_select %p26, %s28, %s17
      %p30 = scmp.ge.s32.totalorder %s29, 1
      %s31 = scalar_select %p30, 0, %s29
      %s32 = sadd.s32 1, %s16
      %s33 = scalar_select %p30, %s32, %s16
      %p34 = scmp.ge.s32.totalorder %s33, 1
      %s35 = scalar_select %p34, 0, %s33
      %s36 = ssub.s32 %s16, %s35
      %s37 = ssub.s32 %s18, %s27
      %s38 = sor.u32 %s36, %s37
      %p39 = scmp.eq.s32.totalorder %s38, 0
      %s41 = sadd.s32 %s40, 1
      %s42 = scalar_select %p39, %s40, %s41
      %p45 = pneg %p39
      %p46 = scmp.eq.s32.totalorder %s9, 1
      %p47 = por %p45, %p46
      %p48 = scmp.ne.s32.totalorder %s40, %s43
      %p49 = scmp.eq.s32.totalorder %s9, 0
      %p50 = por %p48, %p49
      %p51 = scmp.ne.s32.totalorder %s40, %s43
      %p52 = scmp.eq.s32.totalorder %s14, 1
      %p53 = por %p51, %p52
      %p54 = scmp.ne.s32.totalorder %s43, %s44
      %p55 = scmp.eq.s32.totalorder %s14, 0
      %p56 = por %p54, %p55
      %p57 = scmp.ne.s32.totalorder %s43, %s44
      %p58 = scmp.eq.s32.totalorder %s15, 1
      %p59 = por %p57, %p58
      %p61 = scmp.ne.s32.totalorder %s44, %s60
      %p62 = scmp.eq.s32.totalorder %s15, 0
      %p63 = por %p61, %p62
      %s64 = ssub.s32 %s18, %s27
      %s65 = ssub.s32 %s17, %s31
      %s66 = sor.u32 %s64, %s65
      %p67 = scmp.eq.s32.totalorder %s66, 0
      %s69 = sadd.s32 %s68, 1
      %s70 = scalar_select %p67, %s68, %s69
      %p73 = pneg %p67
      %p74 = scmp.eq.s32.totalorder %s9, 1
      %p75 = por %p73, %p74
      %p76 = scmp.ne.s32.totalorder %s68, %s71
      %p77 = scmp.eq.s32.totalorder %s9, 0
      %p78 = por %p76, %p77
      %p79 = scmp.ne.s32.totalorder %s68, %s71
      %p80 = scmp.eq.s32.totalorder %s14, 1
      %p81 = por %p79, %p80
      %p82 = scmp.ne.s32.totalorder %s71, %s72
      %p83 = scmp.eq.s32.totalorder %s14, 0
      %p84 = por %p82, %p83
      %p85 = scmp.ne.s32.totalorder %s71, %s72
      %p86 = scmp.eq.s32.totalorder %s15, 1
      %p87 = por %p85, %p86
      %p89 = scmp.ne.s32.totalorder %s72, %s88
      %p90 = scmp.eq.s32.totalorder %s15, 0
      %p91 = por %p89, %p90
      %s92 = ssub.s32 %s17, %s31
      %p93 = scmp.eq.s32.totalorder %s92, 0
      %s95 = sadd.s32 %s94, 1
      %s96 = scalar_select %p93, %s94, %s95
      %p99 = pneg %p93
      %p100 = scmp.eq.s32.totalorder %s9, 1
      %p101 = por %p99, %p100
      %p102 = scmp.ne.s32.totalorder %s94, %s97
      %p103 = scmp.eq.s32.totalorder %s9, 0
      %p104 = por %p102, %p103
      %p105 = scmp.ne.s32.totalorder %s94, %s97
      %p106 = scmp.eq.s32.totalorder %s14, 1
      %p107 = por %p105, %p106
      %p108 = scmp.ne.s32.totalorder %s97, %s98
      %p109 = scmp.eq.s32.totalorder %s14, 0
      %p110 = por %p108, %p109
      %p111 = scmp.ne.s32.totalorder %s97, %s98
      %p112 = scmp.eq.s32.totalorder %s15, 1
      %p113 = por %p111, %p112
      %p115 = scmp.ne.s32.totalorder %s98, %s114
      %p116 = scmp.eq.s32.totalorder %s15, 0
      %p117 = por %p115, %p116
      %s118 = ssub.s32 %s16, %s35
      %s119 = ssub.s32 %s17, %s31
      %s120 = sor.u32 %s118, %s119
      %p121 = scmp.eq.s32.totalorder %s120, 0
      %s123 = sadd.s32 %s122, 1
      %s124 = scalar_select %p121, %s122, %s123
      %p127 = pneg %p121
      %p128 = scmp.eq.s32.totalorder %s9, 1
      %p129 = por %p127, %p128
      %p130 = scmp.ne.s32.totalorder %s122, %s125
      %p131 = scmp.eq.s32.totalorder %s9, 0
      %p132 = por %p130, %p131
      %p133 = scmp.ne.s32.totalorder %s122, %s125
      %p134 = scmp.eq.s32.totalorder %s14, 1
      %p135 = por %p133, %p134
      %p136 = scmp.ne.s32.totalorder %s125, %s126
      %p137 = scmp.eq.s32.totalorder %s14, 0
      %p138 = por %p136, %p137
      %p139 = scmp.ne.s32.totalorder %s125, %s126
      %p140 = scmp.eq.s32.totalorder %s15, 1
      %p141 = por %p139, %p140
      %p143 = scmp.ne.s32.totalorder %s126, %s142
      %p144 = scmp.eq.s32.totalorder %s15, 0
      %p145 = por %p143, %p144
      %p146 = scmp.le.s32.totalorder 1, %s9
      %p147 = scmp.lt.s32.totalorder %s9, 3
      %p148 = pnand %p146, %p147
      %p149 = pneg %p148
      // Predicated region
      $region9: #{patch_discriminator.11} parent=5 // pred_check
        _
      $region10: #{patch_discriminator.11} parent=5 // pred_check_branch
        %151 = sbr.rel (%p148) target = $region12
      $region11: #{patch_discriminator.11} parent=5 // pred_region
        %s152 = ssub.s32 %s9, 1
        // Predicated region
        $region13: #{patch_discriminator.11} parent=11 // pred_check
          %p153 = pneg %p110
        $region14: #{patch_discriminator.11} parent=11 // pred_check_branch
          %155 = sbr.rel (%p153) target = $region16
        $region15: #{patch_discriminator.11} parent=11 // pred_region
          %s156 = smul.u32 2, %s20
          %p157 = scmp.lt.s32.totalorder %s156, 1
          %s158 = scalar_select %p157, %s156, 1
          %s159 = scalar_lea.vmem %s2, %s158
          %s160 = smul.u32 2, %s20
        $region16: #{patch_discriminator.11} parent=11 // pred_fallthru
          _
      $region12: #{patch_discriminator.11} parent=5 // pred_fallthru
        _
      %p161 = scmp.lt.s32.totalorder %s9, 2
      // Predicated region
      $region17: #{patch_discriminator.11} parent=5 // pred_check
        %p162 = pneg %p161
      $region18: #{patch_discriminator.11} parent=5 // pred_check_branch
        %164 = sbr.rel (%p162) target = $region20
      $region19: #{patch_discriminator.11} parent=5 // pred_region
        // Predicated region
        $region21: #{patch_discriminator.11} parent=19 // pred_check
          %p165 = pneg %p50
        $region22: #{patch_discriminator.11} parent=19 // pred_check_branch
          %167 = sbr.rel (%p165) target = $region24
        $region23: #{patch_discriminator.11} parent=19 // pred_region
          %s168 = sand.u32 %s40, 1
          %s169 = sand.u32 %s40, 1
          %s170 = smul.addr %s169, 128
          %s171 = scalar_lea.vmem [#allocation3], %s170
          %s172 = smul.u32 4, %s16
          %s173 = smul.u32 8, %s18
          %s174 = smul.addr %s172, 16
          %s175 = sadd.s32 %s173, %s174
          %s176 = smul.addr %s175, 4
          %s177 = scalar_lea.vmem %s0, %s176
          // Predicated region
          $region25: #{patch_discriminator.11} parent=23 // pred_check
            _
          $region26: #{patch_discriminator.11} parent=23 // pred_check_branch
            %179 = sbr.rel (0) target = $region28
          $region27: #{patch_discriminator.11} parent=23 // pred_region
            // Predicated region
            $region29: #{patch_discriminator.11} parent=27 // pred_check
              _
            $region30: #{patch_discriminator.11} parent=27 // pred_check_branch
              %181 = sbr.rel (0) target = $region32
            $region31: #{patch_discriminator.11} parent=27 // pred_region
              loop: start=0, step=1, limit=1
              $region33: #{patch_discriminator.11} parent=31 // loop_pre_header
                _
              $region34: #{patch_discriminator.11} parent=31 // loop_header
                %s183 = sphi 0, %s187
                %p184 = scmp.ge.s32.totalorder %s183, 1
                %s188 = sphi %s177, %s177
                %s189 = sphi %s171, %s171
              $region35: #{patch_discriminator.11} parent=31 // loop_header_branch
                %186 = sbr.rel (%p184) target = $region39
              $region36: #{patch_discriminator.11} parent=31 // loop_body
                %v190 = vld [vmem:[%s188] sm:$0xff]
                %191 = vst [vmem:[%s189] sm:$0xff] %v190
                %v192 = vld [vmem:[%s188 + $0x8] sm:$0xff]
                %193 = vst [vmem:[%s189 + $0x8] sm:$0xff] %v192
                %v194 = vld [vmem:[%s188 + $0x10] sm:$0xff]
                %195 = vst [vmem:[%s189 + $0x10] sm:$0xff] %v194
                %v196 = vld [vmem:[%s188 + $0x18] sm:$0xff]
                %197 = vst [vmem:[%s189 + $0x18] sm:$0xff] %v196
                %v198 = vld [vmem:[%s188 + $0x40] sm:$0xff]
                %199 = vst [vmem:[%s189 + $0x20] sm:$0xff] %v198
                %v200 = vld [vmem:[%s188 + $0x48] sm:$0xff]
                %201 = vst [vmem:[%s189 + $0x28] sm:$0xff] %v200
                %v202 = vld [vmem:[%s188 + $0x50] sm:$0xff]
                %203 = vst [vmem:[%s189 + $0x30] sm:$0xff] %v202
                %v204 = vld [vmem:[%s188 + $0x58] sm:$0xff]
                %205 = vst [vmem:[%s189 + $0x38] sm:$0xff] %v204
                %v206 = vld [vmem:[%s188 + $0x80] sm:$0xff]
                %207 = vst [vmem:[%s189 + $0x40] sm:$0xff] %v206
                %v208 = vld [vmem:[%s188 + $0x88] sm:$0xff]
                %209 = vst [vmem:[%s189 + $0x48] sm:$0xff] %v208
                %v210 = vld [vmem:[%s188 + $0x90] sm:$0xff]
                %211 = vst [vmem:[%s189 + $0x50] sm:$0xff] %v210
                %v212 = vld [vmem:[%s188 + $0x98] sm:$0xff]
                %213 = vst [vmem:[%s189 + $0x58] sm:$0xff] %v212
                %v214 = vld [vmem:[%s188 + $0xc0] sm:$0xff]
                %215 = vst [vmem:[%s189 + $0x60] sm:$0xff] %v214
                %v216 = vld [vmem:[%s188 + $0xc8] sm:$0xff]
                %217 = vst [vmem:[%s189 + $0x68] sm:$0xff] %v216
                %v218 = vld [vmem:[%s188 + $0xd0] sm:$0xff]
                %219 = vst [vmem:[%s189 + $0x70] sm:$0xff] %v218
                %v220 = vld [vmem:[%s188 + $0xd8] sm:$0xff]
                %221 = vst [vmem:[%s189 + $0x78] sm:$0xff] %v220
              $region37: #{patch_discriminator.11} parent=31 // loop_footer
                %s187 = sadd.s32 1, %s183
              $region38: #{patch_discriminator.11} parent=31 // loop_footer_branch
                %182 = sbr.rel target = $region34
              $region39: #{patch_discriminator.11} parent=31 // loop_exit
                _
            $region32: #{patch_discriminator.11} parent=27 // pred_fallthru
              _
            // Predicated region
            $region40: #{patch_discriminator.11} parent=27 // pred_check
              _
            $region41: #{patch_discriminator.11} parent=27 // pred_check_branch
              %223 = sbr.rel target = $region43
            $region42: #{patch_discriminator.11} parent=27 // pred_region
              _
            $region43: #{patch_discriminator.11} parent=27 // pred_fallthru
              _
          $region28: #{patch_discriminator.11} parent=23 // pred_fallthru
            _
          %224 = vnop
        $region24: #{patch_discriminator.11} parent=19 // pred_fallthru
          _
        // Predicated region
        $region44: #{patch_discriminator.11} parent=19 // pred_check
          %p225 = pneg %p78
        $region45: #{patch_discriminator.11} parent=19 // pred_check_branch
          %227 = sbr.rel (%p225) target = $region47
        $region46: #{patch_discriminator.11} parent=19 // pred_region
          %s228 = smul.u32 128, %s18
          %s229 = smul.u32 2, %s17
          %p230 = scmp.lt.s32.totalorder %s228, 255
          %s231 = scalar_select %p230, %s228, 255
          %p232 = scmp.lt.s32.totalorder %s229, 1
          %s233 = scalar_select %p232, %s229, 1
          %s234 = smul.addr %s231, 2
          %s235 = sadd.s32 %s233, %s234
          %s236 = smul.addr %s235, 4
          %s237 = scalar_lea.vmem %s1, %s236
          %s238 = smul.u32 128, %s18
          %s239 = smul.u32 2, %s17
        $region47: #{patch_discriminator.11} parent=19 // pred_fallthru
          _
      $region20: #{patch_discriminator.11} parent=5 // pred_fallthru
        _
      %p240 = scmp.le.s32.totalorder 1, %s9
      %p241 = scmp.lt.s32.totalorder %s9, 3
      %p242 = pnand %p240, %p241
      %p243 = pneg %p242
      // Predicated region
      $region48: #{patch_discriminator.11} parent=5 // pred_check
        _
      $region49: #{patch_discriminator.11} parent=5 // pred_check_branch
        %245 = sbr.rel (%p242) target = $region51
      $region50: #{patch_discriminator.11} parent=5 // pred_region
        %s246 = ssub.s32 %s9, 1
        %s247 = sand.u32 %s43, 1
        %s248 = sand.u32 %s43, 1
        %s249 = smul.addr %s248, 128
        %s250 = scalar_lea.vmem [#allocation3], %s249
        // Predicated region
        $region52: #{patch_discriminator.11} parent=50 // pred_check
          %p251 = pneg %p56
        $region53: #{patch_discriminator.11} parent=50 // pred_check_branch
          %253 = sbr.rel (%p251) target = $region55
        $region54: #{patch_discriminator.11} parent=50 // pred_region
          _
        $region55: #{patch_discriminator.11} parent=50 // pred_fallthru
          _
        %s254 = sand.u32 %s43, 1
        %s255 = sand.u32 %s43, 1
        %s256 = smul.addr %s255, 128
        %s257 = scalar_lea.vmem [#allocation3], %s256
        %p258 = pneg %p56
        %p259 = pneg %p53
        %s260 = smul.u32 128, %s21
        %s261 = smul.u32 2, %s20
        %p262 = scmp.lt.s32.totalorder %s260, 255
        %s263 = scalar_select %p262, %s260, 255
        %p264 = scmp.lt.s32.totalorder %s261, 1
        %s265 = scalar_select %p264, %s261, 1
        %s266 = smul.addr %s263, 2
        %s267 = sadd.s32 %s265, %s266
        %s268 = smul.addr %s267, 4
        %s269 = scalar_lea.vmem %s1, %s268
        %p270 = pneg %p84
        %p271 = pneg %p81
        %s272 = smul.u32 2, %s20
        %p273 = scmp.lt.s32.totalorder %s272, 1
        %s274 = scalar_select %p273, %s272, 1
        %s275 = scalar_lea.vmem %s2, %s274
        %p276 = pneg %p110
        %p277 = pneg %p107
        %p278 = pneg %p138
        %p279 = pneg %p135
        %s280 = smul.u32 4, %s19
        %s281 = smul.u32 2, %s20
        %p282 = scmp.lt.s32.totalorder %s280, 3
        %s283 = scalar_select %p282, %s280, 3
        %p284 = scmp.lt.s32.totalorder %s281, 1
        %s285 = scalar_select %p284, %s281, 1
        %s286 = smul.addr %s283, 2
        %s287 = sadd.s32 %s285, %s286
        %s288 = smul.addr %s287, 4
        %s289 = scalar_lea.vmem %s3, %s288
        %s290 = smul.u32 4, %s19
        %s291 = smul.u32 8, %s21
        %s292 = smul.u32 128, %s21
        %s293 = smul.u32 2, %s20
        %p294 = scmp.lt.s32.totalorder %s292, 255
        %s295 = scalar_select %p294, %s292, 255
        %p296 = scmp.lt.s32.totalorder %s293, 1
        %s297 = scalar_select %p296, %s293, 1
        %s298 = smul.addr %s295, 2
        %s299 = sadd.s32 %s297, %s298
        %s300 = smul.addr %s299, 4
        %s301 = scalar_lea.vmem %s1, %s300
        %s302 = smul.u32 128, %s21
        %s303 = smul.u32 2, %s20
        %s304 = smul.u32 2, %s20
        %p305 = scmp.lt.s32.totalorder %s304, 1
        %s306 = scalar_select %p305, %s304, 1
        %s307 = scalar_lea.vmem %s2, %s306
        %s308 = smul.u32 2, %s20
        %s309 = smul.u32 4, %s19
        %s310 = smul.u32 2, %s20
        %p311 = scmp.lt.s32.totalorder %s309, 3
        %s312 = scalar_select %p311, %s309, 3
        %p313 = scmp.lt.s32.totalorder %s310, 1
        %s314 = scalar_select %p313, %s310, 1
        %s315 = smul.addr %s312, 2
        %s316 = sadd.s32 %s314, %s315
        %s317 = smul.addr %s316, 4
        %s318 = scalar_lea.vmem %s3, %s317
        %s319 = smul.u32 4, %s19
        %s320 = smul.u32 2, %s20
        %v321 = vld [vmem:[%s250] sm:$0xff]
        %v322 = vld [vmem:[%s250 + $0x8] sm:$0xff]
        %v323 = vld [vmem:[%s250 + $0x10] sm:$0xff]
        %v324 = vld [vmem:[%s250 + $0x18] sm:$0xff]
        %v325 = vld [vmem:[%s250 + $0x20] sm:$0xff]
        %v326 = vld [vmem:[%s250 + $0x28] sm:$0xff]
        %v327 = vld [vmem:[%s250 + $0x30] sm:$0xff]
        %v328 = vld [vmem:[%s250 + $0x38] sm:$0xff]
        %v329 = vld [vmem:[%s250 + $0x40] sm:$0xff]
        %v330 = vld [vmem:[%s250 + $0x48] sm:$0xff]
        %v331 = vld [vmem:[%s250 + $0x50] sm:$0xff]
        %v332 = vld [vmem:[%s250 + $0x58] sm:$0xff]
        %v333 = vld [vmem:[%s250 + $0x60] sm:$0xff]
        %v334 = vld [vmem:[%s250 + $0x68] sm:$0xff]
        %v335 = vld [vmem:[%s250 + $0x70] sm:$0xff]
        %v336 = vld [vmem:[%s250 + $0x78] sm:$0xff]
        %v337 = vld [vmem:[%s301] sm:$0xff]
        %v338 = vld [vmem:[%s301 + $0x8] sm:$0xff]
        %v339 = vld [vmem:[%s301 + $0x10] sm:$0xff]
        %v340 = vld [vmem:[%s301 + $0x18] sm:$0xff]
        %v341 = vld [vmem:[%s301 + $0x20] sm:$0xff]
        %v342 = vld [vmem:[%s301 + $0x28] sm:$0xff]
        %v343 = vld [vmem:[%s301 + $0x30] sm:$0xff]
        %v344 = vld [vmem:[%s301 + $0x38] sm:$0xff]
        %v345 = vld [vmem:[%s301 + $0x40] sm:$0xff]
        %v346 = vld [vmem:[%s301 + $0x48] sm:$0xff]
        %v347 = vld [vmem:[%s301 + $0x50] sm:$0xff]
        %v348 = vld [vmem:[%s301 + $0x58] sm:$0xff]
        %v349 = vld [vmem:[%s301 + $0x60] sm:$0xff]
        %v350 = vld [vmem:[%s301 + $0x68] sm:$0xff]
        %v351 = vld [vmem:[%s301 + $0x70] sm:$0xff]
        %v352 = vld [vmem:[%s301 + $0x78] sm:$0xff]
        %v353 = vld [vmem:[%s301 + $0x80] sm:$0xff]
        %v354 = vld [vmem:[%s301 + $0x88] sm:$0xff]
        %v355 = vld [vmem:[%s301 + $0x90] sm:$0xff]
        %v356 = vld [vmem:[%s301 + $0x98] sm:$0xff]
        %v357 = vld [vmem:[%s301 + $0xa0] sm:$0xff]
        %v358 = vld [vmem:[%s301 + $0xa8] sm:$0xff]
        %v359 = vld [vmem:[%s301 + $0xb0] sm:$0xff]
        %v360 = vld [vmem:[%s301 + $0xb8] sm:$0xff]
        %v361 = vld [vmem:[%s301 + $0xc0] sm:$0xff]
        %v362 = vld [vmem:[%s301 + $0xc8] sm:$0xff]
        %v363 = vld [vmem:[%s301 + $0xd0] sm:$0xff]
        %v364 = vld [vmem:[%s301 + $0xd8] sm:$0xff]
        %v365 = vld [vmem:[%s301 + $0xe0] sm:$0xff]
        %v366 = vld [vmem:[%s301 + $0xe8] sm:$0xff]
        %v367 = vld [vmem:[%s301 + $0xf0] sm:$0xff]
        %v368 = vld [vmem:[%s301 + $0xf8] sm:$0xff]
        %v369 = vld [vmem:[%s301 + $0x100] sm:$0xff]
        %v370 = vld [vmem:[%s301 + $0x108] sm:$0xff]
        %v371 = vld [vmem:[%s301 + $0x110] sm:$0xff]
        %v372 = vld [vmem:[%s301 + $0x118] sm:$0xff]
        %v373 = vld [vmem:[%s301 + $0x120] sm:$0xff]
        %v374 = vld [vmem:[%s301 + $0x128] sm:$0xff]
        %v375 = vld [vmem:[%s301 + $0x130] sm:$0xff]
        %v376 = vld [vmem:[%s301 + $0x138] sm:$0xff]
        %v377 = vld [vmem:[%s301 + $0x140] sm:$0xff]
        %v378 = vld [vmem:[%s301 + $0x148] sm:$0xff]
        %v379 = vld [vmem:[%s301 + $0x150] sm:$0xff]
        %v380 = vld [vmem:[%s301 + $0x158] sm:$0xff]
        %v381 = vld [vmem:[%s301 + $0x160] sm:$0xff]
        %v382 = vld [vmem:[%s301 + $0x168] sm:$0xff]
        %v383 = vld [vmem:[%s301 + $0x170] sm:$0xff]
        %v384 = vld [vmem:[%s301 + $0x178] sm:$0xff]
        %v385 = vld [vmem:[%s301 + $0x180] sm:$0xff]
        %v386 = vld [vmem:[%s301 + $0x188] sm:$0xff]
        %v387 = vld [vmem:[%s301 + $0x190] sm:$0xff]
        %v388 = vld [vmem:[%s301 + $0x198] sm:$0xff]
        %v389 = vld [vmem:[%s301 + $0x1a0] sm:$0xff]
        %v390 = vld [vmem:[%s301 + $0x1a8] sm:$0xff]
        %v391 = vld [vmem:[%s301 + $0x1b0] sm:$0xff]
        %v392 = vld [vmem:[%s301 + $0x1b8] sm:$0xff]
        %v393 = vld [vmem:[%s301 + $0x1c0] sm:$0xff]
        %v394 = vld [vmem:[%s301 + $0x1c8] sm:$0xff]
        %v395 = vld [vmem:[%s301 + $0x1d0] sm:$0xff]
        %v396 = vld [vmem:[%s301 + $0x1d8] sm:$0xff]
        %v397 = vld [vmem:[%s301 + $0x1e0] sm:$0xff]
        %v398 = vld [vmem:[%s301 + $0x1e8] sm:$0xff]
        %v399 = vld [vmem:[%s301 + $0x1f0] sm:$0xff]
        %v400 = vld [vmem:[%s301 + $0x1f8] sm:$0xff]
        %v401 = vld [vmem:[%s301 + $0x200] sm:$0xff]
        %v402 = vld [vmem:[%s301 + $0x208] sm:$0xff]
        %v403 = vld [vmem:[%s301 + $0x210] sm:$0xff]
        %v404 = vld [vmem:[%s301 + $0x218] sm:$0xff]
        %v405 = vld [vmem:[%s301 + $0x220] sm:$0xff]
        %v406 = vld [vmem:[%s301 + $0x228] sm:$0xff]
        %v407 = vld [vmem:[%s301 + $0x230] sm:$0xff]
        %v408 = vld [vmem:[%s301 + $0x238] sm:$0xff]
        %v409 = vld [vmem:[%s301 + $0x240] sm:$0xff]
        %v410 = vld [vmem:[%s301 + $0x248] sm:$0xff]
        %v411 = vld [vmem:[%s301 + $0x250] sm:$0xff]
        %v412 = vld [vmem:[%s301 + $0x258] sm:$0xff]
        %v413 = vld [vmem:[%s301 + $0x260] sm:$0xff]
        %v414 = vld [vmem:[%s301 + $0x268] sm:$0xff]
        %v415 = vld [vmem:[%s301 + $0x270] sm:$0xff]
        %v416 = vld [vmem:[%s301 + $0x278] sm:$0xff]
        %v417 = vld [vmem:[%s301 + $0x280] sm:$0xff]
        %v418 = vld [vmem:[%s301 + $0x288] sm:$0xff]
        %v419 = vld [vmem:[%s301 + $0x290] sm:$0xff]
        %v420 = vld [vmem:[%s301 + $0x298] sm:$0xff]
        %v421 = vld [vmem:[%s301 + $0x2a0] sm:$0xff]
        %v422 = vld [vmem:[%s301 + $0x2a8] sm:$0xff]
        %v423 = vld [vmem:[%s301 + $0x2b0] sm:$0xff]
        %v424 = vld [vmem:[%s301 + $0x2b8] sm:$0xff]
        %v425 = vld [vmem:[%s301 + $0x2c0] sm:$0xff]
        %v426 = vld [vmem:[%s301 + $0x2c8] sm:$0xff]
        %v427 = vld [vmem:[%s301 + $0x2d0] sm:$0xff]
        %v428 = vld [vmem:[%s301 + $0x2d8] sm:$0xff]
        %v429 = vld [vmem:[%s301 + $0x2e0] sm:$0xff]
        %v430 = vld [vmem:[%s301 + $0x2e8] sm:$0xff]
        %v431 = vld [vmem:[%s301 + $0x2f0] sm:$0xff]
        %v432 = vld [vmem:[%s301 + $0x2f8] sm:$0xff]
        %v433 = vld [vmem:[%s301 + $0x300] sm:$0xff]
        %v434 = vld [vmem:[%s301 + $0x308] sm:$0xff]
        %v435 = vld [vmem:[%s301 + $0x310] sm:$0xff]
        %v436 = vld [vmem:[%s301 + $0x318] sm:$0xff]
        %v437 = vld [vmem:[%s301 + $0x320] sm:$0xff]
        %v438 = vld [vmem:[%s301 + $0x328] sm:$0xff]
        %v439 = vld [vmem:[%s301 + $0x330] sm:$0xff]
        %v440 = vld [vmem:[%s301 + $0x338] sm:$0xff]
        %v441 = vld [vmem:[%s301 + $0x340] sm:$0xff]
        %v442 = vld [vmem:[%s301 + $0x348] sm:$0xff]
        %v443 = vld [vmem:[%s301 + $0x350] sm:$0xff]
        %v444 = vld [vmem:[%s301 + $0x358] sm:$0xff]
        %v445 = vld [vmem:[%s301 + $0x360] sm:$0xff]
        %v446 = vld [vmem:[%s301 + $0x368] sm:$0xff]
        %v447 = vld [vmem:[%s301 + $0x370] sm:$0xff]
        %v448 = vld [vmem:[%s301 + $0x378] sm:$0xff]
        %v449 = vld [vmem:[%s301 + $0x380] sm:$0xff]
        %v450 = vld [vmem:[%s301 + $0x388] sm:$0xff]
        %v451 = vld [vmem:[%s301 + $0x390] sm:$0xff]
        %v452 = vld [vmem:[%s301 + $0x398] sm:$0xff]
        %v453 = vld [vmem:[%s301 + $0x3a0] sm:$0xff]
        %v454 = vld [vmem:[%s301 + $0x3a8] sm:$0xff]
        %v455 = vld [vmem:[%s301 + $0x3b0] sm:$0xff]
        %v456 = vld [vmem:[%s301 + $0x3b8] sm:$0xff]
        %v457 = vld [vmem:[%s301 + $0x3c0] sm:$0xff]
        %v458 = vld [vmem:[%s301 + $0x3c8] sm:$0xff]
        %v459 = vld [vmem:[%s301 + $0x3d0] sm:$0xff]
        %v460 = vld [vmem:[%s301 + $0x3d8] sm:$0xff]
        %v461 = vld [vmem:[%s301 + $0x3e0] sm:$0xff]
        %v462 = vld [vmem:[%s301 + $0x3e8] sm:$0xff]
        %v463 = vld [vmem:[%s301 + $0x3f0] sm:$0xff]
        %v464 = vld [vmem:[%s301 + $0x3f8] sm:$0xff]
        %v481 = vunpack.c.l.b16 %v321
        %v482 = vunpack.c.h.b16 %v321
        %v483 = vunpack.c.l.b16 %v322
        %v484 = vunpack.c.h.b16 %v322
        %v485 = vunpack.c.l.b16 %v323
        %v486 = vunpack.c.h.b16 %v323
        %v487 = vunpack.c.l.b16 %v324
        %v488 = vunpack.c.h.b16 %v324
        %v489 = vunpack.c.l.b16 %v325
        %v490 = vunpack.c.h.b16 %v325
        %v491 = vunpack.c.l.b16 %v326
        %v492 = vunpack.c.h.b16 %v326
        %v493 = vunpack.c.l.b16 %v327
        %v494 = vunpack.c.h.b16 %v327
        %v495 = vunpack.c.l.b16 %v328
        %v496 = vunpack.c.h.b16 %v328
        %v497 = vunpack.c.l.b16 %v329
        %v498 = vunpack.c.h.b16 %v329
        %v499 = vunpack.c.l.b16 %v330
        %v500 = vunpack.c.h.b16 %v330
        %v501 = vunpack.c.l.b16 %v331
        %v502 = vunpack.c.h.b16 %v331
        %v503 = vunpack.c.l.b16 %v332
        %v504 = vunpack.c.h.b16 %v332
        %v505 = vunpack.c.l.b16 %v333
        %v506 = vunpack.c.h.b16 %v333
        %v507 = vunpack.c.l.b16 %v334
        %v508 = vunpack.c.h.b16 %v334
        %v509 = vunpack.c.l.b16 %v335
        %v510 = vunpack.c.h.b16 %v335
        %v511 = vunpack.c.l.b16 %v336
        %v512 = vunpack.c.h.b16 %v336
        %v513 = vpack.c.b16 %v489, %v481
        %v514 = vpack.c.b16 %v490, %v482
        %v515 = vpack.c.b16 %v491, %v483
        %v516 = vpack.c.b16 %v492, %v484
        %v517 = vpack.c.b16 %v493, %v485
        %v518 = vpack.c.b16 %v494, %v486
        %v519 = vpack.c.b16 %v495, %v487
        %v520 = vpack.c.b16 %v496, %v488
        %v521 = vpack.c.b16 %v505, %v497
        %v522 = vpack.c.b16 %v506, %v498
        %v523 = vpack.c.b16 %v507, %v499
        %v524 = vpack.c.b16 %v508, %v500
        %v525 = vpack.c.b16 %v509, %v501
        %v526 = vpack.c.b16 %v510, %v502
        %v527 = vpack.c.b16 %v511, %v503
        %v528 = vpack.c.b16 %v512, %v504
        %v673 = vunpack.c.l.b16 %v337
        %v674 = vunpack.c.h.b16 %v337
        %v675 = vunpack.c.l.b16 %v338
        %v676 = vunpack.c.h.b16 %v338
        %v677 = vunpack.c.l.b16 %v339
        %v678 = vunpack.c.h.b16 %v339
        %v679 = vunpack.c.l.b16 %v340
        %v680 = vunpack.c.h.b16 %v340
        %v681 = vunpack.c.l.b16 %v341
        %v682 = vunpack.c.h.b16 %v341
        %v683 = vunpack.c.l.b16 %v342
        %v684 = vunpack.c.h.b16 %v342
        %v685 = vunpack.c.l.b16 %v343
        %v686 = vunpack.c.h.b16 %v343
        %v687 = vunpack.c.l.b16 %v344
        %v688 = vunpack.c.h.b16 %v344
        %v689 = vunpack.c.l.b16 %v345
        %v690 = vunpack.c.h.b16 %v345
        %v691 = vunpack.c.l.b16 %v346
        %v692 = vunpack.c.h.b16 %v346
        %v693 = vunpack.c.l.b16 %v347
        %v694 = vunpack.c.h.b16 %v347
        %v695 = vunpack.c.l.b16 %v348
        %v696 = vunpack.c.h.b16 %v348
        %v697 = vunpack.c.l.b16 %v349
        %v698 = vunpack.c.h.b16 %v349
        %v699 = vunpack.c.l.b16 %v350
        %v700 = vunpack.c.h.b16 %v350
        %v701 = vunpack.c.l.b16 %v351
        %v702 = vunpack.c.h.b16 %v351
        %v703 = vunpack.c.l.b16 %v352
        %v704 = vunpack.c.h.b16 %v352
        %v705 = vunpack.c.l.b16 %v353
        %v706 = vunpack.c.h.b16 %v353
        %v707 = vunpack.c.l.b16 %v354
        %v708 = vunpack.c.h.b16 %v354
        %v709 = vunpack.c.l.b16 %v355
        %v710 = vunpack.c.h.b16 %v355
        %v711 = vunpack.c.l.b16 %v356
        %v712 = vunpack.c.h.b16 %v356
        %v713 = vunpack.c.l.b16 %v357
        %v714 = vunpack.c.h.b16 %v357
        %v715 = vunpack.c.l.b16 %v358
        %v716 = vunpack.c.h.b16 %v358
        %v717 = vunpack.c.l.b16 %v359
        %v718 = vunpack.c.h.b16 %v359
        %v719 = vunpack.c.l.b16 %v360
        %v720 = vunpack.c.h.b16 %v360
        %v721 = vunpack.c.l.b16 %v361
        %v722 = vunpack.c.h.b16 %v361
        %v723 = vunpack.c.l.b16 %v362
        %v724 = vunpack.c.h.b16 %v362
        %v725 = vunpack.c.l.b16 %v363
        %v726 = vunpack.c.h.b16 %v363
        %v727 = vunpack.c.l.b16 %v364
        %v728 = vunpack.c.h.b16 %v364
        %v729 = vunpack.c.l.b16 %v365
        %v730 = vunpack.c.h.b16 %v365
        %v731 = vunpack.c.l.b16 %v366
        %v732 = vunpack.c.h.b16 %v366
        %v733 = vunpack.c.l.b16 %v367
        %v734 = vunpack.c.h.b16 %v367
        %v735 = vunpack.c.l.b16 %v368
        %v736 = vunpack.c.h.b16 %v368
        %v737 = vunpack.c.l.b16 %v369
        %v738 = vunpack.c.h.b16 %v369
        %v739 = vunpack.c.l.b16 %v370
        %v740 = vunpack.c.h.b16 %v370
        %v741 = vunpack.c.l.b16 %v371
        %v742 = vunpack.c.h.b16 %v371
        %v743 = vunpack.c.l.b16 %v372
        %v744 = vunpack.c.h.b16 %v372
        %v745 = vunpack.c.l.b16 %v373
        %v746 = vunpack.c.h.b16 %v373
        %v747 = vunpack.c.l.b16 %v374
        %v748 = vunpack.c.h.b16 %v374
        %v749 = vunpack.c.l.b16 %v375
        %v750 = vunpack.c.h.b16 %v375
        %v751 = vunpack.c.l.b16 %v376
        %v752 = vunpack.c.h.b16 %v376
        %v753 = vunpack.c.l.b16 %v377
        %v754 = vunpack.c.h.b16 %v377
        %v755 = vunpack.c.l.b16 %v378
        %v756 = vunpack.c.h.b16 %v378
        %v757 = vunpack.c.l.b16 %v379
        %v758 = vunpack.c.h.b16 %v379
        %v759 = vunpack.c.l.b16 %v380
        %v760 = vunpack.c.h.b16 %v380
        %v761 = vunpack.c.l.b16 %v381
        %v762 = vunpack.c.h.b16 %v381
        %v763 = vunpack.c.l.b16 %v382
        %v764 = vunpack.c.h.b16 %v382
        %v765 = vunpack.c.l.b16 %v383
        %v766 = vunpack.c.h.b16 %v383
        %v767 = vunpack.c.l.b16 %v384
        %v768 = vunpack.c.h.b16 %v384
        %v769 = vunpack.c.l.b16 %v385
        %v770 = vunpack.c.h.b16 %v385
        %v771 = vunpack.c.l.b16 %v386
        %v772 = vunpack.c.h.b16 %v386
        %v773 = vunpack.c.l.b16 %v387
        %v774 = vunpack.c.h.b16 %v387
        %v775 = vunpack.c.l.b16 %v388
        %v776 = vunpack.c.h.b16 %v388
        %v777 = vunpack.c.l.b16 %v389
        %v778 = vunpack.c.h.b16 %v389
        %v779 = vunpack.c.l.b16 %v390
        %v780 = vunpack.c.h.b16 %v390
        %v781 = vunpack.c.l.b16 %v391
        %v782 = vunpack.c.h.b16 %v391
        %v783 = vunpack.c.l.b16 %v392
        %v784 = vunpack.c.h.b16 %v392
        %v785 = vunpack.c.l.b16 %v393
        %v786 = vunpack.c.h.b16 %v393
        %v787 = vunpack.c.l.b16 %v394
        %v788 = vunpack.c.h.b16 %v394
        %v789 = vunpack.c.l.b16 %v395
        %v790 = vunpack.c.h.b16 %v395
        %v791 = vunpack.c.l.b16 %v396
        %v792 = vunpack.c.h.b16 %v396
        %v793 = vunpack.c.l.b16 %v397
        %v794 = vunpack.c.h.b16 %v397
        %v795 = vunpack.c.l.b16 %v398
        %v796 = vunpack.c.h.b16 %v398
        %v797 = vunpack.c.l.b16 %v399
        %v798 = vunpack.c.h.b16 %v399
        %v799 = vunpack.c.l.b16 %v400
        %v800 = vunpack.c.h.b16 %v400
        %v801 = vunpack.c.l.b16 %v401
        %v802 = vunpack.c.h.b16 %v401
        %v803 = vunpack.c.l.b16 %v402
        %v804 = vunpack.c.h.b16 %v402
        %v805 = vunpack.c.l.b16 %v403
        %v806 = vunpack.c.h.b16 %v403
        %v807 = vunpack.c.l.b16 %v404
        %v808 = vunpack.c.h.b16 %v404
        %v809 = vunpack.c.l.b16 %v405
        %v810 = vunpack.c.h.b16 %v405
        %v811 = vunpack.c.l.b16 %v406
        %v812 = vunpack.c.h.b16 %v406
        %v813 = vunpack.c.l.b16 %v407
        %v814 = vunpack.c.h.b16 %v407
        %v815 = vunpack.c.l.b16 %v408
        %v816 = vunpack.c.h.b16 %v408
        %v817 = vunpack.c.l.b16 %v409
        %v818 = vunpack.c.h.b16 %v409
        %v819 = vunpack.c.l.b16 %v410
        %v820 = vunpack.c.h.b16 %v410
        %v821 = vunpack.c.l.b16 %v411
        %v822 = vunpack.c.h.b16 %v411
        %v823 = vunpack.c.l.b16 %v412
        %v824 = vunpack.c.h.b16 %v412
        %v825 = vunpack.c.l.b16 %v413
        %v826 = vunpack.c.h.b16 %v413
        %v827 = vunpack.c.l.b16 %v414
        %v828 = vunpack.c.h.b16 %v414
        %v829 = vunpack.c.l.b16 %v415
        %v830 = vunpack.c.h.b16 %v415
        %v831 = vunpack.c.l.b16 %v416
        %v832 = vunpack.c.h.b16 %v416
        %v833 = vunpack.c.l.b16 %v417
        %v834 = vunpack.c.h.b16 %v417
        %v835 = vunpack.c.l.b16 %v418
        %v836 = vunpack.c.h.b16 %v418
        %v837 = vunpack.c.l.b16 %v419
        %v838 = vunpack.c.h.b16 %v419
        %v839 = vunpack.c.l.b16 %v420
        %v840 = vunpack.c.h.b16 %v420
        %v841 = vunpack.c.l.b16 %v421
        %v842 = vunpack.c.h.b16 %v421
        %v843 = vunpack.c.l.b16 %v422
        %v844 = vunpack.c.h.b16 %v422
        %v845 = vunpack.c.l.b16 %v423
        %v846 = vunpack.c.h.b16 %v423
        %v847 = vunpack.c.l.b16 %v424
        %v848 = vunpack.c.h.b16 %v424
        %v849 = vunpack.c.l.b16 %v425
        %v850 = vunpack.c.h.b16 %v425
        %v851 = vunpack.c.l.b16 %v426
        %v852 = vunpack.c.h.b16 %v426
        %v853 = vunpack.c.l.b16 %v427
        %v854 = vunpack.c.h.b16 %v427
        %v855 = vunpack.c.l.b16 %v428
        %v856 = vunpack.c.h.b16 %v428
        %v857 = vunpack.c.l.b16 %v429
        %v858 = vunpack.c.h.b16 %v429
        %v859 = vunpack.c.l.b16 %v430
        %v860 = vunpack.c.h.b16 %v430
        %v861 = vunpack.c.l.b16 %v431
        %v862 = vunpack.c.h.b16 %v431
        %v863 = vunpack.c.l.b16 %v432
        %v864 = vunpack.c.h.b16 %v432
        %v865 = vunpack.c.l.b16 %v433
        %v866 = vunpack.c.h.b16 %v433
        %v867 = vunpack.c.l.b16 %v434
        %v868 = vunpack.c.h.b16 %v434
        %v869 = vunpack.c.l.b16 %v435
        %v870 = vunpack.c.h.b16 %v435
        %v871 = vunpack.c.l.b16 %v436
        %v872 = vunpack.c.h.b16 %v436
        %v873 = vunpack.c.l.b16 %v437
        %v874 = vunpack.c.h.b16 %v437
        %v875 = vunpack.c.l.b16 %v438
        %v876 = vunpack.c.h.b16 %v438
        %v877 = vunpack.c.l.b16 %v439
        %v878 = vunpack.c.h.b16 %v439
        %v879 = vunpack.c.l.b16 %v440
        %v880 = vunpack.c.h.b16 %v440
        %v881 = vunpack.c.l.b16 %v441
        %v882 = vunpack.c.h.b16 %v441
        %v883 = vunpack.c.l.b16 %v442
        %v884 = vunpack.c.h.b16 %v442
        %v885 = vunpack.c.l.b16 %v443
        %v886 = vunpack.c.h.b16 %v443
        %v887 = vunpack.c.l.b16 %v444
        %v888 = vunpack.c.h.b16 %v444
        %v889 = vunpack.c.l.b16 %v445
        %v890 = vunpack.c.h.b16 %v445
        %v891 = vunpack.c.l.b16 %v446
        %v892 = vunpack.c.h.b16 %v446
        %v893 = vunpack.c.l.b16 %v447
        %v894 = vunpack.c.h.b16 %v447
        %v895 = vunpack.c.l.b16 %v448
        %v896 = vunpack.c.h.b16 %v448
        %v897 = vunpack.c.l.b16 %v449
        %v898 = vunpack.c.h.b16 %v449
        %v899 = vunpack.c.l.b16 %v450
        %v900 = vunpack.c.h.b16 %v450
        %v901 = vunpack.c.l.b16 %v451
        %v902 = vunpack.c.h.b16 %v451
        %v903 = vunpack.c.l.b16 %v452
        %v904 = vunpack.c.h.b16 %v452
        %v905 = vunpack.c.l.b16 %v453
        %v906 = vunpack.c.h.b16 %v453
        %v907 = vunpack.c.l.b16 %v454
        %v908 = vunpack.c.h.b16 %v454
        %v909 = vunpack.c.l.b16 %v455
        %v910 = vunpack.c.h.b16 %v455
        %v911 = vunpack.c.l.b16 %v456
        %v912 = vunpack.c.h.b16 %v456
        %v913 = vunpack.c.l.b16 %v457
        %v914 = vunpack.c.h.b16 %v457
        %v915 = vunpack.c.l.b16 %v458
        %v916 = vunpack.c.h.b16 %v458
        %v917 = vunpack.c.l.b16 %v459
        %v918 = vunpack.c.h.b16 %v459
        %v919 = vunpack.c.l.b16 %v460
        %v920 = vunpack.c.h.b16 %v460
        %v921 = vunpack.c.l.b16 %v461
        %v922 = vunpack.c.h.b16 %v461
        %v923 = vunpack.c.l.b16 %v462
        %v924 = vunpack.c.h.b16 %v462
        %v925 = vunpack.c.l.b16 %v463
        %v926 = vunpack.c.h.b16 %v463
        %v927 = vunpack.c.l.b16 %v464
        %v928 = vunpack.c.h.b16 %v464
        %v929 = vpack.c.b16 %v675, %v673
        %v930 = vpack.c.b16 %v676, %v674
        %v931 = vpack.c.b16 %v679, %v677
        %v932 = vpack.c.b16 %v680, %v678
        %v933 = vpack.c.b16 %v683, %v681
        %v934 = vpack.c.b16 %v684, %v682
        %v935 = vpack.c.b16 %v687, %v685
        %v936 = vpack.c.b16 %v688, %v686
        %v937 = vpack.c.b16 %v691, %v689
        %v938 = vpack.c.b16 %v692, %v690
        %v939 = vpack.c.b16 %v695, %v693
        %v940 = vpack.c.b16 %v696, %v694
        %v941 = vpack.c.b16 %v699, %v697
        %v942 = vpack.c.b16 %v700, %v698
        %v943 = vpack.c.b16 %v703, %v701
        %v944 = vpack.c.b16 %v704, %v702
        %v945 = vpack.c.b16 %v707, %v705
        %v946 = vpack.c.b16 %v708, %v706
        %v947 = vpack.c.b16 %v711, %v709
        %v948 = vpack.c.b16 %v712, %v710
        %v949 = vpack.c.b16 %v715, %v713
        %v950 = vpack.c.b16 %v716, %v714
        %v951 = vpack.c.b16 %v719, %v717
        %v952 = vpack.c.b16 %v720, %v718
        %v953 = vpack.c.b16 %v723, %v721
        %v954 = vpack.c.b16 %v724, %v722
        %v955 = vpack.c.b16 %v727, %v725
        %v956 = vpack.c.b16 %v728, %v726
        %v957 = vpack.c.b16 %v731, %v729
        %v958 = vpack.c.b16 %v732, %v730
        %v959 = vpack.c.b16 %v735, %v733
        %v960 = vpack.c.b16 %v736, %v734
        %v961 = vpack.c.b16 %v739, %v737
        %v962 = vpack.c.b16 %v740, %v738
        %v963 = vpack.c.b16 %v743, %v741
        %v964 = vpack.c.b16 %v744, %v742
        %v965 = vpack.c.b16 %v747, %v745
        %v966 = vpack.c.b16 %v748, %v746
        %v967 = vpack.c.b16 %v751, %v749
        %v968 = vpack.c.b16 %v752, %v750
        %v969 = vpack.c.b16 %v755, %v753
        %v970 = vpack.c.b16 %v756, %v754
        %v971 = vpack.c.b16 %v759, %v757
        %v972 = vpack.c.b16 %v760, %v758
        %v973 = vpack.c.b16 %v763, %v761
        %v974 = vpack.c.b16 %v764, %v762
        %v975 = vpack.c.b16 %v767, %v765
        %v976 = vpack.c.b16 %v768, %v766
        %v977 = vpack.c.b16 %v771, %v769
        %v978 = vpack.c.b16 %v772, %v770
        %v979 = vpack.c.b16 %v775, %v773
        %v980 = vpack.c.b16 %v776, %v774
        %v981 = vpack.c.b16 %v779, %v777
        %v982 = vpack.c.b16 %v780, %v778
        %v983 = vpack.c.b16 %v783, %v781
        %v984 = vpack.c.b16 %v784, %v782
        %v985 = vpack.c.b16 %v787, %v785
        %v986 = vpack.c.b16 %v788, %v786
        %v987 = vpack.c.b16 %v791, %v789
        %v988 = vpack.c.b16 %v792, %v790
        %v989 = vpack.c.b16 %v795, %v793
        %v990 = vpack.c.b16 %v796, %v794
        %v991 = vpack.c.b16 %v799, %v797
        %v992 = vpack.c.b16 %v800, %v798
        %v993 = vpack.c.b16 %v803, %v801
        %v994 = vpack.c.b16 %v804, %v802
        %v995 = vpack.c.b16 %v807, %v805
        %v996 = vpack.c.b16 %v808, %v806
        %v997 = vpack.c.b16 %v811, %v809
        %v998 = vpack.c.b16 %v812, %v810
        %v999 = vpack.c.b16 %v815, %v813
        %v1000 = vpack.c.b16 %v816, %v814
        %v1001 = vpack.c.b16 %v819, %v817
        %v1002 = vpack.c.b16 %v820, %v818
        %v1003 = vpack.c.b16 %v823, %v821
        %v1004 = vpack.c.b16 %v824, %v822
        %v1005 = vpack.c.b16 %v827, %v825
        %v1006 = vpack.c.b16 %v828, %v826
        %v1007 = vpack.c.b16 %v831, %v829
        %v1008 = vpack.c.b16 %v832, %v830
        %v1009 = vpack.c.b16 %v835, %v833
        %v1010 = vpack.c.b16 %v836, %v834
        %v1011 = vpack.c.b16 %v839, %v837
        %v1012 = vpack.c.b16 %v840, %v838
        %v1013 = vpack.c.b16 %v843, %v841
        %v1014 = vpack.c.b16 %v844, %v842
        %v1015 = vpack.c.b16 %v847, %v845
        %v1016 = vpack.c.b16 %v848, %v846
        %v1017 = vpack.c.b16 %v851, %v849
        %v1018 = vpack.c.b16 %v852, %v850
        %v1019 = vpack.c.b16 %v855, %v853
        %v1020 = vpack.c.b16 %v856, %v854
        %v1021 = vpack.c.b16 %v859, %v857
        %v1022 = vpack.c.b16 %v860, %v858
        %v1023 = vpack.c.b16 %v863, %v861
        %v1024 = vpack.c.b16 %v864, %v862
        %v1025 = vpack.c.b16 %v867, %v865
        %v1026 = vpack.c.b16 %v868, %v866
        %v1027 = vpack.c.b16 %v871, %v869
        %v1028 = vpack.c.b16 %v872, %v870
        %v1029 = vpack.c.b16 %v875, %v873
        %v1030 = vpack.c.b16 %v876, %v874
        %v1031 = vpack.c.b16 %v879, %v877
        %v1032 = vpack.c.b16 %v880, %v878
        %v1033 = vpack.c.b16 %v883, %v881
        %v1034 = vpack.c.b16 %v884, %v882
        %v1035 = vpack.c.b16 %v887, %v885
        %v1036 = vpack.c.b16 %v888, %v886
        %v1037 = vpack.c.b16 %v891, %v889
        %v1038 = vpack.c.b16 %v892, %v890
        %v1039 = vpack.c.b16 %v895, %v893
        %v1040 = vpack.c.b16 %v896, %v894
        %v1041 = vpack.c.b16 %v899, %v897
        %v1042 = vpack.c.b16 %v900, %v898
        %v1043 = vpack.c.b16 %v903, %v901
        %v1044 = vpack.c.b16 %v904, %v902
        %v1045 = vpack.c.b16 %v907, %v905
        %v1046 = vpack.c.b16 %v908, %v906
        %v1047 = vpack.c.b16 %v911, %v909
        %v1048 = vpack.c.b16 %v912, %v910
        %v1049 = vpack.c.b16 %v915, %v913
        %v1050 = vpack.c.b16 %v916, %v914
        %v1051 = vpack.c.b16 %v919, %v917
        %v1052 = vpack.c.b16 %v920, %v918
        %v1053 = vpack.c.b16 %v923, %v921
        %v1054 = vpack.c.b16 %v924, %v922
        %v1055 = vpack.c.b16 %v927, %v925
        %v1056 = vpack.c.b16 %v928, %v926
        %1185 = vmatpush.bf16.msra.mxu0 %v943
        %1186 = vmatpush.bf16.msra.mxu0 %v941
        %1187 = vmatpush.bf16.msra.mxu0 %v939
        %1188 = vmatpush.bf16.msra.mxu0 %v937
        %1189 = vmatpush.bf16.msra.mxu0 %v935
        %1190 = vmatpush.bf16.msra.mxu0 %v933
        %1191 = vmatpush.bf16.msra.mxu0 %v931
        %1192 = vmatpush.bf16.msra.mxu0 %v929
        %1193 = vmatmul.bf16.gmra.mxu0 %v513
        %v1194 = vpop.f32.mrf.mxu0
        %v1195 = vadd.f32 0.0, %v1194
        %v1196 = vpop.f32.mrf.mxu0
        %v1197 = vadd.f32 0.0, %v1196
        %1198 = vmatmul.bf16.gmra.mxu0 %v521
        %v1199 = vpop.f32.mrf.mxu0
        %v1200 = vadd.f32 0.0, %v1199
        %v1201 = vpop.f32.mrf.mxu0
        %v1202 = vadd.f32 0.0, %v1201
        %1203 = vdwg.mxu0
        %1204 = vmatpush.bf16.msra.mxu0 %v959
        %1205 = vmatpush.bf16.msra.mxu0 %v957
        %1206 = vmatpush.bf16.msra.mxu0 %v955
        %1207 = vmatpush.bf16.msra.mxu0 %v953
        %1208 = vmatpush.bf16.msra.mxu0 %v951
        %1209 = vmatpush.bf16.msra.mxu0 %v949
        %1210 = vmatpush.bf16.msra.mxu0 %v947
        %1211 = vmatpush.bf16.msra.mxu0 %v945
        %1212 = vmatmul.bf16.gmra.mxu0 %v514
        %v1213 = vpop.f32.mrf.mxu0
        %v1214 = vadd.f32 %v1195, %v1213
        %v1215 = vpop.f32.mrf.mxu0
        %v1216 = vadd.f32 %v1197, %v1215
        %1217 = vmatmul.bf16.gmra.mxu0 %v522
        %v1218 = vpop.f32.mrf.mxu0
        %v1219 = vadd.f32 %v1200, %v1218
        %v1220 = vpop.f32.mrf.mxu0
        %v1221 = vadd.f32 %v1202, %v1220
        %1222 = vdwg.mxu0
        %1223 = vmatpush.bf16.msra.mxu0 %v975
        %1224 = vmatpush.bf16.msra.mxu0 %v973
        %1225 = vmatpush.bf16.msra.mxu0 %v971
        %1226 = vmatpush.bf16.msra.mxu0 %v969
        %1227 = vmatpush.bf16.msra.mxu0 %v967
        %1228 = vmatpush.bf16.msra.mxu0 %v965
        %1229 = vmatpush.bf16.msra.mxu0 %v963
        %1230 = vmatpush.bf16.msra.mxu0 %v961
        %1231 = vmatmul.bf16.gmra.mxu0 %v515
        %v1232 = vpop.f32.mrf.mxu0
        %v1233 = vadd.f32 %v1214, %v1232
        %v1234 = vpop.f32.mrf.mxu0
        %v1235 = vadd.f32 %v1216, %v1234
        %1236 = vmatmul.bf16.gmra.mxu0 %v523
        %v1237 = vpop.f32.mrf.mxu0
        %v1238 = vadd.f32 %v1219, %v1237
        %v1239 = vpop.f32.mrf.mxu0
        %v1240 = vadd.f32 %v1221, %v1239
        %1241 = vdwg.mxu0
        %1242 = vmatpush.bf16.msra.mxu0 %v991
        %1243 = vmatpush.bf16.msra.mxu0 %v989
        %1244 = vmatpush.bf16.msra.mxu0 %v987
        %1245 = vmatpush.bf16.msra.mxu0 %v985
        %1246 = vmatpush.bf16.msra.mxu0 %v983
        %1247 = vmatpush.bf16.msra.mxu0 %v981
        %1248 = vmatpush.bf16.msra.mxu0 %v979
        %1249 = vmatpush.bf16.msra.mxu0 %v977
        %1250 = vmatmul.bf16.gmra.mxu0 %v516
        %v1251 = vpop.f32.mrf.mxu0
        %v1252 = vadd.f32 %v1233, %v1251
        %v1253 = vpop.f32.mrf.mxu0
        %v1254 = vadd.f32 %v1235, %v1253
        %1255 = vmatmul.bf16.gmra.mxu0 %v524
        %v1256 = vpop.f32.mrf.mxu0
        %v1257 = vadd.f32 %v1238, %v1256
        %v1258 = vpop.f32.mrf.mxu0
        %v1259 = vadd.f32 %v1240, %v1258
        %1260 = vdwg.mxu0
        %1261 = vmatpush.bf16.msra.mxu0 %v1007
        %1262 = vmatpush.bf16.msra.mxu0 %v1005
        %1263 = vmatpush.bf16.msra.mxu0 %v1003
        %1264 = vmatpush.bf16.msra.mxu0 %v1001
        %1265 = vmatpush.bf16.msra.mxu0 %v999
        %1266 = vmatpush.bf16.msra.mxu0 %v997
        %1267 = vmatpush.bf16.msra.mxu0 %v995
        %1268 = vmatpush.bf16.msra.mxu0 %v993
        %1269 = vmatmul.bf16.gmra.mxu0 %v517
        %v1270 = vpop.f32.mrf.mxu0
        %v1271 = vadd.f32 %v1252, %v1270
        %v1272 = vpop.f32.mrf.mxu0
        %v1273 = vadd.f32 %v1254, %v1272
        %1274 = vmatmul.bf16.gmra.mxu0 %v525
        %v1275 = vpop.f32.mrf.mxu0
        %v1276 = vadd.f32 %v1257, %v1275
        %v1277 = vpop.f32.mrf.mxu0
        %v1278 = vadd.f32 %v1259, %v1277
        %1279 = vdwg.mxu0
        %1280 = vmatpush.bf16.msra.mxu0 %v1023
        %1281 = vmatpush.bf16.msra.mxu0 %v1021
        %1282 = vmatpush.bf16.msra.mxu0 %v1019
        %1283 = vmatpush.bf16.msra.mxu0 %v1017
        %1284 = vmatpush.bf16.msra.mxu0 %v1015
        %1285 = vmatpush.bf16.msra.mxu0 %v1013
        %1286 = vmatpush.bf16.msra.mxu0 %v1011
        %1287 = vmatpush.bf16.msra.mxu0 %v1009
        %1288 = vmatmul.bf16.gmra.mxu0 %v518
        %v1289 = vpop.f32.mrf.mxu0
        %v1290 = vadd.f32 %v1271, %v1289
        %v1291 = vpop.f32.mrf.mxu0
        %v1292 = vadd.f32 %v1273, %v1291
        %1293 = vmatmul.bf16.gmra.mxu0 %v526
        %v1294 = vpop.f32.mrf.mxu0
        %v1295 = vadd.f32 %v1276, %v1294
        %v1296 = vpop.f32.mrf.mxu0
        %v1297 = vadd.f32 %v1278, %v1296
        %1298 = vdwg.mxu0
        %1299 = vmatpush.bf16.msra.mxu0 %v1039
        %1300 = vmatpush.bf16.msra.mxu0 %v1037
        %1301 = vmatpush.bf16.msra.mxu0 %v1035
        %1302 = vmatpush.bf16.msra.mxu0 %v1033
        %1303 = vmatpush.bf16.msra.mxu0 %v1031
        %1304 = vmatpush.bf16.msra.mxu0 %v1029
        %1305 = vmatpush.bf16.msra.mxu0 %v1027
        %1306 = vmatpush.bf16.msra.mxu0 %v1025
        %1307 = vmatmul.bf16.gmra.mxu0 %v519
        %v1308 = vpop.f32.mrf.mxu0
        %v1309 = vadd.f32 %v1290, %v1308
        %v1310 = vpop.f32.mrf.mxu0
        %v1311 = vadd.f32 %v1292, %v1310
        %1312 = vmatmul.bf16.gmra.mxu0 %v527
        %v1313 = vpop.f32.mrf.mxu0
        %v1314 = vadd.f32 %v1295, %v1313
        %v1315 = vpop.f32.mrf.mxu0
        %v1316 = vadd.f32 %v1297, %v1315
        %1317 = vdwg.mxu0
        %1318 = vmatpush.bf16.msra.mxu0 %v1055
        %1319 = vmatpush.bf16.msra.mxu0 %v1053
        %1320 = vmatpush.bf16.msra.mxu0 %v1051
        %1321 = vmatpush.bf16.msra.mxu0 %v1049
        %1322 = vmatpush.bf16.msra.mxu0 %v1047
        %1323 = vmatpush.bf16.msra.mxu0 %v1045
        %1324 = vmatpush.bf16.msra.mxu0 %v1043
        %1325 = vmatpush.bf16.msra.mxu0 %v1041
        %1326 = vmatmul.bf16.gmra.mxu0 %v520
        %v1327 = vpop.f32.mrf.mxu0
        %v1328 = vadd.f32 %v1309, %v1327
        %v1329 = vpop.f32.mrf.mxu0
        %v1330 = vadd.f32 %v1311, %v1329
        %1331 = vmatmul.bf16.gmra.mxu0 %v528
        %v1332 = vpop.f32.mrf.mxu0
        %v1333 = vadd.f32 %v1314, %v1332
        %v1334 = vpop.f32.mrf.mxu0
        %v1335 = vadd.f32 %v1316, %v1334
        %1336 = vdwg.mxu0
        %1337 = vmatpush.bf16.msra.mxu0 %v944
        %1338 = vmatpush.bf16.msra.mxu0 %v942
        %1339 = vmatpush.bf16.msra.mxu0 %v940
        %1340 = vmatpush.bf16.msra.mxu0 %v938
        %1341 = vmatpush.bf16.msra.mxu0 %v936
        %1342 = vmatpush.bf16.msra.mxu0 %v934
        %1343 = vmatpush.bf16.msra.mxu0 %v932
        %1344 = vmatpush.bf16.msra.mxu0 %v930
        %1345 = vmatmul.bf16.gmra.mxu0 %v513
        %v1346 = vpop.f32.mrf.mxu0
        %v1347 = vadd.f32 0.0, %v1346
        %v1348 = vpop.f32.mrf.mxu0
        %v1349 = vadd.f32 0.0, %v1348
        %1350 = vmatmul.bf16.gmra.mxu0 %v521
        %v1351 = vpop.f32.mrf.mxu0
        %v1352 = vadd.f32 0.0, %v1351
        %v1353 = vpop.f32.mrf.mxu0
        %v1354 = vadd.f32 0.0, %v1353
        %1355 = vdwg.mxu0
        %1356 = vmatpush.bf16.msra.mxu0 %v960
        %1357 = vmatpush.bf16.msra.mxu0 %v958
        %1358 = vmatpush.bf16.msra.mxu0 %v956
        %1359 = vmatpush.bf16.msra.mxu0 %v954
        %1360 = vmatpush.bf16.msra.mxu0 %v952
        %1361 = vmatpush.bf16.msra.mxu0 %v950
        %1362 = vmatpush.bf16.msra.mxu0 %v948
        %1363 = vmatpush.bf16.msra.mxu0 %v946
        %1364 = vmatmul.bf16.gmra.mxu0 %v514
        %v1365 = vpop.f32.mrf.mxu0
        %v1366 = vadd.f32 %v1347, %v1365
        %v1367 = vpop.f32.mrf.mxu0
        %v1368 = vadd.f32 %v1349, %v1367
        %1369 = vmatmul.bf16.gmra.mxu0 %v522
        %v1370 = vpop.f32.mrf.mxu0
        %v1371 = vadd.f32 %v1352, %v1370
        %v1372 = vpop.f32.mrf.mxu0
        %v1373 = vadd.f32 %v1354, %v1372
        %1374 = vdwg.mxu0
        %1375 = vmatpush.bf16.msra.mxu0 %v976
        %1376 = vmatpush.bf16.msra.mxu0 %v974
        %1377 = vmatpush.bf16.msra.mxu0 %v972
        %1378 = vmatpush.bf16.msra.mxu0 %v970
        %1379 = vmatpush.bf16.msra.mxu0 %v968
        %1380 = vmatpush.bf16.msra.mxu0 %v966
        %1381 = vmatpush.bf16.msra.mxu0 %v964
        %1382 = vmatpush.bf16.msra.mxu0 %v962
        %1383 = vmatmul.bf16.gmra.mxu0 %v515
        %v1384 = vpop.f32.mrf.mxu0
        %v1385 = vadd.f32 %v1366, %v1384
        %v1386 = vpop.f32.mrf.mxu0
        %v1387 = vadd.f32 %v1368, %v1386
        %1388 = vmatmul.bf16.gmra.mxu0 %v523
        %v1389 = vpop.f32.mrf.mxu0
        %v1390 = vadd.f32 %v1371, %v1389
        %v1391 = vpop.f32.mrf.mxu0
        %v1392 = vadd.f32 %v1373, %v1391
        %1393 = vdwg.mxu0
        %1394 = vmatpush.bf16.msra.mxu0 %v992
        %1395 = vmatpush.bf16.msra.mxu0 %v990
        %1396 = vmatpush.bf16.msra.mxu0 %v988
        %1397 = vmatpush.bf16.msra.mxu0 %v986
        %1398 = vmatpush.bf16.msra.mxu0 %v984
        %1399 = vmatpush.bf16.msra.mxu0 %v982
        %1400 = vmatpush.bf16.msra.mxu0 %v980
        %1401 = vmatpush.bf16.msra.mxu0 %v978
        %1402 = vmatmul.bf16.gmra.mxu0 %v516
        %v1403 = vpop.f32.mrf.mxu0
        %v1404 = vadd.f32 %v1385, %v1403
        %v1405 = vpop.f32.mrf.mxu0
        %v1406 = vadd.f32 %v1387, %v1405
        %1407 = vmatmul.bf16.gmra.mxu0 %v524
        %v1408 = vpop.f32.mrf.mxu0
        %v1409 = vadd.f32 %v1390, %v1408
        %v1410 = vpop.f32.mrf.mxu0
        %v1411 = vadd.f32 %v1392, %v1410
        %1412 = vdwg.mxu0
        %1413 = vmatpush.bf16.msra.mxu0 %v1008
        %1414 = vmatpush.bf16.msra.mxu0 %v1006
        %1415 = vmatpush.bf16.msra.mxu0 %v1004
        %1416 = vmatpush.bf16.msra.mxu0 %v1002
        %1417 = vmatpush.bf16.msra.mxu0 %v1000
        %1418 = vmatpush.bf16.msra.mxu0 %v998
        %1419 = vmatpush.bf16.msra.mxu0 %v996
        %1420 = vmatpush.bf16.msra.mxu0 %v994
        %1421 = vmatmul.bf16.gmra.mxu0 %v517
        %v1422 = vpop.f32.mrf.mxu0
        %v1423 = vadd.f32 %v1404, %v1422
        %v1424 = vpop.f32.mrf.mxu0
        %v1425 = vadd.f32 %v1406, %v1424
        %1426 = vmatmul.bf16.gmra.mxu0 %v525
        %v1427 = vpop.f32.mrf.mxu0
        %v1428 = vadd.f32 %v1409, %v1427
        %v1429 = vpop.f32.mrf.mxu0
        %v1430 = vadd.f32 %v1411, %v1429
        %1431 = vdwg.mxu0
        %1432 = vmatpush.bf16.msra.mxu0 %v1024
        %1433 = vmatpush.bf16.msra.mxu0 %v1022
        %1434 = vmatpush.bf16.msra.mxu0 %v1020
        %1435 = vmatpush.bf16.msra.mxu0 %v1018
        %1436 = vmatpush.bf16.msra.mxu0 %v1016
        %1437 = vmatpush.bf16.msra.mxu0 %v1014
        %1438 = vmatpush.bf16.msra.mxu0 %v1012
        %1439 = vmatpush.bf16.msra.mxu0 %v1010
        %1440 = vmatmul.bf16.gmra.mxu0 %v518
        %v1441 = vpop.f32.mrf.mxu0
        %v1442 = vadd.f32 %v1423, %v1441
        %v1443 = vpop.f32.mrf.mxu0
        %v1444 = vadd.f32 %v1425, %v1443
        %1445 = vmatmul.bf16.gmra.mxu0 %v526
        %v1446 = vpop.f32.mrf.mxu0
        %v1447 = vadd.f32 %v1428, %v1446
        %v1448 = vpop.f32.mrf.mxu0
        %v1449 = vadd.f32 %v1430, %v1448
        %1450 = vdwg.mxu0
        %1451 = vmatpush.bf16.msra.mxu0 %v1040
        %1452 = vmatpush.bf16.msra.mxu0 %v1038
        %1453 = vmatpush.bf16.msra.mxu0 %v1036
        %1454 = vmatpush.bf16.msra.mxu0 %v1034
        %1455 = vmatpush.bf16.msra.mxu0 %v1032
        %1456 = vmatpush.bf16.msra.mxu0 %v1030
        %1457 = vmatpush.bf16.msra.mxu0 %v1028
        %1458 = vmatpush.bf16.msra.mxu0 %v1026
        %1459 = vmatmul.bf16.gmra.mxu0 %v519
        %v1460 = vpop.f32.mrf.mxu0
        %v1461 = vadd.f32 %v1442, %v1460
        %v1462 = vpop.f32.mrf.mxu0
        %v1463 = vadd.f32 %v1444, %v1462
        %1464 = vmatmul.bf16.gmra.mxu0 %v527
        %v1465 = vpop.f32.mrf.mxu0
        %v1466 = vadd.f32 %v1447, %v1465
        %v1467 = vpop.f32.mrf.mxu0
        %v1468 = vadd.f32 %v1449, %v1467
        %1469 = vdwg.mxu0
        %1470 = vmatpush.bf16.msra.mxu0 %v1056
        %1471 = vmatpush.bf16.msra.mxu0 %v1054
        %1472 = vmatpush.bf16.msra.mxu0 %v1052
        %1473 = vmatpush.bf16.msra.mxu0 %v1050
        %1474 = vmatpush.bf16.msra.mxu0 %v1048
        %1475 = vmatpush.bf16.msra.mxu0 %v1046
        %1476 = vmatpush.bf16.msra.mxu0 %v1044
        %1477 = vmatpush.bf16.msra.mxu0 %v1042
        %1478 = vmatmul.bf16.gmra.mxu0 %v520
        %v1479 = vpop.f32.mrf.mxu0
        %v1480 = vadd.f32 %v1461, %v1479
        %v1481 = vpop.f32.mrf.mxu0
        %v1482 = vadd.f32 %v1463, %v1481
        %1483 = vmatmul.bf16.gmra.mxu0 %v528
        %v1484 = vpop.f32.mrf.mxu0
        %v1485 = vadd.f32 %v1466, %v1484
        %v1486 = vpop.f32.mrf.mxu0
        %v1487 = vadd.f32 %v1468, %v1486
        %1488 = vdwg.mxu0
        %p1489 = scmp.eq.s32.totalorder %s21, 0
        // Predicated region
        $region56: #{patch_discriminator.11} parent=50 // pred_check
          %p1490 = pneg %p1489
        $region57: #{patch_discriminator.11} parent=50 // pred_check_branch
          %1492 = sbr.rel (%p1490) target = $region59
        $region58: #{patch_discriminator.11} parent=50 // pred_region
          %1493 = vst [vmem:[#allocation2] sm:$0xff] %v1328
          %1494 = vst [vmem:[#allocation2 + $0x8] sm:$0xff] %v1480
          %1495 = vst [vmem:[#allocation2 + $0x10] sm:$0xff] %v1330
          %1496 = vst [vmem:[#allocation2 + $0x18] sm:$0xff] %v1482
          %1497 = vst [vmem:[#allocation2 + $0x20] sm:$0xff] %v1333
          %1498 = vst [vmem:[#allocation2 + $0x28] sm:$0xff] %v1485
          %1499 = vst [vmem:[#allocation2 + $0x30] sm:$0xff] %v1335
          %1500 = vst [vmem:[#allocation2 + $0x38] sm:$0xff] %v1487
        $region59: #{patch_discriminator.11} parent=50 // pred_fallthru
          _
        %p1501 = scmp.ne.s32.totalorder %s21, 0
        // Predicated region
        $region60: #{patch_discriminator.11} parent=50 // pred_check
          %p1502 = pneg %p1501
        $region61: #{patch_discriminator.11} parent=50 // pred_check_branch
          %1504 = sbr.rel (%p1502) target = $region63
        $region62: #{patch_discriminator.11} parent=50 // pred_region
          %v1505 = vld [vmem:[#allocation2] sm:$0xff]
          %v1506 = vld [vmem:[#allocation2 + $0x8] sm:$0xff]
          %v1507 = vld [vmem:[#allocation2 + $0x10] sm:$0xff]
          %v1508 = vld [vmem:[#allocation2 + $0x18] sm:$0xff]
          %v1509 = vld [vmem:[#allocation2 + $0x20] sm:$0xff]
          %v1510 = vld [vmem:[#allocation2 + $0x28] sm:$0xff]
          %v1511 = vld [vmem:[#allocation2 + $0x30] sm:$0xff]
          %v1512 = vld [vmem:[#allocation2 + $0x38] sm:$0xff]
          %v1513 = vadd.f32 %v1505, %v1328
          %v1514 = vadd.f32 %v1506, %v1480
          %v1515 = vadd.f32 %v1507, %v1330
          %v1516 = vadd.f32 %v1508, %v1482
          %v1517 = vadd.f32 %v1509, %v1333
          %v1518 = vadd.f32 %v1510, %v1485
          %v1519 = vadd.f32 %v1511, %v1335
          %v1520 = vadd.f32 %v1512, %v1487
          %1521 = vst [vmem:[#allocation2] sm:$0xff] %v1513
          %1522 = vst [vmem:[#allocation2 + $0x8] sm:$0xff] %v1514
          %1523 = vst [vmem:[#allocation2 + $0x10] sm:$0xff] %v1515
          %1524 = vst [vmem:[#allocation2 + $0x18] sm:$0xff] %v1516
          %1525 = vst [vmem:[#allocation2 + $0x20] sm:$0xff] %v1517
          %1526 = vst [vmem:[#allocation2 + $0x28] sm:$0xff] %v1518
          %1527 = vst [vmem:[#allocation2 + $0x30] sm:$0xff] %v1519
          %1528 = vst [vmem:[#allocation2 + $0x38] sm:$0xff] %v1520
        $region63: #{patch_discriminator.11} parent=50 // pred_fallthru
          _
        %p1529 = scmp.eq.s32.totalorder %s21, 1
        // Predicated region
        $region64: #{patch_discriminator.11} parent=50 // pred_check
          %p1530 = pneg %p1529
        $region65: #{patch_discriminator.11} parent=50 // pred_check_branch
          %1532 = sbr.rel (%p1530) target = $region67
        $region66: #{patch_discriminator.11} parent=50 // pred_region
          %v1533 = vld [vmem:[#allocation2] sm:$0xff]
          %v1534 = vld [vmem:[#allocation2 + $0x8] sm:$0xff]
          %v1535 = vld [vmem:[#allocation2 + $0x10] sm:$0xff]
          %v1536 = vld [vmem:[#allocation2 + $0x18] sm:$0xff]
          %v1537 = vld [vmem:[#allocation2 + $0x20] sm:$0xff]
          %v1538 = vld [vmem:[#allocation2 + $0x28] sm:$0xff]
          %v1539 = vld [vmem:[#allocation2 + $0x30] sm:$0xff]
          %v1540 = vld [vmem:[#allocation2 + $0x38] sm:$0xff]
          %v1541 = vld [vmem:[%s307] sm:$0x3]
          %v1543 = vperm.slane %v1541, 0
          %v1544 = vperm.slane %v1541, 1
          %v1547 = vadd.f32 %v1533, %v1543
          %v1548 = vadd.f32 %v1534, %v1544
          %v1549 = vadd.f32 %v1535, %v1543
          %v1550 = vadd.f32 %v1536, %v1544
          %v1551 = vadd.f32 %v1537, %v1543
          %v1552 = vadd.f32 %v1538, %v1544
          %v1553 = vadd.f32 %v1539, %v1543
          %v1554 = vadd.f32 %v1540, %v1544
          %v1555 = vpack.c.bf16 %v1548, %v1547
          %v1556 = vpack.c.bf16 %v1550, %v1549
          %v1557 = vpack.c.bf16 %v1552, %v1551
          %v1558 = vpack.c.bf16 %v1554, %v1553
          %1559 = vst [vmem:[%s318] sm:$0xff] %v1555
          %1560 = vst [vmem:[%s318 + $0x8] sm:$0xff] %v1556
          %1561 = vst [vmem:[%s318 + $0x10] sm:$0xff] %v1557
          %1562 = vst [vmem:[%s318 + $0x18] sm:$0xff] %v1558
        $region67: #{patch_discriminator.11} parent=50 // pred_fallthru
          _
        %s1563 = smul.u32 4, %s19
        %s1564 = smul.u32 2, %s20
        %p1565 = scmp.lt.s32.totalorder %s1563, 3
        %s1566 = scalar_select %p1565, %s1563, 3
        %p1567 = scmp.lt.s32.totalorder %s1564, 1
        %s1568 = scalar_select %p1567, %s1564, 1
        %s1569 = smul.addr %s1566, 2
        %s1570 = sadd.s32 %s1568, %s1569
        %s1571 = smul.addr %s1570, 4
        %s1572 = scalar_lea.vmem %s3, %s1571
        // Predicated region
        $region68: #{patch_discriminator.11} parent=50 // pred_check
          %p1573 = pneg %p135
        $region69: #{patch_discriminator.11} parent=50 // pred_check_branch
          %1575 = sbr.rel (%p1573) target = $region71
        $region70: #{patch_discriminator.11} parent=50 // pred_region
          %s1576 = smul.u32 4, %s19
          %s1577 = smul.u32 2, %s20
        $region71: #{patch_discriminator.11} parent=50 // pred_fallthru
          _
        // Predicated region
        $region72: #{patch_discriminator.11} parent=50 // pred_check
          %p1578 = pneg %p135
        $region73: #{patch_discriminator.11} parent=50 // pred_check_branch
          %1580 = sbr.rel (%p1578) target = $region75
        $region74: #{patch_discriminator.11} parent=50 // pred_region
          %s1581 = smul.u32 4, %s19
          %s1582 = smul.u32 2, %s20
          %p1583 = scmp.lt.s32.totalorder %s1581, 3
          %s1584 = scalar_select %p1583, %s1581, 3
          %p1585 = scmp.lt.s32.totalorder %s1582, 1
          %s1586 = scalar_select %p1585, %s1582, 1
          %s1587 = smul.addr %s1584, 2
          %s1588 = sadd.s32 %s1586, %s1587
          %s1589 = smul.addr %s1588, 4
          %s1590 = scalar_lea.vmem %s3, %s1589
        $region75: #{patch_discriminator.11} parent=50 // pred_fallthru
          _
      $region51: #{patch_discriminator.11} parent=5 // pred_fallthru
        _
      %p1591 = scmp.le.s32.totalorder 2, %s9
      // Predicated region
      $region76: #{patch_discriminator.11} parent=5 // pred_check
        %p1592 = pneg %p1591
      $region77: #{patch_discriminator.11} parent=5 // pred_check_branch
        %1594 = sbr.rel (%p1592) target = $region79
      $region78: #{patch_discriminator.11} parent=5 // pred_region
        %s1595 = ssub.s32 %s9, 2
      $region79: #{patch_discriminator.11} parent=5 // pred_fallthru
        _
    $region6: #{patch_discriminator.11} parent=1 // loop_footer
      %s13 = sadd.s32 1, %s9
    $region7: #{patch_discriminator.11} parent=1 // loop_footer_branch
      %8 = sbr.rel target = $region3
    $region8: #{patch_discriminator.11} parent=1 // loop_exit
      _

// kernel: patch_discriminator.14
$region0: #{patch_discriminator.14}
  #allocation0 [shape = 'u32[]', space=smem, size = 0x4, offset = 0x4, fixed_abs, tag = 'smem constant byte address 0x4 - core index']
  #allocation1 [shape = 'u32[72,128]{1,0:T(1,128)}', space=vmem, size = 0x9000, scoped, tag = 'internal scratch']
  %s0 = inlined_call_operand.vmem [shape: bf16[2,9,512], index: 0, kind: input, shape index: {}]
  %s1 = inlined_call_operand.vmem [shape: bf16[2,9,512], index: 1, kind: output, shape index: {}]
  %s2 = sld [smem:[#allocation0]]
  $region115: #{patch_discriminator.14} parent=0
    _
  %s4 = ssub.s32 1, %s2
  %s5 = scalar_select 0, %s4, %s2
  $region1: #{patch_discriminator.14} parent=0
    #allocation2 [shape = 'u8[8192]{0}', space=vmem, size = 0x2000, scoped, tag = 'input window, operand 0']
    #allocation3 [shape = 'u8[8192]{0}', space=vmem, size = 0x2000, scoped, tag = 'output window, operand 0']
    loop: start=0, step=1, limit=10
    $region2: #{patch_discriminator.14} parent=1 // loop_pre_header
      _
    $region3: #{patch_discriminator.14} parent=1 // loop_header
      %s7 = sphi 0, %s11
      %p8 = scmp.ge.s32.totalorder %s7, 10
      %s14 = sphi 0, %s26
      %s15 = sphi 0, %s22
      %s16 = sphi 0, %s14
      %s17 = sphi 0, %s15
      %s18 = sphi 0, %s16
      %s19 = sphi 0, %s17
      %s31 = sphi 0, %s33
      %s34 = sphi 0, %s31
      %s35 = sphi 0, %s34
      %s51 = sphi 0, %s35
      %s59 = sphi 0, %s61
      %s62 = sphi 0, %s59
      %s63 = sphi 0, %s62
      %s79 = sphi 0, %s63
    $region4: #{patch_discriminator.14} parent=1 // loop_header_branch
      %10 = sbr.rel (%p8) target = $region8
    $region5: #{patch_discriminator.14} parent=1 // loop_body
      %s12 = ssub.s32 %s7, 1
      %s13 = ssub.s32 %s7, 2
      %s20 = sadd.s32 1, %s15
      %p21 = scmp.ge.s32.totalorder %s20, 4
      %s22 = scalar_select %p21, 0, %s20
      %s23 = sadd.s32 1, %s14
      %s24 = scalar_select %p21, %s23, %s14
      %p25 = scmp.ge.s32.totalorder %s24, 2
      %s26 = scalar_select %p25, 0, %s24
      %s27 = ssub.s32 %s14, %s26
      %s28 = ssub.s32 %s15, %s22
      %s29 = sor.u32 %s27, %s28
      %p30 = scmp.eq.s32.totalorder %s29, 0
      %s32 = sadd.s32 %s31, 1
      %s33 = scalar_select %p30, %s31, %s32
      %p36 = pneg %p30
      %p37 = scmp.eq.s32.totalorder %s7, 7
      %p38 = por %p36, %p37
      %p39 = scmp.ne.s32.totalorder %s31, %s34
      %p40 = scmp.eq.s32.totalorder %s7, 0
      %p41 = por %p39, %p40
      %p42 = scmp.ne.s32.totalorder %s31, %s34
      %p43 = scmp.eq.s32.totalorder %s12, 7
      %p44 = por %p42, %p43
      %p45 = scmp.ne.s32.totalorder %s34, %s35
      %p46 = scmp.eq.s32.totalorder %s12, 0
      %p47 = por %p45, %p46
      %p48 = scmp.ne.s32.totalorder %s34, %s35
      %p49 = scmp.eq.s32.totalorder %s13, 7
      %p50 = por %p48, %p49
      %p52 = scmp.ne.s32.totalorder %s35, %s51
      %p53 = scmp.eq.s32.totalorder %s13, 0
      %p54 = por %p52, %p53
      %s55 = ssub.s32 %s14, %s26
      %s56 = ssub.s32 %s15, %s22
      %s57 = sor.u32 %s55, %s56
      %p58 = scmp.eq.s32.totalorder %s57, 0
      %s60 = sadd.s32 %s59, 1
      %s61 = scalar_select %p58, %s59, %s60
      %p64 = pneg %p58
      %p65 = scmp.eq.s32.totalorder %s7, 7
      %p66 = por %p64, %p65
      %p67 = scmp.ne.s32.totalorder %s59, %s62
      %p68 = scmp.eq.s32.totalorder %s7, 0
      %p69 = por %p67, %p68
      %p70 = scmp.ne.s32.totalorder %s59, %s62
      %p71 = scmp.eq.s32.totalorder %s12, 7
      %p72 = por %p70, %p71
      %p73 = scmp.ne.s32.totalorder %s62, %s63
      %p74 = scmp.eq.s32.totalorder %s12, 0
      %p75 = por %p73, %p74
      %p76 = scmp.ne.s32.totalorder %s62, %s63
      %p77 = scmp.eq.s32.totalorder %s13, 7
      %p78 = por %p76, %p77
      %p80 = scmp.ne.s32.totalorder %s63, %s79
      %p81 = scmp.eq.s32.totalorder %s13, 0
      %p82 = por %p80, %p81
      %p83 = scmp.le.s32.totalorder 1, %s7
      %p84 = scmp.lt.s32.totalorder %s7, 9
      %p85 = pnand %p83, %p84
      %p86 = pneg %p85
      // Predicated region
      $region9: #{patch_discriminator.14} parent=5 // pred_check
        _
      $region10: #{patch_discriminator.14} parent=5 // pred_check_branch
        %88 = sbr.rel (%p85) target = $region12
      $region11: #{patch_discriminator.14} parent=5 // pred_region
        %s89 = ssub.s32 %s7, 1
      $region12: #{patch_discriminator.14} parent=5 // pred_fallthru
        _
      %p90 = scmp.lt.s32.totalorder %s7, 8
      // Predicated region
      $region13: #{patch_discriminator.14} parent=5 // pred_check
        %p91 = pneg %p90
      $region14: #{patch_discriminator.14} parent=5 // pred_check_branch
        %93 = sbr.rel (%p91) target = $region16
      $region15: #{patch_discriminator.14} parent=5 // pred_region
        // Predicated region
        $region17: #{patch_discriminator.14} parent=15 // pred_check
          %p94 = pneg %p41
        $region18: #{patch_discriminator.14} parent=15 // pred_check_branch
          %96 = sbr.rel (%p94) target = $region20
        $region19: #{patch_discriminator.14} parent=15 // pred_region
          %s97 = sand.u32 %s31, 1
          %s98 = sand.u32 %s31, 1
          %s99 = smul.addr %s98, 8
          %s100 = scalar_lea.vmem [#allocation2], %s99
          %s101 = smul.addr %s14, 8
          %s102 = sadd.s32 %s15, %s101
          %s103 = smul.addr %s102, 4
          %s104 = scalar_lea.vmem %s0, %s103
          // Predicated region
          $region21: #{patch_discriminator.14} parent=19 // pred_check
            _
          $region22: #{patch_discriminator.14} parent=19 // pred_check_branch
            %106 = sbr.rel (0) target = $region24
          $region23: #{patch_discriminator.14} parent=19 // pred_region
            // Predicated region
            $region25: #{patch_discriminator.14} parent=23 // pred_check
              _
            $region26: #{patch_discriminator.14} parent=23 // pred_check_branch
              %108 = sbr.rel target = $region28
            $region27: #{patch_discriminator.14} parent=23 // pred_region
              // Predicated region
              $region40: #{patch_discriminator.14} parent=27 // pred_check
                _
              $region41: #{patch_discriminator.14} parent=27 // pred_check_branch
                %126 = sbr.rel (0) target = $region43
              $region42: #{patch_discriminator.14} parent=27 // pred_region
                loop: start=0, step=1, limit=1
                $region44: #{patch_discriminator.14} parent=42 // loop_pre_header
                  _
                $region45: #{patch_discriminator.14} parent=42 // loop_header
                  %s128 = sphi 0, %s132
                  %p129 = scmp.ge.s32.totalorder %s128, 1
                  %s133 = sphi %s104, %s104
                  %s134 = sphi %s100, %s100
                $region46: #{patch_discriminator.14} parent=42 // loop_header_branch
                  %131 = sbr.rel (%p129) target = $region50
                $region47: #{patch_discriminator.14} parent=42 // loop_body
                  _
                $region48: #{patch_discriminator.14} parent=42 // loop_footer
                  %s132 = sadd.s32 1, %s128
                $region49: #{patch_discriminator.14} parent=42 // loop_footer_branch
                  %127 = sbr.rel target = $region45
                $region50: #{patch_discriminator.14} parent=42 // loop_exit
                  _
                %s136 = ssub.s32 16, 1
                loop: start=0, step=1, limit=1
                $region51: #{patch_discriminator.14} parent=42 // loop_pre_header
                  _
                $region52: #{patch_discriminator.14} parent=42 // loop_header
                  %s138 = sphi 0, %s142
                  %p139 = scmp.ge.s32.totalorder %s138, 1
                  %s143 = sphi %s104, %s104
                  %s144 = sphi %s100, %s100
                $region53: #{patch_discriminator.14} parent=42 // loop_header_branch
                  %141 = sbr.rel (%p139) target = $region57
                $region54: #{patch_discriminator.14} parent=42 // loop_body
                  %v145 = vld [vmem:[%s143] sm:%s136]
                  %146 = vst [vmem:[%s144] sm:%s136] %v145
                  %v147 = vld [vmem:[%s143 + $0x10] sm:%s136]
                  %148 = vst [vmem:[%s144 + $0x4] sm:%s136] %v147
                $region55: #{patch_discriminator.14} parent=42 // loop_footer
                  %s142 = sadd.s32 1, %s138
                $region56: #{patch_discriminator.14} parent=42 // loop_footer_branch
                  %137 = sbr.rel target = $region52
                $region57: #{patch_discriminator.14} parent=42 // loop_exit
                  _
              $region43: #{patch_discriminator.14} parent=27 // pred_fallthru
                _
            $region28: #{patch_discriminator.14} parent=23 // pred_fallthru
              _
            // Predicated region
            $region29: #{patch_discriminator.14} parent=23 // pred_check
              _
            $region30: #{patch_discriminator.14} parent=23 // pred_check_branch
              %110 = sbr.rel (0) target = $region32
            $region31: #{patch_discriminator.14} parent=23 // pred_region
              %s112 = ssub.s32 16, 1
              loop: start=0, step=1, limit=1
              $region33: #{patch_discriminator.14} parent=31 // loop_pre_header
                _
              $region34: #{patch_discriminator.14} parent=31 // loop_header
                %s114 = sphi 0, %s118
                %p115 = scmp.ge.s32.totalorder %s114, 1
                %s119 = sphi %s104, %s104
                %s120 = sphi %s100, %s100
              $region35: #{patch_discriminator.14} parent=31 // loop_header_branch
                %117 = sbr.rel (%p115) target = $region39
              $region36: #{patch_discriminator.14} parent=31 // loop_body
                %v121 = vld [vmem:[%s119] sm:%s112]
                %122 = vst [vmem:[%s120] sm:%s112] %v121
                %v123 = vld [vmem:[%s119 + $0x10] sm:%s112]
                %124 = vst [vmem:[%s120 + $0x4] sm:%s112] %v123
              $region37: #{patch_discriminator.14} parent=31 // loop_footer
                %s118 = sadd.s32 1, %s114
              $region38: #{patch_discriminator.14} parent=31 // loop_footer_branch
                %113 = sbr.rel target = $region34
              $region39: #{patch_discriminator.14} parent=31 // loop_exit
                _
            $region32: #{patch_discriminator.14} parent=23 // pred_fallthru
              _
          $region24: #{patch_discriminator.14} parent=19 // pred_fallthru
            _
          %149 = vnop
        $region20: #{patch_discriminator.14} parent=15 // pred_fallthru
          _
      $region16: #{patch_discriminator.14} parent=5 // pred_fallthru
        _
      %p150 = scmp.le.s32.totalorder 1, %s7
      %p151 = scmp.lt.s32.totalorder %s7, 9
      %p152 = pnand %p150, %p151
      %p153 = pneg %p152
      // Predicated region
      $region58: #{patch_discriminator.14} parent=5 // pred_check
        _
      $region59: #{patch_discriminator.14} parent=5 // pred_check_branch
        %155 = sbr.rel (%p152) target = $region61
      $region60: #{patch_discriminator.14} parent=5 // pred_region
        %s156 = ssub.s32 %s7, 1
        %s157 = sand.u32 %s34, 1
        %s158 = sand.u32 %s34, 1
        %s159 = smul.addr %s158, 8
        %s160 = scalar_lea.vmem [#allocation2], %s159
        // Predicated region
        $region62: #{patch_discriminator.14} parent=60 // pred_check
          %p161 = pneg %p47
        $region63: #{patch_discriminator.14} parent=60 // pred_check_branch
          %163 = sbr.rel (%p161) target = $region65
        $region64: #{patch_discriminator.14} parent=60 // pred_region
          _
        $region65: #{patch_discriminator.14} parent=60 // pred_fallthru
          _
        %s164 = sand.u32 %s34, 1
        %s165 = sand.u32 %s34, 1
        %s166 = smul.addr %s165, 8
        %s167 = scalar_lea.vmem [#allocation2], %s166
        %p168 = pneg %p47
        %p169 = pneg %p44
        %p170 = pneg %p75
        %p171 = pneg %p72
        %s172 = sand.u32 %s62, 1
        %s173 = sand.u32 %s62, 1
        %s174 = smul.addr %s173, 8
        %s175 = scalar_lea.vmem [#allocation3], %s174
        %v176 = vld [vmem:[%s160] sm:$0xf]
        %v177 = vld [vmem:[%s160 + $0x4] sm:$0x1]
        %v178 = vunpack.c.l.bf16 %v176
        %v179 = vunpack.c.l.bf16 %v177
        %vm180 = vcmask 1040384
        %v181 = vsel %vm180, %v179, 0.0
        %v182 = vadd.f32 %v178, %v181
        %v183 = vrot.slane %v182, 4
        %v184 = vadd.f32 %v182, %v183
        %v185 = vrot.slane %v184, 2
        %v186 = vadd.f32 %v184, %v185
        %v187 = vrot.slane %v186, 1
        %v188 = vadd.f32 %v186, %v187
        %v189 = vmul.f32 %v188, 0.11111111
        %v190 = vmul.f32 %v178, %v178
        %v191 = vmul.f32 %v179, %v179
        %v192 = vsel %vm180, %v191, 0.0
        %v193 = vadd.f32 %v190, %v192
        %v194 = vrot.slane %v193, 4
        %v195 = vadd.f32 %v193, %v194
        %v196 = vrot.slane %v195, 2
        %v197 = vadd.f32 %v195, %v196
        %v198 = vrot.slane %v197, 1
        %v199 = vadd.f32 %v197, %v198
        %v200 = vmul.f32 %v199, 0.11111111
        %v201 = vmul.f32 %v189, %v189
        %v202 = vsub.f32 %v200, %v201
        %v203 = vsub.f32 %v178, %v189
        %v204 = vsub.f32 %v179, %v189
        %v205 = vadd.f32 %v202, 1e-05
        %v206 = vrsqrt.pop %v205
        %v207 = vmul.f32 %v206, %v205
        %v208 = vmul.f32 %v207, %v206
        %v209 = vmul.f32 0.5, %v208
        %v210 = vsub.f32 1.5, %v209
        %v211 = vmul.f32 %v206, %v210
        %vm212 = vweird.f32 %v205
        %vm213 = vweird.f32 %v206
        %vm214 = vmor %vm212, %vm213
        %v215 = vsel %vm214, %v206, %v211
        %v216 = vmul.f32 %v203, %v215
        %v217 = vmul.f32 %v204, %v215
        %vm218 = vcmp.ge.f32.partialorder %v216, 0.0
        %vm219 = vcmp.ge.f32.partialorder %v217, 0.0
        %v220 = vmul.f32 %v216, 0.2
        %v221 = vmul.f32 %v217, 0.2
        %v222 = vsel %vm218, %v216, %v220
        %v223 = vsel %vm219, %v217, %v221
        %v224 = vpack.c.bf16 %v222, %v222
        %v225 = vpack.c.bf16 %v223, %v223
        %226 = vst [vmem:[%s175] sm:$0xf] %v224
        %vm227 = vcmask 1040384
        %vm228 = vsmask.f32 256
        %vm229 = vmand %vm227, %vm228
        %v230 = vld [vmem:[%s175 + $0x4] sm:$0x1]
        %v231 = vsel %vm229, %v225, %v230
        %232 = vst [vmem:[%s175 + $0x4] sm:$0x1] %v231
        %s233 = sand.u32 %s62, 1
        %s234 = sand.u32 %s62, 1
        %s235 = smul.addr %s234, 8
        %s236 = scalar_lea.vmem [#allocation3], %s235
        // Predicated region
        $region66: #{patch_discriminator.14} parent=60 // pred_check
          %p237 = pneg %p72
        $region67: #{patch_discriminator.14} parent=60 // pred_check_branch
          %239 = sbr.rel (%p237) target = $region69
        $region68: #{patch_discriminator.14} parent=60 // pred_region
          %s240 = smul.addr %s16, 8
          %s241 = sadd.s32 %s17, %s240
          %s242 = smul.addr %s241, 4
          %s243 = scalar_lea.vmem %s1, %s242
          // Predicated region
          $region70: #{patch_discriminator.14} parent=68 // pred_check
            _
          $region71: #{patch_discriminator.14} parent=68 // pred_check_branch
            %245 = sbr.rel (0) target = $region73
          $region72: #{patch_discriminator.14} parent=68 // pred_region
            // Predicated region
            $region74: #{patch_discriminator.14} parent=72 // pred_check
              _
            $region75: #{patch_discriminator.14} parent=72 // pred_check_branch
              %247 = sbr.rel target = $region77
            $region76: #{patch_discriminator.14} parent=72 // pred_region
              // Predicated region
              $region89: #{patch_discriminator.14} parent=76 // pred_check
                _
              $region90: #{patch_discriminator.14} parent=76 // pred_check_branch
                %265 = sbr.rel (0) target = $region92
              $region91: #{patch_discriminator.14} parent=76 // pred_region
                loop: start=0, step=1, limit=1
                $region93: #{patch_discriminator.14} parent=91 // loop_pre_header
                  _
                $region94: #{patch_discriminator.14} parent=91 // loop_header
                  %s267 = sphi 0, %s271
                  %p268 = scmp.ge.s32.totalorder %s267, 1
                  %s272 = sphi %s236, %s236
                  %s273 = sphi %s243, %s243
                $region95: #{patch_discriminator.14} parent=91 // loop_header_branch
                  %270 = sbr.rel (%p268) target = $region99
                $region96: #{patch_discriminator.14} parent=91 // loop_body
                  _
                $region97: #{patch_discriminator.14} parent=91 // loop_footer
                  %s271 = sadd.s32 1, %s267
                $region98: #{patch_discriminator.14} parent=91 // loop_footer_branch
                  %266 = sbr.rel target = $region94
                $region99: #{patch_discriminator.14} parent=91 // loop_exit
                  _
                %s275 = ssub.s32 16, 1
                loop: start=0, step=1, limit=1
                $region100: #{patch_discriminator.14} parent=91 // loop_pre_header
                  _
                $region101: #{patch_discriminator.14} parent=91 // loop_header
                  %s277 = sphi 0, %s281
                  %p278 = scmp.ge.s32.totalorder %s277, 1
                  %s282 = sphi %s236, %s236
                  %s283 = sphi %s243, %s243
                $region102: #{patch_discriminator.14} parent=91 // loop_header_branch
                  %280 = sbr.rel (%p278) target = $region106
                $region103: #{patch_discriminator.14} parent=91 // loop_body
                  %v284 = vld [vmem:[%s282] sm:%s275]
                  %285 = vst [vmem:[%s283] sm:%s275] %v284
                  %v286 = vld [vmem:[%s282 + $0x4] sm:%s275]
                  %287 = vst [vmem:[%s283 + $0x10] sm:%s275] %v286
                $region104: #{patch_discriminator.14} parent=91 // loop_footer
                  %s281 = sadd.s32 1, %s277
                $region105: #{patch_discriminator.14} parent=91 // loop_footer_branch
                  %276 = sbr.rel target = $region101
                $region106: #{patch_discriminator.14} parent=91 // loop_exit
                  _
              $region92: #{patch_discriminator.14} parent=76 // pred_fallthru
                _
            $region77: #{patch_discriminator.14} parent=72 // pred_fallthru
              _
            // Predicated region
            $region78: #{patch_discriminator.14} parent=72 // pred_check
              _
            $region79: #{patch_discriminator.14} parent=72 // pred_check_branch
              %249 = sbr.rel (0) target = $region81
            $region80: #{patch_discriminator.14} parent=72 // pred_region
              %s251 = ssub.s32 16, 1
              loop: start=0, step=1, limit=1
              $region82: #{patch_discriminator.14} parent=80 // loop_pre_header
                _
              $region83: #{patch_discriminator.14} parent=80 // loop_header
                %s253 = sphi 0, %s257
                %p254 = scmp.ge.s32.totalorder %s253, 1
                %s258 = sphi %s236, %s236
                %s259 = sphi %s243, %s243
              $region84: #{patch_discriminator.14} parent=80 // loop_header_branch
                %256 = sbr.rel (%p254) target = $region88
              $region85: #{patch_discriminator.14} parent=80 // loop_body
                %v260 = vld [vmem:[%s258] sm:%s251]
                %261 = vst [vmem:[%s259] sm:%s251] %v260
                %v262 = vld [vmem:[%s258 + $0x4] sm:%s251]
                %263 = vst [vmem:[%s259 + $0x10] sm:%s251] %v262
              $region86: #{patch_discriminator.14} parent=80 // loop_footer
                %s257 = sadd.s32 1, %s253
              $region87: #{patch_discriminator.14} parent=80 // loop_footer_branch
                %252 = sbr.rel target = $region83
              $region88: #{patch_discriminator.14} parent=80 // loop_exit
                _
            $region81: #{patch_discriminator.14} parent=72 // pred_fallthru
              _
          $region73: #{patch_discriminator.14} parent=68 // pred_fallthru
            _
          %288 = vnop
        $region69: #{patch_discriminator.14} parent=60 // pred_fallthru
          _
      $region61: #{patch_discriminator.14} parent=5 // pred_fallthru
        _
      %p289 = scmp.le.s32.totalorder 2, %s7
      // Predicated region
      $region107: #{patch_discriminator.14} parent=5 // pred_check
        %p290 = pneg %p289
      $region108: #{patch_discriminator.14} parent=5 // pred_check_branch
        %292 = sbr.rel (%p290) target = $region110
      $region109: #{patch_discriminator.14} parent=5 // pred_region
        %s293 = ssub.s32 %s7, 2
        // Predicated region
        $region111: #{patch_discriminator.14} parent=109 // pred_check
          %p294 = pneg %p78
        $region112: #{patch_discriminator.14} parent=109 // pred_check_branch
          %296 = sbr.rel (%p294) target = $region114
        $region113: #{patch_discriminator.14} parent=109 // pred_region
          %s297 = sand.u32 %s63, 1
          %s298 = sand.u32 %s63, 1
          %s299 = smul.addr %s298, 8
          %s300 = scalar_lea.vmem [#allocation3], %s299
        $region114: #{patch_discriminator.14} parent=109 // pred_fallthru
          _
      $region110: #{patch_discriminator.14} parent=5 // pred_fallthru
        _
    $region6: #{patch_discriminator.14} parent=1 // loop_footer
      %s11 = sadd.s32 1, %s7
    $region7: #{patch_discriminator.14} parent=1 // loop_footer_branch
      %6 = sbr.rel target = $region3
    $region8: #{patch_discriminator.14} parent=1 // loop_exit
      _

// kernel: patch_discriminator.13
$region0: #{patch_discriminator.13}
  #allocation0 [shape = 'u32[]', space=smem, size = 0x4, offset = 0x4, fixed_abs, tag = 'smem constant byte address 0x4 - core index']
  #allocation1 [shape = 'u32[72,128]{1,0:T(1,128)}', space=vmem, size = 0x9000, scoped, tag = 'internal scratch']
  #allocation2 [shape = 'f32[24,256]{1,0:T(8,128)}', space=vmem, size = 0x6000, scoped, tag = 'scratch operand']
  %s0 = inlined_call_operand.vmem [shape: bf16[18,4096], index: 0, kind: input, shape index: {}]
  %s1 = inlined_call_operand.vmem [shape: bf16[4096,512], index: 1, kind: input, shape index: {}]
  %s2 = inlined_call_operand.vmem [shape: f32[1,512], index: 2, kind: input, shape index: {}]
  %s3 = inlined_call_operand.vmem [shape: bf16[18,512], index: 3, kind: output, shape index: {}]
  %s4 = sld [smem:[#allocation0]]
  $region152: #{patch_discriminator.13} parent=0
    _
  %s6 = ssub.s32 1, %s4
  %s7 = scalar_select 0, %s6, %s4
  $region1: #{patch_discriminator.13} parent=0
    #allocation3 [shape = 'u8[98304]{0}', space=vmem, size = 0x18000, scoped, tag = 'input window, operand 0']
    #allocation4 [shape = 'u8[1048576]{0}', space=vmem, size = 0x100000, scoped, tag = 'input window, operand 1']
    #allocation5 [shape = 'u8[24576]{0}', space=vmem, size = 0x6000, scoped, tag = 'output window, operand 0']
    loop: start=0, step=1, limit=10
    $region2: #{patch_discriminator.13} parent=1 // loop_pre_header
      _
    $region3: #{patch_discriminator.13} parent=1 // loop_header
      %s9 = sphi 0, %s13
      %p10 = scmp.ge.s32.totalorder %s9, 10
      %s16 = sphi 0, %s35
      %s17 = sphi 0, %s31
      %s18 = sphi 0, %s27
      %s19 = sphi 0, %s16
      %s20 = sphi 0, %s17
      %s21 = sphi 0, %s18
      %s22 = sphi 0, %s19
      %s23 = sphi 0, %s20
      %s24 = sphi 0, %s21
      %s40 = sphi 0, %s42
      %s43 = sphi 0, %s40
      %s44 = sphi 0, %s43
      %s60 = sphi 0, %s44
      %s68 = sphi 0, %s70
      %s71 = sphi 0, %s68
      %s72 = sphi 0, %s71
      %s88 = sphi 0, %s72
      %s94 = sphi 0, %s96
      %s97 = sphi 0, %s94
      %s98 = sphi 0, %s97
      %s114 = sphi 0, %s98
      %s122 = sphi 0, %s124
      %s125 = sphi 0, %s122
      %s126 = sphi 0, %s125
      %s142 = sphi 0, %s126
    $region4: #{patch_discriminator.13} parent=1 // loop_header_branch
      %12 = sbr.rel (%p10) target = $region8
    $region5: #{patch_discriminator.13} parent=1 // loop_body
      %s14 = ssub.s32 %s9, 1
      %s15 = ssub.s32 %s9, 2
      %s25 = sadd.s32 1, %s18
      %p26 = scmp.ge.s32.totalorder %s25, 4
      %s27 = scalar_select %p26, 0, %s25
      %s28 = sadd.s32 1, %s17
      %s29 = scalar_select %p26, %s28, %s17
      %p30 = scmp.ge.s32.totalorder %s29, 2
      %s31 = scalar_select %p30, 0, %s29
      %s32 = sadd.s32 1, %s16
      %s33 = scalar_select %p30, %s32, %s16
      %p34 = scmp.ge.s32.totalorder %s33, 1
      %s35 = scalar_select %p34, 0, %s33
      %s36 = ssub.s32 %s16, %s35
      %s37 = ssub.s32 %s18, %s27
      %s38 = sor.u32 %s36, %s37
      %p39 = scmp.eq.s32.totalorder %s38, 0
      %s41 = sadd.s32 %s40, 1
      %s42 = scalar_select %p39, %s40, %s41
      %p45 = pneg %p39
      %p46 = scmp.eq.s32.totalorder %s9, 7
      %p47 = por %p45, %p46
      %p48 = scmp.ne.s32.totalorder %s40, %s43
      %p49 = scmp.eq.s32.totalorder %s9, 0
      %p50 = por %p48, %p49
      %p51 = scmp.ne.s32.totalorder %s40, %s43
      %p52 = scmp.eq.s32.totalorder %s14, 7
      %p53 = por %p51, %p52
      %p54 = scmp.ne.s32.totalorder %s43, %s44
      %p55 = scmp.eq.s32.totalorder %s14, 0
      %p56 = por %p54, %p55
      %p57 = scmp.ne.s32.totalorder %s43, %s44
      %p58 = scmp.eq.s32.totalorder %s15, 7
      %p59 = por %p57, %p58
      %p61 = scmp.ne.s32.totalorder %s44, %s60
      %p62 = scmp.eq.s32.totalorder %s15, 0
      %p63 = por %p61, %p62
      %s64 = ssub.s32 %s18, %s27
      %s65 = ssub.s32 %s17, %s31
      %s66 = sor.u32 %s64, %s65
      %p67 = scmp.eq.s32.totalorder %s66, 0
      %s69 = sadd.s32 %s68, 1
      %s70 = scalar_select %p67, %s68, %s69
      %p73 = pneg %p67
      %p74 = scmp.eq.s32.totalorder %s9, 7
      %p75 = por %p73, %p74
      %p76 = scmp.ne.s32.totalorder %s68, %s71
      %p77 = scmp.eq.s32.totalorder %s9, 0
      %p78 = por %p76, %p77
      %p79 = scmp.ne.s32.totalorder %s68, %s71
      %p80 = scmp.eq.s32.totalorder %s14, 7
      %p81 = por %p79, %p80
      %p82 = scmp.ne.s32.totalorder %s71, %s72
      %p83 = scmp.eq.s32.totalorder %s14, 0
      %p84 = por %p82, %p83
      %p85 = scmp.ne.s32.totalorder %s71, %s72
      %p86 = scmp.eq.s32.totalorder %s15, 7
      %p87 = por %p85, %p86
      %p89 = scmp.ne.s32.totalorder %s72, %s88
      %p90 = scmp.eq.s32.totalorder %s15, 0
      %p91 = por %p89, %p90
      %s92 = ssub.s32 %s17, %s31
      %p93 = scmp.eq.s32.totalorder %s92, 0
      %s95 = sadd.s32 %s94, 1
      %s96 = scalar_select %p93, %s94, %s95
      %p99 = pneg %p93
      %p100 = scmp.eq.s32.totalorder %s9, 7
      %p101 = por %p99, %p100
      %p102 = scmp.ne.s32.totalorder %s94, %s97
      %p103 = scmp.eq.s32.totalorder %s9, 0
      %p104 = por %p102, %p103
      %p105 = scmp.ne.s32.totalorder %s94, %s97
      %p106 = scmp.eq.s32.totalorder %s14, 7
      %p107 = por %p105, %p106
      %p108 = scmp.ne.s32.totalorder %s97, %s98
      %p109 = scmp.eq.s32.totalorder %s14, 0
      %p110 = por %p108, %p109
      %p111 = scmp.ne.s32.totalorder %s97, %s98
      %p112 = scmp.eq.s32.totalorder %s15, 7
      %p113 = por %p111, %p112
      %p115 = scmp.ne.s32.totalorder %s98, %s114
      %p116 = scmp.eq.s32.totalorder %s15, 0
      %p117 = por %p115, %p116
      %s118 = ssub.s32 %s16, %s35
      %s119 = ssub.s32 %s17, %s31
      %s120 = sor.u32 %s118, %s119
      %p121 = scmp.eq.s32.totalorder %s120, 0
      %s123 = sadd.s32 %s122, 1
      %s124 = scalar_select %p121, %s122, %s123
      %p127 = pneg %p121
      %p128 = scmp.eq.s32.totalorder %s9, 7
      %p129 = por %p127, %p128
      %p130 = scmp.ne.s32.totalorder %s122, %s125
      %p131 = scmp.eq.s32.totalorder %s9, 0
      %p132 = por %p130, %p131
      %p133 = scmp.ne.s32.totalorder %s122, %s125
      %p134 = scmp.eq.s32.totalorder %s14, 7
      %p135 = por %p133, %p134
      %p136 = scmp.ne.s32.totalorder %s125, %s126
      %p137 = scmp.eq.s32.totalorder %s14, 0
      %p138 = por %p136, %p137
      %p139 = scmp.ne.s32.totalorder %s125, %s126
      %p140 = scmp.eq.s32.totalorder %s15, 7
      %p141 = por %p139, %p140
      %p143 = scmp.ne.s32.totalorder %s126, %s142
      %p144 = scmp.eq.s32.totalorder %s15, 0
      %p145 = por %p143, %p144
      %p146 = scmp.le.s32.totalorder 1, %s9
      %p147 = scmp.lt.s32.totalorder %s9, 9
      %p148 = pnand %p146, %p147
      %p149 = pneg %p148
      // Predicated region
      $region9: #{patch_discriminator.13} parent=5 // pred_check
        _
      $region10: #{patch_discriminator.13} parent=5 // pred_check_branch
        %151 = sbr.rel (%p148) target = $region12
      $region11: #{patch_discriminator.13} parent=5 // pred_region
        %s152 = ssub.s32 %s9, 1
      $region12: #{patch_discriminator.13} parent=5 // pred_fallthru
        _
      %p153 = scmp.lt.s32.totalorder %s9, 8
      // Predicated region
      $region13: #{patch_discriminator.13} parent=5 // pred_check
        %p154 = pneg %p153
      $region14: #{patch_discriminator.13} parent=5 // pred_check_branch
        %156 = sbr.rel (%p154) target = $region16
      $region15: #{patch_discriminator.13} parent=5 // pred_region
        // Predicated region
        $region17: #{patch_discriminator.13} parent=15 // pred_check
          %p157 = pneg %p50
        $region18: #{patch_discriminator.13} parent=15 // pred_check_branch
          %159 = sbr.rel (%p157) target = $region20
        $region19: #{patch_discriminator.13} parent=15 // pred_region
          %s160 = sand.u32 %s40, 1
          %s161 = sand.u32 %s40, 1
          %s162 = smul.addr %s161, 96
          %s163 = scalar_lea.vmem [#allocation3], %s162
          %s164 = smul.u32 3, %s16
          %s165 = smul.u32 8, %s18
          %s166 = smul.addr %s164, 32
          %s167 = sadd.s32 %s165, %s166
          %s168 = smul.addr %s167, 4
          %s169 = scalar_lea.vmem %s0, %s168
          // Predicated region
          $region21: #{patch_discriminator.13} parent=19 // pred_check
            _
          $region22: #{patch_discriminator.13} parent=19 // pred_check_branch
            %171 = sbr.rel (0) target = $region24
          $region23: #{patch_discriminator.13} parent=19 // pred_region
            // Predicated region
            $region25: #{patch_discriminator.13} parent=23 // pred_check
              _
            $region26: #{patch_discriminator.13} parent=23 // pred_check_branch
              %173 = sbr.rel (0) target = $region28
            $region27: #{patch_discriminator.13} parent=23 // pred_region
              loop: start=0, step=1, limit=1
              $region29: #{patch_discriminator.13} parent=27 // loop_pre_header
                _
              $region30: #{patch_discriminator.13} parent=27 // loop_header
                %s175 = sphi 0, %s179
                %p176 = scmp.ge.s32.totalorder %s175, 1
                %s180 = sphi %s169, %s169
                %s181 = sphi %s163, %s163
              $region31: #{patch_discriminator.13} parent=27 // loop_header_branch
                %178 = sbr.rel (%p176) target = $region35
              $region32: #{patch_discriminator.13} parent=27 // loop_body
                %v182 = vld [vmem:[%s180] sm:$0xff]
                %183 = vst [vmem:[%s181] sm:$0xff] %v182
                %v184 = vld [vmem:[%s180 + $0x8] sm:$0xff]
                %185 = vst [vmem:[%s181 + $0x8] sm:$0xff] %v184
                %v186 = vld [vmem:[%s180 + $0x10] sm:$0xff]
                %187 = vst [vmem:[%s181 + $0x10] sm:$0xff] %v186
                %v188 = vld [vmem:[%s180 + $0x18] sm:$0xff]
                %189 = vst [vmem:[%s181 + $0x18] sm:$0xff] %v188
                %v190 = vld [vmem:[%s180 + $0x80] sm:$0xff]
                %191 = vst [vmem:[%s181 + $0x20] sm:$0xff] %v190
                %v192 = vld [vmem:[%s180 + $0x88] sm:$0xff]
                %193 = vst [vmem:[%s181 + $0x28] sm:$0xff] %v192
                %v194 = vld [vmem:[%s180 + $0x90] sm:$0xff]
                %195 = vst [vmem:[%s181 + $0x30] sm:$0xff] %v194
                %v196 = vld [vmem:[%s180 + $0x98] sm:$0xff]
                %197 = vst [vmem:[%s181 + $0x38] sm:$0xff] %v196
                %v198 = vld [vmem:[%s180 + $0x100] sm:$0xff]
                %199 = vst [vmem:[%s181 + $0x40] sm:$0xff] %v198
                %v200 = vld [vmem:[%s180 + $0x108] sm:$0xff]
                %201 = vst [vmem:[%s181 + $0x48] sm:$0xff] %v200
                %v202 = vld [vmem:[%s180 + $0x110] sm:$0xff]
                %203 = vst [vmem:[%s181 + $0x50] sm:$0xff] %v202
                %v204 = vld [vmem:[%s180 + $0x118] sm:$0xff]
                %205 = vst [vmem:[%s181 + $0x58] sm:$0xff] %v204
              $region33: #{patch_discriminator.13} parent=27 // loop_footer
                %s179 = sadd.s32 1, %s175
              $region34: #{patch_discriminator.13} parent=27 // loop_footer_branch
                %174 = sbr.rel target = $region30
              $region35: #{patch_discriminator.13} parent=27 // loop_exit
                _
            $region28: #{patch_discriminator.13} parent=23 // pred_fallthru
              _
            // Predicated region
            $region36: #{patch_discriminator.13} parent=23 // pred_check
              _
            $region37: #{patch_discriminator.13} parent=23 // pred_check_branch
              %207 = sbr.rel target = $region39
            $region38: #{patch_discriminator.13} parent=23 // pred_region
              _
            $region39: #{patch_discriminator.13} parent=23 // pred_fallthru
              _
          $region24: #{patch_discriminator.13} parent=19 // pred_fallthru
            _
          %208 = vnop
        $region20: #{patch_discriminator.13} parent=15 // pred_fallthru
          _
        // Predicated region
        $region40: #{patch_discriminator.13} parent=15 // pred_check
          %p209 = pneg %p78
        $region41: #{patch_discriminator.13} parent=15 // pred_check_branch
          %211 = sbr.rel (%p209) target = $region43
        $region42: #{patch_discriminator.13} parent=15 // pred_region
          %s212 = sand.u32 %s68, 1
          %s213 = sand.u32 %s68, 1
          %s214 = smul.addr %s213, 1024
          %s215 = scalar_lea.vmem [#allocation4], %s214
          %s216 = smul.u32 128, %s18
          %s217 = smul.u32 2, %s17
          %s218 = smul.addr %s216, 4
          %s219 = sadd.s32 %s217, %s218
          %s220 = smul.addr %s219, 4
          %s221 = scalar_lea.vmem %s1, %s220
          // Predicated region
          $region44: #{patch_discriminator.13} parent=42 // pred_check
            _
          $region45: #{patch_discriminator.13} parent=42 // pred_check_branch
            %223 = sbr.rel (0) target = $region47
          $region46: #{patch_discriminator.13} parent=42 // pred_region
            // Predicated region
            $region48: #{patch_discriminator.13} parent=46 // pred_check
              _
            $region49: #{patch_discriminator.13} parent=46 // pred_check_branch
              %225 = sbr.rel (0) target = $region51
            $region50: #{patch_discriminator.13} parent=46 // pred_region
              // Predicated region
              $region63: #{patch_discriminator.13} parent=50 // pred_check
                _
              $region64: #{patch_discriminator.13} parent=50 // pred_check_branch
                %495 = sbr.rel (0) target = $region66
              $region65: #{patch_discriminator.13} parent=50 // pred_region
                loop: start=0, step=1, limit=1
                $region67: #{patch_discriminator.13} parent=65 // loop_pre_header
                  _
                $region68: #{patch_discriminator.13} parent=65 // loop_header
                  %s497 = sphi 0, %s501
                  %p498 = scmp.ge.s32.totalorder %s497, 1
                  %s502 = sphi %s221, %s221
                  %s503 = sphi %s215, %s215
                $region69: #{patch_discriminator.13} parent=65 // loop_header_branch
                  %500 = sbr.rel (%p498) target = $region73
                $region70: #{patch_discriminator.13} parent=65 // loop_body
                  %v504 = vld [vmem:[%s502] sm:$0xff]
                  %505 = vst [vmem:[%s503] sm:$0xff] %v504
                  %v506 = vld [vmem:[%s502 + $0x10] sm:$0xff]
                  %507 = vst [vmem:[%s503 + $0x8] sm:$0xff] %v506
                  %v508 = vld [vmem:[%s502 + $0x20] sm:$0xff]
                  %509 = vst [vmem:[%s503 + $0x10] sm:$0xff] %v508
                  %v510 = vld [vmem:[%s502 + $0x30] sm:$0xff]
                  %511 = vst [vmem:[%s503 + $0x18] sm:$0xff] %v510
                  %v512 = vld [vmem:[%s502 + $0x40] sm:$0xff]
                  %513 = vst [vmem:[%s503 + $0x20] sm:$0xff] %v512
                  %v514 = vld [vmem:[%s502 + $0x50] sm:$0xff]
                  %515 = vst [vmem:[%s503 + $0x28] sm:$0xff] %v514
                  %v516 = vld [vmem:[%s502 + $0x60] sm:$0xff]
                  %517 = vst [vmem:[%s503 + $0x30] sm:$0xff] %v516
                  %v518 = vld [vmem:[%s502 + $0x70] sm:$0xff]
                  %519 = vst [vmem:[%s503 + $0x38] sm:$0xff] %v518
                  %v520 = vld [vmem:[%s502 + $0x80] sm:$0xff]
                  %521 = vst [vmem:[%s503 + $0x40] sm:$0xff] %v520
                  %v522 = vld [vmem:[%s502 + $0x90] sm:$0xff]
                  %523 = vst [vmem:[%s503 + $0x48] sm:$0xff] %v522
                  %v524 = vld [vmem:[%s502 + $0xa0] sm:$0xff]
                  %525 = vst [vmem:[%s503 + $0x50] sm:$0xff] %v524
                  %v526 = vld [vmem:[%s502 + $0xb0] sm:$0xff]
                  %527 = vst [vmem:[%s503 + $0x58] sm:$0xff] %v526
                  %v528 = vld [vmem:[%s502 + $0xc0] sm:$0xff]
                  %529 = vst [vmem:[%s503 + $0x60] sm:$0xff] %v528
                  %v530 = vld [vmem:[%s502 + $0xd0] sm:$0xff]
                  %531 = vst [vmem:[%s503 + $0x68] sm:$0xff] %v530
                  %v532 = vld [vmem:[%s502 + $0xe0] sm:$0xff]
                  %533 = vst [vmem:[%s503 + $0x70] sm:$0xff] %v532
                  %v534 = vld [vmem:[%s502 + $0xf0] sm:$0xff]
                  %535 = vst [vmem:[%s503 + $0x78] sm:$0xff] %v534
                  %v536 = vld [vmem:[%s502 + $0x100] sm:$0xff]
                  %537 = vst [vmem:[%s503 + $0x80] sm:$0xff] %v536
                  %v538 = vld [vmem:[%s502 + $0x110] sm:$0xff]
                  %539 = vst [vmem:[%s503 + $0x88] sm:$0xff] %v538
                  %v540 = vld [vmem:[%s502 + $0x120] sm:$0xff]
                  %541 = vst [vmem:[%s503 + $0x90] sm:$0xff] %v540
                  %v542 = vld [vmem:[%s502 + $0x130] sm:$0xff]
                  %543 = vst [vmem:[%s503 + $0x98] sm:$0xff] %v542
                  %v544 = vld [vmem:[%s502 + $0x140] sm:$0xff]
                  %545 = vst [vmem:[%s503 + $0xa0] sm:$0xff] %v544
                  %v546 = vld [vmem:[%s502 + $0x150] sm:$0xff]
                  %547 = vst [vmem:[%s503 + $0xa8] sm:$0xff] %v546
                  %v548 = vld [vmem:[%s502 + $0x160] sm:$0xff]
                  %549 = vst [vmem:[%s503 + $0xb0] sm:$0xff] %v548
                  %v550 = vld [vmem:[%s502 + $0x170] sm:$0xff]
                  %551 = vst [vmem:[%s503 + $0xb8] sm:$0xff] %v550
                  %v552 = vld [vmem:[%s502 + $0x180] sm:$0xff]
                  %553 = vst [vmem:[%s503 + $0xc0] sm:$0xff] %v552
                  %v554 = vld [vmem:[%s502 + $0x190] sm:$0xff]
                  %555 = vst [vmem:[%s503 + $0xc8] sm:$0xff] %v554
                  %v556 = vld [vmem:[%s502 + $0x1a0] sm:$0xff]
                  %557 = vst [vmem:[%s503 + $0xd0] sm:$0xff] %v556
                  %v558 = vld [vmem:[%s502 + $0x1b0] sm:$0xff]
                  %559 = vst [vmem:[%s503 + $0xd8] sm:$0xff] %v558
                  %v560 = vld [vmem:[%s502 + $0x1c0] sm:$0xff]
                  %561 = vst [vmem:[%s503 + $0xe0] sm:$0xff] %v560
                  %v562 = vld [vmem:[%s502 + $0x1d0] sm:$0xff]
                  %563 = vst [vmem:[%s503 + $0xe8] sm:$0xff] %v562
                  %v564 = vld [vmem:[%s502 + $0x1e0] sm:$0xff]
                  %565 = vst [vmem:[%s503 + $0xf0] sm:$0xff] %v564
                  %v566 = vld [vmem:[%s502 + $0x1f0] sm:$0xff]
                  %567 = vst [vmem:[%s503 + $0xf8] sm:$0xff] %v566
                  %v568 = vld [vmem:[%s502 + $0x200] sm:$0xff]
                  %569 = vst [vmem:[%s503 + $0x100] sm:$0xff] %v568
                  %v570 = vld [vmem:[%s502 + $0x210] sm:$0xff]
                  %571 = vst [vmem:[%s503 + $0x108] sm:$0xff] %v570
                  %v572 = vld [vmem:[%s502 + $0x220] sm:$0xff]
                  %573 = vst [vmem:[%s503 + $0x110] sm:$0xff] %v572
                  %v574 = vld [vmem:[%s502 + $0x230] sm:$0xff]
                  %575 = vst [vmem:[%s503 + $0x118] sm:$0xff] %v574
                  %v576 = vld [vmem:[%s502 + $0x240] sm:$0xff]
                  %577 = vst [vmem:[%s503 + $0x120] sm:$0xff] %v576
                  %v578 = vld [vmem:[%s502 + $0x250] sm:$0xff]
                  %579 = vst [vmem:[%s503 + $0x128] sm:$0xff] %v578
                  %v580 = vld [vmem:[%s502 + $0x260] sm:$0xff]
                  %581 = vst [vmem:[%s503 + $0x130] sm:$0xff] %v580
                  %v582 = vld [vmem:[%s502 + $0x270] sm:$0xff]
                  %583 = vst [vmem:[%s503 + $0x138] sm:$0xff] %v582
                  %v584 = vld [vmem:[%s502 + $0x280] sm:$0xff]
                  %585 = vst [vmem:[%s503 + $0x140] sm:$0xff] %v584
                  %v586 = vld [vmem:[%s502 + $0x290] sm:$0xff]
                  %587 = vst [vmem:[%s503 + $0x148] sm:$0xff] %v586
                  %v588 = vld [vmem:[%s502 + $0x2a0] sm:$0xff]
                  %589 = vst [vmem:[%s503 + $0x150] sm:$0xff] %v588
                  %v590 = vld [vmem:[%s502 + $0x2b0] sm:$0xff]
                  %591 = vst [vmem:[%s503 + $0x158] sm:$0xff] %v590
                  %v592 = vld [vmem:[%s502 + $0x2c0] sm:$0xff]
                  %593 = vst [vmem:[%s503 + $0x160] sm:$0xff] %v592
                  %v594 = vld [vmem:[%s502 + $0x2d0] sm:$0xff]
                  %595 = vst [vmem:[%s503 + $0x168] sm:$0xff] %v594
                  %v596 = vld [vmem:[%s502 + $0x2e0] sm:$0xff]
                  %597 = vst [vmem:[%s503 + $0x170] sm:$0xff] %v596
                  %v598 = vld [vmem:[%s502 + $0x2f0] sm:$0xff]
                  %599 = vst [vmem:[%s503 + $0x178] sm:$0xff] %v598
                  %v600 = vld [vmem:[%s502 + $0x300] sm:$0xff]
                  %601 = vst [vmem:[%s503 + $0x180] sm:$0xff] %v600
                  %v602 = vld [vmem:[%s502 + $0x310] sm:$0xff]
                  %603 = vst [vmem:[%s503 + $0x188] sm:$0xff] %v602
                  %v604 = vld [vmem:[%s502 + $0x320] sm:$0xff]
                  %605 = vst [vmem:[%s503 + $0x190] sm:$0xff] %v604
                  %v606 = vld [vmem:[%s502 + $0x330] sm:$0xff]
                  %607 = vst [vmem:[%s503 + $0x198] sm:$0xff] %v606
                  %v608 = vld [vmem:[%s502 + $0x340] sm:$0xff]
                  %609 = vst [vmem:[%s503 + $0x1a0] sm:$0xff] %v608
                  %v610 = vld [vmem:[%s502 + $0x350] sm:$0xff]
                  %611 = vst [vmem:[%s503 + $0x1a8] sm:$0xff] %v610
                  %v612 = vld [vmem:[%s502 + $0x360] sm:$0xff]
                  %613 = vst [vmem:[%s503 + $0x1b0] sm:$0xff] %v612
                  %v614 = vld [vmem:[%s502 + $0x370] sm:$0xff]
                  %615 = vst [vmem:[%s503 + $0x1b8] sm:$0xff] %v614
                  %v616 = vld [vmem:[%s502 + $0x380] sm:$0xff]
                  %617 = vst [vmem:[%s503 + $0x1c0] sm:$0xff] %v616
                  %v618 = vld [vmem:[%s502 + $0x390] sm:$0xff]
                  %619 = vst [vmem:[%s503 + $0x1c8] sm:$0xff] %v618
                  %v620 = vld [vmem:[%s502 + $0x3a0] sm:$0xff]
                  %621 = vst [vmem:[%s503 + $0x1d0] sm:$0xff] %v620
                  %v622 = vld [vmem:[%s502 + $0x3b0] sm:$0xff]
                  %623 = vst [vmem:[%s503 + $0x1d8] sm:$0xff] %v622
                  %v624 = vld [vmem:[%s502 + $0x3c0] sm:$0xff]
                  %625 = vst [vmem:[%s503 + $0x1e0] sm:$0xff] %v624
                  %v626 = vld [vmem:[%s502 + $0x3d0] sm:$0xff]
                  %627 = vst [vmem:[%s503 + $0x1e8] sm:$0xff] %v626
                  %v628 = vld [vmem:[%s502 + $0x3e0] sm:$0xff]
                  %629 = vst [vmem:[%s503 + $0x1f0] sm:$0xff] %v628
                  %v630 = vld [vmem:[%s502 + $0x3f0] sm:$0xff]
                  %631 = vst [vmem:[%s503 + $0x1f8] sm:$0xff] %v630
                  %v632 = vld [vmem:[%s502 + $0x400] sm:$0xff]
                  %633 = vst [vmem:[%s503 + $0x200] sm:$0xff] %v632
                  %v634 = vld [vmem:[%s502 + $0x410] sm:$0xff]
                  %635 = vst [vmem:[%s503 + $0x208] sm:$0xff] %v634
                  %v636 = vld [vmem:[%s502 + $0x420] sm:$0xff]
                  %637 = vst [vmem:[%s503 + $0x210] sm:$0xff] %v636
                  %v638 = vld [vmem:[%s502 + $0x430] sm:$0xff]
                  %639 = vst [vmem:[%s503 + $0x218] sm:$0xff] %v638
                  %v640 = vld [vmem:[%s502 + $0x440] sm:$0xff]
                  %641 = vst [vmem:[%s503 + $0x220] sm:$0xff] %v640
                  %v642 = vld [vmem:[%s502 + $0x450] sm:$0xff]
                  %643 = vst [vmem:[%s503 + $0x228] sm:$0xff] %v642
                  %v644 = vld [vmem:[%s502 + $0x460] sm:$0xff]
                  %645 = vst [vmem:[%s503 + $0x230] sm:$0xff] %v644
                  %v646 = vld [vmem:[%s502 + $0x470] sm:$0xff]
                  %647 = vst [vmem:[%s503 + $0x238] sm:$0xff] %v646
                  %v648 = vld [vmem:[%s502 + $0x480] sm:$0xff]
                  %649 = vst [vmem:[%s503 + $0x240] sm:$0xff] %v648
                  %v650 = vld [vmem:[%s502 + $0x490] sm:$0xff]
                  %651 = vst [vmem:[%s503 + $0x248] sm:$0xff] %v650
                  %v652 = vld [vmem:[%s502 + $0x4a0] sm:$0xff]
                  %653 = vst [vmem:[%s503 + $0x250] sm:$0xff] %v652
                  %v654 = vld [vmem:[%s502 + $0x4b0] sm:$0xff]
                  %655 = vst [vmem:[%s503 + $0x258] sm:$0xff] %v654
                  %v656 = vld [vmem:[%s502 + $0x4c0] sm:$0xff]
                  %657 = vst [vmem:[%s503 + $0x260] sm:$0xff] %v656
                  %v658 = vld [vmem:[%s502 + $0x4d0] sm:$0xff]
                  %659 = vst [vmem:[%s503 + $0x268] sm:$0xff] %v658
                  %v660 = vld [vmem:[%s502 + $0x4e0] sm:$0xff]
                  %661 = vst [vmem:[%s503 + $0x270] sm:$0xff] %v660
                  %v662 = vld [vmem:[%s502 + $0x4f0] sm:$0xff]
                  %663 = vst [vmem:[%s503 + $0x278] sm:$0xff] %v662
                  %v664 = vld [vmem:[%s502 + $0x500] sm:$0xff]
                  %665 = vst [vmem:[%s503 + $0x280] sm:$0xff] %v664
                  %v666 = vld [vmem:[%s502 + $0x510] sm:$0xff]
                  %667 = vst [vmem:[%s503 + $0x288] sm:$0xff] %v666
                  %v668 = vld [vmem:[%s502 + $0x520] sm:$0xff]
                  %669 = vst [vmem:[%s503 + $0x290] sm:$0xff] %v668
                  %v670 = vld [vmem:[%s502 + $0x530] sm:$0xff]
                  %671 = vst [vmem:[%s503 + $0x298] sm:$0xff] %v670
                  %v672 = vld [vmem:[%s502 + $0x540] sm:$0xff]
                  %673 = vst [vmem:[%s503 + $0x2a0] sm:$0xff] %v672
                  %v674 = vld [vmem:[%s502 + $0x550] sm:$0xff]
                  %675 = vst [vmem:[%s503 + $0x2a8] sm:$0xff] %v674
                  %v676 = vld [vmem:[%s502 + $0x560] sm:$0xff]
                  %677 = vst [vmem:[%s503 + $0x2b0] sm:$0xff] %v676
                  %v678 = vld [vmem:[%s502 + $0x570] sm:$0xff]
                  %679 = vst [vmem:[%s503 + $0x2b8] sm:$0xff] %v678
                  %v680 = vld [vmem:[%s502 + $0x580] sm:$0xff]
                  %681 = vst [vmem:[%s503 + $0x2c0] sm:$0xff] %v680
                  %v682 = vld [vmem:[%s502 + $0x590] sm:$0xff]
                  %683 = vst [vmem:[%s503 + $0x2c8] sm:$0xff] %v682
                  %v684 = vld [vmem:[%s502 + $0x5a0] sm:$0xff]
                  %685 = vst [vmem:[%s503 + $0x2d0] sm:$0xff] %v684
                  %v686 = vld [vmem:[%s502 + $0x5b0] sm:$0xff]
                  %687 = vst [vmem:[%s503 + $0x2d8] sm:$0xff] %v686
                  %v688 = vld [vmem:[%s502 + $0x5c0] sm:$0xff]
                  %689 = vst [vmem:[%s503 + $0x2e0] sm:$0xff] %v688
                  %v690 = vld [vmem:[%s502 + $0x5d0] sm:$0xff]
                  %691 = vst [vmem:[%s503 + $0x2e8] sm:$0xff] %v690
                  %v692 = vld [vmem:[%s502 + $0x5e0] sm:$0xff]
                  %693 = vst [vmem:[%s503 + $0x2f0] sm:$0xff] %v692
                  %v694 = vld [vmem:[%s502 + $0x5f0] sm:$0xff]
                  %695 = vst [vmem:[%s503 + $0x2f8] sm:$0xff] %v694
                  %v696 = vld [vmem:[%s502 + $0x600] sm:$0xff]
                  %697 = vst [vmem:[%s503 + $0x300] sm:$0xff] %v696
                  %v698 = vld [vmem:[%s502 + $0x610] sm:$0xff]
                  %699 = vst [vmem:[%s503 + $0x308] sm:$0xff] %v698
                  %v700 = vld [vmem:[%s502 + $0x620] sm:$0xff]
                  %701 = vst [vmem:[%s503 + $0x310] sm:$0xff] %v700
                  %v702 = vld [vmem:[%s502 + $0x630] sm:$0xff]
                  %703 = vst [vmem:[%s503 + $0x318] sm:$0xff] %v702
                  %v704 = vld [vmem:[%s502 + $0x640] sm:$0xff]
                  %705 = vst [vmem:[%s503 + $0x320] sm:$0xff] %v704
                  %v706 = vld [vmem:[%s502 + $0x650] sm:$0xff]
                  %707 = vst [vmem:[%s503 + $0x328] sm:$0xff] %v706
                  %v708 = vld [vmem:[%s502 + $0x660] sm:$0xff]
                  %709 = vst [vmem:[%s503 + $0x330] sm:$0xff] %v708
                  %v710 = vld [vmem:[%s502 + $0x670] sm:$0xff]
                  %711 = vst [vmem:[%s503 + $0x338] sm:$0xff] %v710
                  %v712 = vld [vmem:[%s502 + $0x680] sm:$0xff]
                  %713 = vst [vmem:[%s503 + $0x340] sm:$0xff] %v712
                  %v714 = vld [vmem:[%s502 + $0x690] sm:$0xff]
                  %715 = vst [vmem:[%s503 + $0x348] sm:$0xff] %v714
                  %v716 = vld [vmem:[%s502 + $0x6a0] sm:$0xff]
                  %717 = vst [vmem:[%s503 + $0x350] sm:$0xff] %v716
                  %v718 = vld [vmem:[%s502 + $0x6b0] sm:$0xff]
                  %719 = vst [vmem:[%s503 + $0x358] sm:$0xff] %v718
                  %v720 = vld [vmem:[%s502 + $0x6c0] sm:$0xff]
                  %721 = vst [vmem:[%s503 + $0x360] sm:$0xff] %v720
                  %v722 = vld [vmem:[%s502 + $0x6d0] sm:$0xff]
                  %723 = vst [vmem:[%s503 + $0x368] sm:$0xff] %v722
                  %v724 = vld [vmem:[%s502 + $0x6e0] sm:$0xff]
                  %725 = vst [vmem:[%s503 + $0x370] sm:$0xff] %v724
                  %v726 = vld [vmem:[%s502 + $0x6f0] sm:$0xff]
                  %727 = vst [vmem:[%s503 + $0x378] sm:$0xff] %v726
                  %v728 = vld [vmem:[%s502 + $0x700] sm:$0xff]
                  %729 = vst [vmem:[%s503 + $0x380] sm:$0xff] %v728
                  %v730 = vld [vmem:[%s502 + $0x710] sm:$0xff]
                  %731 = vst [vmem:[%s503 + $0x388] sm:$0xff] %v730
                  %v732 = vld [vmem:[%s502 + $0x720] sm:$0xff]
                  %733 = vst [vmem:[%s503 + $0x390] sm:$0xff] %v732
                  %v734 = vld [vmem:[%s502 + $0x730] sm:$0xff]
                  %735 = vst [vmem:[%s503 + $0x398] sm:$0xff] %v734
                  %v736 = vld [vmem:[%s502 + $0x740] sm:$0xff]
                  %737 = vst [vmem:[%s503 + $0x3a0] sm:$0xff] %v736
                  %v738 = vld [vmem:[%s502 + $0x750] sm:$0xff]
                  %739 = vst [vmem:[%s503 + $0x3a8] sm:$0xff] %v738
                  %v740 = vld [vmem:[%s502 + $0x760] sm:$0xff]
                  %741 = vst [vmem:[%s503 + $0x3b0] sm:$0xff] %v740
                  %v742 = vld [vmem:[%s502 + $0x770] sm:$0xff]
                  %743 = vst [vmem:[%s503 + $0x3b8] sm:$0xff] %v742
                  %v744 = vld [vmem:[%s502 + $0x780] sm:$0xff]
                  %745 = vst [vmem:[%s503 + $0x3c0] sm:$0xff] %v744
                  %v746 = vld [vmem:[%s502 + $0x790] sm:$0xff]
                  %747 = vst [vmem:[%s503 + $0x3c8] sm:$0xff] %v746
                  %v748 = vld [vmem:[%s502 + $0x7a0] sm:$0xff]
                  %749 = vst [vmem:[%s503 + $0x3d0] sm:$0xff] %v748
                  %v750 = vld [vmem:[%s502 + $0x7b0] sm:$0xff]
                  %751 = vst [vmem:[%s503 + $0x3d8] sm:$0xff] %v750
                  %v752 = vld [vmem:[%s502 + $0x7c0] sm:$0xff]
                  %753 = vst [vmem:[%s503 + $0x3e0] sm:$0xff] %v752
                  %v754 = vld [vmem:[%s502 + $0x7d0] sm:$0xff]
                  %755 = vst [vmem:[%s503 + $0x3e8] sm:$0xff] %v754
                  %v756 = vld [vmem:[%s502 + $0x7e0] sm:$0xff]
                  %757 = vst [vmem:[%s503 + $0x3f0] sm:$0xff] %v756
                  %v758 = vld [vmem:[%s502 + $0x7f0] sm:$0xff]
                  %759 = vst [vmem:[%s503 + $0x3f8] sm:$0xff] %v758
                $region71: #{patch_discriminator.13} parent=65 // loop_footer
                  %s501 = sadd.s32 1, %s497
                $region72: #{patch_discriminator.13} parent=65 // loop_footer_branch
                  %496 = sbr.rel target = $region68
                $region73: #{patch_discriminator.13} parent=65 // loop_exit
                  _
              $region66: #{patch_discriminator.13} parent=50 // pred_fallthru
                _
              // Predicated region
              $region74: #{patch_discriminator.13} parent=50 // pred_check
                _
              $region75: #{patch_discriminator.13} parent=50 // pred_check_branch
                %761 = sbr.rel target = $region77
              $region76: #{patch_discriminator.13} parent=50 // pred_region
                _
              $region77: #{patch_discriminator.13} parent=50 // pred_fallthru
                _
            $region51: #{patch_discriminator.13} parent=46 // pred_fallthru
              _
            // Predicated region
            $region52: #{patch_discriminator.13} parent=46 // pred_check
              _
            $region53: #{patch_discriminator.13} parent=46 // pred_check_branch
              %227 = sbr.rel target = $region55
            $region54: #{patch_discriminator.13} parent=46 // pred_region
              %s229 = ssub.s32 256, 1
              loop: start=0, step=1, limit=1
              $region56: #{patch_discriminator.13} parent=54 // loop_pre_header
                _
              $region57: #{patch_discriminator.13} parent=54 // loop_header
                %s231 = sphi 0, %s235
                %p232 = scmp.ge.s32.totalorder %s231, 1
                %s236 = sphi %s221, %s221
                %s237 = sphi %s215, %s215
              $region58: #{patch_discriminator.13} parent=54 // loop_header_branch
                %234 = sbr.rel (%p232) target = $region62
              $region59: #{patch_discriminator.13} parent=54 // loop_body
                %v238 = vld [vmem:[%s236] sm:%s229]
                %239 = vst [vmem:[%s237] sm:%s229] %v238
                %v240 = vld [vmem:[%s236 + $0x10] sm:%s229]
                %241 = vst [vmem:[%s237 + $0x8] sm:%s229] %v240
                %v242 = vld [vmem:[%s236 + $0x20] sm:%s229]
                %243 = vst [vmem:[%s237 + $0x10] sm:%s229] %v242
                %v244 = vld [vmem:[%s236 + $0x30] sm:%s229]
                %245 = vst [vmem:[%s237 + $0x18] sm:%s229] %v244
                %v246 = vld [vmem:[%s236 + $0x40] sm:%s229]
                %247 = vst [vmem:[%s237 + $0x20] sm:%s229] %v246
                %v248 = vld [vmem:[%s236 + $0x50] sm:%s229]
                %249 = vst [vmem:[%s237 + $0x28] sm:%s229] %v248
                %v250 = vld [vmem:[%s236 + $0x60] sm:%s229]
                %251 = vst [vmem:[%s237 + $0x30] sm:%s229] %v250
                %v252 = vld [vmem:[%s236 + $0x70] sm:%s229]
                %253 = vst [vmem:[%s237 + $0x38] sm:%s229] %v252
                %v254 = vld [vmem:[%s236 + $0x80] sm:%s229]
                %255 = vst [vmem:[%s237 + $0x40] sm:%s229] %v254
                %v256 = vld [vmem:[%s236 + $0x90] sm:%s229]
                %257 = vst [vmem:[%s237 + $0x48] sm:%s229] %v256
                %v258 = vld [vmem:[%s236 + $0xa0] sm:%s229]
                %259 = vst [vmem:[%s237 + $0x50] sm:%s229] %v258
                %v260 = vld [vmem:[%s236 + $0xb0] sm:%s229]
                %261 = vst [vmem:[%s237 + $0x58] sm:%s229] %v260
                %v262 = vld [vmem:[%s236 + $0xc0] sm:%s229]
                %263 = vst [vmem:[%s237 + $0x60] sm:%s229] %v262
                %v264 = vld [vmem:[%s236 + $0xd0] sm:%s229]
                %265 = vst [vmem:[%s237 + $0x68] sm:%s229] %v264
                %v266 = vld [vmem:[%s236 + $0xe0] sm:%s229]
                %267 = vst [vmem:[%s237 + $0x70] sm:%s229] %v266
                %v268 = vld [vmem:[%s236 + $0xf0] sm:%s229]
                %269 = vst [vmem:[%s237 + $0x78] sm:%s229] %v268
                %v270 = vld [vmem:[%s236 + $0x100] sm:%s229]
                %271 = vst [vmem:[%s237 + $0x80] sm:%s229] %v270
                %v272 = vld [vmem:[%s236 + $0x110] sm:%s229]
                %273 = vst [vmem:[%s237 + $0x88] sm:%s229] %v272
                %v274 = vld [vmem:[%s236 + $0x120] sm:%s229]
                %275 = vst [vmem:[%s237 + $0x90] sm:%s229] %v274
                %v276 = vld [vmem:[%s236 + $0x130] sm:%s229]
                %277 = vst [vmem:[%s237 + $0x98] sm:%s229] %v276
                %v278 = vld [vmem:[%s236 + $0x140] sm:%s229]
                %279 = vst [vmem:[%s237 + $0xa0] sm:%s229] %v278
                %v280 = vld [vmem:[%s236 + $0x150] sm:%s229]
                %281 = vst [vmem:[%s237 + $0xa8] sm:%s229] %v280
                %v282 = vld [vmem:[%s236 + $0x160] sm:%s229]
                %283 = vst [vmem:[%s237 + $0xb0] sm:%s229] %v282
                %v284 = vld [vmem:[%s236 + $0x170] sm:%s229]
                %285 = vst [vmem:[%s237 + $0xb8] sm:%s229] %v284
                %v286 = vld [vmem:[%s236 + $0x180] sm:%s229]
                %287 = vst [vmem:[%s237 + $0xc0] sm:%s229] %v286
                %v288 = vld [vmem:[%s236 + $0x190] sm:%s229]
                %289 = vst [vmem:[%s237 + $0xc8] sm:%s229] %v288
                %v290 = vld [vmem:[%s236 + $0x1a0] sm:%s229]
                %291 = vst [vmem:[%s237 + $0xd0] sm:%s229] %v290
                %v292 = vld [vmem:[%s236 + $0x1b0] sm:%s229]
                %293 = vst [vmem:[%s237 + $0xd8] sm:%s229] %v292
                %v294 = vld [vmem:[%s236 + $0x1c0] sm:%s229]
                %295 = vst [vmem:[%s237 + $0xe0] sm:%s229] %v294
                %v296 = vld [vmem:[%s236 + $0x1d0] sm:%s229]
                %297 = vst [vmem:[%s237 + $0xe8] sm:%s229] %v296
                %v298 = vld [vmem:[%s236 + $0x1e0] sm:%s229]
                %299 = vst [vmem:[%s237 + $0xf0] sm:%s229] %v298
                %v300 = vld [vmem:[%s236 + $0x1f0] sm:%s229]
                %301 = vst [vmem:[%s237 + $0xf8] sm:%s229] %v300
                %v302 = vld [vmem:[%s236 + $0x200] sm:%s229]
                %303 = vst [vmem:[%s237 + $0x100] sm:%s229] %v302
                %v304 = vld [vmem:[%s236 + $0x210] sm:%s229]
                %305 = vst [vmem:[%s237 + $0x108] sm:%s229] %v304
                %v306 = vld [vmem:[%s236 + $0x220] sm:%s229]
                %307 = vst [vmem:[%s237 + $0x110] sm:%s229] %v306
                %v308 = vld [vmem:[%s236 + $0x230] sm:%s229]
                %309 = vst [vmem:[%s237 + $0x118] sm:%s229] %v308
                %v310 = vld [vmem:[%s236 + $0x240] sm:%s229]
                %311 = vst [vmem:[%s237 + $0x120] sm:%s229] %v310
                %v312 = vld [vmem:[%s236 + $0x250] sm:%s229]
                %313 = vst [vmem:[%s237 + $0x128] sm:%s229] %v312
                %v314 = vld [vmem:[%s236 + $0x260] sm:%s229]
                %315 = vst [vmem:[%s237 + $0x130] sm:%s229] %v314
                %v316 = vld [vmem:[%s236 + $0x270] sm:%s229]
                %317 = vst [vmem:[%s237 + $0x138] sm:%s229] %v316
                %v318 = vld [vmem:[%s236 + $0x280] sm:%s229]
                %319 = vst [vmem:[%s237 + $0x140] sm:%s229] %v318
                %v320 = vld [vmem:[%s236 + $0x290] sm:%s229]
                %321 = vst [vmem:[%s237 + $0x148] sm:%s229] %v320
                %v322 = vld [vmem:[%s236 + $0x2a0] sm:%s229]
                %323 = vst [vmem:[%s237 + $0x150] sm:%s229] %v322
                %v324 = vld [vmem:[%s236 + $0x2b0] sm:%s229]
                %325 = vst [vmem:[%s237 + $0x158] sm:%s229] %v324
                %v326 = vld [vmem:[%s236 + $0x2c0] sm:%s229]
                %327 = vst [vmem:[%s237 + $0x160] sm:%s229] %v326
                %v328 = vld [vmem:[%s236 + $0x2d0] sm:%s229]
                %329 = vst [vmem:[%s237 + $0x168] sm:%s229] %v328
                %v330 = vld [vmem:[%s236 + $0x2e0] sm:%s229]
                %331 = vst [vmem:[%s237 + $0x170] sm:%s229] %v330
                %v332 = vld [vmem:[%s236 + $0x2f0] sm:%s229]
                %333 = vst [vmem:[%s237 + $0x178] sm:%s229] %v332
                %v334 = vld [vmem:[%s236 + $0x300] sm:%s229]
                %335 = vst [vmem:[%s237 + $0x180] sm:%s229] %v334
                %v336 = vld [vmem:[%s236 + $0x310] sm:%s229]
                %337 = vst [vmem:[%s237 + $0x188] sm:%s229] %v336
                %v338 = vld [vmem:[%s236 + $0x320] sm:%s229]
                %339 = vst [vmem:[%s237 + $0x190] sm:%s229] %v338
                %v340 = vld [vmem:[%s236 + $0x330] sm:%s229]
                %341 = vst [vmem:[%s237 + $0x198] sm:%s229] %v340
                %v342 = vld [vmem:[%s236 + $0x340] sm:%s229]
                %343 = vst [vmem:[%s237 + $0x1a0] sm:%s229] %v342
                %v344 = vld [vmem:[%s236 + $0x350] sm:%s229]
                %345 = vst [vmem:[%s237 + $0x1a8] sm:%s229] %v344
                %v346 = vld [vmem:[%s236 + $0x360] sm:%s229]
                %347 = vst [vmem:[%s237 + $0x1b0] sm:%s229] %v346
                %v348 = vld [vmem:[%s236 + $0x370] sm:%s229]
                %349 = vst [vmem:[%s237 + $0x1b8] sm:%s229] %v348
                %v350 = vld [vmem:[%s236 + $0x380] sm:%s229]
                %351 = vst [vmem:[%s237 + $0x1c0] sm:%s229] %v350
                %v352 = vld [vmem:[%s236 + $0x390] sm:%s229]
                %353 = vst [vmem:[%s237 + $0x1c8] sm:%s229] %v352
                %v354 = vld [vmem:[%s236 + $0x3a0] sm:%s229]
                %355 = vst [vmem:[%s237 + $0x1d0] sm:%s229] %v354
                %v356 = vld [vmem:[%s236 + $0x3b0] sm:%s229]
                %357 = vst [vmem:[%s237 + $0x1d8] sm:%s229] %v356
                %v358 = vld [vmem:[%s236 + $0x3c0] sm:%s229]
                %359 = vst [vmem:[%s237 + $0x1e0] sm:%s229] %v358
                %v360 = vld [vmem:[%s236 + $0x3d0] sm:%s229]
                %361 = vst [vmem:[%s237 + $0x1e8] sm:%s229] %v360
                %v362 = vld [vmem:[%s236 + $0x3e0] sm:%s229]
                %363 = vst [vmem:[%s237 + $0x1f0] sm:%s229] %v362
                %v364 = vld [vmem:[%s236 + $0x3f0] sm:%s229]
                %365 = vst [vmem:[%s237 + $0x1f8] sm:%s229] %v364
                %v366 = vld [vmem:[%s236 + $0x400] sm:%s229]
                %367 = vst [vmem:[%s237 + $0x200] sm:%s229] %v366
                %v368 = vld [vmem:[%s236 + $0x410] sm:%s229]
                %369 = vst [vmem:[%s237 + $0x208] sm:%s229] %v368
                %v370 = vld [vmem:[%s236 + $0x420] sm:%s229]
                %371 = vst [vmem:[%s237 + $0x210] sm:%s229] %v370
                %v372 = vld [vmem:[%s236 + $0x430] sm:%s229]
                %373 = vst [vmem:[%s237 + $0x218] sm:%s229] %v372
                %v374 = vld [vmem:[%s236 + $0x440] sm:%s229]
                %375 = vst [vmem:[%s237 + $0x220] sm:%s229] %v374
                %v376 = vld [vmem:[%s236 + $0x450] sm:%s229]
                %377 = vst [vmem:[%s237 + $0x228] sm:%s229] %v376
                %v378 = vld [vmem:[%s236 + $0x460] sm:%s229]
                %379 = vst [vmem:[%s237 + $0x230] sm:%s229] %v378
                %v380 = vld [vmem:[%s236 + $0x470] sm:%s229]
                %381 = vst [vmem:[%s237 + $0x238] sm:%s229] %v380
                %v382 = vld [vmem:[%s236 + $0x480] sm:%s229]
                %383 = vst [vmem:[%s237 + $0x240] sm:%s229] %v382
                %v384 = vld [vmem:[%s236 + $0x490] sm:%s229]
                %385 = vst [vmem:[%s237 + $0x248] sm:%s229] %v384
                %v386 = vld [vmem:[%s236 + $0x4a0] sm:%s229]
                %387 = vst [vmem:[%s237 + $0x250] sm:%s229] %v386
                %v388 = vld [vmem:[%s236 + $0x4b0] sm:%s229]
                %389 = vst [vmem:[%s237 + $0x258] sm:%s229] %v388
                %v390 = vld [vmem:[%s236 + $0x4c0] sm:%s229]
                %391 = vst [vmem:[%s237 + $0x260] sm:%s229] %v390
                %v392 = vld [vmem:[%s236 + $0x4d0] sm:%s229]
                %393 = vst [vmem:[%s237 + $0x268] sm:%s229] %v392
                %v394 = vld [vmem:[%s236 + $0x4e0] sm:%s229]
                %395 = vst [vmem:[%s237 + $0x270] sm:%s229] %v394
                %v396 = vld [vmem:[%s236 + $0x4f0] sm:%s229]
                %397 = vst [vmem:[%s237 + $0x278] sm:%s229] %v396
                %v398 = vld [vmem:[%s236 + $0x500] sm:%s229]
                %399 = vst [vmem:[%s237 + $0x280] sm:%s229] %v398
                %v400 = vld [vmem:[%s236 + $0x510] sm:%s229]
                %401 = vst [vmem:[%s237 + $0x288] sm:%s229] %v400
                %v402 = vld [vmem:[%s236 + $0x520] sm:%s229]
                %403 = vst [vmem:[%s237 + $0x290] sm:%s229] %v402
                %v404 = vld [vmem:[%s236 + $0x530] sm:%s229]
                %405 = vst [vmem:[%s237 + $0x298] sm:%s229] %v404
                %v406 = vld [vmem:[%s236 + $0x540] sm:%s229]
                %407 = vst [vmem:[%s237 + $0x2a0] sm:%s229] %v406
                %v408 = vld [vmem:[%s236 + $0x550] sm:%s229]
                %409 = vst [vmem:[%s237 + $0x2a8] sm:%s229] %v408
                %v410 = vld [vmem:[%s236 + $0x560] sm:%s229]
                %411 = vst [vmem:[%s237 + $0x2b0] sm:%s229] %v410
                %v412 = vld [vmem:[%s236 + $0x570] sm:%s229]
                %413 = vst [vmem:[%s237 + $0x2b8] sm:%s229] %v412
                %v414 = vld [vmem:[%s236 + $0x580] sm:%s229]
                %415 = vst [vmem:[%s237 + $0x2c0] sm:%s229] %v414
                %v416 = vld [vmem:[%s236 + $0x590] sm:%s229]
                %417 = vst [vmem:[%s237 + $0x2c8] sm:%s229] %v416
                %v418 = vld [vmem:[%s236 + $0x5a0] sm:%s229]
                %419 = vst [vmem:[%s237 + $0x2d0] sm:%s229] %v418
                %v420 = vld [vmem:[%s236 + $0x5b0] sm:%s229]
                %421 = vst [vmem:[%s237 + $0x2d8] sm:%s229] %v420
                %v422 = vld [vmem:[%s236 + $0x5c0] sm:%s229]
                %423 = vst [vmem:[%s237 + $0x2e0] sm:%s229] %v422
                %v424 = vld [vmem:[%s236 + $0x5d0] sm:%s229]
                %425 = vst [vmem:[%s237 + $0x2e8] sm:%s229] %v424
                %v426 = vld [vmem:[%s236 + $0x5e0] sm:%s229]
                %427 = vst [vmem:[%s237 + $0x2f0] sm:%s229] %v426
                %v428 = vld [vmem:[%s236 + $0x5f0] sm:%s229]
                %429 = vst [vmem:[%s237 + $0x2f8] sm:%s229] %v428
                %v430 = vld [vmem:[%s236 + $0x600] sm:%s229]
                %431 = vst [vmem:[%s237 + $0x300] sm:%s229] %v430
                %v432 = vld [vmem:[%s236 + $0x610] sm:%s229]
                %433 = vst [vmem:[%s237 + $0x308] sm:%s229] %v432
                %v434 = vld [vmem:[%s236 + $0x620] sm:%s229]
                %435 = vst [vmem:[%s237 + $0x310] sm:%s229] %v434
                %v436 = vld [vmem:[%s236 + $0x630] sm:%s229]
                %437 = vst [vmem:[%s237 + $0x318] sm:%s229] %v436
                %v438 = vld [vmem:[%s236 + $0x640] sm:%s229]
                %439 = vst [vmem:[%s237 + $0x320] sm:%s229] %v438
                %v440 = vld [vmem:[%s236 + $0x650] sm:%s229]
                %441 = vst [vmem:[%s237 + $0x328] sm:%s229] %v440
                %v442 = vld [vmem:[%s236 + $0x660] sm:%s229]
                %443 = vst [vmem:[%s237 + $0x330] sm:%s229] %v442
                %v444 = vld [vmem:[%s236 + $0x670] sm:%s229]
                %445 = vst [vmem:[%s237 + $0x338] sm:%s229] %v444
                %v446 = vld [vmem:[%s236 + $0x680] sm:%s229]
                %447 = vst [vmem:[%s237 + $0x340] sm:%s229] %v446
                %v448 = vld [vmem:[%s236 + $0x690] sm:%s229]
                %449 = vst [vmem:[%s237 + $0x348] sm:%s229] %v448
                %v450 = vld [vmem:[%s236 + $0x6a0] sm:%s229]
                %451 = vst [vmem:[%s237 + $0x350] sm:%s229] %v450
                %v452 = vld [vmem:[%s236 + $0x6b0] sm:%s229]
                %453 = vst [vmem:[%s237 + $0x358] sm:%s229] %v452
                %v454 = vld [vmem:[%s236 + $0x6c0] sm:%s229]
                %455 = vst [vmem:[%s237 + $0x360] sm:%s229] %v454
                %v456 = vld [vmem:[%s236 + $0x6d0] sm:%s229]
                %457 = vst [vmem:[%s237 + $0x368] sm:%s229] %v456
                %v458 = vld [vmem:[%s236 + $0x6e0] sm:%s229]
                %459 = vst [vmem:[%s237 + $0x370] sm:%s229] %v458
                %v460 = vld [vmem:[%s236 + $0x6f0] sm:%s229]
                %461 = vst [vmem:[%s237 + $0x378] sm:%s229] %v460
                %v462 = vld [vmem:[%s236 + $0x700] sm:%s229]
                %463 = vst [vmem:[%s237 + $0x380] sm:%s229] %v462
                %v464 = vld [vmem:[%s236 + $0x710] sm:%s229]
                %465 = vst [vmem:[%s237 + $0x388] sm:%s229] %v464
                %v466 = vld [vmem:[%s236 + $0x720] sm:%s229]
                %467 = vst [vmem:[%s237 + $0x390] sm:%s229] %v466
                %v468 = vld [vmem:[%s236 + $0x730] sm:%s229]
                %469 = vst [vmem:[%s237 + $0x398] sm:%s229] %v468
                %v470 = vld [vmem:[%s236 + $0x740] sm:%s229]
                %471 = vst [vmem:[%s237 + $0x3a0] sm:%s229] %v470
                %v472 = vld [vmem:[%s236 + $0x750] sm:%s229]
                %473 = vst [vmem:[%s237 + $0x3a8] sm:%s229] %v472
                %v474 = vld [vmem:[%s236 + $0x760] sm:%s229]
                %475 = vst [vmem:[%s237 + $0x3b0] sm:%s229] %v474
                %v476 = vld [vmem:[%s236 + $0x770] sm:%s229]
                %477 = vst [vmem:[%s237 + $0x3b8] sm:%s229] %v476
                %v478 = vld [vmem:[%s236 + $0x780] sm:%s229]
                %479 = vst [vmem:[%s237 + $0x3c0] sm:%s229] %v478
                %v480 = vld [vmem:[%s236 + $0x790] sm:%s229]
                %481 = vst [vmem:[%s237 + $0x3c8] sm:%s229] %v480
                %v482 = vld [vmem:[%s236 + $0x7a0] sm:%s229]
                %483 = vst [vmem:[%s237 + $0x3d0] sm:%s229] %v482
                %v484 = vld [vmem:[%s236 + $0x7b0] sm:%s229]
                %485 = vst [vmem:[%s237 + $0x3d8] sm:%s229] %v484
                %v486 = vld [vmem:[%s236 + $0x7c0] sm:%s229]
                %487 = vst [vmem:[%s237 + $0x3e0] sm:%s229] %v486
                %v488 = vld [vmem:[%s236 + $0x7d0] sm:%s229]
                %489 = vst [vmem:[%s237 + $0x3e8] sm:%s229] %v488
                %v490 = vld [vmem:[%s236 + $0x7e0] sm:%s229]
                %491 = vst [vmem:[%s237 + $0x3f0] sm:%s229] %v490
                %v492 = vld [vmem:[%s236 + $0x7f0] sm:%s229]
                %493 = vst [vmem:[%s237 + $0x3f8] sm:%s229] %v492
              $region60: #{patch_discriminator.13} parent=54 // loop_footer
                %s235 = sadd.s32 1, %s231
              $region61: #{patch_discriminator.13} parent=54 // loop_footer_branch
                %230 = sbr.rel target = $region57
              $region62: #{patch_discriminator.13} parent=54 // loop_exit
                _
            $region55: #{patch_discriminator.13} parent=46 // pred_fallthru
              _
          $region47: #{patch_discriminator.13} parent=42 // pred_fallthru
            _
          %762 = vnop
        $region43: #{patch_discriminator.13} parent=15 // pred_fallthru
          _
        // Predicated region
        $region78: #{patch_discriminator.13} parent=15 // pred_check
          %p763 = pneg %p104
        $region79: #{patch_discriminator.13} parent=15 // pred_check_branch
          %765 = sbr.rel (%p763) target = $region81
        $region80: #{patch_discriminator.13} parent=15 // pred_region
          %s766 = smul.u32 2, %s17
          %p767 = scmp.lt.s32.totalorder %s766, 3
          %s768 = scalar_select %p767, %s766, 3
          %s769 = scalar_lea.vmem %s2, %s768
          %s770 = smul.u32 2, %s17
        $region81: #{patch_discriminator.13} parent=15 // pred_fallthru
          _
      $region16: #{patch_discriminator.13} parent=5 // pred_fallthru
        _
      %p771 = scmp.le.s32.totalorder 1, %s9
      %p772 = scmp.lt.s32.totalorder %s9, 9
      %p773 = pnand %p771, %p772
      %p774 = pneg %p773
      // Predicated region
      $region82: #{patch_discriminator.13} parent=5 // pred_check
        _
      $region83: #{patch_discriminator.13} parent=5 // pred_check_branch
        %776 = sbr.rel (%p773) target = $region85
      $region84: #{patch_discriminator.13} parent=5 // pred_region
        %s777 = ssub.s32 %s9, 1
        %s778 = sand.u32 %s43, 1
        %s779 = sand.u32 %s43, 1
        %s780 = smul.addr %s779, 96
        %s781 = scalar_lea.vmem [#allocation3], %s780
        // Predicated region
        $region86: #{patch_discriminator.13} parent=84 // pred_check
          %p782 = pneg %p56
        $region87: #{patch_discriminator.13} parent=84 // pred_check_branch
          %784 = sbr.rel (%p782) target = $region89
        $region88: #{patch_discriminator.13} parent=84 // pred_region
          _
        $region89: #{patch_discriminator.13} parent=84 // pred_fallthru
          _
        %s785 = sand.u32 %s71, 1
        %s786 = sand.u32 %s71, 1
        %s787 = smul.addr %s786, 1024
        %s788 = scalar_lea.vmem [#allocation4], %s787
        // Predicated region
        $region90: #{patch_discriminator.13} parent=84 // pred_check
          %p789 = pneg %p84
        $region91: #{patch_discriminator.13} parent=84 // pred_check_branch
          %791 = sbr.rel (%p789) target = $region93
        $region92: #{patch_discriminator.13} parent=84 // pred_region
          _
        $region93: #{patch_discriminator.13} parent=84 // pred_fallthru
          _
        %s792 = sand.u32 %s43, 1
        %s793 = sand.u32 %s43, 1
        %s794 = smul.addr %s793, 96
        %s795 = scalar_lea.vmem [#allocation3], %s794
        %p796 = pneg %p56
        %p797 = pneg %p53
        %s798 = sand.u32 %s71, 1
        %s799 = sand.u32 %s71, 1
        %s800 = smul.addr %s799, 1024
        %s801 = scalar_lea.vmem [#allocation4], %s800
        %p802 = pneg %p84
        %p803 = pneg %p81
        %s804 = smul.u32 2, %s20
        %p805 = scmp.lt.s32.totalorder %s804, 3
        %s806 = scalar_select %p805, %s804, 3
        %s807 = scalar_lea.vmem %s2, %s806
        %p808 = pneg %p110
        %p809 = pneg %p107
        %p810 = pneg %p138
        %p811 = pneg %p135
        %s812 = sand.u32 %s125, 1
        %s813 = sand.u32 %s125, 1
        %s814 = smul.addr %s813, 24
        %s815 = scalar_lea.vmem [#allocation5], %s814
        %s816 = smul.u32 3, %s19
        %s817 = smul.u32 8, %s21
        %s818 = smul.u32 128, %s21
        %s819 = smul.u32 2, %s20
        %s820 = smul.u32 2, %s20
        %p821 = scmp.lt.s32.totalorder %s820, 3
        %s822 = scalar_select %p821, %s820, 3
        %s823 = scalar_lea.vmem %s2, %s822
        %s824 = smul.u32 2, %s20
        %s825 = smul.u32 3, %s19
        %s826 = smul.u32 2, %s20
        %v827 = vld [vmem:[%s781] sm:$0xff]
        %v828 = vld [vmem:[%s781 + $0x8] sm:$0xff]
        %v829 = vld [vmem:[%s781 + $0x10] sm:$0xff]
        %v830 = vld [vmem:[%s781 + $0x18] sm:$0xff]
        %v831 = vld [vmem:[%s781 + $0x20] sm:$0xff]
        %v832 = vld [vmem:[%s781 + $0x28] sm:$0xff]
        %v833 = vld [vmem:[%s781 + $0x30] sm:$0xff]
        %v834 = vld [vmem:[%s781 + $0x38] sm:$0xff]
        %v835 = vld [vmem:[%s781 + $0x40] sm:$0xff]
        %v836 = vld [vmem:[%s781 + $0x48] sm:$0xff]
        %v837 = vld [vmem:[%s781 + $0x50] sm:$0xff]
        %v838 = vld [vmem:[%s781 + $0x58] sm:$0xff]
        %v839 = vld [vmem:[%s788] sm:$0xff]
        %v840 = vld [vmem:[%s788 + $0x8] sm:$0xff]
        %v841 = vld [vmem:[%s788 + $0x10] sm:$0xff]
        %v842 = vld [vmem:[%s788 + $0x18] sm:$0xff]
        %v843 = vld [vmem:[%s788 + $0x20] sm:$0xff]
        %v844 = vld [vmem:[%s788 + $0x28] sm:$0xff]
        %v845 = vld [vmem:[%s788 + $0x30] sm:$0xff]
        %v846 = vld [vmem:[%s788 + $0x38] sm:$0xff]
        %v847 = vld [vmem:[%s788 + $0x40] sm:$0xff]
        %v848 = vld [vmem:[%s788 + $0x48] sm:$0xff]
        %v849 = vld [vmem:[%s788 + $0x50] sm:$0xff]
        %v850 = vld [vmem:[%s788 + $0x58] sm:$0xff]
        %v851 = vld [vmem:[%s788 + $0x60] sm:$0xff]
        %v852 = vld [vmem:[%s788 + $0x68] sm:$0xff]
        %v853 = vld [vmem:[%s788 + $0x70] sm:$0xff]
        %v854 = vld [vmem:[%s788 + $0x78] sm:$0xff]
        %v855 = vld [vmem:[%s788 + $0x80] sm:$0xff]
        %v856 = vld [vmem:[%s788 + $0x88] sm:$0xff]
        %v857 = vld [vmem:[%s788 + $0x90] sm:$0xff]
        %v858 = vld [vmem:[%s788 + $0x98] sm:$0xff]
        %v859 = vld [vmem:[%s788 + $0xa0] sm:$0xff]
        %v860 = vld [vmem:[%s788 + $0xa8] sm:$0xff]
        %v861 = vld [vmem:[%s788 + $0xb0] sm:$0xff]
        %v862 = vld [vmem:[%s788 + $0xb8] sm:$0xff]
        %v863 = vld [vmem:[%s788 + $0xc0] sm:$0xff]
        %v864 = vld [vmem:[%s788 + $0xc8] sm:$0xff]
        %v865 = vld [vmem:[%s788 + $0xd0] sm:$0xff]
        %v866 = vld [vmem:[%s788 + $0xd8] sm:$0xff]
        %v867 = vld [vmem:[%s788 + $0xe0] sm:$0xff]
        %v868 = vld [vmem:[%s788 + $0xe8] sm:$0xff]
        %v869 = vld [vmem:[%s788 + $0xf0] sm:$0xff]
        %v870 = vld [vmem:[%s788 + $0xf8] sm:$0xff]
        %v871 = vld [vmem:[%s788 + $0x100] sm:$0xff]
        %v872 = vld [vmem:[%s788 + $0x108] sm:$0xff]
        %v873 = vld [vmem:[%s788 + $0x110] sm:$0xff]
        %v874 = vld [vmem:[%s788 + $0x118] sm:$0xff]
        %v875 = vld [vmem:[%s788 + $0x120] sm:$0xff]
        %v876 = vld [vmem:[%s788 + $0x128] sm:$0xff]
        %v877 = vld [vmem:[%s788 + $0x130] sm:$0xff]
        %v878 = vld [vmem:[%s788 + $0x138] sm:$0xff]
        %v879 = vld [vmem:[%s788 + $0x140] sm:$0xff]
        %v880 = vld [vmem:[%s788 + $0x148] sm:$0xff]
        %v881 = vld [vmem:[%s788 + $0x150] sm:$0xff]
        %v882 = vld [vmem:[%s788 + $0x158] sm:$0xff]
        %v883 = vld [vmem:[%s788 + $0x160] sm:$0xff]
        %v884 = vld [vmem:[%s788 + $0x168] sm:$0xff]
        %v885 = vld [vmem:[%s788 + $0x170] sm:$0xff]
        %v886 = vld [vmem:[%s788 + $0x178] sm:$0xff]
        %v887 = vld [vmem:[%s788 + $0x180] sm:$0xff]
        %v888 = vld [vmem:[%s788 + $0x188] sm:$0xff]
        %v889 = vld [vmem:[%s788 + $0x190] sm:$0xff]
        %v890 = vld [vmem:[%s788 + $0x198] sm:$0xff]
        %v891 = vld [vmem:[%s788 + $0x1a0] sm:$0xff]
        %v892 = vld [vmem:[%s788 + $0x1a8] sm:$0xff]
        %v893 = vld [vmem:[%s788 + $0x1b0] sm:$0xff]
        %v894 = vld [vmem:[%s788 + $0x1b8] sm:$0xff]
        %v895 = vld [vmem:[%s788 + $0x1c0] sm:$0xff]
        %v896 = vld [vmem:[%s788 + $0x1c8] sm:$0xff]
        %v897 = vld [vmem:[%s788 + $0x1d0] sm:$0xff]
        %v898 = vld [vmem:[%s788 + $0x1d8] sm:$0xff]
        %v899 = vld [vmem:[%s788 + $0x1e0] sm:$0xff]
        %v900 = vld [vmem:[%s788 + $0x1e8] sm:$0xff]
        %v901 = vld [vmem:[%s788 + $0x1f0] sm:$0xff]
        %v902 = vld [vmem:[%s788 + $0x1f8] sm:$0xff]
        %v903 = vld [vmem:[%s788 + $0x200] sm:$0xff]
        %v904 = vld [vmem:[%s788 + $0x208] sm:$0xff]
        %v905 = vld [vmem:[%s788 + $0x210] sm:$0xff]
        %v906 = vld [vmem:[%s788 + $0x218] sm:$0xff]
        %v907 = vld [vmem:[%s788 + $0x220] sm:$0xff]
        %v908 = vld [vmem:[%s788 + $0x228] sm:$0xff]
        %v909 = vld [vmem:[%s788 + $0x230] sm:$0xff]
        %v910 = vld [vmem:[%s788 + $0x238] sm:$0xff]
        %v911 = vld [vmem:[%s788 + $0x240] sm:$0xff]
        %v912 = vld [vmem:[%s788 + $0x248] sm:$0xff]
        %v913 = vld [vmem:[%s788 + $0x250] sm:$0xff]
        %v914 = vld [vmem:[%s788 + $0x258] sm:$0xff]
        %v915 = vld [vmem:[%s788 + $0x260] sm:$0xff]
        %v916 = vld [vmem:[%s788 + $0x268] sm:$0xff]
        %v917 = vld [vmem:[%s788 + $0x270] sm:$0xff]
        %v918 = vld [vmem:[%s788 + $0x278] sm:$0xff]
        %v919 = vld [vmem:[%s788 + $0x280] sm:$0xff]
        %v920 = vld [vmem:[%s788 + $0x288] sm:$0xff]
        %v921 = vld [vmem:[%s788 + $0x290] sm:$0xff]
        %v922 = vld [vmem:[%s788 + $0x298] sm:$0xff]
        %v923 = vld [vmem:[%s788 + $0x2a0] sm:$0xff]
        %v924 = vld [vmem:[%s788 + $0x2a8] sm:$0xff]
        %v925 = vld [vmem:[%s788 + $0x2b0] sm:$0xff]
        %v926 = vld [vmem:[%s788 + $0x2b8] sm:$0xff]
        %v927 = vld [vmem:[%s788 + $0x2c0] sm:$0xff]
        %v928 = vld [vmem:[%s788 + $0x2c8] sm:$0xff]
        %v929 = vld [vmem:[%s788 + $0x2d0] sm:$0xff]
        %v930 = vld [vmem:[%s788 + $0x2d8] sm:$0xff]
        %v931 = vld [vmem:[%s788 + $0x2e0] sm:$0xff]
        %v932 = vld [vmem:[%s788 + $0x2e8] sm:$0xff]
        %v933 = vld [vmem:[%s788 + $0x2f0] sm:$0xff]
        %v934 = vld [vmem:[%s788 + $0x2f8] sm:$0xff]
        %v935 = vld [vmem:[%s788 + $0x300] sm:$0xff]
        %v936 = vld [vmem:[%s788 + $0x308] sm:$0xff]
        %v937 = vld [vmem:[%s788 + $0x310] sm:$0xff]
        %v938 = vld [vmem:[%s788 + $0x318] sm:$0xff]
        %v939 = vld [vmem:[%s788 + $0x320] sm:$0xff]
        %v940 = vld [vmem:[%s788 + $0x328] sm:$0xff]
        %v941 = vld [vmem:[%s788 + $0x330] sm:$0xff]
        %v942 = vld [vmem:[%s788 + $0x338] sm:$0xff]
        %v943 = vld [vmem:[%s788 + $0x340] sm:$0xff]
        %v944 = vld [vmem:[%s788 + $0x348] sm:$0xff]
        %v945 = vld [vmem:[%s788 + $0x350] sm:$0xff]
        %v946 = vld [vmem:[%s788 + $0x358] sm:$0xff]
        %v947 = vld [vmem:[%s788 + $0x360] sm:$0xff]
        %v948 = vld [vmem:[%s788 + $0x368] sm:$0xff]
        %v949 = vld [vmem:[%s788 + $0x370] sm:$0xff]
        %v950 = vld [vmem:[%s788 + $0x378] sm:$0xff]
        %v951 = vld [vmem:[%s788 + $0x380] sm:$0xff]
        %v952 = vld [vmem:[%s788 + $0x388] sm:$0xff]
        %v953 = vld [vmem:[%s788 + $0x390] sm:$0xff]
        %v954 = vld [vmem:[%s788 + $0x398] sm:$0xff]
        %v955 = vld [vmem:[%s788 + $0x3a0] sm:$0xff]
        %v956 = vld [vmem:[%s788 + $0x3a8] sm:$0xff]
        %v957 = vld [vmem:[%s788 + $0x3b0] sm:$0xff]
        %v958 = vld [vmem:[%s788 + $0x3b8] sm:$0xff]
        %v959 = vld [vmem:[%s788 + $0x3c0] sm:$0xff]
        %v960 = vld [vmem:[%s788 + $0x3c8] sm:$0xff]
        %v961 = vld [vmem:[%s788 + $0x3d0] sm:$0xff]
        %v962 = vld [vmem:[%s788 + $0x3d8] sm:$0xff]
        %v963 = vld [vmem:[%s788 + $0x3e0] sm:$0xff]
        %v964 = vld [vmem:[%s788 + $0x3e8] sm:$0xff]
        %v965 = vld [vmem:[%s788 + $0x3f0] sm:$0xff]
        %v966 = vld [vmem:[%s788 + $0x3f8] sm:$0xff]
        %v979 = vunpack.c.l.b16 %v827
        %v980 = vunpack.c.h.b16 %v827
        %v981 = vunpack.c.l.b16 %v828
        %v982 = vunpack.c.h.b16 %v828
        %v983 = vunpack.c.l.b16 %v829
        %v984 = vunpack.c.h.b16 %v829
        %v985 = vunpack.c.l.b16 %v830
        %v986 = vunpack.c.h.b16 %v830
        %v987 = vunpack.c.l.b16 %v831
        %v988 = vunpack.c.h.b16 %v831
        %v989 = vunpack.c.l.b16 %v832
        %v990 = vunpack.c.h.b16 %v832
        %v991 = vunpack.c.l.b16 %v833
        %v992 = vunpack.c.h.b16 %v833
        %v993 = vunpack.c.l.b16 %v834
        %v994 = vunpack.c.h.b16 %v834
        %v995 = vunpack.c.l.b16 %v835
        %v996 = vunpack.c.h.b16 %v835
        %v997 = vunpack.c.l.b16 %v836
        %v998 = vunpack.c.h.b16 %v836
        %v999 = vunpack.c.l.b16 %v837
        %v1000 = vunpack.c.h.b16 %v837
        %v1001 = vunpack.c.l.b16 %v838
        %v1002 = vunpack.c.h.b16 %v838
        %v1003 = vpack.c.b16 %v987, %v979
        %v1004 = vpack.c.b16 %v988, %v980
        %v1005 = vpack.c.b16 %v989, %v981
        %v1006 = vpack.c.b16 %v990, %v982
        %v1007 = vpack.c.b16 %v991, %v983
        %v1008 = vpack.c.b16 %v992, %v984
        %v1009 = vpack.c.b16 %v993, %v985
        %v1010 = vpack.c.b16 %v994, %v986
        %v1011 = vpack.c.b16 %v995, %v995
        %v1012 = vpack.c.b16 %v996, %v996
        %v1013 = vpack.c.b16 %v997, %v997
        %v1014 = vpack.c.b16 %v998, %v998
        %v1015 = vpack.c.b16 %v999, %v999
        %v1016 = vpack.c.b16 %v1000, %v1000
        %v1017 = vpack.c.b16 %v1001, %v1001
        %v1018 = vpack.c.b16 %v1002, %v1002
        %v1163 = vunpack.c.l.b16 %v839
        %v1164 = vunpack.c.h.b16 %v839
        %v1165 = vunpack.c.l.b16 %v840
        %v1166 = vunpack.c.h.b16 %v840
        %v1167 = vunpack.c.l.b16 %v841
        %v1168 = vunpack.c.h.b16 %v841
        %v1169 = vunpack.c.l.b16 %v842
        %v1170 = vunpack.c.h.b16 %v842
        %v1171 = vunpack.c.l.b16 %v843
        %v1172 = vunpack.c.h.b16 %v843
        %v1173 = vunpack.c.l.b16 %v844
        %v1174 = vunpack.c.h.b16 %v844
        %v1175 = vunpack.c.l.b16 %v845
        %v1176 = vunpack.c.h.b16 %v845
        %v1177 = vunpack.c.l.b16 %v846
        %v1178 = vunpack.c.h.b16 %v846
        %v1179 = vunpack.c.l.b16 %v847
        %v1180 = vunpack.c.h.b16 %v847
        %v1181 = vunpack.c.l.b16 %v848
        %v1182 = vunpack.c.h.b16 %v848
        %v1183 = vunpack.c.l.b16 %v849
        %v1184 = vunpack.c.h.b16 %v849
        %v1185 = vunpack.c.l.b16 %v850
        %v1186 = vunpack.c.h.b16 %v850
        %v1187 = vunpack.c.l.b16 %v851
        %v1188 = vunpack.c.h.b16 %v851
        %v1189 = vunpack.c.l.b16 %v852
        %v1190 = vunpack.c.h.b16 %v852
        %v1191 = vunpack.c.l.b16 %v853
        %v1192 = vunpack.c.h.b16 %v853
        %v1193 = vunpack.c.l.b16 %v854
        %v1194 = vunpack.c.h.b16 %v854
        %v1195 = vunpack.c.l.b16 %v855
        %v1196 = vunpack.c.h.b16 %v855
        %v1197 = vunpack.c.l.b16 %v856
        %v1198 = vunpack.c.h.b16 %v856
        %v1199 = vunpack.c.l.b16 %v857
        %v1200 = vunpack.c.h.b16 %v857
        %v1201 = vunpack.c.l.b16 %v858
        %v1202 = vunpack.c.h.b16 %v858
        %v1203 = vunpack.c.l.b16 %v859
        %v1204 = vunpack.c.h.b16 %v859
        %v1205 = vunpack.c.l.b16 %v860
        %v1206 = vunpack.c.h.b16 %v860
        %v1207 = vunpack.c.l.b16 %v861
        %v1208 = vunpack.c.h.b16 %v861
        %v1209 = vunpack.c.l.b16 %v862
        %v1210 = vunpack.c.h.b16 %v862
        %v1211 = vunpack.c.l.b16 %v863
        %v1212 = vunpack.c.h.b16 %v863
        %v1213 = vunpack.c.l.b16 %v864
        %v1214 = vunpack.c.h.b16 %v864
        %v1215 = vunpack.c.l.b16 %v865
        %v1216 = vunpack.c.h.b16 %v865
        %v1217 = vunpack.c.l.b16 %v866
        %v1218 = vunpack.c.h.b16 %v866
        %v1219 = vunpack.c.l.b16 %v867
        %v1220 = vunpack.c.h.b16 %v867
        %v1221 = vunpack.c.l.b16 %v868
        %v1222 = vunpack.c.h.b16 %v868
        %v1223 = vunpack.c.l.b16 %v869
        %v1224 = vunpack.c.h.b16 %v869
        %v1225 = vunpack.c.l.b16 %v870
        %v1226 = vunpack.c.h.b16 %v870
        %v1227 = vunpack.c.l.b16 %v871
        %v1228 = vunpack.c.h.b16 %v871
        %v1229 = vunpack.c.l.b16 %v872
        %v1230 = vunpack.c.h.b16 %v872
        %v1231 = vunpack.c.l.b16 %v873
        %v1232 = vunpack.c.h.b16 %v873
        %v1233 = vunpack.c.l.b16 %v874
        %v1234 = vunpack.c.h.b16 %v874
        %v1235 = vunpack.c.l.b16 %v875
        %v1236 = vunpack.c.h.b16 %v875
        %v1237 = vunpack.c.l.b16 %v876
        %v1238 = vunpack.c.h.b16 %v876
        %v1239 = vunpack.c.l.b16 %v877
        %v1240 = vunpack.c.h.b16 %v877
        %v1241 = vunpack.c.l.b16 %v878
        %v1242 = vunpack.c.h.b16 %v878
        %v1243 = vunpack.c.l.b16 %v879
        %v1244 = vunpack.c.h.b16 %v879
        %v1245 = vunpack.c.l.b16 %v880
        %v1246 = vunpack.c.h.b16 %v880
        %v1247 = vunpack.c.l.b16 %v881
        %v1248 = vunpack.c.h.b16 %v881
        %v1249 = vunpack.c.l.b16 %v882
        %v1250 = vunpack.c.h.b16 %v882
        %v1251 = vunpack.c.l.b16 %v883
        %v1252 = vunpack.c.h.b16 %v883
        %v1253 = vunpack.c.l.b16 %v884
        %v1254 = vunpack.c.h.b16 %v884
        %v1255 = vunpack.c.l.b16 %v885
        %v1256 = vunpack.c.h.b16 %v885
        %v1257 = vunpack.c.l.b16 %v886
        %v1258 = vunpack.c.h.b16 %v886
        %v1259 = vunpack.c.l.b16 %v887
        %v1260 = vunpack.c.h.b16 %v887
        %v1261 = vunpack.c.l.b16 %v888
        %v1262 = vunpack.c.h.b16 %v888
        %v1263 = vunpack.c.l.b16 %v889
        %v1264 = vunpack.c.h.b16 %v889
        %v1265 = vunpack.c.l.b16 %v890
        %v1266 = vunpack.c.h.b16 %v890
        %v1267 = vunpack.c.l.b16 %v891
        %v1268 = vunpack.c.h.b16 %v891
        %v1269 = vunpack.c.l.b16 %v892
        %v1270 = vunpack.c.h.b16 %v892
        %v1271 = vunpack.c.l.b16 %v893
        %v1272 = vunpack.c.h.b16 %v893
        %v1273 = vunpack.c.l.b16 %v894
        %v1274 = vunpack.c.h.b16 %v894
        %v1275 = vunpack.c.l.b16 %v895
        %v1276 = vunpack.c.h.b16 %v895
        %v1277 = vunpack.c.l.b16 %v896
        %v1278 = vunpack.c.h.b16 %v896
        %v1279 = vunpack.c.l.b16 %v897
        %v1280 = vunpack.c.h.b16 %v897
        %v1281 = vunpack.c.l.b16 %v898
        %v1282 = vunpack.c.h.b16 %v898
        %v1283 = vunpack.c.l.b16 %v899
        %v1284 = vunpack.c.h.b16 %v899
        %v1285 = vunpack.c.l.b16 %v900
        %v1286 = vunpack.c.h.b16 %v900
        %v1287 = vunpack.c.l.b16 %v901
        %v1288 = vunpack.c.h.b16 %v901
        %v1289 = vunpack.c.l.b16 %v902
        %v1290 = vunpack.c.h.b16 %v902
        %v1291 = vunpack.c.l.b16 %v903
        %v1292 = vunpack.c.h.b16 %v903
        %v1293 = vunpack.c.l.b16 %v904
        %v1294 = vunpack.c.h.b16 %v904
        %v1295 = vunpack.c.l.b16 %v905
        %v1296 = vunpack.c.h.b16 %v905
        %v1297 = vunpack.c.l.b16 %v906
        %v1298 = vunpack.c.h.b16 %v906
        %v1299 = vunpack.c.l.b16 %v907
        %v1300 = vunpack.c.h.b16 %v907
        %v1301 = vunpack.c.l.b16 %v908
        %v1302 = vunpack.c.h.b16 %v908
        %v1303 = vunpack.c.l.b16 %v909
        %v1304 = vunpack.c.h.b16 %v909
        %v1305 = vunpack.c.l.b16 %v910
        %v1306 = vunpack.c.h.b16 %v910
        %v1307 = vunpack.c.l.b16 %v911
        %v1308 = vunpack.c.h.b16 %v911
        %v1309 = vunpack.c.l.b16 %v912
        %v1310 = vunpack.c.h.b16 %v912
        %v1311 = vunpack.c.l.b16 %v913
        %v1312 = vunpack.c.h.b16 %v913
        %v1313 = vunpack.c.l.b16 %v914
        %v1314 = vunpack.c.h.b16 %v914
        %v1315 = vunpack.c.l.b16 %v915
        %v1316 = vunpack.c.h.b16 %v915
        %v1317 = vunpack.c.l.b16 %v916
        %v1318 = vunpack.c.h.b16 %v916
        %v1319 = vunpack.c.l.b16 %v917
        %v1320 = vunpack.c.h.b16 %v917
        %v1321 = vunpack.c.l.b16 %v918
        %v1322 = vunpack.c.h.b16 %v918
        %v1323 = vunpack.c.l.b16 %v919
        %v1324 = vunpack.c.h.b16 %v919
        %v1325 = vunpack.c.l.b16 %v920
        %v1326 = vunpack.c.h.b16 %v920
        %v1327 = vunpack.c.l.b16 %v921
        %v1328 = vunpack.c.h.b16 %v921
        %v1329 = vunpack.c.l.b16 %v922
        %v1330 = vunpack.c.h.b16 %v922
        %v1331 = vunpack.c.l.b16 %v923
        %v1332 = vunpack.c.h.b16 %v923
        %v1333 = vunpack.c.l.b16 %v924
        %v1334 = vunpack.c.h.b16 %v924
        %v1335 = vunpack.c.l.b16 %v925
        %v1336 = vunpack.c.h.b16 %v925
        %v1337 = vunpack.c.l.b16 %v926
        %v1338 = vunpack.c.h.b16 %v926
        %v1339 = vunpack.c.l.b16 %v927
        %v1340 = vunpack.c.h.b16 %v927
        %v1341 = vunpack.c.l.b16 %v928
        %v1342 = vunpack.c.h.b16 %v928
        %v1343 = vunpack.c.l.b16 %v929
        %v1344 = vunpack.c.h.b16 %v929
        %v1345 = vunpack.c.l.b16 %v930
        %v1346 = vunpack.c.h.b16 %v930
        %v1347 = vunpack.c.l.b16 %v931
        %v1348 = vunpack.c.h.b16 %v931
        %v1349 = vunpack.c.l.b16 %v932
        %v1350 = vunpack.c.h.b16 %v932
        %v1351 = vunpack.c.l.b16 %v933
        %v1352 = vunpack.c.h.b16 %v933
        %v1353 = vunpack.c.l.b16 %v934
        %v1354 = vunpack.c.h.b16 %v934
        %v1355 = vunpack.c.l.b16 %v935
        %v1356 = vunpack.c.h.b16 %v935
        %v1357 = vunpack.c.l.b16 %v936
        %v1358 = vunpack.c.h.b16 %v936
        %v1359 = vunpack.c.l.b16 %v937
        %v1360 = vunpack.c.h.b16 %v937
        %v1361 = vunpack.c.l.b16 %v938
        %v1362 = vunpack.c.h.b16 %v938
        %v1363 = vunpack.c.l.b16 %v939
        %v1364 = vunpack.c.h.b16 %v939
        %v1365 = vunpack.c.l.b16 %v940
        %v1366 = vunpack.c.h.b16 %v940
        %v1367 = vunpack.c.l.b16 %v941
        %v1368 = vunpack.c.h.b16 %v941
        %v1369 = vunpack.c.l.b16 %v942
        %v1370 = vunpack.c.h.b16 %v942
        %v1371 = vunpack.c.l.b16 %v943
        %v1372 = vunpack.c.h.b16 %v943
        %v1373 = vunpack.c.l.b16 %v944
        %v1374 = vunpack.c.h.b16 %v944
        %v1375 = vunpack.c.l.b16 %v945
        %v1376 = vunpack.c.h.b16 %v945
        %v1377 = vunpack.c.l.b16 %v946
        %v1378 = vunpack.c.h.b16 %v946
        %v1379 = vunpack.c.l.b16 %v947
        %v1380 = vunpack.c.h.b16 %v947
        %v1381 = vunpack.c.l.b16 %v948
        %v1382 = vunpack.c.h.b16 %v948
        %v1383 = vunpack.c.l.b16 %v949
        %v1384 = vunpack.c.h.b16 %v949
        %v1385 = vunpack.c.l.b16 %v950
        %v1386 = vunpack.c.h.b16 %v950
        %v1387 = vunpack.c.l.b16 %v951
        %v1388 = vunpack.c.h.b16 %v951
        %v1389 = vunpack.c.l.b16 %v952
        %v1390 = vunpack.c.h.b16 %v952
        %v1391 = vunpack.c.l.b16 %v953
        %v1392 = vunpack.c.h.b16 %v953
        %v1393 = vunpack.c.l.b16 %v954
        %v1394 = vunpack.c.h.b16 %v954
        %v1395 = vunpack.c.l.b16 %v955
        %v1396 = vunpack.c.h.b16 %v955
        %v1397 = vunpack.c.l.b16 %v956
        %v1398 = vunpack.c.h.b16 %v956
        %v1399 = vunpack.c.l.b16 %v957
        %v1400 = vunpack.c.h.b16 %v957
        %v1401 = vunpack.c.l.b16 %v958
        %v1402 = vunpack.c.h.b16 %v958
        %v1403 = vunpack.c.l.b16 %v959
        %v1404 = vunpack.c.h.b16 %v959
        %v1405 = vunpack.c.l.b16 %v960
        %v1406 = vunpack.c.h.b16 %v960
        %v1407 = vunpack.c.l.b16 %v961
        %v1408 = vunpack.c.h.b16 %v961
        %v1409 = vunpack.c.l.b16 %v962
        %v1410 = vunpack.c.h.b16 %v962
        %v1411 = vunpack.c.l.b16 %v963
        %v1412 = vunpack.c.h.b16 %v963
        %v1413 = vunpack.c.l.b16 %v964
        %v1414 = vunpack.c.h.b16 %v964
        %v1415 = vunpack.c.l.b16 %v965
        %v1416 = vunpack.c.h.b16 %v965
        %v1417 = vunpack.c.l.b16 %v966
        %v1418 = vunpack.c.h.b16 %v966
        %v1419 = vpack.c.b16 %v1165, %v1163
        %v1420 = vpack.c.b16 %v1166, %v1164
        %v1421 = vpack.c.b16 %v1169, %v1167
        %v1422 = vpack.c.b16 %v1170, %v1168
        %v1423 = vpack.c.b16 %v1173, %v1171
        %v1424 = vpack.c.b16 %v1174, %v1172
        %v1425 = vpack.c.b16 %v1177, %v1175
        %v1426 = vpack.c.b16 %v1178, %v1176
        %v1427 = vpack.c.b16 %v1181, %v1179
        %v1428 = vpack.c.b16 %v1182, %v1180
        %v1429 = vpack.c.b16 %v1185, %v1183
        %v1430 = vpack.c.b16 %v1186, %v1184
        %v1431 = vpack.c.b16 %v1189, %v1187
        %v1432 = vpack.c.b16 %v1190, %v1188
        %v1433 = vpack.c.b16 %v1193, %v1191
        %v1434 = vpack.c.b16 %v1194, %v1192
        %v1435 = vpack.c.b16 %v1197, %v1195
        %v1436 = vpack.c.b16 %v1198, %v1196
        %v1437 = vpack.c.b16 %v1201, %v1199
        %v1438 = vpack.c.b16 %v1202, %v1200
        %v1439 = vpack.c.b16 %v1205, %v1203
        %v1440 = vpack.c.b16 %v1206, %v1204
        %v1441 = vpack.c.b16 %v1209, %v1207
        %v1442 = vpack.c.b16 %v1210, %v1208
        %v1443 = vpack.c.b16 %v1213, %v1211
        %v1444 = vpack.c.b16 %v1214, %v1212
        %v1445 = vpack.c.b16 %v1217, %v1215
        %v1446 = vpack.c.b16 %v1218, %v1216
        %v1447 = vpack.c.b16 %v1221, %v1219
        %v1448 = vpack.c.b16 %v1222, %v1220
        %v1449 = vpack.c.b16 %v1225, %v1223
        %v1450 = vpack.c.b16 %v1226, %v1224
        %v1451 = vpack.c.b16 %v1229, %v1227
        %v1452 = vpack.c.b16 %v1230, %v1228
        %v1453 = vpack.c.b16 %v1233, %v1231
        %v1454 = vpack.c.b16 %v1234, %v1232
        %v1455 = vpack.c.b16 %v1237, %v1235
        %v1456 = vpack.c.b16 %v1238, %v1236
        %v1457 = vpack.c.b16 %v1241, %v1239
        %v1458 = vpack.c.b16 %v1242, %v1240
        %v1459 = vpack.c.b16 %v1245, %v1243
        %v1460 = vpack.c.b16 %v1246, %v1244
        %v1461 = vpack.c.b16 %v1249, %v1247
        %v1462 = vpack.c.b16 %v1250, %v1248
        %v1463 = vpack.c.b16 %v1253, %v1251
        %v1464 = vpack.c.b16 %v1254, %v1252
        %v1465 = vpack.c.b16 %v1257, %v1255
        %v1466 = vpack.c.b16 %v1258, %v1256
        %v1467 = vpack.c.b16 %v1261, %v1259
        %v1468 = vpack.c.b16 %v1262, %v1260
        %v1469 = vpack.c.b16 %v1265, %v1263
        %v1470 = vpack.c.b16 %v1266, %v1264
        %v1471 = vpack.c.b16 %v1269, %v1267
        %v1472 = vpack.c.b16 %v1270, %v1268
        %v1473 = vpack.c.b16 %v1273, %v1271
        %v1474 = vpack.c.b16 %v1274, %v1272
        %v1475 = vpack.c.b16 %v1277, %v1275
        %v1476 = vpack.c.b16 %v1278, %v1276
        %v1477 = vpack.c.b16 %v1281, %v1279
        %v1478 = vpack.c.b16 %v1282, %v1280
        %v1479 = vpack.c.b16 %v1285, %v1283
        %v1480 = vpack.c.b16 %v1286, %v1284
        %v1481 = vpack.c.b16 %v1289, %v1287
        %v1482 = vpack.c.b16 %v1290, %v1288
        %v1483 = vpack.c.b16 %v1293, %v1291
        %v1484 = vpack.c.b16 %v1294, %v1292
        %v1485 = vpack.c.b16 %v1297, %v1295
        %v1486 = vpack.c.b16 %v1298, %v1296
        %v1487 = vpack.c.b16 %v1301, %v1299
        %v1488 = vpack.c.b16 %v1302, %v1300
        %v1489 = vpack.c.b16 %v1305, %v1303
        %v1490 = vpack.c.b16 %v1306, %v1304
        %v1491 = vpack.c.b16 %v1309, %v1307
        %v1492 = vpack.c.b16 %v1310, %v1308
        %v1493 = vpack.c.b16 %v1313, %v1311
        %v1494 = vpack.c.b16 %v1314, %v1312
        %v1495 = vpack.c.b16 %v1317, %v1315
        %v1496 = vpack.c.b16 %v1318, %v1316
        %v1497 = vpack.c.b16 %v1321, %v1319
        %v1498 = vpack.c.b16 %v1322, %v1320
        %v1499 = vpack.c.b16 %v1325, %v1323
        %v1500 = vpack.c.b16 %v1326, %v1324
        %v1501 = vpack.c.b16 %v1329, %v1327
        %v1502 = vpack.c.b16 %v1330, %v1328
        %v1503 = vpack.c.b16 %v1333, %v1331
        %v1504 = vpack.c.b16 %v1334, %v1332
        %v1505 = vpack.c.b16 %v1337, %v1335
        %v1506 = vpack.c.b16 %v1338, %v1336
        %v1507 = vpack.c.b16 %v1341, %v1339
        %v1508 = vpack.c.b16 %v1342, %v1340
        %v1509 = vpack.c.b16 %v1345, %v1343
        %v1510 = vpack.c.b16 %v1346, %v1344
        %v1511 = vpack.c.b16 %v1349, %v1347
        %v1512 = vpack.c.b16 %v1350, %v1348
        %v1513 = vpack.c.b16 %v1353, %v1351
        %v1514 = vpack.c.b16 %v1354, %v1352
        %v1515 = vpack.c.b16 %v1357, %v1355
        %v1516 = vpack.c.b16 %v1358, %v1356
        %v1517 = vpack.c.b16 %v1361, %v1359
        %v1518 = vpack.c.b16 %v1362, %v1360
        %v1519 = vpack.c.b16 %v1365, %v1363
        %v1520 = vpack.c.b16 %v1366, %v1364
        %v1521 = vpack.c.b16 %v1369, %v1367
        %v1522 = vpack.c.b16 %v1370, %v1368
        %v1523 = vpack.c.b16 %v1373, %v1371
        %v1524 = vpack.c.b16 %v1374, %v1372
        %v1525 = vpack.c.b16 %v1377, %v1375
        %v1526 = vpack.c.b16 %v1378, %v1376
        %v1527 = vpack.c.b16 %v1381, %v1379
        %v1528 = vpack.c.b16 %v1382, %v1380
        %v1529 = vpack.c.b16 %v1385, %v1383
        %v1530 = vpack.c.b16 %v1386, %v1384
        %v1531 = vpack.c.b16 %v1389, %v1387
        %v1532 = vpack.c.b16 %v1390, %v1388
        %v1533 = vpack.c.b16 %v1393, %v1391
        %v1534 = vpack.c.b16 %v1394, %v1392
        %v1535 = vpack.c.b16 %v1397, %v1395
        %v1536 = vpack.c.b16 %v1398, %v1396
        %v1537 = vpack.c.b16 %v1401, %v1399
        %v1538 = vpack.c.b16 %v1402, %v1400
        %v1539 = vpack.c.b16 %v1405, %v1403
        %v1540 = vpack.c.b16 %v1406, %v1404
        %v1541 = vpack.c.b16 %v1409, %v1407
        %v1542 = vpack.c.b16 %v1410, %v1408
        %v1543 = vpack.c.b16 %v1413, %v1411
        %v1544 = vpack.c.b16 %v1414, %v1412
        %v1545 = vpack.c.b16 %v1417, %v1415
        %v1546 = vpack.c.b16 %v1418, %v1416
        %1675 = vmatpush.bf16.msra.mxu0 %v1433
        %1676 = vmatpush.bf16.msra.mxu0 %v1431
        %1677 = vmatpush.bf16.msra.mxu0 %v1429
        %1678 = vmatpush.bf16.msra.mxu0 %v1427
        %1679 = vmatpush.bf16.msra.mxu0 %v1425
        %1680 = vmatpush.bf16.msra.mxu0 %v1423
        %1681 = vmatpush.bf16.msra.mxu0 %v1421
        %1682 = vmatpush.bf16.msra.mxu0 %v1419
        %1683 = vmatmul.bf16.gmra.mxu0 %v1003
        %v1684 = vpop.f32.mrf.mxu0
        %v1685 = vadd.f32 0.0, %v1684
        %v1686 = vpop.f32.mrf.mxu0
        %v1687 = vadd.f32 0.0, %v1686
        %1688 = vmatmul.bf16.gmra.mxu0 %v1011
        %v1689 = vpop.f32.mrf.mxu0
        %v1690 = vadd.f32 0.0, %v1689
        %v1691 = vpop.f32.mrf.mxu0
        %1692 = vdwg.mxu0
        %1693 = vmatpush.bf16.msra.mxu0 %v1449
        %1694 = vmatpush.bf16.msra.mxu0 %v1447
        %1695 = vmatpush.bf16.msra.mxu0 %v1445
        %1696 = vmatpush.bf16.msra.mxu0 %v1443
        %1697 = vmatpush.bf16.msra.mxu0 %v1441
        %1698 = vmatpush.bf16.msra.mxu0 %v1439
        %1699 = vmatpush.bf16.msra.mxu0 %v1437
        %1700 = vmatpush.bf16.msra.mxu0 %v1435
        %1701 = vmatmul.bf16.gmra.mxu0 %v1004
        %v1702 = vpop.f32.mrf.mxu0
        %v1703 = vadd.f32 %v1685, %v1702
        %v1704 = vpop.f32.mrf.mxu0
        %v1705 = vadd.f32 %v1687, %v1704
        %1706 = vmatmul.bf16.gmra.mxu0 %v1012
        %v1707 = vpop.f32.mrf.mxu0
        %v1708 = vadd.f32 %v1690, %v1707
        %v1709 = vpop.f32.mrf.mxu0
        %1710 = vdwg.mxu0
        %1711 = vmatpush.bf16.msra.mxu0 %v1465
        %1712 = vmatpush.bf16.msra.mxu0 %v1463
        %1713 = vmatpush.bf16.msra.mxu0 %v1461
        %1714 = vmatpush.bf16.msra.mxu0 %v1459
        %1715 = vmatpush.bf16.msra.mxu0 %v1457
        %1716 = vmatpush.bf16.msra.mxu0 %v1455
        %1717 = vmatpush.bf16.msra.mxu0 %v1453
        %1718 = vmatpush.bf16.msra.mxu0 %v1451
        %1719 = vmatmul.bf16.gmra.mxu0 %v1005
        %v1720 = vpop.f32.mrf.mxu0
        %v1721 = vadd.f32 %v1703, %v1720
        %v1722 = vpop.f32.mrf.mxu0
        %v1723 = vadd.f32 %v1705, %v1722
        %1724 = vmatmul.bf16.gmra.mxu0 %v1013
        %v1725 = vpop.f32.mrf.mxu0
        %v1726 = vadd.f32 %v1708, %v1725
        %v1727 = vpop.f32.mrf.mxu0
        %1728 = vdwg.mxu0
        %1729 = vmatpush.bf16.msra.mxu0 %v1481
        %1730 = vmatpush.bf16.msra.mxu0 %v1479
        %1731 = vmatpush.bf16.msra.mxu0 %v1477
        %1732 = vmatpush.bf16.msra.mxu0 %v1475
        %1733 = vmatpush.bf16.msra.mxu0 %v1473
        %1734 = vmatpush.bf16.msra.mxu0 %v1471
        %1735 = vmatpush.bf16.msra.mxu0 %v1469
        %1736 = vmatpush.bf16.msra.mxu0 %v1467
        %1737 = vmatmul.bf16.gmra.mxu0 %v1006
        %v1738 = vpop.f32.mrf.mxu0
        %v1739 = vadd.f32 %v1721, %v1738
        %v1740 = vpop.f32.mrf.mxu0
        %v1741 = vadd.f32 %v1723, %v1740
        %1742 = vmatmul.bf16.gmra.mxu0 %v1014
        %v1743 = vpop.f32.mrf.mxu0
        %v1744 = vadd.f32 %v1726, %v1743
        %v1745 = vpop.f32.mrf.mxu0
        %1746 = vdwg.mxu0
        %1747 = vmatpush.bf16.msra.mxu0 %v1497
        %1748 = vmatpush.bf16.msra.mxu0 %v1495
        %1749 = vmatpush.bf16.msra.mxu0 %v1493
        %1750 = vmatpush.bf16.msra.mxu0 %v1491
        %1751 = vmatpush.bf16.msra.mxu0 %v1489
        %1752 = vmatpush.bf16.msra.mxu0 %v1487
        %1753 = vmatpush.bf16.msra.mxu0 %v1485
        %1754 = vmatpush.bf16.msra.mxu0 %v1483
        %1755 = vmatmul.bf16.gmra.mxu0 %v1007
        %v1756 = vpop.f32.mrf.mxu0
        %v1757 = vadd.f32 %v1739, %v1756
        %v1758 = vpop.f32.mrf.mxu0
        %v1759 = vadd.f32 %v1741, %v1758
        %1760 = vmatmul.bf16.gmra.mxu0 %v1015
        %v1761 = vpop.f32.mrf.mxu0
        %v1762 = vadd.f32 %v1744, %v1761
        %v1763 = vpop.f32.mrf.mxu0
        %1764 = vdwg.mxu0
        %1765 = vmatpush.bf16.msra.mxu0 %v1513
        %1766 = vmatpush.bf16.msra.mxu0 %v1511
        %1767 = vmatpush.bf16.msra.mxu0 %v1509
        %1768 = vmatpush.bf16.msra.mxu0 %v1507
        %1769 = vmatpush.bf16.msra.mxu0 %v1505
        %1770 = vmatpush.bf16.msra.mxu0 %v1503
        %1771 = vmatpush.bf16.msra.mxu0 %v1501
        %1772 = vmatpush.bf16.msra.mxu0 %v1499
        %1773 = vmatmul.bf16.gmra.mxu0 %v1008
        %v1774 = vpop.f32.mrf.mxu0
        %v1775 = vadd.f32 %v1757, %v1774
        %v1776 = vpop.f32.mrf.mxu0
        %v1777 = vadd.f32 %v1759, %v1776
        %1778 = vmatmul.bf16.gmra.mxu0 %v1016
        %v1779 = vpop.f32.mrf.mxu0
        %v1780 = vadd.f32 %v1762, %v1779
        %v1781 = vpop.f32.mrf.mxu0
        %1782 = vdwg.mxu0
        %1783 = vmatpush.bf16.msra.mxu0 %v1529
        %1784 = vmatpush.bf16.msra.mxu0 %v1527
        %1785 = vmatpush.bf16.msra.mxu0 %v1525
        %1786 = vmatpush.bf16.msra.mxu0 %v1523
        %1787 = vmatpush.bf16.msra.mxu0 %v1521
        %1788 = vmatpush.bf16.msra.mxu0 %v1519
        %1789 = vmatpush.bf16.msra.mxu0 %v1517
        %1790 = vmatpush.bf16.msra.mxu0 %v1515
        %1791 = vmatmul.bf16.gmra.mxu0 %v1009
        %v1792 = vpop.f32.mrf.mxu0
        %v1793 = vadd.f32 %v1775, %v1792
        %v1794 = vpop.f32.mrf.mxu0
        %v1795 = vadd.f32 %v1777, %v1794
        %1796 = vmatmul.bf16.gmra.mxu0 %v1017
        %v1797 = vpop.f32.mrf.mxu0
        %v1798 = vadd.f32 %v1780, %v1797
        %v1799 = vpop.f32.mrf.mxu0
        %1800 = vdwg.mxu0
        %1801 = vmatpush.bf16.msra.mxu0 %v1545
        %1802 = vmatpush.bf16.msra.mxu0 %v1543
        %1803 = vmatpush.bf16.msra.mxu0 %v1541
        %1804 = vmatpush.bf16.msra.mxu0 %v1539
        %1805 = vmatpush.bf16.msra.mxu0 %v1537
        %1806 = vmatpush.bf16.msra.mxu0 %v1535
        %1807 = vmatpush.bf16.msra.mxu0 %v1533
        %1808 = vmatpush.bf16.msra.mxu0 %v1531
        %1809 = vmatmul.bf16.gmra.mxu0 %v1010
        %v1810 = vpop.f32.mrf.mxu0
        %v1811 = vadd.f32 %v1793, %v1810
        %v1812 = vpop.f32.mrf.mxu0
        %v1813 = vadd.f32 %v1795, %v1812
        %1814 = vmatmul.bf16.gmra.mxu0 %v1018
        %v1815 = vpop.f32.mrf.mxu0
        %v1816 = vadd.f32 %v1798, %v1815
        %v1817 = vpop.f32.mrf.mxu0
        %1818 = vdwg.mxu0
        %1819 = vmatpush.bf16.msra.mxu0 %v1434
        %1820 = vmatpush.bf16.msra.mxu0 %v1432
        %1821 = vmatpush.bf16.msra.mxu0 %v1430
        %1822 = vmatpush.bf16.msra.mxu0 %v1428
        %1823 = vmatpush.bf16.msra.mxu0 %v1426
        %1824 = vmatpush.bf16.msra.mxu0 %v1424
        %1825 = vmatpush.bf16.msra.mxu0 %v1422
        %1826 = vmatpush.bf16.msra.mxu0 %v1420
        %1827 = vmatmul.bf16.gmra.mxu0 %v1003
        %v1828 = vpop.f32.mrf.mxu0
        %v1829 = vadd.f32 0.0, %v1828
        %v1830 = vpop.f32.mrf.mxu0
        %v1831 = vadd.f32 0.0, %v1830
        %1832 = vmatmul.bf16.gmra.mxu0 %v1011
        %v1833 = vpop.f32.mrf.mxu0
        %v1834 = vadd.f32 0.0, %v1833
        %v1835 = vpop.f32.mrf.mxu0
        %1836 = vdwg.mxu0
        %1837 = vmatpush.bf16.msra.mxu0 %v1450
        %1838 = vmatpush.bf16.msra.mxu0 %v1448
        %1839 = vmatpush.bf16.msra.mxu0 %v1446
        %1840 = vmatpush.bf16.msra.mxu0 %v1444
        %1841 = vmatpush.bf16.msra.mxu0 %v1442
        %1842 = vmatpush.bf16.msra.mxu0 %v1440
        %1843 = vmatpush.bf16.msra.mxu0 %v1438
        %1844 = vmatpush.bf16.msra.mxu0 %v1436
        %1845 = vmatmul.bf16.gmra.mxu0 %v1004
        %v1846 = vpop.f32.mrf.mxu0
        %v1847 = vadd.f32 %v1829, %v1846
        %v1848 = vpop.f32.mrf.mxu0
        %v1849 = vadd.f32 %v1831, %v1848
        %1850 = vmatmul.bf16.gmra.mxu0 %v1012
        %v1851 = vpop.f32.mrf.mxu0
        %v1852 = vadd.f32 %v1834, %v1851
        %v1853 = vpop.f32.mrf.mxu0
        %1854 = vdwg.mxu0
        %1855 = vmatpush.bf16.msra.mxu0 %v1466
        %1856 = vmatpush.bf16.msra.mxu0 %v1464
        %1857 = vmatpush.bf16.msra.mxu0 %v1462
        %1858 = vmatpush.bf16.msra.mxu0 %v1460
        %1859 = vmatpush.bf16.msra.mxu0 %v1458
        %1860 = vmatpush.bf16.msra.mxu0 %v1456
        %1861 = vmatpush.bf16.msra.mxu0 %v1454
        %1862 = vmatpush.bf16.msra.mxu0 %v1452
        %1863 = vmatmul.bf16.gmra.mxu0 %v1005
        %v1864 = vpop.f32.mrf.mxu0
        %v1865 = vadd.f32 %v1847, %v1864
        %v1866 = vpop.f32.mrf.mxu0
        %v1867 = vadd.f32 %v1849, %v1866
        %1868 = vmatmul.bf16.gmra.mxu0 %v1013
        %v1869 = vpop.f32.mrf.mxu0
        %v1870 = vadd.f32 %v1852, %v1869
        %v1871 = vpop.f32.mrf.mxu0
        %1872 = vdwg.mxu0
        %1873 = vmatpush.bf16.msra.mxu0 %v1482
        %1874 = vmatpush.bf16.msra.mxu0 %v1480
        %1875 = vmatpush.bf16.msra.mxu0 %v1478
        %1876 = vmatpush.bf16.msra.mxu0 %v1476
        %1877 = vmatpush.bf16.msra.mxu0 %v1474
        %1878 = vmatpush.bf16.msra.mxu0 %v1472
        %1879 = vmatpush.bf16.msra.mxu0 %v1470
        %1880 = vmatpush.bf16.msra.mxu0 %v1468
        %1881 = vmatmul.bf16.gmra.mxu0 %v1006
        %v1882 = vpop.f32.mrf.mxu0
        %v1883 = vadd.f32 %v1865, %v1882
        %v1884 = vpop.f32.mrf.mxu0
        %v1885 = vadd.f32 %v1867, %v1884
        %1886 = vmatmul.bf16.gmra.mxu0 %v1014
        %v1887 = vpop.f32.mrf.mxu0
        %v1888 = vadd.f32 %v1870, %v1887
        %v1889 = vpop.f32.mrf.mxu0
        %1890 = vdwg.mxu0
        %1891 = vmatpush.bf16.msra.mxu0 %v1498
        %1892 = vmatpush.bf16.msra.mxu0 %v1496
        %1893 = vmatpush.bf16.msra.mxu0 %v1494
        %1894 = vmatpush.bf16.msra.mxu0 %v1492
        %1895 = vmatpush.bf16.msra.mxu0 %v1490
        %1896 = vmatpush.bf16.msra.mxu0 %v1488
        %1897 = vmatpush.bf16.msra.mxu0 %v1486
        %1898 = vmatpush.bf16.msra.mxu0 %v1484
        %1899 = vmatmul.bf16.gmra.mxu0 %v1007
        %v1900 = vpop.f32.mrf.mxu0
        %v1901 = vadd.f32 %v1883, %v1900
        %v1902 = vpop.f32.mrf.mxu0
        %v1903 = vadd.f32 %v1885, %v1902
        %1904 = vmatmul.bf16.gmra.mxu0 %v1015
        %v1905 = vpop.f32.mrf.mxu0
        %v1906 = vadd.f32 %v1888, %v1905
        %v1907 = vpop.f32.mrf.mxu0
        %1908 = vdwg.mxu0
        %1909 = vmatpush.bf16.msra.mxu0 %v1514
        %1910 = vmatpush.bf16.msra.mxu0 %v1512
        %1911 = vmatpush.bf16.msra.mxu0 %v1510
        %1912 = vmatpush.bf16.msra.mxu0 %v1508
        %1913 = vmatpush.bf16.msra.mxu0 %v1506
        %1914 = vmatpush.bf16.msra.mxu0 %v1504
        %1915 = vmatpush.bf16.msra.mxu0 %v1502
        %1916 = vmatpush.bf16.msra.mxu0 %v1500
        %1917 = vmatmul.bf16.gmra.mxu0 %v1008
        %v1918 = vpop.f32.mrf.mxu0
        %v1919 = vadd.f32 %v1901, %v1918
        %v1920 = vpop.f32.mrf.mxu0
        %v1921 = vadd.f32 %v1903, %v1920
        %1922 = vmatmul.bf16.gmra.mxu0 %v1016
        %v1923 = vpop.f32.mrf.mxu0
        %v1924 = vadd.f32 %v1906, %v1923
        %v1925 = vpop.f32.mrf.mxu0
        %1926 = vdwg.mxu0
        %1927 = vmatpush.bf16.msra.mxu0 %v1530
        %1928 = vmatpush.bf16.msra.mxu0 %v1528
        %1929 = vmatpush.bf16.msra.mxu0 %v1526
        %1930 = vmatpush.bf16.msra.mxu0 %v1524
        %1931 = vmatpush.bf16.msra.mxu0 %v1522
        %1932 = vmatpush.bf16.msra.mxu0 %v1520
        %1933 = vmatpush.bf16.msra.mxu0 %v1518
        %1934 = vmatpush.bf16.msra.mxu0 %v1516
        %1935 = vmatmul.bf16.gmra.mxu0 %v1009
        %v1936 = vpop.f32.mrf.mxu0
        %v1937 = vadd.f32 %v1919, %v1936
        %v1938 = vpop.f32.mrf.mxu0
        %v1939 = vadd.f32 %v1921, %v1938
        %1940 = vmatmul.bf16.gmra.mxu0 %v1017
        %v1941 = vpop.f32.mrf.mxu0
        %v1942 = vadd.f32 %v1924, %v1941
        %v1943 = vpop.f32.mrf.mxu0
        %1944 = vdwg.mxu0
        %1945 = vmatpush.bf16.msra.mxu0 %v1546
        %1946 = vmatpush.bf16.msra.mxu0 %v1544
        %1947 = vmatpush.bf16.msra.mxu0 %v1542
        %1948 = vmatpush.bf16.msra.mxu0 %v1540
        %1949 = vmatpush.bf16.msra.mxu0 %v1538
        %1950 = vmatpush.bf16.msra.mxu0 %v1536
        %1951 = vmatpush.bf16.msra.mxu0 %v1534
        %1952 = vmatpush.bf16.msra.mxu0 %v1532
        %1953 = vmatmul.bf16.gmra.mxu0 %v1010
        %v1954 = vpop.f32.mrf.mxu0
        %v1955 = vadd.f32 %v1937, %v1954
        %v1956 = vpop.f32.mrf.mxu0
        %v1957 = vadd.f32 %v1939, %v1956
        %1958 = vmatmul.bf16.gmra.mxu0 %v1018
        %v1959 = vpop.f32.mrf.mxu0
        %v1960 = vadd.f32 %v1942, %v1959
        %v1961 = vpop.f32.mrf.mxu0
        %1962 = vdwg.mxu0
        %p1963 = scmp.eq.s32.totalorder %s21, 0
        // Predicated region
        $region94: #{patch_discriminator.13} parent=84 // pred_check
          %p1964 = pneg %p1963
        $region95: #{patch_discriminator.13} parent=84 // pred_check_branch
          %1966 = sbr.rel (%p1964) target = $region97
        $region96: #{patch_discriminator.13} parent=84 // pred_region
          %1967 = vst [vmem:[#allocation2] sm:$0xff] %v1811
          %1968 = vst [vmem:[#allocation2 + $0x8] sm:$0xff] %v1955
          %1969 = vst [vmem:[#allocation2 + $0x10] sm:$0xff] %v1813
          %1970 = vst [vmem:[#allocation2 + $0x18] sm:$0xff] %v1957
          %1971 = vst [vmem:[#allocation2 + $0x20] sm:$0xff] %v1816
          %1972 = vst [vmem:[#allocation2 + $0x28] sm:$0xff] %v1960
        $region97: #{patch_discriminator.13} parent=84 // pred_fallthru
          _
        %p1973 = scmp.ne.s32.totalorder %s21, 0
        // Predicated region
        $region98: #{patch_discriminator.13} parent=84 // pred_check
          %p1974 = pneg %p1973
        $region99: #{patch_discriminator.13} parent=84 // pred_check_branch
          %1976 = sbr.rel (%p1974) target = $region101
        $region100: #{patch_discriminator.13} parent=84 // pred_region
          %v1977 = vld [vmem:[#allocation2] sm:$0xff]
          %v1978 = vld [vmem:[#allocation2 + $0x8] sm:$0xff]
          %v1979 = vld [vmem:[#allocation2 + $0x10] sm:$0xff]
          %v1980 = vld [vmem:[#allocation2 + $0x18] sm:$0xff]
          %v1981 = vld [vmem:[#allocation2 + $0x20] sm:$0xff]
          %v1982 = vld [vmem:[#allocation2 + $0x28] sm:$0xff]
          %v1983 = vadd.f32 %v1977, %v1811
          %v1984 = vadd.f32 %v1978, %v1955
          %v1985 = vadd.f32 %v1979, %v1813
          %v1986 = vadd.f32 %v1980, %v1957
          %v1987 = vadd.f32 %v1981, %v1816
          %v1988 = vadd.f32 %v1982, %v1960
          %1989 = vst [vmem:[#allocation2] sm:$0xff] %v1983
          %1990 = vst [vmem:[#allocation2 + $0x8] sm:$0xff] %v1984
          %1991 = vst [vmem:[#allocation2 + $0x10] sm:$0xff] %v1985
          %1992 = vst [vmem:[#allocation2 + $0x18] sm:$0xff] %v1986
          %1993 = vst [vmem:[#allocation2 + $0x20] sm:$0xff] %v1987
          %1994 = vst [vmem:[#allocation2 + $0x28] sm:$0xff] %v1988
        $region101: #{patch_discriminator.13} parent=84 // pred_fallthru
          _
        %p1995 = scmp.eq.s32.totalorder %s21, 3
        // Predicated region
        $region102: #{patch_discriminator.13} parent=84 // pred_check
          %p1996 = pneg %p1995
        $region103: #{patch_discriminator.13} parent=84 // pred_check_branch
          %1998 = sbr.rel (%p1996) target = $region105
        $region104: #{patch_discriminator.13} parent=84 // pred_region
          %v1999 = vld [vmem:[#allocation2] sm:$0xff]
          %v2000 = vld [vmem:[#allocation2 + $0x8] sm:$0xff]
          %v2001 = vld [vmem:[#allocation2 + $0x10] sm:$0xff]
          %v2002 = vld [vmem:[#allocation2 + $0x18] sm:$0xff]
          %v2003 = vld [vmem:[#allocation2 + $0x20] sm:$0xff]
          %v2004 = vld [vmem:[#allocation2 + $0x28] sm:$0xff]
          %v2005 = vld [vmem:[%s823] sm:$0x3]
          %v2007 = vperm.slane %v2005, 0
          %v2008 = vperm.slane %v2005, 1
          %v2011 = vadd.f32 %v1999, %v2007
          %v2012 = vadd.f32 %v2000, %v2008
          %v2013 = vadd.f32 %v2001, %v2007
          %v2014 = vadd.f32 %v2002, %v2008
          %v2015 = vadd.f32 %v2003, %v2007
          %v2016 = vadd.f32 %v2004, %v2008
          %v2017 = vpack.c.bf16 %v2012, %v2011
          %v2018 = vpack.c.bf16 %v2014, %v2013
          %v2019 = vpack.c.bf16 %v2016, %v2015
          %2020 = vst [vmem:[%s815] sm:$0xff] %v2017
          %2021 = vst [vmem:[%s815 + $0x8] sm:$0xff] %v2018
          %2022 = vst [vmem:[%s815 + $0x10] sm:$0xff] %v2019
        $region105: #{patch_discriminator.13} parent=84 // pred_fallthru
          _
        %s2023 = sand.u32 %s125, 1
        %s2024 = sand.u32 %s125, 1
        %s2025 = smul.addr %s2024, 24
        %s2026 = scalar_lea.vmem [#allocation5], %s2025
        // Predicated region
        $region106: #{patch_discriminator.13} parent=84 // pred_check
          %p2027 = pneg %p135
        $region107: #{patch_discriminator.13} parent=84 // pred_check_branch
          %2029 = sbr.rel (%p2027) target = $region109
        $region108: #{patch_discriminator.13} parent=84 // pred_region
          %s2030 = smul.u32 3, %s19
          %s2031 = smul.u32 2, %s20
          %s2032 = smul.addr %s2030, 4
          %s2033 = sadd.s32 %s2031, %s2032
          %s2034 = smul.addr %s2033, 4
          %s2035 = scalar_lea.vmem %s3, %s2034
          // Predicated region
          $region110: #{patch_discriminator.13} parent=108 // pred_check
            _
          $region111: #{patch_discriminator.13} parent=108 // pred_check_branch
            %2037 = sbr.rel (0) target = $region113
          $region112: #{patch_discriminator.13} parent=108 // pred_region
            // Predicated region
            $region114: #{patch_discriminator.13} parent=112 // pred_check
              _
            $region115: #{patch_discriminator.13} parent=112 // pred_check_branch
              %2039 = sbr.rel (0) target = $region117
            $region116: #{patch_discriminator.13} parent=112 // pred_region
              // Predicated region
              $region129: #{patch_discriminator.13} parent=116 // pred_check
                _
              $region130: #{patch_discriminator.13} parent=116 // pred_check_branch
                %2059 = sbr.rel (0) target = $region132
              $region131: #{patch_discriminator.13} parent=116 // pred_region
                loop: start=0, step=1, limit=1
                $region133: #{patch_discriminator.13} parent=131 // loop_pre_header
                  _
                $region134: #{patch_discriminator.13} parent=131 // loop_header
                  %s2061 = sphi 0, %s2065
                  %p2062 = scmp.ge.s32.totalorder %s2061, 1
                  %s2066 = sphi %s2026, %s2026
                  %s2067 = sphi %s2035, %s2035
                $region135: #{patch_discriminator.13} parent=131 // loop_header_branch
                  %2064 = sbr.rel (%p2062) target = $region139
                $region136: #{patch_discriminator.13} parent=131 // loop_body
                  %v2068 = vld [vmem:[%s2066] sm:$0xff]
                  %2069 = vst [vmem:[%s2067] sm:$0xff] %v2068
                  %v2070 = vld [vmem:[%s2066 + $0x8] sm:$0xff]
                  %2071 = vst [vmem:[%s2067 + $0x10] sm:$0xff] %v2070
                  %v2072 = vld [vmem:[%s2066 + $0x10] sm:$0xff]
                  %2073 = vst [vmem:[%s2067 + $0x20] sm:$0xff] %v2072
                $region137: #{patch_discriminator.13} parent=131 // loop_footer
                  %s2065 = sadd.s32 1, %s2061
                $region138: #{patch_discriminator.13} parent=131 // loop_footer_branch
                  %2060 = sbr.rel target = $region134
                $region139: #{patch_discriminator.13} parent=131 // loop_exit
                  _
              $region132: #{patch_discriminator.13} parent=116 // pred_fallthru
                _
              // Predicated region
              $region140: #{patch_discriminator.13} parent=116 // pred_check
                _
              $region141: #{patch_discriminator.13} parent=116 // pred_check_branch
                %2075 = sbr.rel target = $region143
              $region142: #{patch_discriminator.13} parent=116 // pred_region
                _
              $region143: #{patch_discriminator.13} parent=116 // pred_fallthru
                _
            $region117: #{patch_discriminator.13} parent=112 // pred_fallthru
              _
            // Predicated region
            $region118: #{patch_discriminator.13} parent=112 // pred_check
              _
            $region119: #{patch_discriminator.13} parent=112 // pred_check_branch
              %2041 = sbr.rel target = $region121
            $region120: #{patch_discriminator.13} parent=112 // pred_region
              %s2043 = ssub.s32 256, 1
              loop: start=0, step=1, limit=1
              $region122: #{patch_discriminator.13} parent=120 // loop_pre_header
                _
              $region123: #{patch_discriminator.13} parent=120 // loop_header
                %s2045 = sphi 0, %s2049
                %p2046 = scmp.ge.s32.totalorder %s2045, 1
                %s2050 = sphi %s2026, %s2026
                %s2051 = sphi %s2035, %s2035
              $region124: #{patch_discriminator.13} parent=120 // loop_header_branch
                %2048 = sbr.rel (%p2046) target = $region128
              $region125: #{patch_discriminator.13} parent=120 // loop_body
                %v2052 = vld [vmem:[%s2050] sm:%s2043]
                %2053 = vst [vmem:[%s2051] sm:%s2043] %v2052
                %v2054 = vld [vmem:[%s2050 + $0x8] sm:%s2043]
                %2055 = vst [vmem:[%s2051 + $0x10] sm:%s2043] %v2054
                %v2056 = vld [vmem:[%s2050 + $0x10] sm:%s2043]
                %2057 = vst [vmem:[%s2051 + $0x20] sm:%s2043] %v2056
              $region126: #{patch_discriminator.13} parent=120 // loop_footer
                %s2049 = sadd.s32 1, %s2045
              $region127: #{patch_discriminator.13} parent=120 // loop_footer_branch
                %2044 = sbr.rel target = $region123
              $region128: #{patch_discriminator.13} parent=120 // loop_exit
                _
            $region121: #{patch_discriminator.13} parent=112 // pred_fallthru
              _
          $region113: #{patch_discriminator.13} parent=108 // pred_fallthru
            _
          %2076 = vnop
        $region109: #{patch_discriminator.13} parent=84 // pred_fallthru
          _
      $region85: #{patch_discriminator.13} parent=5 // pred_fallthru
        _
      %p2077 = scmp.le.s32.totalorder 2, %s9
      // Predicated region
      $region144: #{patch_discriminator.13} parent=5 // pred_check
        %p2078 = pneg %p2077
      $region145: #{patch_discriminator.13} parent=5 // pred_check_branch
        %2080 = sbr.rel (%p2078) target = $region147
      $region146: #{patch_discriminator.13} parent=5 // pred_region
        %s2081 = ssub.s32 %s9, 2
        // Predicated region
        $region148: #{patch_discriminator.13} parent=146 // pred_check
          %p2082 = pneg %p141
        $region149: #{patch_discriminator.13} parent=146 // pred_check_branch
          %2084 = sbr.rel (%p2082) target = $region151
        $region150: #{patch_discriminator.13} parent=146 // pred_region
          %s2085 = sand.u32 %s126, 1
          %s2086 = sand.u32 %s126, 1
          %s2087 = smul.addr %s2086, 24
          %s2088 = scalar_lea.vmem [#allocation5], %s2087
        $region151: #{patch_discriminator.13} parent=146 // pred_fallthru
          _
      $region147: #{patch_discriminator.13} parent=5 // pred_fallthru
        _
    $region6: #{patch_discriminator.13} parent=1 // loop_footer
      %s13 = sadd.s32 1, %s9
    $region7: #{patch_discriminator.13} parent=1 // loop_footer_branch
      %8 = sbr.rel target = $region3
    $region8: #{patch_discriminator.13} parent=1 // loop_exit
      _

// kernel: patch_discriminator.15
$region0: #{patch_discriminator.15}
  #allocation0 [shape = 'u32[]', space=smem, size = 0x4, offset = 0x4, fixed_abs, tag = 'smem constant byte address 0x4 - core index']
  #allocation1 [shape = 'u32[72,128]{1,0:T(1,128)}', space=vmem, size = 0x9000, scoped, tag = 'internal scratch']
  #allocation2 [shape = 'f32[8,128]{1,0:T(8,128)}', space=vmem, size = 0x1000, scoped, tag = 'scratch operand']
  %s0 = inlined_call_operand.vmem [shape: bf16[8,8192], index: 0, kind: input, shape index: {}]
  %s1 = inlined_call_operand.vmem [shape: bf16[8192,128], index: 1, kind: input, shape index: {}]
  %s2 = inlined_call_operand.vmem [shape: f32[1,128], index: 2, kind: input, shape index: {}]
  %s3 = inlined_call_operand.vmem [shape: f32[8,128], index: 3, kind: output, shape index: {}]
  %s4 = sld [smem:[#allocation0]]
  $region57: #{patch_discriminator.15} parent=0
    _
  %s6 = ssub.s32 1, %s4
  %s7 = scalar_select 0, %s6, %s4
  loop: start=0, step=1, limit=10
  $region2: #{patch_discriminator.15} parent=0 // loop_pre_header
    _
  $region3: #{patch_discriminator.15} parent=0 // loop_header
    %s9 = sphi 0, %s13
    %p10 = scmp.ge.s32.totalorder %s9, 10
    %s16 = sphi 0, %s35
    %s17 = sphi 0, %s31
    %s18 = sphi 0, %s27
    %s19 = sphi 0, %s16
    %s20 = sphi 0, %s17
    %s21 = sphi 0, %s18
    %s22 = sphi 0, %s19
    %s23 = sphi 0, %s20
    %s24 = sphi 0, %s21
    %s40 = sphi 0, %s42
    %s43 = sphi 0, %s40
    %s44 = sphi 0, %s43
    %s60 = sphi 0, %s44
    %s68 = sphi 0, %s70
    %s71 = sphi 0, %s68
    %s72 = sphi 0, %s71
    %s88 = sphi 0, %s72
    %s94 = sphi 0, %s96
    %s97 = sphi 0, %s94
    %s98 = sphi 0, %s97
    %s114 = sphi 0, %s98
    %s122 = sphi 0, %s124
    %s125 = sphi 0, %s122
    %s126 = sphi 0, %s125
    %s142 = sphi 0, %s126
  $region4: #{patch_discriminator.15} parent=0 // loop_header_branch
    %12 = sbr.rel (%p10) target = $region8
  $region5: #{patch_discriminator.15} parent=0 // loop_body
    %s14 = ssub.s32 %s9, 1
    %s15 = ssub.s32 %s9, 2
    %s25 = sadd.s32 1, %s18
    %p26 = scmp.ge.s32.totalorder %s25, 8
    %s27 = scalar_select %p26, 0, %s25
    %s28 = sadd.s32 1, %s17
    %s29 = scalar_select %p26, %s28, %s17
    %p30 = scmp.ge.s32.totalorder %s29, 1
    %s31 = scalar_select %p30, 0, %s29
    %s32 = sadd.s32 1, %s16
    %s33 = scalar_select %p30, %s32, %s16
    %p34 = scmp.ge.s32.totalorder %s33, 1
    %s35 = scalar_select %p34, 0, %s33
    %s36 = ssub.s32 %s16, %s35
    %s37 = ssub.s32 %s18, %s27
    %s38 = sor.u32 %s36, %s37
    %p39 = scmp.eq.s32.totalorder %s38, 0
    %s41 = sadd.s32 %s40, 1
    %s42 = scalar_select %p39, %s40, %s41
    %p45 = pneg %p39
    %p46 = scmp.eq.s32.totalorder %s9, 7
    %p47 = por %p45, %p46
    %p48 = scmp.ne.s32.totalorder %s40, %s43
    %p49 = scmp.eq.s32.totalorder %s9, 0
    %p50 = por %p48, %p49
    %p51 = scmp.ne.s32.totalorder %s40, %s43
    %p52 = scmp.eq.s32.totalorder %s14, 7
    %p53 = por %p51, %p52
    %p54 = scmp.ne.s32.totalorder %s43, %s44
    %p55 = scmp.eq.s32.totalorder %s14, 0
    %p56 = por %p54, %p55
    %p57 = scmp.ne.s32.totalorder %s43, %s44
    %p58 = scmp.eq.s32.totalorder %s15, 7
    %p59 = por %p57, %p58
    %p61 = scmp.ne.s32.totalorder %s44, %s60
    %p62 = scmp.eq.s32.totalorder %s15, 0
    %p63 = por %p61, %p62
    %s64 = ssub.s32 %s18, %s27
    %s65 = ssub.s32 %s17, %s31
    %s66 = sor.u32 %s64, %s65
    %p67 = scmp.eq.s32.totalorder %s66, 0
    %s69 = sadd.s32 %s68, 1
    %s70 = scalar_select %p67, %s68, %s69
    %p73 = pneg %p67
    %p74 = scmp.eq.s32.totalorder %s9, 7
    %p75 = por %p73, %p74
    %p76 = scmp.ne.s32.totalorder %s68, %s71
    %p77 = scmp.eq.s32.totalorder %s9, 0
    %p78 = por %p76, %p77
    %p79 = scmp.ne.s32.totalorder %s68, %s71
    %p80 = scmp.eq.s32.totalorder %s14, 7
    %p81 = por %p79, %p80
    %p82 = scmp.ne.s32.totalorder %s71, %s72
    %p83 = scmp.eq.s32.totalorder %s14, 0
    %p84 = por %p82, %p83
    %p85 = scmp.ne.s32.totalorder %s71, %s72
    %p86 = scmp.eq.s32.totalorder %s15, 7
    %p87 = por %p85, %p86
    %p89 = scmp.ne.s32.totalorder %s72, %s88
    %p90 = scmp.eq.s32.totalorder %s15, 0
    %p91 = por %p89, %p90
    %s92 = ssub.s32 %s17, %s31
    %p93 = scmp.eq.s32.totalorder %s92, 0
    %s95 = sadd.s32 %s94, 1
    %s96 = scalar_select %p93, %s94, %s95
    %p99 = pneg %p93
    %p100 = scmp.eq.s32.totalorder %s9, 7
    %p101 = por %p99, %p100
    %p102 = scmp.ne.s32.totalorder %s94, %s97
    %p103 = scmp.eq.s32.totalorder %s9, 0
    %p104 = por %p102, %p103
    %p105 = scmp.ne.s32.totalorder %s94, %s97
    %p106 = scmp.eq.s32.totalorder %s14, 7
    %p107 = por %p105, %p106
    %p108 = scmp.ne.s32.totalorder %s97, %s98
    %p109 = scmp.eq.s32.totalorder %s14, 0
    %p110 = por %p108, %p109
    %p111 = scmp.ne.s32.totalorder %s97, %s98
    %p112 = scmp.eq.s32.totalorder %s15, 7
    %p113 = por %p111, %p112
    %p115 = scmp.ne.s32.totalorder %s98, %s114
    %p116 = scmp.eq.s32.totalorder %s15, 0
    %p117 = por %p115, %p116
    %s118 = ssub.s32 %s16, %s35
    %s119 = ssub.s32 %s17, %s31
    %s120 = sor.u32 %s118, %s119
    %p121 = scmp.eq.s32.totalorder %s120, 0
    %s123 = sadd.s32 %s122, 1
    %s124 = scalar_select %p121, %s122, %s123
    %p127 = pneg %p121
    %p128 = scmp.eq.s32.totalorder %s9, 7
    %p129 = por %p127, %p128
    %p130 = scmp.ne.s32.totalorder %s122, %s125
    %p131 = scmp.eq.s32.totalorder %s9, 0
    %p132 = por %p130, %p131
    %p133 = scmp.ne.s32.totalorder %s122, %s125
    %p134 = scmp.eq.s32.totalorder %s14, 7
    %p135 = por %p133, %p134
    %p136 = scmp.ne.s32.totalorder %s125, %s126
    %p137 = scmp.eq.s32.totalorder %s14, 0
    %p138 = por %p136, %p137
    %p139 = scmp.ne.s32.totalorder %s125, %s126
    %p140 = scmp.eq.s32.totalorder %s15, 7
    %p141 = por %p139, %p140
    %p143 = scmp.ne.s32.totalorder %s126, %s142
    %p144 = scmp.eq.s32.totalorder %s15, 0
    %p145 = por %p143, %p144
    %p146 = scmp.le.s32.totalorder 1, %s9
    %p147 = scmp.lt.s32.totalorder %s9, 9
    %p148 = pnand %p146, %p147
    %p149 = pneg %p148
    // Predicated region
    $region9: #{patch_discriminator.15} parent=5 // pred_check
      _
    $region10: #{patch_discriminator.15} parent=5 // pred_check_branch
      %151 = sbr.rel (%p148) target = $region12
    $region11: #{patch_discriminator.15} parent=5 // pred_region
      %s152 = ssub.s32 %s9, 1
      // Predicated region
      $region13: #{patch_discriminator.15} parent=11 // pred_check
        %p153 = pneg %p110
      $region14: #{patch_discriminator.15} parent=11 // pred_check_branch
        %155 = sbr.rel (%p153) target = $region16
      $region15: #{patch_discriminator.15} parent=11 // pred_region
        %p156 = scmp.lt.s32.totalorder %s20, 0
        %s157 = scalar_select %p156, %s20, 0
        %s158 = scalar_lea.vmem %s2, %s157
      $region16: #{patch_discriminator.15} parent=11 // pred_fallthru
        _
    $region12: #{patch_discriminator.15} parent=5 // pred_fallthru
      _
    %p159 = scmp.lt.s32.totalorder %s9, 8
    // Predicated region
    $region17: #{patch_discriminator.15} parent=5 // pred_check
      %p160 = pneg %p159
    $region18: #{patch_discriminator.15} parent=5 // pred_check_branch
      %162 = sbr.rel (%p160) target = $region20
    $region19: #{patch_discriminator.15} parent=5 // pred_region
      // Predicated region
      $region21: #{patch_discriminator.15} parent=19 // pred_check
        %p163 = pneg %p50
      $region22: #{patch_discriminator.15} parent=19 // pred_check_branch
        %165 = sbr.rel (%p163) target = $region24
      $region23: #{patch_discriminator.15} parent=19 // pred_region
        %s166 = smul.u32 8, %s18
        %p167 = scmp.lt.s32.totalorder %s16, 0
        %s168 = scalar_select %p167, %s16, 0
        %p169 = scmp.lt.s32.totalorder %s166, 63
        %s170 = scalar_select %p169, %s166, 63
        %s171 = smul.addr %s168, 64
        %s172 = sadd.s32 %s170, %s171
        %s173 = smul.addr %s172, 4
        %s174 = scalar_lea.vmem %s0, %s173
        %s175 = smul.u32 8, %s18
      $region24: #{patch_discriminator.15} parent=19 // pred_fallthru
        _
      // Predicated region
      $region25: #{patch_discriminator.15} parent=19 // pred_check
        %p176 = pneg %p78
      $region26: #{patch_discriminator.15} parent=19 // pred_check_branch
        %178 = sbr.rel (%p176) target = $region28
      $region27: #{patch_discriminator.15} parent=19 // pred_region
        %s179 = smul.u32 128, %s18
        %p180 = scmp.lt.s32.totalorder %s179, 1023
        %s181 = scalar_select %p180, %s179, 1023
        %p182 = scmp.lt.s32.totalorder %s17, 0
        %s183 = scalar_select %p182, %s17, 0
        %s184 = sadd.s32 %s183, %s181
        %s185 = smul.addr %s184, 4
        %s186 = scalar_lea.vmem %s1, %s185
        %s187 = smul.u32 128, %s18
      $region28: #{patch_discriminator.15} parent=19 // pred_fallthru
        _
    $region20: #{patch_discriminator.15} parent=5 // pred_fallthru
      _
    %p188 = scmp.le.s32.totalorder 1, %s9
    %p189 = scmp.lt.s32.totalorder %s9, 9
    %p190 = pnand %p188, %p189
    %p191 = pneg %p190
    // Predicated region
    $region29: #{patch_discriminator.15} parent=5 // pred_check
      _
    $region30: #{patch_discriminator.15} parent=5 // pred_check_branch
      %193 = sbr.rel (%p190) target = $region32
    $region31: #{patch_discriminator.15} parent=5 // pred_region
      %s194 = ssub.s32 %s9, 1
      %s195 = smul.u32 8, %s21
      %p196 = scmp.lt.s32.totalorder %s19, 0
      %s197 = scalar_select %p196, %s19, 0
      %p198 = scmp.lt.s32.totalorder %s195, 63
      %s199 = scalar_select %p198, %s195, 63
      %s200 = smul.addr %s197, 64
      %s201 = sadd.s32 %s199, %s200
      %s202 = smul.addr %s201, 4
      %s203 = scalar_lea.vmem %s0, %s202
      %p204 = pneg %p56
      %p205 = pneg %p53
      %s206 = smul.u32 128, %s21
      %p207 = scmp.lt.s32.totalorder %s206, 1023
      %s208 = scalar_select %p207, %s206, 1023
      %p209 = scmp.lt.s32.totalorder %s20, 0
      %s210 = scalar_select %p209, %s20, 0
      %s211 = sadd.s32 %s210, %s208
      %s212 = smul.addr %s211, 4
      %s213 = scalar_lea.vmem %s1, %s212
      %p214 = pneg %p84
      %p215 = pneg %p81
      %p216 = scmp.lt.s32.totalorder %s20, 0
      %s217 = scalar_select %p216, %s20, 0
      %s218 = scalar_lea.vmem %s2, %s217
      %p219 = pneg %p110
      %p220 = pneg %p107
      %p221 = pneg %p138
      %p222 = pneg %p135
      %p223 = scmp.lt.s32.totalorder %s19, 0
      %s224 = scalar_select %p223, %s19, 0
      %p225 = scmp.lt.s32.totalorder %s20, 0
      %s226 = scalar_select %p225, %s20, 0
      %s227 = sadd.s32 %s226, %s224
      %s228 = smul.addr %s227, 8
      %s229 = scalar_lea.vmem %s3, %s228
      %s230 = smul.u32 8, %s21
      %p231 = scmp.lt.s32.totalorder %s19, 0
      %s232 = scalar_select %p231, %s19, 0
      %p233 = scmp.lt.s32.totalorder %s230, 63
      %s234 = scalar_select %p233, %s230, 63
      %s235 = smul.addr %s232, 64
      %s236 = sadd.s32 %s234, %s235
      %s237 = smul.addr %s236, 4
      %s238 = scalar_lea.vmem %s0, %s237
      %s239 = smul.u32 8, %s21
      %s240 = smul.u32 128, %s21
      %p241 = scmp.lt.s32.totalorder %s240, 1023
      %s242 = scalar_select %p241, %s240, 1023
      %p243 = scmp.lt.s32.totalorder %s20, 0
      %s244 = scalar_select %p243, %s20, 0
      %s245 = sadd.s32 %s244, %s242
      %s246 = smul.addr %s245, 4
      %s247 = scalar_lea.vmem %s1, %s246
      %s248 = smul.u32 128, %s21
      %p249 = scmp.lt.s32.totalorder %s20, 0
      %s250 = scalar_select %p249, %s20, 0
      %s251 = scalar_lea.vmem %s2, %s250
      %p252 = scmp.lt.s32.totalorder %s19, 0
      %s253 = scalar_select %p252, %s19, 0
      %p254 = scmp.lt.s32.totalorder %s20, 0
      %s255 = scalar_select %p254, %s20, 0
      %s256 = sadd.s32 %s255, %s253
      %s257 = smul.addr %s256, 8
      %s258 = scalar_lea.vmem %s3, %s257
      %v259 = vld [vmem:[%s238] sm:$0xff]
      %v260 = vld [vmem:[%s238 + $0x8] sm:$0xff]
      %v261 = vld [vmem:[%s238 + $0x10] sm:$0xff]
      %v262 = vld [vmem:[%s238 + $0x18] sm:$0xff]
      %v263 = vld [vmem:[%s247] sm:$0xf]
      %v264 = vld [vmem:[%s247 + $0x4] sm:$0xf]
      %v265 = vld [vmem:[%s247 + $0x8] sm:$0xf]
      %v266 = vld [vmem:[%s247 + $0xc] sm:$0xf]
      %v267 = vld [vmem:[%s247 + $0x10] sm:$0xf]
      %v268 = vld [vmem:[%s247 + $0x14] sm:$0xf]
      %v269 = vld [vmem:[%s247 + $0x18] sm:$0xf]
      %v270 = vld [vmem:[%s247 + $0x1c] sm:$0xf]
      %v271 = vld [vmem:[%s247 + $0x20] sm:$0xf]
      %v272 = vld [vmem:[%s247 + $0x24] sm:$0xf]
      %v273 = vld [vmem:[%s247 + $0x28] sm:$0xf]
      %v274 = vld [vmem:[%s247 + $0x2c] sm:$0xf]
      %v275 = vld [vmem:[%s247 + $0x30] sm:$0xf]
      %v276 = vld [vmem:[%s247 + $0x34] sm:$0xf]
      %v277 = vld [vmem:[%s247 + $0x38] sm:$0xf]
      %v278 = vld [vmem:[%s247 + $0x3c] sm:$0xf]
      %v279 = vld [vmem:[%s247 + $0x40] sm:$0xf]
      %v280 = vld [vmem:[%s247 + $0x44] sm:$0xf]
      %v281 = vld [vmem:[%s247 + $0x48] sm:$0xf]
      %v282 = vld [vmem:[%s247 + $0x4c] sm:$0xf]
      %v283 = vld [vmem:[%s247 + $0x50] sm:$0xf]
      %v284 = vld [vmem:[%s247 + $0x54] sm:$0xf]
      %v285 = vld [vmem:[%s247 + $0x58] sm:$0xf]
      %v286 = vld [vmem:[%s247 + $0x5c] sm:$0xf]
      %v287 = vld [vmem:[%s247 + $0x60] sm:$0xf]
      %v288 = vld [vmem:[%s247 + $0x64] sm:$0xf]
      %v289 = vld [vmem:[%s247 + $0x68] sm:$0xf]
      %v290 = vld [vmem:[%s247 + $0x6c] sm:$0xf]
      %v291 = vld [vmem:[%s247 + $0x70] sm:$0xf]
      %v292 = vld [vmem:[%s247 + $0x74] sm:$0xf]
      %v293 = vld [vmem:[%s247 + $0x78] sm:$0xf]
      %v294 = vld [vmem:[%s247 + $0x7c] sm:$0xf]
      %v295 = vld [vmem:[%s247 + $0x80] sm:$0xf]
      %v296 = vld [vmem:[%s247 + $0x84] sm:$0xf]
      %v297 = vld [vmem:[%s247 + $0x88] sm:$0xf]
      %v298 = vld [vmem:[%s247 + $0x8c] sm:$0xf]
      %v299 = vld [vmem:[%s247 + $0x90] sm:$0xf]
      %v300 = vld [vmem:[%s247 + $0x94] sm:$0xf]
      %v301 = vld [vmem:[%s247 + $0x98] sm:$0xf]
      %v302 = vld [vmem:[%s247 + $0x9c] sm:$0xf]
      %v303 = vld [vmem:[%s247 + $0xa0] sm:$0xf]
      %v304 = vld [vmem:[%s247 + $0xa4] sm:$0xf]
      %v305 = vld [vmem:[%s247 + $0xa8] sm:$0xf]
      %v306 = vld [vmem:[%s247 + $0xac] sm:$0xf]
      %v307 = vld [vmem:[%s247 + $0xb0] sm:$0xf]
      %v308 = vld [vmem:[%s247 + $0xb4] sm:$0xf]
      %v309 = vld [vmem:[%s247 + $0xb8] sm:$0xf]
      %v310 = vld [vmem:[%s247 + $0xbc] sm:$0xf]
      %v311 = vld [vmem:[%s247 + $0xc0] sm:$0xf]
      %v312 = vld [vmem:[%s247 + $0xc4] sm:$0xf]
      %v313 = vld [vmem:[%s247 + $0xc8] sm:$0xf]
      %v314 = vld [vmem:[%s247 + $0xcc] sm:$0xf]
      %v315 = vld [vmem:[%s247 + $0xd0] sm:$0xf]
      %v316 = vld [vmem:[%s247 + $0xd4] sm:$0xf]
      %v317 = vld [vmem:[%s247 + $0xd8] sm:$0xf]
      %v318 = vld [vmem:[%s247 + $0xdc] sm:$0xf]
      %v319 = vld [vmem:[%s247 + $0xe0] sm:$0xf]
      %v320 = vld [vmem:[%s247 + $0xe4] sm:$0xf]
      %v321 = vld [vmem:[%s247 + $0xe8] sm:$0xf]
      %v322 = vld [vmem:[%s247 + $0xec] sm:$0xf]
      %v323 = vld [vmem:[%s247 + $0xf0] sm:$0xf]
      %v324 = vld [vmem:[%s247 + $0xf4] sm:$0xf]
      %v325 = vld [vmem:[%s247 + $0xf8] sm:$0xf]
      %v326 = vld [vmem:[%s247 + $0xfc] sm:$0xf]
      %v327 = vld [vmem:[%s247 + $0x100] sm:$0xf]
      %v328 = vld [vmem:[%s247 + $0x104] sm:$0xf]
      %v329 = vld [vmem:[%s247 + $0x108] sm:$0xf]
      %v330 = vld [vmem:[%s247 + $0x10c] sm:$0xf]
      %v331 = vld [vmem:[%s247 + $0x110] sm:$0xf]
      %v332 = vld [vmem:[%s247 + $0x114] sm:$0xf]
      %v333 = vld [vmem:[%s247 + $0x118] sm:$0xf]
      %v334 = vld [vmem:[%s247 + $0x11c] sm:$0xf]
      %v335 = vld [vmem:[%s247 + $0x120] sm:$0xf]
      %v336 = vld [vmem:[%s247 + $0x124] sm:$0xf]
      %v337 = vld [vmem:[%s247 + $0x128] sm:$0xf]
      %v338 = vld [vmem:[%s247 + $0x12c] sm:$0xf]
      %v339 = vld [vmem:[%s247 + $0x130] sm:$0xf]
      %v340 = vld [vmem:[%s247 + $0x134] sm:$0xf]
      %v341 = vld [vmem:[%s247 + $0x138] sm:$0xf]
      %v342 = vld [vmem:[%s247 + $0x13c] sm:$0xf]
      %v343 = vld [vmem:[%s247 + $0x140] sm:$0xf]
      %v344 = vld [vmem:[%s247 + $0x144] sm:$0xf]
      %v345 = vld [vmem:[%s247 + $0x148] sm:$0xf]
      %v346 = vld [vmem:[%s247 + $0x14c] sm:$0xf]
      %v347 = vld [vmem:[%s247 + $0x150] sm:$0xf]
      %v348 = vld [vmem:[%s247 + $0x154] sm:$0xf]
      %v349 = vld [vmem:[%s247 + $0x158] sm:$0xf]
      %v350 = vld [vmem:[%s247 + $0x15c] sm:$0xf]
      %v351 = vld [vmem:[%s247 + $0x160] sm:$0xf]
      %v352 = vld [vmem:[%s247 + $0x164] sm:$0xf]
      %v353 = vld [vmem:[%s247 + $0x168] sm:$0xf]
      %v354 = vld [vmem:[%s247 + $0x16c] sm:$0xf]
      %v355 = vld [vmem:[%s247 + $0x170] sm:$0xf]
      %v356 = vld [vmem:[%s247 + $0x174] sm:$0xf]
      %v357 = vld [vmem:[%s247 + $0x178] sm:$0xf]
      %v358 = vld [vmem:[%s247 + $0x17c] sm:$0xf]
      %v359 = vld [vmem:[%s247 + $0x180] sm:$0xf]
      %v360 = vld [vmem:[%s247 + $0x184] sm:$0xf]
      %v361 = vld [vmem:[%s247 + $0x188] sm:$0xf]
      %v362 = vld [vmem:[%s247 + $0x18c] sm:$0xf]
      %v363 = vld [vmem:[%s247 + $0x190] sm:$0xf]
      %v364 = vld [vmem:[%s247 + $0x194] sm:$0xf]
      %v365 = vld [vmem:[%s247 + $0x198] sm:$0xf]
      %v366 = vld [vmem:[%s247 + $0x19c] sm:$0xf]
      %v367 = vld [vmem:[%s247 + $0x1a0] sm:$0xf]
      %v368 = vld [vmem:[%s247 + $0x1a4] sm:$0xf]
      %v369 = vld [vmem:[%s247 + $0x1a8] sm:$0xf]
      %v370 = vld [vmem:[%s247 + $0x1ac] sm:$0xf]
      %v371 = vld [vmem:[%s247 + $0x1b0] sm:$0xf]
      %v372 = vld [vmem:[%s247 + $0x1b4] sm:$0xf]
      %v373 = vld [vmem:[%s247 + $0x1b8] sm:$0xf]
      %v374 = vld [vmem:[%s247 + $0x1bc] sm:$0xf]
      %v375 = vld [vmem:[%s247 + $0x1c0] sm:$0xf]
      %v376 = vld [vmem:[%s247 + $0x1c4] sm:$0xf]
      %v377 = vld [vmem:[%s247 + $0x1c8] sm:$0xf]
      %v378 = vld [vmem:[%s247 + $0x1cc] sm:$0xf]
      %v379 = vld [vmem:[%s247 + $0x1d0] sm:$0xf]
      %v380 = vld [vmem:[%s247 + $0x1d4] sm:$0xf]
      %v381 = vld [vmem:[%s247 + $0x1d8] sm:$0xf]
      %v382 = vld [vmem:[%s247 + $0x1dc] sm:$0xf]
      %v383 = vld [vmem:[%s247 + $0x1e0] sm:$0xf]
      %v384 = vld [vmem:[%s247 + $0x1e4] sm:$0xf]
      %v385 = vld [vmem:[%s247 + $0x1e8] sm:$0xf]
      %v386 = vld [vmem:[%s247 + $0x1ec] sm:$0xf]
      %v387 = vld [vmem:[%s247 + $0x1f0] sm:$0xf]
      %v388 = vld [vmem:[%s247 + $0x1f4] sm:$0xf]
      %v389 = vld [vmem:[%s247 + $0x1f8] sm:$0xf]
      %v390 = vld [vmem:[%s247 + $0x1fc] sm:$0xf]
      %v395 = vunpack.c.l.b16 %v259
      %v396 = vunpack.c.h.b16 %v259
      %v397 = vunpack.c.l.b16 %v260
      %v398 = vunpack.c.h.b16 %v260
      %v399 = vunpack.c.l.b16 %v261
      %v400 = vunpack.c.h.b16 %v261
      %v401 = vunpack.c.l.b16 %v262
      %v402 = vunpack.c.h.b16 %v262
      %v403 = vpack.c.b16 %v395, %v395
      %v404 = vpack.c.b16 %v396, %v396
      %v405 = vpack.c.b16 %v397, %v397
      %v406 = vpack.c.b16 %v398, %v398
      %v407 = vpack.c.b16 %v399, %v399
      %v408 = vpack.c.b16 %v400, %v400
      %v409 = vpack.c.b16 %v401, %v401
      %v410 = vpack.c.b16 %v402, %v402
      %v547 = vunpack.c.l.b16 %v263
      %v548 = vunpack.c.l.b16 %v264
      %v549 = vunpack.c.l.b16 %v265
      %v550 = vunpack.c.l.b16 %v266
      %v551 = vunpack.c.l.b16 %v267
      %v552 = vunpack.c.l.b16 %v268
      %v553 = vunpack.c.l.b16 %v269
      %v554 = vunpack.c.l.b16 %v270
      %v555 = vunpack.c.l.b16 %v271
      %v556 = vunpack.c.l.b16 %v272
      %v557 = vunpack.c.l.b16 %v273
      %v558 = vunpack.c.l.b16 %v274
      %v559 = vunpack.c.l.b16 %v275
      %v560 = vunpack.c.l.b16 %v276
      %v561 = vunpack.c.l.b16 %v277
      %v562 = vunpack.c.l.b16 %v278
      %v563 = vunpack.c.l.b16 %v279
      %v564 = vunpack.c.l.b16 %v280
      %v565 = vunpack.c.l.b16 %v281
      %v566 = vunpack.c.l.b16 %v282
      %v567 = vunpack.c.l.b16 %v283
      %v568 = vunpack.c.l.b16 %v284
      %v569 = vunpack.c.l.b16 %v285
      %v570 = vunpack.c.l.b16 %v286
      %v571 = vunpack.c.l.b16 %v287
      %v572 = vunpack.c.l.b16 %v288
      %v573 = vunpack.c.l.b16 %v289
      %v574 = vunpack.c.l.b16 %v290
      %v575 = vunpack.c.l.b16 %v291
      %v576 = vunpack.c.l.b16 %v292
      %v577 = vunpack.c.l.b16 %v293
      %v578 = vunpack.c.l.b16 %v294
      %v579 = vunpack.c.l.b16 %v295
      %v580 = vunpack.c.l.b16 %v296
      %v581 = vunpack.c.l.b16 %v297
      %v582 = vunpack.c.l.b16 %v298
      %v583 = vunpack.c.l.b16 %v299
      %v584 = vunpack.c.l.b16 %v300
      %v585 = vunpack.c.l.b16 %v301
      %v586 = vunpack.c.l.b16 %v302
      %v587 = vunpack.c.l.b16 %v303
      %v588 = vunpack.c.l.b16 %v304
      %v589 = vunpack.c.l.b16 %v305
      %v590 = vunpack.c.l.b16 %v306
      %v591 = vunpack.c.l.b16 %v307
      %v592 = vunpack.c.l.b16 %v308
      %v593 = vunpack.c.l.b16 %v309
      %v594 = vunpack.c.l.b16 %v310
      %v595 = vunpack.c.l.b16 %v311
      %v596 = vunpack.c.l.b16 %v312
      %v597 = vunpack.c.l.b16 %v313
      %v598 = vunpack.c.l.b16 %v314
      %v599 = vunpack.c.l.b16 %v315
      %v600 = vunpack.c.l.b16 %v316
      %v601 = vunpack.c.l.b16 %v317
      %v602 = vunpack.c.l.b16 %v318
      %v603 = vunpack.c.l.b16 %v319
      %v604 = vunpack.c.l.b16 %v320
      %v605 = vunpack.c.l.b16 %v321
      %v606 = vunpack.c.l.b16 %v322
      %v607 = vunpack.c.l.b16 %v323
      %v608 = vunpack.c.l.b16 %v324
      %v609 = vunpack.c.l.b16 %v325
      %v610 = vunpack.c.l.b16 %v326
      %v611 = vunpack.c.l.b16 %v327
      %v612 = vunpack.c.l.b16 %v328
      %v613 = vunpack.c.l.b16 %v329
      %v614 = vunpack.c.l.b16 %v330
      %v615 = vunpack.c.l.b16 %v331
      %v616 = vunpack.c.l.b16 %v332
      %v617 = vunpack.c.l.b16 %v333
      %v618 = vunpack.c.l.b16 %v334
      %v619 = vunpack.c.l.b16 %v335
      %v620 = vunpack.c.l.b16 %v336
      %v621 = vunpack.c.l.b16 %v337
      %v622 = vunpack.c.l.b16 %v338
      %v623 = vunpack.c.l.b16 %v339
      %v624 = vunpack.c.l.b16 %v340
      %v625 = vunpack.c.l.b16 %v341
      %v626 = vunpack.c.l.b16 %v342
      %v627 = vunpack.c.l.b16 %v343
      %v628 = vunpack.c.l.b16 %v344
      %v629 = vunpack.c.l.b16 %v345
      %v630 = vunpack.c.l.b16 %v346
      %v631 = vunpack.c.l.b16 %v347
      %v632 = vunpack.c.l.b16 %v348
      %v633 = vunpack.c.l.b16 %v349
      %v634 = vunpack.c.l.b16 %v350
      %v635 = vunpack.c.l.b16 %v351
      %v636 = vunpack.c.l.b16 %v352
      %v637 = vunpack.c.l.b16 %v353
      %v638 = vunpack.c.l.b16 %v354
      %v639 = vunpack.c.l.b16 %v355
      %v640 = vunpack.c.l.b16 %v356
      %v641 = vunpack.c.l.b16 %v357
      %v642 = vunpack.c.l.b16 %v358
      %v643 = vunpack.c.l.b16 %v359
      %v644 = vunpack.c.l.b16 %v360
      %v645 = vunpack.c.l.b16 %v361
      %v646 = vunpack.c.l.b16 %v362
      %v647 = vunpack.c.l.b16 %v363
      %v648 = vunpack.c.l.b16 %v364
      %v649 = vunpack.c.l.b16 %v365
      %v650 = vunpack.c.l.b16 %v366
      %v651 = vunpack.c.l.b16 %v367
      %v652 = vunpack.c.l.b16 %v368
      %v653 = vunpack.c.l.b16 %v369
      %v654 = vunpack.c.l.b16 %v370
      %v655 = vunpack.c.l.b16 %v371
      %v656 = vunpack.c.l.b16 %v372
      %v657 = vunpack.c.l.b16 %v373
      %v658 = vunpack.c.l.b16 %v374
      %v659 = vunpack.c.l.b16 %v375
      %v660 = vunpack.c.l.b16 %v376
      %v661 = vunpack.c.l.b16 %v377
      %v662 = vunpack.c.l.b16 %v378
      %v663 = vunpack.c.l.b16 %v379
      %v664 = vunpack.c.l.b16 %v380
      %v665 = vunpack.c.l.b16 %v381
      %v666 = vunpack.c.l.b16 %v382
      %v667 = vunpack.c.l.b16 %v383
      %v668 = vunpack.c.l.b16 %v384
      %v669 = vunpack.c.l.b16 %v385
      %v670 = vunpack.c.l.b16 %v386
      %v671 = vunpack.c.l.b16 %v387
      %v672 = vunpack.c.l.b16 %v388
      %v673 = vunpack.c.l.b16 %v389
      %v674 = vunpack.c.l.b16 %v390
      %v675 = vpack.c.b16 %v548, %v547
      %v676 = vpack.c.b16 %v550, %v549
      %v677 = vpack.c.b16 %v552, %v551
      %v678 = vpack.c.b16 %v554, %v553
      %v679 = vpack.c.b16 %v556, %v555
      %v680 = vpack.c.b16 %v558, %v557
      %v681 = vpack.c.b16 %v560, %v559
      %v682 = vpack.c.b16 %v562, %v561
      %v683 = vpack.c.b16 %v564, %v563
      %v684 = vpack.c.b16 %v566, %v565
      %v685 = vpack.c.b16 %v568, %v567
      %v686 = vpack.c.b16 %v570, %v569
      %v687 = vpack.c.b16 %v572, %v571
      %v688 = vpack.c.b16 %v574, %v573
      %v689 = vpack.c.b16 %v576, %v575
      %v690 = vpack.c.b16 %v578, %v577
      %v691 = vpack.c.b16 %v580, %v579
      %v692 = vpack.c.b16 %v582, %v581
      %v693 = vpack.c.b16 %v584, %v583
      %v694 = vpack.c.b16 %v586, %v585
      %v695 = vpack.c.b16 %v588, %v587
      %v696 = vpack.c.b16 %v590, %v589
      %v697 = vpack.c.b16 %v592, %v591
      %v698 = vpack.c.b16 %v594, %v593
      %v699 = vpack.c.b16 %v596, %v595
      %v700 = vpack.c.b16 %v598, %v597
      %v701 = vpack.c.b16 %v600, %v599
      %v702 = vpack.c.b16 %v602, %v601
      %v703 = vpack.c.b16 %v604, %v603
      %v704 = vpack.c.b16 %v606, %v605
      %v705 = vpack.c.b16 %v608, %v607
      %v706 = vpack.c.b16 %v610, %v609
      %v707 = vpack.c.b16 %v612, %v611
      %v708 = vpack.c.b16 %v614, %v613
      %v709 = vpack.c.b16 %v616, %v615
      %v710 = vpack.c.b16 %v618, %v617
      %v711 = vpack.c.b16 %v620, %v619
      %v712 = vpack.c.b16 %v622, %v621
      %v713 = vpack.c.b16 %v624, %v623
      %v714 = vpack.c.b16 %v626, %v625
      %v715 = vpack.c.b16 %v628, %v627
      %v716 = vpack.c.b16 %v630, %v629
      %v717 = vpack.c.b16 %v632, %v631
      %v718 = vpack.c.b16 %v634, %v633
      %v719 = vpack.c.b16 %v636, %v635
      %v720 = vpack.c.b16 %v638, %v637
      %v721 = vpack.c.b16 %v640, %v639
      %v722 = vpack.c.b16 %v642, %v641
      %v723 = vpack.c.b16 %v644, %v643
      %v724 = vpack.c.b16 %v646, %v645
      %v725 = vpack.c.b16 %v648, %v647
      %v726 = vpack.c.b16 %v650, %v649
      %v727 = vpack.c.b16 %v652, %v651
      %v728 = vpack.c.b16 %v654, %v653
      %v729 = vpack.c.b16 %v656, %v655
      %v730 = vpack.c.b16 %v658, %v657
      %v731 = vpack.c.b16 %v660, %v659
      %v732 = vpack.c.b16 %v662, %v661
      %v733 = vpack.c.b16 %v664, %v663
      %v734 = vpack.c.b16 %v666, %v665
      %v735 = vpack.c.b16 %v668, %v667
      %v736 = vpack.c.b16 %v670, %v669
      %v737 = vpack.c.b16 %v672, %v671
      %v738 = vpack.c.b16 %v674, %v673
      %803 = vmatpush.bf16.msra.mxu0 %v682
      %804 = vmatpush.bf16.msra.mxu0 %v681
      %805 = vmatpush.bf16.msra.mxu0 %v680
      %806 = vmatpush.bf16.msra.mxu0 %v679
      %807 = vmatpush.bf16.msra.mxu0 %v678
      %808 = vmatpush.bf16.msra.mxu0 %v677
      %809 = vmatpush.bf16.msra.mxu0 %v676
      %810 = vmatpush.bf16.msra.mxu0 %v675
      %811 = vmatmul.bf16.gmra.mxu0 %v403
      %v812 = vpop.f32.mrf.mxu0
      %v813 = vadd.f32 0.0, %v812
      %v814 = vpop.f32.mrf.mxu0
      %815 = vdwg.mxu0
      %816 = vmatpush.bf16.msra.mxu0 %v690
      %817 = vmatpush.bf16.msra.mxu0 %v689
      %818 = vmatpush.bf16.msra.mxu0 %v688
      %819 = vmatpush.bf16.msra.mxu0 %v687
      %820 = vmatpush.bf16.msra.mxu0 %v686
      %821 = vmatpush.bf16.msra.mxu0 %v685
      %822 = vmatpush.bf16.msra.mxu0 %v684
      %823 = vmatpush.bf16.msra.mxu0 %v683
      %824 = vmatmul.bf16.gmra.mxu0 %v404
      %v825 = vpop.f32.mrf.mxu0
      %v826 = vadd.f32 %v813, %v825
      %v827 = vpop.f32.mrf.mxu0
      %828 = vdwg.mxu0
      %829 = vmatpush.bf16.msra.mxu0 %v698
      %830 = vmatpush.bf16.msra.mxu0 %v697
      %831 = vmatpush.bf16.msra.mxu0 %v696
      %832 = vmatpush.bf16.msra.mxu0 %v695
      %833 = vmatpush.bf16.msra.mxu0 %v694
      %834 = vmatpush.bf16.msra.mxu0 %v693
      %835 = vmatpush.bf16.msra.mxu0 %v692
      %836 = vmatpush.bf16.msra.mxu0 %v691
      %837 = vmatmul.bf16.gmra.mxu0 %v405
      %v838 = vpop.f32.mrf.mxu0
      %v839 = vadd.f32 %v826, %v838
      %v840 = vpop.f32.mrf.mxu0
      %841 = vdwg.mxu0
      %842 = vmatpush.bf16.msra.mxu0 %v706
      %843 = vmatpush.bf16.msra.mxu0 %v705
      %844 = vmatpush.bf16.msra.mxu0 %v704
      %845 = vmatpush.bf16.msra.mxu0 %v703
      %846 = vmatpush.bf16.msra.mxu0 %v702
      %847 = vmatpush.bf16.msra.mxu0 %v701
      %848 = vmatpush.bf16.msra.mxu0 %v700
      %849 = vmatpush.bf16.msra.mxu0 %v699
      %850 = vmatmul.bf16.gmra.mxu0 %v406
      %v851 = vpop.f32.mrf.mxu0
      %v852 = vadd.f32 %v839, %v851
      %v853 = vpop.f32.mrf.mxu0
      %854 = vdwg.mxu0
      %855 = vmatpush.bf16.msra.mxu0 %v714
      %856 = vmatpush.bf16.msra.mxu0 %v713
      %857 = vmatpush.bf16.msra.mxu0 %v712
      %858 = vmatpush.bf16.msra.mxu0 %v711
      %859 = vmatpush.bf16.msra.mxu0 %v710
      %860 = vmatpush.bf16.msra.mxu0 %v709
      %861 = vmatpush.bf16.msra.mxu0 %v708
      %862 = vmatpush.bf16.msra.mxu0 %v707
      %863 = vmatmul.bf16.gmra.mxu0 %v407
      %v864 = vpop.f32.mrf.mxu0
      %v865 = vadd.f32 %v852, %v864
      %v866 = vpop.f32.mrf.mxu0
      %867 = vdwg.mxu0
      %868 = vmatpush.bf16.msra.mxu0 %v722
      %869 = vmatpush.bf16.msra.mxu0 %v721
      %870 = vmatpush.bf16.msra.mxu0 %v720
      %871 = vmatpush.bf16.msra.mxu0 %v719
      %872 = vmatpush.bf16.msra.mxu0 %v718
      %873 = vmatpush.bf16.msra.mxu0 %v717
      %874 = vmatpush.bf16.msra.mxu0 %v716
      %875 = vmatpush.bf16.msra.mxu0 %v715
      %876 = vmatmul.bf16.gmra.mxu0 %v408
      %v877 = vpop.f32.mrf.mxu0
      %v878 = vadd.f32 %v865, %v877
      %v879 = vpop.f32.mrf.mxu0
      %880 = vdwg.mxu0
      %881 = vmatpush.bf16.msra.mxu0 %v730
      %882 = vmatpush.bf16.msra.mxu0 %v729
      %883 = vmatpush.bf16.msra.mxu0 %v728
      %884 = vmatpush.bf16.msra.mxu0 %v727
      %885 = vmatpush.bf16.msra.mxu0 %v726
      %886 = vmatpush.bf16.msra.mxu0 %v725
      %887 = vmatpush.bf16.msra.mxu0 %v724
      %888 = vmatpush.bf16.msra.mxu0 %v723
      %889 = vmatmul.bf16.gmra.mxu0 %v409
      %v890 = vpop.f32.mrf.mxu0
      %v891 = vadd.f32 %v878, %v890
      %v892 = vpop.f32.mrf.mxu0
      %893 = vdwg.mxu0
      %894 = vmatpush.bf16.msra.mxu0 %v738
      %895 = vmatpush.bf16.msra.mxu0 %v737
      %896 = vmatpush.bf16.msra.mxu0 %v736
      %897 = vmatpush.bf16.msra.mxu0 %v735
      %898 = vmatpush.bf16.msra.mxu0 %v734
      %899 = vmatpush.bf16.msra.mxu0 %v733
      %900 = vmatpush.bf16.msra.mxu0 %v732
      %901 = vmatpush.bf16.msra.mxu0 %v731
      %902 = vmatmul.bf16.gmra.mxu0 %v410
      %v903 = vpop.f32.mrf.mxu0
      %v904 = vadd.f32 %v891, %v903
      %v905 = vpop.f32.mrf.mxu0
      %906 = vdwg.mxu0
      %p907 = scmp.eq.s32.totalorder %s21, 0
      // Predicated region
      $region33: #{patch_discriminator.15} parent=31 // pred_check
        %p908 = pneg %p907
      $region34: #{patch_discriminator.15} parent=31 // pred_check_branch
        %910 = sbr.rel (%p908) target = $region36
      $region35: #{patch_discriminator.15} parent=31 // pred_region
        %911 = vst [vmem:[#allocation2] sm:$0xff] %v904
      $region36: #{patch_discriminator.15} parent=31 // pred_fallthru
        _
      %p912 = scmp.ne.s32.totalorder %s21, 0
      // Predicated region
      $region37: #{patch_discriminator.15} parent=31 // pred_check
        %p913 = pneg %p912
      $region38: #{patch_discriminator.15} parent=31 // pred_check_branch
        %915 = sbr.rel (%p913) target = $region40
      $region39: #{patch_discriminator.15} parent=31 // pred_region
        %v916 = vld [vmem:[#allocation2] sm:$0xff]
        %v917 = vadd.f32 %v916, %v904
        %918 = vst [vmem:[#allocation2] sm:$0xff] %v917
      $region40: #{patch_discriminator.15} parent=31 // pred_fallthru
        _
      %p919 = scmp.eq.s32.totalorder %s21, 7
      // Predicated region
      $region41: #{patch_discriminator.15} parent=31 // pred_check
        %p920 = pneg %p919
      $region42: #{patch_discriminator.15} parent=31 // pred_check_branch
        %922 = sbr.rel (%p920) target = $region44
      $region43: #{patch_discriminator.15} parent=31 // pred_region
        %v923 = vld [vmem:[#allocation2] sm:$0xff]
        %v924 = vld [vmem:[%s251] sm:$0x1]
        %v926 = vperm.slane %v924, 0
        %v928 = vadd.f32 %v923, %v926
        %929 = vst [vmem:[%s258] sm:$0xff] %v928
      $region44: #{patch_discriminator.15} parent=31 // pred_fallthru
        _
      %p930 = scmp.lt.s32.totalorder %s19, 0
      %s931 = scalar_select %p930, %s19, 0
      %p932 = scmp.lt.s32.totalorder %s20, 0
      %s933 = scalar_select %p932, %s20, 0
      %s934 = sadd.s32 %s933, %s931
      %s935 = smul.addr %s934, 8
      %s936 = scalar_lea.vmem %s3, %s935
      // Predicated region
      $region45: #{patch_discriminator.15} parent=31 // pred_check
        %p937 = pneg %p135
      $region46: #{patch_discriminator.15} parent=31 // pred_check_branch
        %939 = sbr.rel (%p937) target = $region48
      $region47: #{patch_discriminator.15} parent=31 // pred_region
        _
      $region48: #{patch_discriminator.15} parent=31 // pred_fallthru
        _
      // Predicated region
      $region49: #{patch_discriminator.15} parent=31 // pred_check
        %p940 = pneg %p135
      $region50: #{patch_discriminator.15} parent=31 // pred_check_branch
        %942 = sbr.rel (%p940) target = $region52
      $region51: #{patch_discriminator.15} parent=31 // pred_region
        %p943 = scmp.lt.s32.totalorder %s19, 0
        %s944 = scalar_select %p943, %s19, 0
        %p945 = scmp.lt.s32.totalorder %s20, 0
        %s946 = scalar_select %p945, %s20, 0
        %s947 = sadd.s32 %s946, %s944
        %s948 = smul.addr %s947, 8
        %s949 = scalar_lea.vmem %s3, %s948
      $region52: #{patch_discriminator.15} parent=31 // pred_fallthru
        _
    $region32: #{patch_discriminator.15} parent=5 // pred_fallthru
      _
    %p950 = scmp.le.s32.totalorder 2, %s9
    // Predicated region
    $region53: #{patch_discriminator.15} parent=5 // pred_check
      %p951 = pneg %p950
    $region54: #{patch_discriminator.15} parent=5 // pred_check_branch
      %953 = sbr.rel (%p951) target = $region56
    $region55: #{patch_discriminator.15} parent=5 // pred_region
      %s954 = ssub.s32 %s9, 2
    $region56: #{patch_discriminator.15} parent=5 // pred_fallthru
      _
  $region6: #{patch_discriminator.15} parent=0 // loop_footer
    %s13 = sadd.s32 1, %s9
  $region7: #{patch_discriminator.15} parent=0 // loop_footer_branch
    %8 = sbr.rel target = $region3
  $region8: #{patch_discriminator.15} parent=0 // loop_exit
    _

</llo_original>
